<compile_context>
chip_gen: v7x
topology: tpu7x:2x2x1
jax: 0.10.0
libtpu: 0.0.40
codegen_flags: <defaults>
</compile_context>

<pallas_src>
import math
import jax
import jax.numpy as jnp
from jax.experimental import pallas as pl
from jax.experimental.pallas import tpu as pltpu

# ---------------- small synthetic MediSimConfig ----------------
N_EMBD = 32          # config.n_embd
N_HEAD = 4           # config.n_head
N_LAYER = 2          # config.n_layer
N_CTX = 8            # config.n_ctx
N_POSITIONS = 8      # config.n_positions
VOCAB = 16           # config.total_vocab_size
LN_EPS = 1e-5        # config.layer_norm_epsilon
BATCH = 2
SEQ = 8

V_PAD = 128          # lane-dense padded decoder width (>= VOCAB, multiple of 128)
PER_LAYER = 16       # number of parameter refs per transformer block

LAYER_KEYS = ("ln1_w", "ln1_b", "wq", "bq", "wk", "bk", "wv", "bv",
              "wpr", "bpr", "ln2_w", "ln2_b", "wfc", "bfc", "wp2", "bp2")


# ---------------- in-kernel helpers ----------------
def _layernorm(x, w, b, eps=LN_EPS):
    u = jnp.mean(x, axis=-1, keepdims=True)
    s = jnp.mean((x - u) ** 2, axis=-1, keepdims=True)
    return w * ((x - u) / jnp.sqrt(s + eps)) + b


def _gelu(x):
    return 0.5 * x * (1.0 + jnp.tanh(math.sqrt(2.0 / math.pi) * (x + 0.044715 * x ** 3)))


def _sigmoid(x):
    # numerically stable sigmoid via tanh (EUP path)
    return 0.5 * (jnp.tanh(0.5 * x) + 1.0)


# ---------------- fused kernel ----------------
def make_gpt_kernel(B, S, E, H, n_layer):
    D = E // H
    scale = 1.0 / math.sqrt(D)
    BS = B * S

    def kernel(*refs):
        # inputs: x, w_vis_T, pos, ln_f_w, ln_f_b, w_dec_pad, then PER_LAYER refs per layer
        x_ref, wvT_ref, pos_ref, lnf_w, lnf_b, wdec_ref = refs[:6]
        layer_refs = refs[6:6 + n_layer * PER_LAYER]
        o_ref = refs[6 + n_layer * PER_LAYER]

        # ---- visit embedding + positional embedding ----
        h = jnp.dot(x_ref[...], wvT_ref[...], preferred_element_type=jnp.float32)  # (BS,E)
        h = (h.reshape(B, S, E) + pos_ref[...][None]).reshape(BS, E)

        # ---- causal mask, built once (shared by all layers/heads) ----
        rows = jax.lax.broadcasted_iota(jnp.int32, (S, S), 0)
        cols = jax.lax.broadcasted_iota(jnp.int32, (S, S), 1)
        causal = rows >= cols                                            # (S,S) bool

        # ---- transformer blocks (static layer loop) ----
        for l in range(n_layer):
            (ln1w, ln1b, wq, bq, wk, bk, wv, bv, wpr, bpr,
             ln2w, ln2b, wfc, bfc, wp2, bp2) = layer_refs[l * PER_LAYER:(l + 1) * PER_LAYER]

            # --- attention (pre-LN), scale=True ---
            hn = _layernorm(h, ln1w[...], ln1b[...])                     # (BS,E)
            attn = jnp.zeros((BS, E), jnp.float32)
            for hi in range(H):                                          # static head loop
                q = (jnp.dot(hn, wq[hi], preferred_element_type=jnp.float32)
                     + bq[hi]).reshape(B, S, D)
                k = (jnp.dot(hn, wk[hi], preferred_element_type=jnp.float32)
                     + bk[hi]).reshape(B, S, D)
                v = (jnp.dot(hn, wv[hi], preferred_element_type=jnp.float32)
                     + bv[hi]).reshape(B, S, D)
                s = jnp.einsum('bqd,bkd->bqk', q, k,
                               preferred_element_type=jnp.float32) * scale
                s = jnp.where(causal[None], s, -1e10)
                s = s - jnp.max(s, axis=-1, keepdims=True)
                e = jnp.exp(s)
                p = e * pl.reciprocal(jnp.sum(e, axis=-1, keepdims=True), approx=True)
                o = jnp.einsum('bqk,bkd->bqd', p, v,
                               preferred_element_type=jnp.float32)       # (B,S,D)
                # accumulate through this head's rows of c_proj (no lane concat)
                attn = attn + jnp.dot(o.reshape(BS, D), wpr[hi],
                                      preferred_element_type=jnp.float32)
            h = h + attn + bpr[...]

            # --- MLP (pre-LN) ---
            hn2 = _layernorm(h, ln2w[...], ln2b[...])
            m = _gelu(jnp.dot(hn2, wfc[...], preferred_element_type=jnp.float32) + bfc[...])
            m = jnp.dot(m, wp2[...], preferred_element_type=jnp.float32) + bp2[...]
            h = h + m

        # ---- final LN + tied decoder head (lane-dense, padded) + sigmoid ----
        hf = _layernorm(h, lnf_w[...], lnf_b[...])
        logits = jnp.dot(hf, wdec_ref[...], preferred_element_type=jnp.float32)  # (BS,128)
        o_ref[...] = _sigmoid(logits)

    return kernel


# ---------------- wrapper (single fused pallas_call) ----------------
def gpt_forward(params, input_visits):
    B, S, V = input_visits.shape
    E, H = N_EMBD, N_HEAD

    x2d = input_visits.reshape(B * S, V)                 # fold batch onto rows
    pos = params["pos_embed"][:S]                        # positions 0..S-1

    inputs = [x2d, params["w_vis_T"], pos,
              params["ln_f_w"], params["ln_f_b"], params["w_dec_pad"]]
    for lp in params["blocks"]:
        inputs += [lp[k] for k in LAYER_KEYS]

    out = pl.pallas_call(
        make_gpt_kernel(B, S, E, H, N_LAYER),
        out_shape=jax.ShapeDtypeStruct((B * S, V_PAD), jnp.float32),
    )(*inputs)

    # strip lane padding, restore (B, S, V)
    return out[:, :V].reshape(B, S, V)


# ---------------- deterministic parameter init (PyTorch Conv1D layout) ----------------
def init_params(key):
    def nrm(k, shape, std=0.02):
        return (std * jax.random.normal(k, shape)).astype(jnp.float32)

    E, H = N_EMBD, N_HEAD
    D = E // H
    keys = jax.random.split(key, 2 + N_LAYER * 4)

    w_vis = nrm(keys[0], (E, VOCAB))                     # nn.Linear(V,E).weight layout (E,V)
    pos_embed = nrm(keys[1], (N_POSITIONS, E))

    blocks = []
    for l in range(N_LAYER):
        k0, k1, k2, k3 = keys[2 + 4 * l: 6 + 4 * l]
        c_attn_w = nrm(k0, (E, 3 * E))                   # Conv1D weight: (in, out), y = x@W + b
        c_attn_b = jnp.zeros((3 * E,), jnp.float32)
        c_proj_w = nrm(k1, (E, E))
        c_proj_b = jnp.zeros((E,), jnp.float32)
        c_fc_w = nrm(k2, (E, 4 * E))
        c_fc_b = jnp.zeros((4 * E,), jnp.float32)
        c_proj2_w = nrm(k3, (4 * E, E))
        c_proj2_b = jnp.zeros((E,), jnp.float32)

        def split_heads_cols(w_cols):                    # (E, E) columns -> (H, E, D)
            return w_cols.reshape(E, H, D).transpose(1, 0, 2)

        blocks.append(dict(
            ln1_w=jnp.ones((1, E), jnp.float32),
            ln1_b=jnp.zeros((1, E), jnp.float32),
            wq=split_heads_cols(c_attn_w[:, :E]),
            bq=c_attn_b[:E].reshape(H, 1, D),
            wk=split_heads_cols(c_attn_w[:, E:2 * E]),
            bk=c_attn_b[E:2 * E].reshape(H, 1, D),
            wv=split_heads_cols(c_attn_w[:, 2 * E:]),
            bv=c_attn_b[2 * E:].reshape(H, 1, D),
            wpr=c_proj_w.reshape(H, D, E),               # per-head rows of c_proj
            bpr=c_proj_b.reshape(1, E),
            ln2_w=jnp.ones((1, E), jnp.float32),
            ln2_b=jnp.zeros((1, E), jnp.float32),
            wfc=c_fc_w,
            bfc=c_fc_b.reshape(1, 4 * E),
            wp2=c_proj2_w,
            bp2=c_proj2_b.reshape(1, E),
        ))

    # tied decoder (logits = h @ w_vis), zero-padded to 128 lanes for dense stores
    w_dec_pad = jnp.concatenate(
        [w_vis, jnp.zeros((E, V_PAD - VOCAB), jnp.float32)], axis=1)

    return dict(
        w_vis_T=w_vis.T,                                 # (V,E): embeds = x @ w_vis_T
        w_dec_pad=w_dec_pad,                             # (E,128): tied head, lane padded
        pos_embed=pos_embed,
        blocks=blocks,
        ln_f_w=jnp.ones((1, E), jnp.float32),
        ln_f_b=jnp.zeros((1, E), jnp.float32),
    )


if __name__ == "__main__":
    key = jax.random.PRNGKey(0)
    k_param, k_in = jax.random.split(key)
    params = init_params(k_param)

    # multi-hot visit vectors (B, S, V)
    input_visits = jax.random.bernoulli(k_in, 0.3, (BATCH, SEQ, VOCAB)).astype(jnp.float32)

    code_probs = jax.jit(gpt_forward)(params, input_visits)
    code_probs = jax.block_until_ready(code_probs)

    assert code_probs.shape == (BATCH, SEQ, VOCAB)
    assert bool(jnp.all(jnp.isfinite(code_probs)))
    assert bool(jnp.all((code_probs >= 0.0) & (code_probs <= 1.0)))
    print("KERNEL_OK")
</pallas_src>

<mosaic_0001>
module attributes {stable_mosaic.version = 11 : i64} {
  func.func @kernel(%arg0: memref<16x16xf32, #tpu.memory_space<vmem>>, %arg1: memref<16x32xf32, #tpu.memory_space<vmem>>, %arg2: memref<8x32xf32, #tpu.memory_space<vmem>>, %arg3: memref<1x32xf32, #tpu.memory_space<vmem>>, %arg4: memref<1x32xf32, #tpu.memory_space<vmem>>, %arg5: memref<32x128xf32, #tpu.memory_space<vmem>>, %arg6: memref<1x32xf32, #tpu.memory_space<vmem>>, %arg7: memref<1x32xf32, #tpu.memory_space<vmem>>, %arg8: memref<4x32x8xf32, #tpu.memory_space<vmem>>, %arg9: memref<4x1x8xf32, #tpu.memory_space<vmem>>, %arg10: memref<4x32x8xf32, #tpu.memory_space<vmem>>, %arg11: memref<4x1x8xf32, #tpu.memory_space<vmem>>, %arg12: memref<4x32x8xf32, #tpu.memory_space<vmem>>, %arg13: memref<4x1x8xf32, #tpu.memory_space<vmem>>, %arg14: memref<4x8x32xf32, #tpu.memory_space<vmem>>, %arg15: memref<1x32xf32, #tpu.memory_space<vmem>>, %arg16: memref<1x32xf32, #tpu.memory_space<vmem>>, %arg17: memref<1x32xf32, #tpu.memory_space<vmem>>, %arg18: memref<32x128xf32, #tpu.memory_space<vmem>>, %arg19: memref<1x128xf32, #tpu.memory_space<vmem>>, %arg20: memref<128x32xf32, #tpu.memory_space<vmem>>, %arg21: memref<1x32xf32, #tpu.memory_space<vmem>>, %arg22: memref<1x32xf32, #tpu.memory_space<vmem>>, %arg23: memref<1x32xf32, #tpu.memory_space<vmem>>, %arg24: memref<4x32x8xf32, #tpu.memory_space<vmem>>, %arg25: memref<4x1x8xf32, #tpu.memory_space<vmem>>, %arg26: memref<4x32x8xf32, #tpu.memory_space<vmem>>, %arg27: memref<4x1x8xf32, #tpu.memory_space<vmem>>, %arg28: memref<4x32x8xf32, #tpu.memory_space<vmem>>, %arg29: memref<4x1x8xf32, #tpu.memory_space<vmem>>, %arg30: memref<4x8x32xf32, #tpu.memory_space<vmem>>, %arg31: memref<1x32xf32, #tpu.memory_space<vmem>>, %arg32: memref<1x32xf32, #tpu.memory_space<vmem>>, %arg33: memref<1x32xf32, #tpu.memory_space<vmem>>, %arg34: memref<32x128xf32, #tpu.memory_space<vmem>>, %arg35: memref<1x128xf32, #tpu.memory_space<vmem>>, %arg36: memref<128x32xf32, #tpu.memory_space<vmem>>, %arg37: memref<1x32xf32, #tpu.memory_space<vmem>>, %arg38: memref<16x128xf32, #tpu.memory_space<vmem>>) attributes {dimension_semantics = [], scalar_prefetch = 0 : i64, scratch_operands = 0 : i64, tpu.core_type = #tpu.core_type<tc>} {
    %c0 = arith.constant 0 : index
    %c0_0 = arith.constant 0 : index
    %0 = vector.load %arg0[%c0, %c0_0] : memref<16x16xf32, #tpu.memory_space<vmem>>, vector<16x16xf32>
    %c0_1 = arith.constant 0 : index
    %c0_2 = arith.constant 0 : index
    %1 = vector.load %arg1[%c0_1, %c0_2] : memref<16x32xf32, #tpu.memory_space<vmem>>, vector<16x32xf32>
    %cst = arith.constant dense<0.000000e+00> : vector<16x32xf32>
    %2 = tpu.matmul %0, %1, %cst {dimension_numbers = #tpu.dot_dimension_numbers<[1], [0], [0], [1], [0, 0, 1, 1], [], []>} : vector<16x16xf32>, vector<16x32xf32>, vector<16x32xf32> -> vector<16x32xf32>
    %3 = vector.shape_cast %2 : vector<16x32xf32> to vector<2x8x32xf32>
    %c0_3 = arith.constant 0 : index
    %c0_4 = arith.constant 0 : index
    %4 = vector.load %arg2[%c0_3, %c0_4] : memref<8x32xf32, #tpu.memory_space<vmem>>, vector<8x32xf32>
    %5 = vector.shape_cast %4 : vector<8x32xf32> to vector<1x8x32xf32>
    %6 = vector.broadcast %5 : vector<1x8x32xf32> to vector<2x8x32xf32>
    %7 = arith.addf %3, %6 : vector<2x8x32xf32>
    %8 = vector.shape_cast %7 : vector<2x8x32xf32> to vector<16x32xf32>
    %9 = tpu.iota {dimensions = array<i32: 0>} : vector<8x8xi32>
    %10 = tpu.iota {dimensions = array<i32: 1>} : vector<8x8xi32>
    %11 = arith.cmpi sge, %9, %10 : vector<8x8xi32>
    %c0_5 = arith.constant 0 : index
    %c0_6 = arith.constant 0 : index
    %12 = vector.load %arg6[%c0_5, %c0_6] : memref<1x32xf32, #tpu.memory_space<vmem>>, vector<1x32xf32>
    %c0_7 = arith.constant 0 : index
    %c0_8 = arith.constant 0 : index
    %13 = vector.load %arg7[%c0_7, %c0_8] : memref<1x32xf32, #tpu.memory_space<vmem>>, vector<1x32xf32>
    %cst_9 = arith.constant dense<0.000000e+00> : vector<16xf32>
    %14 = vector.multi_reduction <add>, %8, %cst_9 [1] : vector<16x32xf32> to vector<16xf32>
    %15 = vector.shape_cast %14 : vector<16xf32> to vector<16x1xf32>
    %cst_10 = arith.constant 3.200000e+01 : f32
    %16 = vector.broadcast %cst_10 : f32 to vector<16x1xf32>
    %17 = arith.divf %15, %16 : vector<16x1xf32>
    %18 = vector.broadcast %17 : vector<16x1xf32> to vector<16x32xf32>
    %19 = arith.subf %8, %18 : vector<16x32xf32>
    %20 = arith.mulf %19, %19 : vector<16x32xf32>
    %cst_11 = arith.constant dense<0.000000e+00> : vector<16xf32>
    %21 = vector.multi_reduction <add>, %20, %cst_11 [1] : vector<16x32xf32> to vector<16xf32>
    %22 = vector.shape_cast %21 : vector<16xf32> to vector<16x1xf32>
    %cst_12 = arith.constant 3.200000e+01 : f32
    %23 = vector.broadcast %cst_12 : f32 to vector<16x1xf32>
    %24 = arith.divf %22, %23 : vector<16x1xf32>
    %25 = vector.broadcast %17 : vector<16x1xf32> to vector<16x32xf32>
    %26 = arith.subf %8, %25 : vector<16x32xf32>
    %cst_13 = arith.constant 9.99999974E-6 : f32
    %27 = vector.broadcast %cst_13 : f32 to vector<16x1xf32>
    %28 = arith.addf %24, %27 : vector<16x1xf32>
    %29 = math.sqrt %28 : vector<16x1xf32>
    %30 = vector.broadcast %29 : vector<16x1xf32> to vector<16x32xf32>
    %31 = arith.divf %26, %30 : vector<16x32xf32>
    %32 = vector.broadcast %12 : vector<1x32xf32> to vector<16x32xf32>
    %33 = arith.mulf %32, %31 : vector<16x32xf32>
    %34 = vector.broadcast %13 : vector<1x32xf32> to vector<16x32xf32>
    %35 = arith.addf %33, %34 : vector<16x32xf32>
    %cst_14 = arith.constant 0.000000e+00 : f32
    %36 = vector.broadcast %cst_14 : f32 to vector<16x32xf32>
    %c0_15 = arith.constant 0 : index
    %c0_16 = arith.constant 0 : index
    %c0_17 = arith.constant 0 : index
    %37 = vector.load %arg8[%c0_15, %c0_16, %c0_17] : memref<4x32x8xf32, #tpu.memory_space<vmem>>, vector<1x32x8xf32>
    %38 = vector.shape_cast %37 : vector<1x32x8xf32> to vector<32x8xf32>
    %cst_18 = arith.constant dense<0.000000e+00> : vector<16x8xf32>
    %39 = tpu.matmul %35, %38, %cst_18 {dimension_numbers = #tpu.dot_dimension_numbers<[1], [0], [0], [1], [0, 0, 1, 1], [], []>} : vector<16x32xf32>, vector<32x8xf32>, vector<16x8xf32> -> vector<16x8xf32>
    %c0_19 = arith.constant 0 : index
    %c0_20 = arith.constant 0 : index
    %c0_21 = arith.constant 0 : index
    %40 = vector.load %arg9[%c0_19, %c0_20, %c0_21] : memref<4x1x8xf32, #tpu.memory_space<vmem>>, vector<1x1x8xf32>
    %41 = vector.shape_cast %40 : vector<1x1x8xf32> to vector<1x8xf32>
    %42 = vector.broadcast %41 : vector<1x8xf32> to vector<16x8xf32>
    %43 = arith.addf %39, %42 : vector<16x8xf32>
    %44 = vector.shape_cast %43 : vector<16x8xf32> to vector<2x8x8xf32>
    %c0_22 = arith.constant 0 : index
    %c0_23 = arith.constant 0 : index
    %c0_24 = arith.constant 0 : index
    %45 = vector.load %arg10[%c0_22, %c0_23, %c0_24] : memref<4x32x8xf32, #tpu.memory_space<vmem>>, vector<1x32x8xf32>
    %46 = vector.shape_cast %45 : vector<1x32x8xf32> to vector<32x8xf32>
    %cst_25 = arith.constant dense<0.000000e+00> : vector<16x8xf32>
    %47 = tpu.matmul %35, %46, %cst_25 {dimension_numbers = #tpu.dot_dimension_numbers<[1], [0], [0], [1], [0, 0, 1, 1], [], []>} : vector<16x32xf32>, vector<32x8xf32>, vector<16x8xf32> -> vector<16x8xf32>
    %c0_26 = arith.constant 0 : index
    %c0_27 = arith.constant 0 : index
    %c0_28 = arith.constant 0 : index
    %48 = vector.load %arg11[%c0_26, %c0_27, %c0_28] : memref<4x1x8xf32, #tpu.memory_space<vmem>>, vector<1x1x8xf32>
    %49 = vector.shape_cast %48 : vector<1x1x8xf32> to vector<1x8xf32>
    %50 = vector.broadcast %49 : vector<1x8xf32> to vector<16x8xf32>
    %51 = arith.addf %47, %50 : vector<16x8xf32>
    %52 = vector.shape_cast %51 : vector<16x8xf32> to vector<2x8x8xf32>
    %c0_29 = arith.constant 0 : index
    %c0_30 = arith.constant 0 : index
    %c0_31 = arith.constant 0 : index
    %53 = vector.load %arg12[%c0_29, %c0_30, %c0_31] : memref<4x32x8xf32, #tpu.memory_space<vmem>>, vector<1x32x8xf32>
    %54 = vector.shape_cast %53 : vector<1x32x8xf32> to vector<32x8xf32>
    %cst_32 = arith.constant dense<0.000000e+00> : vector<16x8xf32>
    %55 = tpu.matmul %35, %54, %cst_32 {dimension_numbers = #tpu.dot_dimension_numbers<[1], [0], [0], [1], [0, 0, 1, 1], [], []>} : vector<16x32xf32>, vector<32x8xf32>, vector<16x8xf32> -> vector<16x8xf32>
    %c0_33 = arith.constant 0 : index
    %c0_34 = arith.constant 0 : index
    %c0_35 = arith.constant 0 : index
    %56 = vector.load %arg13[%c0_33, %c0_34, %c0_35] : memref<4x1x8xf32, #tpu.memory_space<vmem>>, vector<1x1x8xf32>
    %57 = vector.shape_cast %56 : vector<1x1x8xf32> to vector<1x8xf32>
    %58 = vector.broadcast %57 : vector<1x8xf32> to vector<16x8xf32>
    %59 = arith.addf %55, %58 : vector<16x8xf32>
    %60 = vector.shape_cast %59 : vector<16x8xf32> to vector<2x8x8xf32>
    "tpu.trace_start"() <{level = 10 : i32, message = "bqd,bkd->bqk"}> : () -> ()
    %cst_36 = arith.constant dense<0.000000e+00> : vector<2x8x8xf32>
    %61 = tpu.matmul %44, %52, %cst_36 {dimension_numbers = #tpu.dot_dimension_numbers<[2], [2], [1], [1], [0, 0, 0, 1, 1, 1], [0], [0]>} : vector<2x8x8xf32>, vector<2x8x8xf32>, vector<2x8x8xf32> -> vector<2x8x8xf32>
    "tpu.trace_stop"() : () -> ()
    %cst_37 = arith.constant 0.353553385 : f32
    %62 = vector.broadcast %cst_37 : f32 to vector<2x8x8xf32>
    %63 = arith.mulf %61, %62 : vector<2x8x8xf32>
    %64 = vector.shape_cast %11 : vector<8x8xi1> to vector<1x8x8xi1>
    %cst_38 = arith.constant -1.000000e+10 : f32
    %65 = vector.shape_cast %64 : vector<1x8x8xi1> to vector<1x8x8xi1>
    %66 = vector.broadcast %65 : vector<1x8x8xi1> to vector<2x8x8xi1>
    %67 = vector.broadcast %cst_38 : f32 to vector<2x8x8xf32>
    %68 = arith.select %66, %63, %67 : vector<2x8x8xi1>, vector<2x8x8xf32>
    %cst_39 = arith.constant dense<0xFF800000> : vector<2x8xf32>
    %69 = vector.multi_reduction <maximumf>, %68, %cst_39 [2] : vector<2x8x8xf32> to vector<2x8xf32>
    %70 = vector.shape_cast %69 : vector<2x8xf32> to vector<2x8x1xf32>
    %71 = vector.broadcast %70 : vector<2x8x1xf32> to vector<2x8x8xf32>
    %72 = arith.subf %68, %71 : vector<2x8x8xf32>
    %73 = math.exp %72 : vector<2x8x8xf32>
    %cst_40 = arith.constant dense<0.000000e+00> : vector<2x8xf32>
    %74 = vector.multi_reduction <add>, %73, %cst_40 [2] : vector<2x8x8xf32> to vector<2x8xf32>
    %75 = vector.shape_cast %74 : vector<2x8xf32> to vector<2x8x1xf32>
    %76 = tpu.reciprocal %75 {approx = true} : vector<2x8x1xf32> -> vector<2x8x1xf32>
    %77 = vector.broadcast %76 : vector<2x8x1xf32> to vector<2x8x8xf32>
    %78 = arith.mulf %73, %77 : vector<2x8x8xf32>
    "tpu.trace_start"() <{level = 10 : i32, message = "bqk,bkd->bqd"}> : () -> ()
    %cst_41 = arith.constant dense<0.000000e+00> : vector<2x8x8xf32>
    %79 = tpu.matmul %78, %60, %cst_41 {dimension_numbers = #tpu.dot_dimension_numbers<[2], [1], [1], [2], [0, 0, 0, 1, 1, 2], [0], [0]>} : vector<2x8x8xf32>, vector<2x8x8xf32>, vector<2x8x8xf32> -> vector<2x8x8xf32>
    "tpu.trace_stop"() : () -> ()
    %80 = vector.shape_cast %79 : vector<2x8x8xf32> to vector<16x8xf32>
    %c0_42 = arith.constant 0 : index
    %c0_43 = arith.constant 0 : index
    %c0_44 = arith.constant 0 : index
    %81 = vector.load %arg14[%c0_42, %c0_43, %c0_44] : memref<4x8x32xf32, #tpu.memory_space<vmem>>, vector<1x8x32xf32>
    %82 = vector.shape_cast %81 : vector<1x8x32xf32> to vector<8x32xf32>
    %cst_45 = arith.constant dense<0.000000e+00> : vector<16x32xf32>
    %83 = tpu.matmul %80, %82, %cst_45 {dimension_numbers = #tpu.dot_dimension_numbers<[1], [0], [0], [1], [0, 0, 1, 1], [], []>} : vector<16x8xf32>, vector<8x32xf32>, vector<16x32xf32> -> vector<16x32xf32>
    %84 = arith.addf %36, %83 : vector<16x32xf32>
    %c1 = arith.constant 1 : index
    %c0_46 = arith.constant 0 : index
    %c0_47 = arith.constant 0 : index
    %85 = vector.load %arg8[%c1, %c0_46, %c0_47] : memref<4x32x8xf32, #tpu.memory_space<vmem>>, vector<1x32x8xf32>
    %86 = vector.shape_cast %85 : vector<1x32x8xf32> to vector<32x8xf32>
    %cst_48 = arith.constant dense<0.000000e+00> : vector<16x8xf32>
    %87 = tpu.matmul %35, %86, %cst_48 {dimension_numbers = #tpu.dot_dimension_numbers<[1], [0], [0], [1], [0, 0, 1, 1], [], []>} : vector<16x32xf32>, vector<32x8xf32>, vector<16x8xf32> -> vector<16x8xf32>
    %c1_49 = arith.constant 1 : index
    %c0_50 = arith.constant 0 : index
    %c0_51 = arith.constant 0 : index
    %88 = vector.load %arg9[%c1_49, %c0_50, %c0_51] : memref<4x1x8xf32, #tpu.memory_space<vmem>>, vector<1x1x8xf32>
    %89 = vector.shape_cast %88 : vector<1x1x8xf32> to vector<1x8xf32>
    %90 = vector.broadcast %89 : vector<1x8xf32> to vector<16x8xf32>
    %91 = arith.addf %87, %90 : vector<16x8xf32>
    %92 = vector.shape_cast %91 : vector<16x8xf32> to vector<2x8x8xf32>
    %c1_52 = arith.constant 1 : index
    %c0_53 = arith.constant 0 : index
    %c0_54 = arith.constant 0 : index
    %93 = vector.load %arg10[%c1_52, %c0_53, %c0_54] : memref<4x32x8xf32, #tpu.memory_space<vmem>>, vector<1x32x8xf32>
    %94 = vector.shape_cast %93 : vector<1x32x8xf32> to vector<32x8xf32>
    %cst_55 = arith.constant dense<0.000000e+00> : vector<16x8xf32>
    %95 = tpu.matmul %35, %94, %cst_55 {dimension_numbers = #tpu.dot_dimension_numbers<[1], [0], [0], [1], [0, 0, 1, 1], [], []>} : vector<16x32xf32>, vector<32x8xf32>, vector<16x8xf32> -> vector<16x8xf32>
    %c1_56 = arith.constant 1 : index
    %c0_57 = arith.constant 0 : index
    %c0_58 = arith.constant 0 : index
    %96 = vector.load %arg11[%c1_56, %c0_57, %c0_58] : memref<4x1x8xf32, #tpu.memory_space<vmem>>, vector<1x1x8xf32>
    %97 = vector.shape_cast %96 : vector<1x1x8xf32> to vector<1x8xf32>
    %98 = vector.broadcast %97 : vector<1x8xf32> to vector<16x8xf32>
    %99 = arith.addf %95, %98 : vector<16x8xf32>
    %100 = vector.shape_cast %99 : vector<16x8xf32> to vector<2x8x8xf32>
    %c1_59 = arith.constant 1 : index
    %c0_60 = arith.constant 0 : index
    %c0_61 = arith.constant 0 : index
    %101 = vector.load %arg12[%c1_59, %c0_60, %c0_61] : memref<4x32x8xf32, #tpu.memory_space<vmem>>, vector<1x32x8xf32>
    %102 = vector.shape_cast %101 : vector<1x32x8xf32> to vector<32x8xf32>
    %cst_62 = arith.constant dense<0.000000e+00> : vector<16x8xf32>
    %103 = tpu.matmul %35, %102, %cst_62 {dimension_numbers = #tpu.dot_dimension_numbers<[1], [0], [0], [1], [0, 0, 1, 1], [], []>} : vector<16x32xf32>, vector<32x8xf32>, vector<16x8xf32> -> vector<16x8xf32>
    %c1_63 = arith.constant 1 : index
    %c0_64 = arith.constant 0 : index
    %c0_65 = arith.constant 0 : index
    %104 = vector.load %arg13[%c1_63, %c0_64, %c0_65] : memref<4x1x8xf32, #tpu.memory_space<vmem>>, vector<1x1x8xf32>
    %105 = vector.shape_cast %104 : vector<1x1x8xf32> to vector<1x8xf32>
    %106 = vector.broadcast %105 : vector<1x8xf32> to vector<16x8xf32>
    %107 = arith.addf %103, %106 : vector<16x8xf32>
    %108 = vector.shape_cast %107 : vector<16x8xf32> to vector<2x8x8xf32>
    "tpu.trace_start"() <{level = 10 : i32, message = "bqd,bkd->bqk"}> : () -> ()
    %cst_66 = arith.constant dense<0.000000e+00> : vector<2x8x8xf32>
    %109 = tpu.matmul %92, %100, %cst_66 {dimension_numbers = #tpu.dot_dimension_numbers<[2], [2], [1], [1], [0, 0, 0, 1, 1, 1], [0], [0]>} : vector<2x8x8xf32>, vector<2x8x8xf32>, vector<2x8x8xf32> -> vector<2x8x8xf32>
    "tpu.trace_stop"() : () -> ()
    %cst_67 = arith.constant 0.353553385 : f32
    %110 = vector.broadcast %cst_67 : f32 to vector<2x8x8xf32>
    %111 = arith.mulf %109, %110 : vector<2x8x8xf32>
    %112 = vector.shape_cast %11 : vector<8x8xi1> to vector<1x8x8xi1>
    %cst_68 = arith.constant -1.000000e+10 : f32
    %113 = vector.shape_cast %112 : vector<1x8x8xi1> to vector<1x8x8xi1>
    %114 = vector.broadcast %113 : vector<1x8x8xi1> to vector<2x8x8xi1>
    %115 = vector.broadcast %cst_68 : f32 to vector<2x8x8xf32>
    %116 = arith.select %114, %111, %115 : vector<2x8x8xi1>, vector<2x8x8xf32>
    %cst_69 = arith.constant dense<0xFF800000> : vector<2x8xf32>
    %117 = vector.multi_reduction <maximumf>, %116, %cst_69 [2] : vector<2x8x8xf32> to vector<2x8xf32>
    %118 = vector.shape_cast %117 : vector<2x8xf32> to vector<2x8x1xf32>
    %119 = vector.broadcast %118 : vector<2x8x1xf32> to vector<2x8x8xf32>
    %120 = arith.subf %116, %119 : vector<2x8x8xf32>
    %121 = math.exp %120 : vector<2x8x8xf32>
    %cst_70 = arith.constant dense<0.000000e+00> : vector<2x8xf32>
    %122 = vector.multi_reduction <add>, %121, %cst_70 [2] : vector<2x8x8xf32> to vector<2x8xf32>
    %123 = vector.shape_cast %122 : vector<2x8xf32> to vector<2x8x1xf32>
    %124 = tpu.reciprocal %123 {approx = true} : vector<2x8x1xf32> -> vector<2x8x1xf32>
    %125 = vector.broadcast %124 : vector<2x8x1xf32> to vector<2x8x8xf32>
    %126 = arith.mulf %121, %125 : vector<2x8x8xf32>
    "tpu.trace_start"() <{level = 10 : i32, message = "bqk,bkd->bqd"}> : () -> ()
    %cst_71 = arith.constant dense<0.000000e+00> : vector<2x8x8xf32>
    %127 = tpu.matmul %126, %108, %cst_71 {dimension_numbers = #tpu.dot_dimension_numbers<[2], [1], [1], [2], [0, 0, 0, 1, 1, 2], [0], [0]>} : vector<2x8x8xf32>, vector<2x8x8xf32>, vector<2x8x8xf32> -> vector<2x8x8xf32>
    "tpu.trace_stop"() : () -> ()
    %128 = vector.shape_cast %127 : vector<2x8x8xf32> to vector<16x8xf32>
    %c1_72 = arith.constant 1 : index
    %c0_73 = arith.constant 0 : index
    %c0_74 = arith.constant 0 : index
    %129 = vector.load %arg14[%c1_72, %c0_73, %c0_74] : memref<4x8x32xf32, #tpu.memory_space<vmem>>, vector<1x8x32xf32>
    %130 = vector.shape_cast %129 : vector<1x8x32xf32> to vector<8x32xf32>
    %cst_75 = arith.constant dense<0.000000e+00> : vector<16x32xf32>
    %131 = tpu.matmul %128, %130, %cst_75 {dimension_numbers = #tpu.dot_dimension_numbers<[1], [0], [0], [1], [0, 0, 1, 1], [], []>} : vector<16x8xf32>, vector<8x32xf32>, vector<16x32xf32> -> vector<16x32xf32>
    %132 = arith.addf %84, %131 : vector<16x32xf32>
    %c2 = arith.constant 2 : index
    %c0_76 = arith.constant 0 : index
    %c0_77 = arith.constant 0 : index
    %133 = vector.load %arg8[%c2, %c0_76, %c0_77] : memref<4x32x8xf32, #tpu.memory_space<vmem>>, vector<1x32x8xf32>
    %134 = vector.shape_cast %133 : vector<1x32x8xf32> to vector<32x8xf32>
    %cst_78 = arith.constant dense<0.000000e+00> : vector<16x8xf32>
    %135 = tpu.matmul %35, %134, %cst_78 {dimension_numbers = #tpu.dot_dimension_numbers<[1], [0], [0], [1], [0, 0, 1, 1], [], []>} : vector<16x32xf32>, vector<32x8xf32>, vector<16x8xf32> -> vector<16x8xf32>
    %c2_79 = arith.constant 2 : index
    %c0_80 = arith.constant 0 : index
    %c0_81 = arith.constant 0 : index
    %136 = vector.load %arg9[%c2_79, %c0_80, %c0_81] : memref<4x1x8xf32, #tpu.memory_space<vmem>>, vector<1x1x8xf32>
    %137 = vector.shape_cast %136 : vector<1x1x8xf32> to vector<1x8xf32>
    %138 = vector.broadcast %137 : vector<1x8xf32> to vector<16x8xf32>
    %139 = arith.addf %135, %138 : vector<16x8xf32>
    %140 = vector.shape_cast %139 : vector<16x8xf32> to vector<2x8x8xf32>
    %c2_82 = arith.constant 2 : index
    %c0_83 = arith.constant 0 : index
    %c0_84 = arith.constant 0 : index
    %141 = vector.load %arg10[%c2_82, %c0_83, %c0_84] : memref<4x32x8xf32, #tpu.memory_space<vmem>>, vector<1x32x8xf32>
    %142 = vector.shape_cast %141 : vector<1x32x8xf32> to vector<32x8xf32>
    %cst_85 = arith.constant dense<0.000000e+00> : vector<16x8xf32>
    %143 = tpu.matmul %35, %142, %cst_85 {dimension_numbers = #tpu.dot_dimension_numbers<[1], [0], [0], [1], [0, 0, 1, 1], [], []>} : vector<16x32xf32>, vector<32x8xf32>, vector<16x8xf32> -> vector<16x8xf32>
    %c2_86 = arith.constant 2 : index
    %c0_87 = arith.constant 0 : index
    %c0_88 = arith.constant 0 : index
    %144 = vector.load %arg11[%c2_86, %c0_87, %c0_88] : memref<4x1x8xf32, #tpu.memory_space<vmem>>, vector<1x1x8xf32>
    %145 = vector.shape_cast %144 : vector<1x1x8xf32> to vector<1x8xf32>
    %146 = vector.broadcast %145 : vector<1x8xf32> to vector<16x8xf32>
    %147 = arith.addf %143, %146 : vector<16x8xf32>
    %148 = vector.shape_cast %147 : vector<16x8xf32> to vector<2x8x8xf32>
    %c2_89 = arith.constant 2 : index
    %c0_90 = arith.constant 0 : index
    %c0_91 = arith.constant 0 : index
    %149 = vector.load %arg12[%c2_89, %c0_90, %c0_91] : memref<4x32x8xf32, #tpu.memory_space<vmem>>, vector<1x32x8xf32>
    %150 = vector.shape_cast %149 : vector<1x32x8xf32> to vector<32x8xf32>
    %cst_92 = arith.constant dense<0.000000e+00> : vector<16x8xf32>
    %151 = tpu.matmul %35, %150, %cst_92 {dimension_numbers = #tpu.dot_dimension_numbers<[1], [0], [0], [1], [0, 0, 1, 1], [], []>} : vector<16x32xf32>, vector<32x8xf32>, vector<16x8xf32> -> vector<16x8xf32>
    %c2_93 = arith.constant 2 : index
    %c0_94 = arith.constant 0 : index
    %c0_95 = arith.constant 0 : index
    %152 = vector.load %arg13[%c2_93, %c0_94, %c0_95] : memref<4x1x8xf32, #tpu.memory_space<vmem>>, vector<1x1x8xf32>
    %153 = vector.shape_cast %152 : vector<1x1x8xf32> to vector<1x8xf32>
    %154 = vector.broadcast %153 : vector<1x8xf32> to vector<16x8xf32>
    %155 = arith.addf %151, %154 : vector<16x8xf32>
    %156 = vector.shape_cast %155 : vector<16x8xf32> to vector<2x8x8xf32>
    "tpu.trace_start"() <{level = 10 : i32, message = "bqd,bkd->bqk"}> : () -> ()
    %cst_96 = arith.constant dense<0.000000e+00> : vector<2x8x8xf32>
    %157 = tpu.matmul %140, %148, %cst_96 {dimension_numbers = #tpu.dot_dimension_numbers<[2], [2], [1], [1], [0, 0, 0, 1, 1, 1], [0], [0]>} : vector<2x8x8xf32>, vector<2x8x8xf32>, vector<2x8x8xf32> -> vector<2x8x8xf32>
    "tpu.trace_stop"() : () -> ()
    %cst_97 = arith.constant 0.353553385 : f32
    %158 = vector.broadcast %cst_97 : f32 to vector<2x8x8xf32>
    %159 = arith.mulf %157, %158 : vector<2x8x8xf32>
    %160 = vector.shape_cast %11 : vector<8x8xi1> to vector<1x8x8xi1>
    %cst_98 = arith.constant -1.000000e+10 : f32
    %161 = vector.shape_cast %160 : vector<1x8x8xi1> to vector<1x8x8xi1>
    %162 = vector.broadcast %161 : vector<1x8x8xi1> to vector<2x8x8xi1>
    %163 = vector.broadcast %cst_98 : f32 to vector<2x8x8xf32>
    %164 = arith.select %162, %159, %163 : vector<2x8x8xi1>, vector<2x8x8xf32>
    %cst_99 = arith.constant dense<0xFF800000> : vector<2x8xf32>
    %165 = vector.multi_reduction <maximumf>, %164, %cst_99 [2] : vector<2x8x8xf32> to vector<2x8xf32>
    %166 = vector.shape_cast %165 : vector<2x8xf32> to vector<2x8x1xf32>
    %167 = vector.broadcast %166 : vector<2x8x1xf32> to vector<2x8x8xf32>
    %168 = arith.subf %164, %167 : vector<2x8x8xf32>
    %169 = math.exp %168 : vector<2x8x8xf32>
    %cst_100 = arith.constant dense<0.000000e+00> : vector<2x8xf32>
    %170 = vector.multi_reduction <add>, %169, %cst_100 [2] : vector<2x8x8xf32> to vector<2x8xf32>
    %171 = vector.shape_cast %170 : vector<2x8xf32> to vector<2x8x1xf32>
    %172 = tpu.reciprocal %171 {approx = true} : vector<2x8x1xf32> -> vector<2x8x1xf32>
    %173 = vector.broadcast %172 : vector<2x8x1xf32> to vector<2x8x8xf32>
    %174 = arith.mulf %169, %173 : vector<2x8x8xf32>
    "tpu.trace_start"() <{level = 10 : i32, message = "bqk,bkd->bqd"}> : () -> ()
    %cst_101 = arith.constant dense<0.000000e+00> : vector<2x8x8xf32>
    %175 = tpu.matmul %174, %156, %cst_101 {dimension_numbers = #tpu.dot_dimension_numbers<[2], [1], [1], [2], [0, 0, 0, 1, 1, 2], [0], [0]>} : vector<2x8x8xf32>, vector<2x8x8xf32>, vector<2x8x8xf32> -> vector<2x8x8xf32>
    "tpu.trace_stop"() : () -> ()
    %176 = vector.shape_cast %175 : vector<2x8x8xf32> to vector<16x8xf32>
    %c2_102 = arith.constant 2 : index
    %c0_103 = arith.constant 0 : index
    %c0_104 = arith.constant 0 : index
    %177 = vector.load %arg14[%c2_102, %c0_103, %c0_104] : memref<4x8x32xf32, #tpu.memory_space<vmem>>, vector<1x8x32xf32>
    %178 = vector.shape_cast %177 : vector<1x8x32xf32> to vector<8x32xf32>
    %cst_105 = arith.constant dense<0.000000e+00> : vector<16x32xf32>
    %179 = tpu.matmul %176, %178, %cst_105 {dimension_numbers = #tpu.dot_dimension_numbers<[1], [0], [0], [1], [0, 0, 1, 1], [], []>} : vector<16x8xf32>, vector<8x32xf32>, vector<16x32xf32> -> vector<16x32xf32>
    %180 = arith.addf %132, %179 : vector<16x32xf32>
    %c3 = arith.constant 3 : index
    %c0_106 = arith.constant 0 : index
    %c0_107 = arith.constant 0 : index
    %181 = vector.load %arg8[%c3, %c0_106, %c0_107] : memref<4x32x8xf32, #tpu.memory_space<vmem>>, vector<1x32x8xf32>
    %182 = vector.shape_cast %181 : vector<1x32x8xf32> to vector<32x8xf32>
    %cst_108 = arith.constant dense<0.000000e+00> : vector<16x8xf32>
    %183 = tpu.matmul %35, %182, %cst_108 {dimension_numbers = #tpu.dot_dimension_numbers<[1], [0], [0], [1], [0, 0, 1, 1], [], []>} : vector<16x32xf32>, vector<32x8xf32>, vector<16x8xf32> -> vector<16x8xf32>
    %c3_109 = arith.constant 3 : index
    %c0_110 = arith.constant 0 : index
    %c0_111 = arith.constant 0 : index
    %184 = vector.load %arg9[%c3_109, %c0_110, %c0_111] : memref<4x1x8xf32, #tpu.memory_space<vmem>>, vector<1x1x8xf32>
    %185 = vector.shape_cast %184 : vector<1x1x8xf32> to vector<1x8xf32>
    %186 = vector.broadcast %185 : vector<1x8xf32> to vector<16x8xf32>
    %187 = arith.addf %183, %186 : vector<16x8xf32>
    %188 = vector.shape_cast %187 : vector<16x8xf32> to vector<2x8x8xf32>
    %c3_112 = arith.constant 3 : index
    %c0_113 = arith.constant 0 : index
    %c0_114 = arith.constant 0 : index
    %189 = vector.load %arg10[%c3_112, %c0_113, %c0_114] : memref<4x32x8xf32, #tpu.memory_space<vmem>>, vector<1x32x8xf32>
    %190 = vector.shape_cast %189 : vector<1x32x8xf32> to vector<32x8xf32>
    %cst_115 = arith.constant dense<0.000000e+00> : vector<16x8xf32>
    %191 = tpu.matmul %35, %190, %cst_115 {dimension_numbers = #tpu.dot_dimension_numbers<[1], [0], [0], [1], [0, 0, 1, 1], [], []>} : vector<16x32xf32>, vector<32x8xf32>, vector<16x8xf32> -> vector<16x8xf32>
    %c3_116 = arith.constant 3 : index
    %c0_117 = arith.constant 0 : index
    %c0_118 = arith.constant 0 : index
    %192 = vector.load %arg11[%c3_116, %c0_117, %c0_118] : memref<4x1x8xf32, #tpu.memory_space<vmem>>, vector<1x1x8xf32>
    %193 = vector.shape_cast %192 : vector<1x1x8xf32> to vector<1x8xf32>
    %194 = vector.broadcast %193 : vector<1x8xf32> to vector<16x8xf32>
    %195 = arith.addf %191, %194 : vector<16x8xf32>
    %196 = vector.shape_cast %195 : vector<16x8xf32> to vector<2x8x8xf32>
    %c3_119 = arith.constant 3 : index
    %c0_120 = arith.constant 0 : index
    %c0_121 = arith.constant 0 : index
    %197 = vector.load %arg12[%c3_119, %c0_120, %c0_121] : memref<4x32x8xf32, #tpu.memory_space<vmem>>, vector<1x32x8xf32>
    %198 = vector.shape_cast %197 : vector<1x32x8xf32> to vector<32x8xf32>
    %cst_122 = arith.constant dense<0.000000e+00> : vector<16x8xf32>
    %199 = tpu.matmul %35, %198, %cst_122 {dimension_numbers = #tpu.dot_dimension_numbers<[1], [0], [0], [1], [0, 0, 1, 1], [], []>} : vector<16x32xf32>, vector<32x8xf32>, vector<16x8xf32> -> vector<16x8xf32>
    %c3_123 = arith.constant 3 : index
    %c0_124 = arith.constant 0 : index
    %c0_125 = arith.constant 0 : index
    %200 = vector.load %arg13[%c3_123, %c0_124, %c0_125] : memref<4x1x8xf32, #tpu.memory_space<vmem>>, vector<1x1x8xf32>
    %201 = vector.shape_cast %200 : vector<1x1x8xf32> to vector<1x8xf32>
    %202 = vector.broadcast %201 : vector<1x8xf32> to vector<16x8xf32>
    %203 = arith.addf %199, %202 : vector<16x8xf32>
    %204 = vector.shape_cast %203 : vector<16x8xf32> to vector<2x8x8xf32>
    "tpu.trace_start"() <{level = 10 : i32, message = "bqd,bkd->bqk"}> : () -> ()
    %cst_126 = arith.constant dense<0.000000e+00> : vector<2x8x8xf32>
    %205 = tpu.matmul %188, %196, %cst_126 {dimension_numbers = #tpu.dot_dimension_numbers<[2], [2], [1], [1], [0, 0, 0, 1, 1, 1], [0], [0]>} : vector<2x8x8xf32>, vector<2x8x8xf32>, vector<2x8x8xf32> -> vector<2x8x8xf32>
    "tpu.trace_stop"() : () -> ()
    %cst_127 = arith.constant 0.353553385 : f32
    %206 = vector.broadcast %cst_127 : f32 to vector<2x8x8xf32>
    %207 = arith.mulf %205, %206 : vector<2x8x8xf32>
    %208 = vector.shape_cast %11 : vector<8x8xi1> to vector<1x8x8xi1>
    %cst_128 = arith.constant -1.000000e+10 : f32
    %209 = vector.shape_cast %208 : vector<1x8x8xi1> to vector<1x8x8xi1>
    %210 = vector.broadcast %209 : vector<1x8x8xi1> to vector<2x8x8xi1>
    %211 = vector.broadcast %cst_128 : f32 to vector<2x8x8xf32>
    %212 = arith.select %210, %207, %211 : vector<2x8x8xi1>, vector<2x8x8xf32>
    %cst_129 = arith.constant dense<0xFF800000> : vector<2x8xf32>
    %213 = vector.multi_reduction <maximumf>, %212, %cst_129 [2] : vector<2x8x8xf32> to vector<2x8xf32>
    %214 = vector.shape_cast %213 : vector<2x8xf32> to vector<2x8x1xf32>
    %215 = vector.broadcast %214 : vector<2x8x1xf32> to vector<2x8x8xf32>
    %216 = arith.subf %212, %215 : vector<2x8x8xf32>
    %217 = math.exp %216 : vector<2x8x8xf32>
    %cst_130 = arith.constant dense<0.000000e+00> : vector<2x8xf32>
    %218 = vector.multi_reduction <add>, %217, %cst_130 [2] : vector<2x8x8xf32> to vector<2x8xf32>
    %219 = vector.shape_cast %218 : vector<2x8xf32> to vector<2x8x1xf32>
    %220 = tpu.reciprocal %219 {approx = true} : vector<2x8x1xf32> -> vector<2x8x1xf32>
    %221 = vector.broadcast %220 : vector<2x8x1xf32> to vector<2x8x8xf32>
    %222 = arith.mulf %217, %221 : vector<2x8x8xf32>
    "tpu.trace_start"() <{level = 10 : i32, message = "bqk,bkd->bqd"}> : () -> ()
    %cst_131 = arith.constant dense<0.000000e+00> : vector<2x8x8xf32>
    %223 = tpu.matmul %222, %204, %cst_131 {dimension_numbers = #tpu.dot_dimension_numbers<[2], [1], [1], [2], [0, 0, 0, 1, 1, 2], [0], [0]>} : vector<2x8x8xf32>, vector<2x8x8xf32>, vector<2x8x8xf32> -> vector<2x8x8xf32>
    "tpu.trace_stop"() : () -> ()
    %224 = vector.shape_cast %223 : vector<2x8x8xf32> to vector<16x8xf32>
    %c3_132 = arith.constant 3 : index
    %c0_133 = arith.constant 0 : index
    %c0_134 = arith.constant 0 : index
    %225 = vector.load %arg14[%c3_132, %c0_133, %c0_134] : memref<4x8x32xf32, #tpu.memory_space<vmem>>, vector<1x8x32xf32>
    %226 = vector.shape_cast %225 : vector<1x8x32xf32> to vector<8x32xf32>
    %cst_135 = arith.constant dense<0.000000e+00> : vector<16x32xf32>
    %227 = tpu.matmul %224, %226, %cst_135 {dimension_numbers = #tpu.dot_dimension_numbers<[1], [0], [0], [1], [0, 0, 1, 1], [], []>} : vector<16x8xf32>, vector<8x32xf32>, vector<16x32xf32> -> vector<16x32xf32>
    %228 = arith.addf %180, %227 : vector<16x32xf32>
    %229 = arith.addf %8, %228 : vector<16x32xf32>
    %c0_136 = arith.constant 0 : index
    %c0_137 = arith.constant 0 : index
    %230 = vector.load %arg15[%c0_136, %c0_137] : memref<1x32xf32, #tpu.memory_space<vmem>>, vector<1x32xf32>
    %231 = vector.broadcast %230 : vector<1x32xf32> to vector<16x32xf32>
    %232 = arith.addf %229, %231 : vector<16x32xf32>
    %c0_138 = arith.constant 0 : index
    %c0_139 = arith.constant 0 : index
    %233 = vector.load %arg16[%c0_138, %c0_139] : memref<1x32xf32, #tpu.memory_space<vmem>>, vector<1x32xf32>
    %c0_140 = arith.constant 0 : index
    %c0_141 = arith.constant 0 : index
    %234 = vector.load %arg17[%c0_140, %c0_141] : memref<1x32xf32, #tpu.memory_space<vmem>>, vector<1x32xf32>
    %cst_142 = arith.constant dense<0.000000e+00> : vector<16xf32>
    %235 = vector.multi_reduction <add>, %232, %cst_142 [1] : vector<16x32xf32> to vector<16xf32>
    %236 = vector.shape_cast %235 : vector<16xf32> to vector<16x1xf32>
    %cst_143 = arith.constant 3.200000e+01 : f32
    %237 = vector.broadcast %cst_143 : f32 to vector<16x1xf32>
    %238 = arith.divf %236, %237 : vector<16x1xf32>
    %239 = vector.broadcast %238 : vector<16x1xf32> to vector<16x32xf32>
    %240 = arith.subf %232, %239 : vector<16x32xf32>
    %241 = arith.mulf %240, %240 : vector<16x32xf32>
    %cst_144 = arith.constant dense<0.000000e+00> : vector<16xf32>
    %242 = vector.multi_reduction <add>, %241, %cst_144 [1] : vector<16x32xf32> to vector<16xf32>
    %243 = vector.shape_cast %242 : vector<16xf32> to vector<16x1xf32>
    %cst_145 = arith.constant 3.200000e+01 : f32
    %244 = vector.broadcast %cst_145 : f32 to vector<16x1xf32>
    %245 = arith.divf %243, %244 : vector<16x1xf32>
    %246 = vector.broadcast %238 : vector<16x1xf32> to vector<16x32xf32>
    %247 = arith.subf %232, %246 : vector<16x32xf32>
    %cst_146 = arith.constant 9.99999974E-6 : f32
    %248 = vector.broadcast %cst_146 : f32 to vector<16x1xf32>
    %249 = arith.addf %245, %248 : vector<16x1xf32>
    %250 = math.sqrt %249 : vector<16x1xf32>
    %251 = vector.broadcast %250 : vector<16x1xf32> to vector<16x32xf32>
    %252 = arith.divf %247, %251 : vector<16x32xf32>
    %253 = vector.broadcast %233 : vector<1x32xf32> to vector<16x32xf32>
    %254 = arith.mulf %253, %252 : vector<16x32xf32>
    %255 = vector.broadcast %234 : vector<1x32xf32> to vector<16x32xf32>
    %256 = arith.addf %254, %255 : vector<16x32xf32>
    %c0_147 = arith.constant 0 : index
    %c0_148 = arith.constant 0 : index
    %257 = vector.load %arg18[%c0_147, %c0_148] : memref<32x128xf32, #tpu.memory_space<vmem>>, vector<32x128xf32>
    %cst_149 = arith.constant dense<0.000000e+00> : vector<16x128xf32>
    %258 = tpu.matmul %256, %257, %cst_149 {dimension_numbers = #tpu.dot_dimension_numbers<[1], [0], [0], [1], [0, 0, 1, 1], [], []>} : vector<16x32xf32>, vector<32x128xf32>, vector<16x128xf32> -> vector<16x128xf32>
    %c0_150 = arith.constant 0 : index
    %c0_151 = arith.constant 0 : index
    %259 = vector.load %arg19[%c0_150, %c0_151] : memref<1x128xf32, #tpu.memory_space<vmem>>, vector<1x128xf32>
    %260 = vector.broadcast %259 : vector<1x128xf32> to vector<16x128xf32>
    %261 = arith.addf %258, %260 : vector<16x128xf32>
    %cst_152 = arith.constant 5.000000e-01 : f32
    %262 = vector.broadcast %cst_152 : f32 to vector<16x128xf32>
    %263 = arith.mulf %262, %261 : vector<16x128xf32>
    %264 = arith.mulf %261, %261 : vector<16x128xf32>
    %265 = arith.mulf %261, %264 : vector<16x128xf32>
    %cst_153 = arith.constant 4.471500e-02 : f32
    %266 = vector.broadcast %cst_153 : f32 to vector<16x128xf32>
    %267 = arith.mulf %266, %265 : vector<16x128xf32>
    %268 = arith.addf %261, %267 : vector<16x128xf32>
    %cst_154 = arith.constant 0.797884583 : f32
    %269 = vector.broadcast %cst_154 : f32 to vector<16x128xf32>
    %270 = arith.mulf %269, %268 : vector<16x128xf32>
    %271 = math.tanh %270 : vector<16x128xf32>
    %cst_155 = arith.constant 1.000000e+00 : f32
    %272 = vector.broadcast %cst_155 : f32 to vector<16x128xf32>
    %273 = arith.addf %272, %271 : vector<16x128xf32>
    %274 = arith.mulf %263, %273 : vector<16x128xf32>
    %c0_156 = arith.constant 0 : index
    %c0_157 = arith.constant 0 : index
    %275 = vector.load %arg20[%c0_156, %c0_157] : memref<128x32xf32, #tpu.memory_space<vmem>>, vector<128x32xf32>
    %cst_158 = arith.constant dense<0.000000e+00> : vector<16x32xf32>
    %276 = tpu.matmul %274, %275, %cst_158 {dimension_numbers = #tpu.dot_dimension_numbers<[1], [0], [0], [1], [0, 0, 1, 1], [], []>} : vector<16x128xf32>, vector<128x32xf32>, vector<16x32xf32> -> vector<16x32xf32>
    %c0_159 = arith.constant 0 : index
    %c0_160 = arith.constant 0 : index
    %277 = vector.load %arg21[%c0_159, %c0_160] : memref<1x32xf32, #tpu.memory_space<vmem>>, vector<1x32xf32>
    %278 = vector.broadcast %277 : vector<1x32xf32> to vector<16x32xf32>
    %279 = arith.addf %276, %278 : vector<16x32xf32>
    %280 = arith.addf %232, %279 : vector<16x32xf32>
    %c0_161 = arith.constant 0 : index
    %c0_162 = arith.constant 0 : index
    %281 = vector.load %arg22[%c0_161, %c0_162] : memref<1x32xf32, #tpu.memory_space<vmem>>, vector<1x32xf32>
    %c0_163 = arith.constant 0 : index
    %c0_164 = arith.constant 0 : index
    %282 = vector.load %arg23[%c0_163, %c0_164] : memref<1x32xf32, #tpu.memory_space<vmem>>, vector<1x32xf32>
    %cst_165 = arith.constant dense<0.000000e+00> : vector<16xf32>
    %283 = vector.multi_reduction <add>, %280, %cst_165 [1] : vector<16x32xf32> to vector<16xf32>
    %284 = vector.shape_cast %283 : vector<16xf32> to vector<16x1xf32>
    %cst_166 = arith.constant 3.200000e+01 : f32
    %285 = vector.broadcast %cst_166 : f32 to vector<16x1xf32>
    %286 = arith.divf %284, %285 : vector<16x1xf32>
    %287 = vector.broadcast %286 : vector<16x1xf32> to vector<16x32xf32>
    %288 = arith.subf %280, %287 : vector<16x32xf32>
    %289 = arith.mulf %288, %288 : vector<16x32xf32>
    %cst_167 = arith.constant dense<0.000000e+00> : vector<16xf32>
    %290 = vector.multi_reduction <add>, %289, %cst_167 [1] : vector<16x32xf32> to vector<16xf32>
    %291 = vector.shape_cast %290 : vector<16xf32> to vector<16x1xf32>
    %cst_168 = arith.constant 3.200000e+01 : f32
    %292 = vector.broadcast %cst_168 : f32 to vector<16x1xf32>
    %293 = arith.divf %291, %292 : vector<16x1xf32>
    %294 = vector.broadcast %286 : vector<16x1xf32> to vector<16x32xf32>
    %295 = arith.subf %280, %294 : vector<16x32xf32>
    %cst_169 = arith.constant 9.99999974E-6 : f32
    %296 = vector.broadcast %cst_169 : f32 to vector<16x1xf32>
    %297 = arith.addf %293, %296 : vector<16x1xf32>
    %298 = math.sqrt %297 : vector<16x1xf32>
    %299 = vector.broadcast %298 : vector<16x1xf32> to vector<16x32xf32>
    %300 = arith.divf %295, %299 : vector<16x32xf32>
    %301 = vector.broadcast %281 : vector<1x32xf32> to vector<16x32xf32>
    %302 = arith.mulf %301, %300 : vector<16x32xf32>
    %303 = vector.broadcast %282 : vector<1x32xf32> to vector<16x32xf32>
    %304 = arith.addf %302, %303 : vector<16x32xf32>
    %cst_170 = arith.constant 0.000000e+00 : f32
    %305 = vector.broadcast %cst_170 : f32 to vector<16x32xf32>
    %c0_171 = arith.constant 0 : index
    %c0_172 = arith.constant 0 : index
    %c0_173 = arith.constant 0 : index
    %306 = vector.load %arg24[%c0_171, %c0_172, %c0_173] : memref<4x32x8xf32, #tpu.memory_space<vmem>>, vector<1x32x8xf32>
    %307 = vector.shape_cast %306 : vector<1x32x8xf32> to vector<32x8xf32>
    %cst_174 = arith.constant dense<0.000000e+00> : vector<16x8xf32>
    %308 = tpu.matmul %304, %307, %cst_174 {dimension_numbers = #tpu.dot_dimension_numbers<[1], [0], [0], [1], [0, 0, 1, 1], [], []>} : vector<16x32xf32>, vector<32x8xf32>, vector<16x8xf32> -> vector<16x8xf32>
    %c0_175 = arith.constant 0 : index
    %c0_176 = arith.constant 0 : index
    %c0_177 = arith.constant 0 : index
    %309 = vector.load %arg25[%c0_175, %c0_176, %c0_177] : memref<4x1x8xf32, #tpu.memory_space<vmem>>, vector<1x1x8xf32>
    %310 = vector.shape_cast %309 : vector<1x1x8xf32> to vector<1x8xf32>
    %311 = vector.broadcast %310 : vector<1x8xf32> to vector<16x8xf32>
    %312 = arith.addf %308, %311 : vector<16x8xf32>
    %313 = vector.shape_cast %312 : vector<16x8xf32> to vector<2x8x8xf32>
    %c0_178 = arith.constant 0 : index
    %c0_179 = arith.constant 0 : index
    %c0_180 = arith.constant 0 : index
    %314 = vector.load %arg26[%c0_178, %c0_179, %c0_180] : memref<4x32x8xf32, #tpu.memory_space<vmem>>, vector<1x32x8xf32>
    %315 = vector.shape_cast %314 : vector<1x32x8xf32> to vector<32x8xf32>
    %cst_181 = arith.constant dense<0.000000e+00> : vector<16x8xf32>
    %316 = tpu.matmul %304, %315, %cst_181 {dimension_numbers = #tpu.dot_dimension_numbers<[1], [0], [0], [1], [0, 0, 1, 1], [], []>} : vector<16x32xf32>, vector<32x8xf32>, vector<16x8xf32> -> vector<16x8xf32>
    %c0_182 = arith.constant 0 : index
    %c0_183 = arith.constant 0 : index
    %c0_184 = arith.constant 0 : index
    %317 = vector.load %arg27[%c0_182, %c0_183, %c0_184] : memref<4x1x8xf32, #tpu.memory_space<vmem>>, vector<1x1x8xf32>
    %318 = vector.shape_cast %317 : vector<1x1x8xf32> to vector<1x8xf32>
    %319 = vector.broadcast %318 : vector<1x8xf32> to vector<16x8xf32>
    %320 = arith.addf %316, %319 : vector<16x8xf32>
    %321 = vector.shape_cast %320 : vector<16x8xf32> to vector<2x8x8xf32>
    %c0_185 = arith.constant 0 : index
    %c0_186 = arith.constant 0 : index
    %c0_187 = arith.constant 0 : index
    %322 = vector.load %arg28[%c0_185, %c0_186, %c0_187] : memref<4x32x8xf32, #tpu.memory_space<vmem>>, vector<1x32x8xf32>
    %323 = vector.shape_cast %322 : vector<1x32x8xf32> to vector<32x8xf32>
    %cst_188 = arith.constant dense<0.000000e+00> : vector<16x8xf32>
    %324 = tpu.matmul %304, %323, %cst_188 {dimension_numbers = #tpu.dot_dimension_numbers<[1], [0], [0], [1], [0, 0, 1, 1], [], []>} : vector<16x32xf32>, vector<32x8xf32>, vector<16x8xf32> -> vector<16x8xf32>
    %c0_189 = arith.constant 0 : index
    %c0_190 = arith.constant 0 : index
    %c0_191 = arith.constant 0 : index
    %325 = vector.load %arg29[%c0_189, %c0_190, %c0_191] : memref<4x1x8xf32, #tpu.memory_space<vmem>>, vector<1x1x8xf32>
    %326 = vector.shape_cast %325 : vector<1x1x8xf32> to vector<1x8xf32>
    %327 = vector.broadcast %326 : vector<1x8xf32> to vector<16x8xf32>
    %328 = arith.addf %324, %327 : vector<16x8xf32>
    %329 = vector.shape_cast %328 : vector<16x8xf32> to vector<2x8x8xf32>
    "tpu.trace_start"() <{level = 10 : i32, message = "bqd,bkd->bqk"}> : () -> ()
    %cst_192 = arith.constant dense<0.000000e+00> : vector<2x8x8xf32>
    %330 = tpu.matmul %313, %321, %cst_192 {dimension_numbers = #tpu.dot_dimension_numbers<[2], [2], [1], [1], [0, 0, 0, 1, 1, 1], [0], [0]>} : vector<2x8x8xf32>, vector<2x8x8xf32>, vector<2x8x8xf32> -> vector<2x8x8xf32>
    "tpu.trace_stop"() : () -> ()
    %cst_193 = arith.constant 0.353553385 : f32
    %331 = vector.broadcast %cst_193 : f32 to vector<2x8x8xf32>
    %332 = arith.mulf %330, %331 : vector<2x8x8xf32>
    %333 = vector.shape_cast %11 : vector<8x8xi1> to vector<1x8x8xi1>
    %cst_194 = arith.constant -1.000000e+10 : f32
    %334 = vector.shape_cast %333 : vector<1x8x8xi1> to vector<1x8x8xi1>
    %335 = vector.broadcast %334 : vector<1x8x8xi1> to vector<2x8x8xi1>
    %336 = vector.broadcast %cst_194 : f32 to vector<2x8x8xf32>
    %337 = arith.select %335, %332, %336 : vector<2x8x8xi1>, vector<2x8x8xf32>
    %cst_195 = arith.constant dense<0xFF800000> : vector<2x8xf32>
    %338 = vector.multi_reduction <maximumf>, %337, %cst_195 [2] : vector<2x8x8xf32> to vector<2x8xf32>
    %339 = vector.shape_cast %338 : vector<2x8xf32> to vector<2x8x1xf32>
    %340 = vector.broadcast %339 : vector<2x8x1xf32> to vector<2x8x8xf32>
    %341 = arith.subf %337, %340 : vector<2x8x8xf32>
    %342 = math.exp %341 : vector<2x8x8xf32>
    %cst_196 = arith.constant dense<0.000000e+00> : vector<2x8xf32>
    %343 = vector.multi_reduction <add>, %342, %cst_196 [2] : vector<2x8x8xf32> to vector<2x8xf32>
    %344 = vector.shape_cast %343 : vector<2x8xf32> to vector<2x8x1xf32>
    %345 = tpu.reciprocal %344 {approx = true} : vector<2x8x1xf32> -> vector<2x8x1xf32>
    %346 = vector.broadcast %345 : vector<2x8x1xf32> to vector<2x8x8xf32>
    %347 = arith.mulf %342, %346 : vector<2x8x8xf32>
    "tpu.trace_start"() <{level = 10 : i32, message = "bqk,bkd->bqd"}> : () -> ()
    %cst_197 = arith.constant dense<0.000000e+00> : vector<2x8x8xf32>
    %348 = tpu.matmul %347, %329, %cst_197 {dimension_numbers = #tpu.dot_dimension_numbers<[2], [1], [1], [2], [0, 0, 0, 1, 1, 2], [0], [0]>} : vector<2x8x8xf32>, vector<2x8x8xf32>, vector<2x8x8xf32> -> vector<2x8x8xf32>
    "tpu.trace_stop"() : () -> ()
    %349 = vector.shape_cast %348 : vector<2x8x8xf32> to vector<16x8xf32>
    %c0_198 = arith.constant 0 : index
    %c0_199 = arith.constant 0 : index
    %c0_200 = arith.constant 0 : index
    %350 = vector.load %arg30[%c0_198, %c0_199, %c0_200] : memref<4x8x32xf32, #tpu.memory_space<vmem>>, vector<1x8x32xf32>
    %351 = vector.shape_cast %350 : vector<1x8x32xf32> to vector<8x32xf32>
    %cst_201 = arith.constant dense<0.000000e+00> : vector<16x32xf32>
    %352 = tpu.matmul %349, %351, %cst_201 {dimension_numbers = #tpu.dot_dimension_numbers<[1], [0], [0], [1], [0, 0, 1, 1], [], []>} : vector<16x8xf32>, vector<8x32xf32>, vector<16x32xf32> -> vector<16x32xf32>
    %353 = arith.addf %305, %352 : vector<16x32xf32>
    %c1_202 = arith.constant 1 : index
    %c0_203 = arith.constant 0 : index
    %c0_204 = arith.constant 0 : index
    %354 = vector.load %arg24[%c1_202, %c0_203, %c0_204] : memref<4x32x8xf32, #tpu.memory_space<vmem>>, vector<1x32x8xf32>
    %355 = vector.shape_cast %354 : vector<1x32x8xf32> to vector<32x8xf32>
    %cst_205 = arith.constant dense<0.000000e+00> : vector<16x8xf32>
    %356 = tpu.matmul %304, %355, %cst_205 {dimension_numbers = #tpu.dot_dimension_numbers<[1], [0], [0], [1], [0, 0, 1, 1], [], []>} : vector<16x32xf32>, vector<32x8xf32>, vector<16x8xf32> -> vector<16x8xf32>
    %c1_206 = arith.constant 1 : index
    %c0_207 = arith.constant 0 : index
    %c0_208 = arith.constant 0 : index
    %357 = vector.load %arg25[%c1_206, %c0_207, %c0_208] : memref<4x1x8xf32, #tpu.memory_space<vmem>>, vector<1x1x8xf32>
    %358 = vector.shape_cast %357 : vector<1x1x8xf32> to vector<1x8xf32>
    %359 = vector.broadcast %358 : vector<1x8xf32> to vector<16x8xf32>
    %360 = arith.addf %356, %359 : vector<16x8xf32>
    %361 = vector.shape_cast %360 : vector<16x8xf32> to vector<2x8x8xf32>
    %c1_209 = arith.constant 1 : index
    %c0_210 = arith.constant 0 : index
    %c0_211 = arith.constant 0 : index
    %362 = vector.load %arg26[%c1_209, %c0_210, %c0_211] : memref<4x32x8xf32, #tpu.memory_space<vmem>>, vector<1x32x8xf32>
    %363 = vector.shape_cast %362 : vector<1x32x8xf32> to vector<32x8xf32>
    %cst_212 = arith.constant dense<0.000000e+00> : vector<16x8xf32>
    %364 = tpu.matmul %304, %363, %cst_212 {dimension_numbers = #tpu.dot_dimension_numbers<[1], [0], [0], [1], [0, 0, 1, 1], [], []>} : vector<16x32xf32>, vector<32x8xf32>, vector<16x8xf32> -> vector<16x8xf32>
    %c1_213 = arith.constant 1 : index
    %c0_214 = arith.constant 0 : index
    %c0_215 = arith.constant 0 : index
    %365 = vector.load %arg27[%c1_213, %c0_214, %c0_215] : memref<4x1x8xf32, #tpu.memory_space<vmem>>, vector<1x1x8xf32>
    %366 = vector.shape_cast %365 : vector<1x1x8xf32> to vector<1x8xf32>
    %367 = vector.broadcast %366 : vector<1x8xf32> to vector<16x8xf32>
    %368 = arith.addf %364, %367 : vector<16x8xf32>
    %369 = vector.shape_cast %368 : vector<16x8xf32> to vector<2x8x8xf32>
    %c1_216 = arith.constant 1 : index
    %c0_217 = arith.constant 0 : index
    %c0_218 = arith.constant 0 : index
    %370 = vector.load %arg28[%c1_216, %c0_217, %c0_218] : memref<4x32x8xf32, #tpu.memory_space<vmem>>, vector<1x32x8xf32>
    %371 = vector.shape_cast %370 : vector<1x32x8xf32> to vector<32x8xf32>
    %cst_219 = arith.constant dense<0.000000e+00> : vector<16x8xf32>
    %372 = tpu.matmul %304, %371, %cst_219 {dimension_numbers = #tpu.dot_dimension_numbers<[1], [0], [0], [1], [0, 0, 1, 1], [], []>} : vector<16x32xf32>, vector<32x8xf32>, vector<16x8xf32> -> vector<16x8xf32>
    %c1_220 = arith.constant 1 : index
    %c0_221 = arith.constant 0 : index
    %c0_222 = arith.constant 0 : index
    %373 = vector.load %arg29[%c1_220, %c0_221, %c0_222] : memref<4x1x8xf32, #tpu.memory_space<vmem>>, vector<1x1x8xf32>
    %374 = vector.shape_cast %373 : vector<1x1x8xf32> to vector<1x8xf32>
    %375 = vector.broadcast %374 : vector<1x8xf32> to vector<16x8xf32>
    %376 = arith.addf %372, %375 : vector<16x8xf32>
    %377 = vector.shape_cast %376 : vector<16x8xf32> to vector<2x8x8xf32>
    "tpu.trace_start"() <{level = 10 : i32, message = "bqd,bkd->bqk"}> : () -> ()
    %cst_223 = arith.constant dense<0.000000e+00> : vector<2x8x8xf32>
    %378 = tpu.matmul %361, %369, %cst_223 {dimension_numbers = #tpu.dot_dimension_numbers<[2], [2], [1], [1], [0, 0, 0, 1, 1, 1], [0], [0]>} : vector<2x8x8xf32>, vector<2x8x8xf32>, vector<2x8x8xf32> -> vector<2x8x8xf32>
    "tpu.trace_stop"() : () -> ()
    %cst_224 = arith.constant 0.353553385 : f32
    %379 = vector.broadcast %cst_224 : f32 to vector<2x8x8xf32>
    %380 = arith.mulf %378, %379 : vector<2x8x8xf32>
    %381 = vector.shape_cast %11 : vector<8x8xi1> to vector<1x8x8xi1>
    %cst_225 = arith.constant -1.000000e+10 : f32
    %382 = vector.shape_cast %381 : vector<1x8x8xi1> to vector<1x8x8xi1>
    %383 = vector.broadcast %382 : vector<1x8x8xi1> to vector<2x8x8xi1>
    %384 = vector.broadcast %cst_225 : f32 to vector<2x8x8xf32>
    %385 = arith.select %383, %380, %384 : vector<2x8x8xi1>, vector<2x8x8xf32>
    %cst_226 = arith.constant dense<0xFF800000> : vector<2x8xf32>
    %386 = vector.multi_reduction <maximumf>, %385, %cst_226 [2] : vector<2x8x8xf32> to vector<2x8xf32>
    %387 = vector.shape_cast %386 : vector<2x8xf32> to vector<2x8x1xf32>
    %388 = vector.broadcast %387 : vector<2x8x1xf32> to vector<2x8x8xf32>
    %389 = arith.subf %385, %388 : vector<2x8x8xf32>
    %390 = math.exp %389 : vector<2x8x8xf32>
    %cst_227 = arith.constant dense<0.000000e+00> : vector<2x8xf32>
    %391 = vector.multi_reduction <add>, %390, %cst_227 [2] : vector<2x8x8xf32> to vector<2x8xf32>
    %392 = vector.shape_cast %391 : vector<2x8xf32> to vector<2x8x1xf32>
    %393 = tpu.reciprocal %392 {approx = true} : vector<2x8x1xf32> -> vector<2x8x1xf32>
    %394 = vector.broadcast %393 : vector<2x8x1xf32> to vector<2x8x8xf32>
    %395 = arith.mulf %390, %394 : vector<2x8x8xf32>
    "tpu.trace_start"() <{level = 10 : i32, message = "bqk,bkd->bqd"}> : () -> ()
    %cst_228 = arith.constant dense<0.000000e+00> : vector<2x8x8xf32>
    %396 = tpu.matmul %395, %377, %cst_228 {dimension_numbers = #tpu.dot_dimension_numbers<[2], [1], [1], [2], [0, 0, 0, 1, 1, 2], [0], [0]>} : vector<2x8x8xf32>, vector<2x8x8xf32>, vector<2x8x8xf32> -> vector<2x8x8xf32>
    "tpu.trace_stop"() : () -> ()
    %397 = vector.shape_cast %396 : vector<2x8x8xf32> to vector<16x8xf32>
    %c1_229 = arith.constant 1 : index
    %c0_230 = arith.constant 0 : index
    %c0_231 = arith.constant 0 : index
    %398 = vector.load %arg30[%c1_229, %c0_230, %c0_231] : memref<4x8x32xf32, #tpu.memory_space<vmem>>, vector<1x8x32xf32>
    %399 = vector.shape_cast %398 : vector<1x8x32xf32> to vector<8x32xf32>
    %cst_232 = arith.constant dense<0.000000e+00> : vector<16x32xf32>
    %400 = tpu.matmul %397, %399, %cst_232 {dimension_numbers = #tpu.dot_dimension_numbers<[1], [0], [0], [1], [0, 0, 1, 1], [], []>} : vector<16x8xf32>, vector<8x32xf32>, vector<16x32xf32> -> vector<16x32xf32>
    %401 = arith.addf %353, %400 : vector<16x32xf32>
    %c2_233 = arith.constant 2 : index
    %c0_234 = arith.constant 0 : index
    %c0_235 = arith.constant 0 : index
    %402 = vector.load %arg24[%c2_233, %c0_234, %c0_235] : memref<4x32x8xf32, #tpu.memory_space<vmem>>, vector<1x32x8xf32>
    %403 = vector.shape_cast %402 : vector<1x32x8xf32> to vector<32x8xf32>
    %cst_236 = arith.constant dense<0.000000e+00> : vector<16x8xf32>
    %404 = tpu.matmul %304, %403, %cst_236 {dimension_numbers = #tpu.dot_dimension_numbers<[1], [0], [0], [1], [0, 0, 1, 1], [], []>} : vector<16x32xf32>, vector<32x8xf32>, vector<16x8xf32> -> vector<16x8xf32>
    %c2_237 = arith.constant 2 : index
    %c0_238 = arith.constant 0 : index
    %c0_239 = arith.constant 0 : index
    %405 = vector.load %arg25[%c2_237, %c0_238, %c0_239] : memref<4x1x8xf32, #tpu.memory_space<vmem>>, vector<1x1x8xf32>
    %406 = vector.shape_cast %405 : vector<1x1x8xf32> to vector<1x8xf32>
    %407 = vector.broadcast %406 : vector<1x8xf32> to vector<16x8xf32>
    %408 = arith.addf %404, %407 : vector<16x8xf32>
    %409 = vector.shape_cast %408 : vector<16x8xf32> to vector<2x8x8xf32>
    %c2_240 = arith.constant 2 : index
    %c0_241 = arith.constant 0 : index
    %c0_242 = arith.constant 0 : index
    %410 = vector.load %arg26[%c2_240, %c0_241, %c0_242] : memref<4x32x8xf32, #tpu.memory_space<vmem>>, vector<1x32x8xf32>
    %411 = vector.shape_cast %410 : vector<1x32x8xf32> to vector<32x8xf32>
    %cst_243 = arith.constant dense<0.000000e+00> : vector<16x8xf32>
    %412 = tpu.matmul %304, %411, %cst_243 {dimension_numbers = #tpu.dot_dimension_numbers<[1], [0], [0], [1], [0, 0, 1, 1], [], []>} : vector<16x32xf32>, vector<32x8xf32>, vector<16x8xf32> -> vector<16x8xf32>
    %c2_244 = arith.constant 2 : index
    %c0_245 = arith.constant 0 : index
    %c0_246 = arith.constant 0 : index
    %413 = vector.load %arg27[%c2_244, %c0_245, %c0_246] : memref<4x1x8xf32, #tpu.memory_space<vmem>>, vector<1x1x8xf32>
    %414 = vector.shape_cast %413 : vector<1x1x8xf32> to vector<1x8xf32>
    %415 = vector.broadcast %414 : vector<1x8xf32> to vector<16x8xf32>
    %416 = arith.addf %412, %415 : vector<16x8xf32>
    %417 = vector.shape_cast %416 : vector<16x8xf32> to vector<2x8x8xf32>
    %c2_247 = arith.constant 2 : index
    %c0_248 = arith.constant 0 : index
    %c0_249 = arith.constant 0 : index
    %418 = vector.load %arg28[%c2_247, %c0_248, %c0_249] : memref<4x32x8xf32, #tpu.memory_space<vmem>>, vector<1x32x8xf32>
    %419 = vector.shape_cast %418 : vector<1x32x8xf32> to vector<32x8xf32>
    %cst_250 = arith.constant dense<0.000000e+00> : vector<16x8xf32>
    %420 = tpu.matmul %304, %419, %cst_250 {dimension_numbers = #tpu.dot_dimension_numbers<[1], [0], [0], [1], [0, 0, 1, 1], [], []>} : vector<16x32xf32>, vector<32x8xf32>, vector<16x8xf32> -> vector<16x8xf32>
    %c2_251 = arith.constant 2 : index
    %c0_252 = arith.constant 0 : index
    %c0_253 = arith.constant 0 : index
    %421 = vector.load %arg29[%c2_251, %c0_252, %c0_253] : memref<4x1x8xf32, #tpu.memory_space<vmem>>, vector<1x1x8xf32>
    %422 = vector.shape_cast %421 : vector<1x1x8xf32> to vector<1x8xf32>
    %423 = vector.broadcast %422 : vector<1x8xf32> to vector<16x8xf32>
    %424 = arith.addf %420, %423 : vector<16x8xf32>
    %425 = vector.shape_cast %424 : vector<16x8xf32> to vector<2x8x8xf32>
    "tpu.trace_start"() <{level = 10 : i32, message = "bqd,bkd->bqk"}> : () -> ()
    %cst_254 = arith.constant dense<0.000000e+00> : vector<2x8x8xf32>
    %426 = tpu.matmul %409, %417, %cst_254 {dimension_numbers = #tpu.dot_dimension_numbers<[2], [2], [1], [1], [0, 0, 0, 1, 1, 1], [0], [0]>} : vector<2x8x8xf32>, vector<2x8x8xf32>, vector<2x8x8xf32> -> vector<2x8x8xf32>
    "tpu.trace_stop"() : () -> ()
    %cst_255 = arith.constant 0.353553385 : f32
    %427 = vector.broadcast %cst_255 : f32 to vector<2x8x8xf32>
    %428 = arith.mulf %426, %427 : vector<2x8x8xf32>
    %429 = vector.shape_cast %11 : vector<8x8xi1> to vector<1x8x8xi1>
    %cst_256 = arith.constant -1.000000e+10 : f32
    %430 = vector.shape_cast %429 : vector<1x8x8xi1> to vector<1x8x8xi1>
    %431 = vector.broadcast %430 : vector<1x8x8xi1> to vector<2x8x8xi1>
    %432 = vector.broadcast %cst_256 : f32 to vector<2x8x8xf32>
    %433 = arith.select %431, %428, %432 : vector<2x8x8xi1>, vector<2x8x8xf32>
    %cst_257 = arith.constant dense<0xFF800000> : vector<2x8xf32>
    %434 = vector.multi_reduction <maximumf>, %433, %cst_257 [2] : vector<2x8x8xf32> to vector<2x8xf32>
    %435 = vector.shape_cast %434 : vector<2x8xf32> to vector<2x8x1xf32>
    %436 = vector.broadcast %435 : vector<2x8x1xf32> to vector<2x8x8xf32>
    %437 = arith.subf %433, %436 : vector<2x8x8xf32>
    %438 = math.exp %437 : vector<2x8x8xf32>
    %cst_258 = arith.constant dense<0.000000e+00> : vector<2x8xf32>
    %439 = vector.multi_reduction <add>, %438, %cst_258 [2] : vector<2x8x8xf32> to vector<2x8xf32>
    %440 = vector.shape_cast %439 : vector<2x8xf32> to vector<2x8x1xf32>
    %441 = tpu.reciprocal %440 {approx = true} : vector<2x8x1xf32> -> vector<2x8x1xf32>
    %442 = vector.broadcast %441 : vector<2x8x1xf32> to vector<2x8x8xf32>
    %443 = arith.mulf %438, %442 : vector<2x8x8xf32>
    "tpu.trace_start"() <{level = 10 : i32, message = "bqk,bkd->bqd"}> : () -> ()
    %cst_259 = arith.constant dense<0.000000e+00> : vector<2x8x8xf32>
    %444 = tpu.matmul %443, %425, %cst_259 {dimension_numbers = #tpu.dot_dimension_numbers<[2], [1], [1], [2], [0, 0, 0, 1, 1, 2], [0], [0]>} : vector<2x8x8xf32>, vector<2x8x8xf32>, vector<2x8x8xf32> -> vector<2x8x8xf32>
    "tpu.trace_stop"() : () -> ()
    %445 = vector.shape_cast %444 : vector<2x8x8xf32> to vector<16x8xf32>
    %c2_260 = arith.constant 2 : index
    %c0_261 = arith.constant 0 : index
    %c0_262 = arith.constant 0 : index
    %446 = vector.load %arg30[%c2_260, %c0_261, %c0_262] : memref<4x8x32xf32, #tpu.memory_space<vmem>>, vector<1x8x32xf32>
    %447 = vector.shape_cast %446 : vector<1x8x32xf32> to vector<8x32xf32>
    %cst_263 = arith.constant dense<0.000000e+00> : vector<16x32xf32>
    %448 = tpu.matmul %445, %447, %cst_263 {dimension_numbers = #tpu.dot_dimension_numbers<[1], [0], [0], [1], [0, 0, 1, 1], [], []>} : vector<16x8xf32>, vector<8x32xf32>, vector<16x32xf32> -> vector<16x32xf32>
    %449 = arith.addf %401, %448 : vector<16x32xf32>
    %c3_264 = arith.constant 3 : index
    %c0_265 = arith.constant 0 : index
    %c0_266 = arith.constant 0 : index
    %450 = vector.load %arg24[%c3_264, %c0_265, %c0_266] : memref<4x32x8xf32, #tpu.memory_space<vmem>>, vector<1x32x8xf32>
    %451 = vector.shape_cast %450 : vector<1x32x8xf32> to vector<32x8xf32>
    %cst_267 = arith.constant dense<0.000000e+00> : vector<16x8xf32>
    %452 = tpu.matmul %304, %451, %cst_267 {dimension_numbers = #tpu.dot_dimension_numbers<[1], [0], [0], [1], [0, 0, 1, 1], [], []>} : vector<16x32xf32>, vector<32x8xf32>, vector<16x8xf32> -> vector<16x8xf32>
    %c3_268 = arith.constant 3 : index
    %c0_269 = arith.constant 0 : index
    %c0_270 = arith.constant 0 : index
    %453 = vector.load %arg25[%c3_268, %c0_269, %c0_270] : memref<4x1x8xf32, #tpu.memory_space<vmem>>, vector<1x1x8xf32>
    %454 = vector.shape_cast %453 : vector<1x1x8xf32> to vector<1x8xf32>
    %455 = vector.broadcast %454 : vector<1x8xf32> to vector<16x8xf32>
    %456 = arith.addf %452, %455 : vector<16x8xf32>
    %457 = vector.shape_cast %456 : vector<16x8xf32> to vector<2x8x8xf32>
    %c3_271 = arith.constant 3 : index
    %c0_272 = arith.constant 0 : index
    %c0_273 = arith.constant 0 : index
    %458 = vector.load %arg26[%c3_271, %c0_272, %c0_273] : memref<4x32x8xf32, #tpu.memory_space<vmem>>, vector<1x32x8xf32>
    %459 = vector.shape_cast %458 : vector<1x32x8xf32> to vector<32x8xf32>
    %cst_274 = arith.constant dense<0.000000e+00> : vector<16x8xf32>
    %460 = tpu.matmul %304, %459, %cst_274 {dimension_numbers = #tpu.dot_dimension_numbers<[1], [0], [0], [1], [0, 0, 1, 1], [], []>} : vector<16x32xf32>, vector<32x8xf32>, vector<16x8xf32> -> vector<16x8xf32>
    %c3_275 = arith.constant 3 : index
    %c0_276 = arith.constant 0 : index
    %c0_277 = arith.constant 0 : index
    %461 = vector.load %arg27[%c3_275, %c0_276, %c0_277] : memref<4x1x8xf32, #tpu.memory_space<vmem>>, vector<1x1x8xf32>
    %462 = vector.shape_cast %461 : vector<1x1x8xf32> to vector<1x8xf32>
    %463 = vector.broadcast %462 : vector<1x8xf32> to vector<16x8xf32>
    %464 = arith.addf %460, %463 : vector<16x8xf32>
    %465 = vector.shape_cast %464 : vector<16x8xf32> to vector<2x8x8xf32>
    %c3_278 = arith.constant 3 : index
    %c0_279 = arith.constant 0 : index
    %c0_280 = arith.constant 0 : index
    %466 = vector.load %arg28[%c3_278, %c0_279, %c0_280] : memref<4x32x8xf32, #tpu.memory_space<vmem>>, vector<1x32x8xf32>
    %467 = vector.shape_cast %466 : vector<1x32x8xf32> to vector<32x8xf32>
    %cst_281 = arith.constant dense<0.000000e+00> : vector<16x8xf32>
    %468 = tpu.matmul %304, %467, %cst_281 {dimension_numbers = #tpu.dot_dimension_numbers<[1], [0], [0], [1], [0, 0, 1, 1], [], []>} : vector<16x32xf32>, vector<32x8xf32>, vector<16x8xf32> -> vector<16x8xf32>
    %c3_282 = arith.constant 3 : index
    %c0_283 = arith.constant 0 : index
    %c0_284 = arith.constant 0 : index
    %469 = vector.load %arg29[%c3_282, %c0_283, %c0_284] : memref<4x1x8xf32, #tpu.memory_space<vmem>>, vector<1x1x8xf32>
    %470 = vector.shape_cast %469 : vector<1x1x8xf32> to vector<1x8xf32>
    %471 = vector.broadcast %470 : vector<1x8xf32> to vector<16x8xf32>
    %472 = arith.addf %468, %471 : vector<16x8xf32>
    %473 = vector.shape_cast %472 : vector<16x8xf32> to vector<2x8x8xf32>
    "tpu.trace_start"() <{level = 10 : i32, message = "bqd,bkd->bqk"}> : () -> ()
    %cst_285 = arith.constant dense<0.000000e+00> : vector<2x8x8xf32>
    %474 = tpu.matmul %457, %465, %cst_285 {dimension_numbers = #tpu.dot_dimension_numbers<[2], [2], [1], [1], [0, 0, 0, 1, 1, 1], [0], [0]>} : vector<2x8x8xf32>, vector<2x8x8xf32>, vector<2x8x8xf32> -> vector<2x8x8xf32>
    "tpu.trace_stop"() : () -> ()
    %cst_286 = arith.constant 0.353553385 : f32
    %475 = vector.broadcast %cst_286 : f32 to vector<2x8x8xf32>
    %476 = arith.mulf %474, %475 : vector<2x8x8xf32>
    %477 = vector.shape_cast %11 : vector<8x8xi1> to vector<1x8x8xi1>
    %cst_287 = arith.constant -1.000000e+10 : f32
    %478 = vector.shape_cast %477 : vector<1x8x8xi1> to vector<1x8x8xi1>
    %479 = vector.broadcast %478 : vector<1x8x8xi1> to vector<2x8x8xi1>
    %480 = vector.broadcast %cst_287 : f32 to vector<2x8x8xf32>
    %481 = arith.select %479, %476, %480 : vector<2x8x8xi1>, vector<2x8x8xf32>
    %cst_288 = arith.constant dense<0xFF800000> : vector<2x8xf32>
    %482 = vector.multi_reduction <maximumf>, %481, %cst_288 [2] : vector<2x8x8xf32> to vector<2x8xf32>
    %483 = vector.shape_cast %482 : vector<2x8xf32> to vector<2x8x1xf32>
    %484 = vector.broadcast %483 : vector<2x8x1xf32> to vector<2x8x8xf32>
    %485 = arith.subf %481, %484 : vector<2x8x8xf32>
    %486 = math.exp %485 : vector<2x8x8xf32>
    %cst_289 = arith.constant dense<0.000000e+00> : vector<2x8xf32>
    %487 = vector.multi_reduction <add>, %486, %cst_289 [2] : vector<2x8x8xf32> to vector<2x8xf32>
    %488 = vector.shape_cast %487 : vector<2x8xf32> to vector<2x8x1xf32>
    %489 = tpu.reciprocal %488 {approx = true} : vector<2x8x1xf32> -> vector<2x8x1xf32>
    %490 = vector.broadcast %489 : vector<2x8x1xf32> to vector<2x8x8xf32>
    %491 = arith.mulf %486, %490 : vector<2x8x8xf32>
    "tpu.trace_start"() <{level = 10 : i32, message = "bqk,bkd->bqd"}> : () -> ()
    %cst_290 = arith.constant dense<0.000000e+00> : vector<2x8x8xf32>
    %492 = tpu.matmul %491, %473, %cst_290 {dimension_numbers = #tpu.dot_dimension_numbers<[2], [1], [1], [2], [0, 0, 0, 1, 1, 2], [0], [0]>} : vector<2x8x8xf32>, vector<2x8x8xf32>, vector<2x8x8xf32> -> vector<2x8x8xf32>
    "tpu.trace_stop"() : () -> ()
    %493 = vector.shape_cast %492 : vector<2x8x8xf32> to vector<16x8xf32>
    %c3_291 = arith.constant 3 : index
    %c0_292 = arith.constant 0 : index
    %c0_293 = arith.constant 0 : index
    %494 = vector.load %arg30[%c3_291, %c0_292, %c0_293] : memref<4x8x32xf32, #tpu.memory_space<vmem>>, vector<1x8x32xf32>
    %495 = vector.shape_cast %494 : vector<1x8x32xf32> to vector<8x32xf32>
    %cst_294 = arith.constant dense<0.000000e+00> : vector<16x32xf32>
    %496 = tpu.matmul %493, %495, %cst_294 {dimension_numbers = #tpu.dot_dimension_numbers<[1], [0], [0], [1], [0, 0, 1, 1], [], []>} : vector<16x8xf32>, vector<8x32xf32>, vector<16x32xf32> -> vector<16x32xf32>
    %497 = arith.addf %449, %496 : vector<16x32xf32>
    %498 = arith.addf %280, %497 : vector<16x32xf32>
    %c0_295 = arith.constant 0 : index
    %c0_296 = arith.constant 0 : index
    %499 = vector.load %arg31[%c0_295, %c0_296] : memref<1x32xf32, #tpu.memory_space<vmem>>, vector<1x32xf32>
    %500 = vector.broadcast %499 : vector<1x32xf32> to vector<16x32xf32>
    %501 = arith.addf %498, %500 : vector<16x32xf32>
    %c0_297 = arith.constant 0 : index
    %c0_298 = arith.constant 0 : index
    %502 = vector.load %arg32[%c0_297, %c0_298] : memref<1x32xf32, #tpu.memory_space<vmem>>, vector<1x32xf32>
    %c0_299 = arith.constant 0 : index
    %c0_300 = arith.constant 0 : index
    %503 = vector.load %arg33[%c0_299, %c0_300] : memref<1x32xf32, #tpu.memory_space<vmem>>, vector<1x32xf32>
    %cst_301 = arith.constant dense<0.000000e+00> : vector<16xf32>
    %504 = vector.multi_reduction <add>, %501, %cst_301 [1] : vector<16x32xf32> to vector<16xf32>
    %505 = vector.shape_cast %504 : vector<16xf32> to vector<16x1xf32>
    %cst_302 = arith.constant 3.200000e+01 : f32
    %506 = vector.broadcast %cst_302 : f32 to vector<16x1xf32>
    %507 = arith.divf %505, %506 : vector<16x1xf32>
    %508 = vector.broadcast %507 : vector<16x1xf32> to vector<16x32xf32>
    %509 = arith.subf %501, %508 : vector<16x32xf32>
    %510 = arith.mulf %509, %509 : vector<16x32xf32>
    %cst_303 = arith.constant dense<0.000000e+00> : vector<16xf32>
    %511 = vector.multi_reduction <add>, %510, %cst_303 [1] : vector<16x32xf32> to vector<16xf32>
    %512 = vector.shape_cast %511 : vector<16xf32> to vector<16x1xf32>
    %cst_304 = arith.constant 3.200000e+01 : f32
    %513 = vector.broadcast %cst_304 : f32 to vector<16x1xf32>
    %514 = arith.divf %512, %513 : vector<16x1xf32>
    %515 = vector.broadcast %507 : vector<16x1xf32> to vector<16x32xf32>
    %516 = arith.subf %501, %515 : vector<16x32xf32>
    %cst_305 = arith.constant 9.99999974E-6 : f32
    %517 = vector.broadcast %cst_305 : f32 to vector<16x1xf32>
    %518 = arith.addf %514, %517 : vector<16x1xf32>
    %519 = math.sqrt %518 : vector<16x1xf32>
    %520 = vector.broadcast %519 : vector<16x1xf32> to vector<16x32xf32>
    %521 = arith.divf %516, %520 : vector<16x32xf32>
    %522 = vector.broadcast %502 : vector<1x32xf32> to vector<16x32xf32>
    %523 = arith.mulf %522, %521 : vector<16x32xf32>
    %524 = vector.broadcast %503 : vector<1x32xf32> to vector<16x32xf32>
    %525 = arith.addf %523, %524 : vector<16x32xf32>
    %c0_306 = arith.constant 0 : index
    %c0_307 = arith.constant 0 : index
    %526 = vector.load %arg34[%c0_306, %c0_307] : memref<32x128xf32, #tpu.memory_space<vmem>>, vector<32x128xf32>
    %cst_308 = arith.constant dense<0.000000e+00> : vector<16x128xf32>
    %527 = tpu.matmul %525, %526, %cst_308 {dimension_numbers = #tpu.dot_dimension_numbers<[1], [0], [0], [1], [0, 0, 1, 1], [], []>} : vector<16x32xf32>, vector<32x128xf32>, vector<16x128xf32> -> vector<16x128xf32>
    %c0_309 = arith.constant 0 : index
    %c0_310 = arith.constant 0 : index
    %528 = vector.load %arg35[%c0_309, %c0_310] : memref<1x128xf32, #tpu.memory_space<vmem>>, vector<1x128xf32>
    %529 = vector.broadcast %528 : vector<1x128xf32> to vector<16x128xf32>
    %530 = arith.addf %527, %529 : vector<16x128xf32>
    %cst_311 = arith.constant 5.000000e-01 : f32
    %531 = vector.broadcast %cst_311 : f32 to vector<16x128xf32>
    %532 = arith.mulf %531, %530 : vector<16x128xf32>
    %533 = arith.mulf %530, %530 : vector<16x128xf32>
    %534 = arith.mulf %530, %533 : vector<16x128xf32>
    %cst_312 = arith.constant 4.471500e-02 : f32
    %535 = vector.broadcast %cst_312 : f32 to vector<16x128xf32>
    %536 = arith.mulf %535, %534 : vector<16x128xf32>
    %537 = arith.addf %530, %536 : vector<16x128xf32>
    %cst_313 = arith.constant 0.797884583 : f32
    %538 = vector.broadcast %cst_313 : f32 to vector<16x128xf32>
    %539 = arith.mulf %538, %537 : vector<16x128xf32>
    %540 = math.tanh %539 : vector<16x128xf32>
    %cst_314 = arith.constant 1.000000e+00 : f32
    %541 = vector.broadcast %cst_314 : f32 to vector<16x128xf32>
    %542 = arith.addf %541, %540 : vector<16x128xf32>
    %543 = arith.mulf %532, %542 : vector<16x128xf32>
    %c0_315 = arith.constant 0 : index
    %c0_316 = arith.constant 0 : index
    %544 = vector.load %arg36[%c0_315, %c0_316] : memref<128x32xf32, #tpu.memory_space<vmem>>, vector<128x32xf32>
    %cst_317 = arith.constant dense<0.000000e+00> : vector<16x32xf32>
    %545 = tpu.matmul %543, %544, %cst_317 {dimension_numbers = #tpu.dot_dimension_numbers<[1], [0], [0], [1], [0, 0, 1, 1], [], []>} : vector<16x128xf32>, vector<128x32xf32>, vector<16x32xf32> -> vector<16x32xf32>
    %c0_318 = arith.constant 0 : index
    %c0_319 = arith.constant 0 : index
    %546 = vector.load %arg37[%c0_318, %c0_319] : memref<1x32xf32, #tpu.memory_space<vmem>>, vector<1x32xf32>
    %547 = vector.broadcast %546 : vector<1x32xf32> to vector<16x32xf32>
    %548 = arith.addf %545, %547 : vector<16x32xf32>
    %549 = arith.addf %501, %548 : vector<16x32xf32>
    %c0_320 = arith.constant 0 : index
    %c0_321 = arith.constant 0 : index
    %550 = vector.load %arg3[%c0_320, %c0_321] : memref<1x32xf32, #tpu.memory_space<vmem>>, vector<1x32xf32>
    %c0_322 = arith.constant 0 : index
    %c0_323 = arith.constant 0 : index
    %551 = vector.load %arg4[%c0_322, %c0_323] : memref<1x32xf32, #tpu.memory_space<vmem>>, vector<1x32xf32>
    %cst_324 = arith.constant dense<0.000000e+00> : vector<16xf32>
    %552 = vector.multi_reduction <add>, %549, %cst_324 [1] : vector<16x32xf32> to vector<16xf32>
    %553 = vector.shape_cast %552 : vector<16xf32> to vector<16x1xf32>
    %cst_325 = arith.constant 3.200000e+01 : f32
    %554 = vector.broadcast %cst_325 : f32 to vector<16x1xf32>
    %555 = arith.divf %553, %554 : vector<16x1xf32>
    %556 = vector.broadcast %555 : vector<16x1xf32> to vector<16x32xf32>
    %557 = arith.subf %549, %556 : vector<16x32xf32>
    %558 = arith.mulf %557, %557 : vector<16x32xf32>
    %cst_326 = arith.constant dense<0.000000e+00> : vector<16xf32>
    %559 = vector.multi_reduction <add>, %558, %cst_326 [1] : vector<16x32xf32> to vector<16xf32>
    %560 = vector.shape_cast %559 : vector<16xf32> to vector<16x1xf32>
    %cst_327 = arith.constant 3.200000e+01 : f32
    %561 = vector.broadcast %cst_327 : f32 to vector<16x1xf32>
    %562 = arith.divf %560, %561 : vector<16x1xf32>
    %563 = vector.broadcast %555 : vector<16x1xf32> to vector<16x32xf32>
    %564 = arith.subf %549, %563 : vector<16x32xf32>
    %cst_328 = arith.constant 9.99999974E-6 : f32
    %565 = vector.broadcast %cst_328 : f32 to vector<16x1xf32>
    %566 = arith.addf %562, %565 : vector<16x1xf32>
    %567 = math.sqrt %566 : vector<16x1xf32>
    %568 = vector.broadcast %567 : vector<16x1xf32> to vector<16x32xf32>
    %569 = arith.divf %564, %568 : vector<16x32xf32>
    %570 = vector.broadcast %550 : vector<1x32xf32> to vector<16x32xf32>
    %571 = arith.mulf %570, %569 : vector<16x32xf32>
    %572 = vector.broadcast %551 : vector<1x32xf32> to vector<16x32xf32>
    %573 = arith.addf %571, %572 : vector<16x32xf32>
    %c0_329 = arith.constant 0 : index
    %c0_330 = arith.constant 0 : index
    %574 = vector.load %arg5[%c0_329, %c0_330] : memref<32x128xf32, #tpu.memory_space<vmem>>, vector<32x128xf32>
    %cst_331 = arith.constant dense<0.000000e+00> : vector<16x128xf32>
    %575 = tpu.matmul %573, %574, %cst_331 {dimension_numbers = #tpu.dot_dimension_numbers<[1], [0], [0], [1], [0, 0, 1, 1], [], []>} : vector<16x32xf32>, vector<32x128xf32>, vector<16x128xf32> -> vector<16x128xf32>
    %cst_332 = arith.constant 5.000000e-01 : f32
    %576 = vector.broadcast %cst_332 : f32 to vector<16x128xf32>
    %577 = arith.mulf %576, %575 : vector<16x128xf32>
    %578 = math.tanh %577 : vector<16x128xf32>
    %cst_333 = arith.constant 1.000000e+00 : f32
    %579 = vector.broadcast %cst_333 : f32 to vector<16x128xf32>
    %580 = arith.addf %578, %579 : vector<16x128xf32>
    %cst_334 = arith.constant 5.000000e-01 : f32
    %581 = vector.broadcast %cst_334 : f32 to vector<16x128xf32>
    %582 = arith.mulf %581, %580 : vector<16x128xf32>
    %c0_335 = arith.constant 0 : index
    %c0_336 = arith.constant 0 : index
    %583 = vector.load %arg38[%c0_335, %c0_336] : memref<16x128xf32, #tpu.memory_space<vmem>>, vector<16x128xf32>
    tpu.vector_store %arg38[%c0_335, %c0_336], %582 {strides = array<i32>} : memref<16x128xf32, #tpu.memory_space<vmem>>, vector<16x128xf32>,
    return
  }
}

</mosaic_0001>

<llo_original>
// kernel: gpt_forward.1
$region0: #{gpt_forward.1}
  #allocation0 [shape = 'u32[]', space=smem, size = 0x4, offset = 0x4, fixed_abs, tag = 'smem constant byte address 0x4 - core index']
  #allocation1 [shape = 'u32[144,128]{1,0:T(1,128)}', space=vmem, size = 0x12000, scoped, tag = 'internal scratch']
  %s0 = inlined_call_operand.smem [shape: u32[39], index: -1, kind: input, shape index: {}]
  %s1 = sld [smem:[%s0]]
  %s2 = scalar_lea.smem %s0, 1
  %s3 = sld [smem:[%s2]]
  %s4 = scalar_lea.smem %s0, 2
  %s5 = sld [smem:[%s4]]
  %s6 = scalar_lea.smem %s0, 3
  %s7 = sld [smem:[%s6]]
  %s8 = scalar_lea.smem %s0, 4
  %s9 = sld [smem:[%s8]]
  %s10 = scalar_lea.smem %s0, 5
  %s11 = sld [smem:[%s10]]
  %s12 = scalar_lea.smem %s0, 6
  %s13 = sld [smem:[%s12]]
  %s14 = scalar_lea.smem %s0, 7
  %s15 = sld [smem:[%s14]]
  %s16 = scalar_lea.smem %s0, 8
  %s17 = sld [smem:[%s16]]
  %s18 = scalar_lea.smem %s0, 9
  %s19 = sld [smem:[%s18]]
  %s20 = scalar_lea.smem %s0, 10
  %s21 = sld [smem:[%s20]]
  %s22 = scalar_lea.smem %s0, 11
  %s23 = sld [smem:[%s22]]
  %s24 = scalar_lea.smem %s0, 12
  %s25 = sld [smem:[%s24]]
  %s26 = scalar_lea.smem %s0, 13
  %s27 = sld [smem:[%s26]]
  %s28 = scalar_lea.smem %s0, 14
  %s29 = sld [smem:[%s28]]
  %s30 = scalar_lea.smem %s0, 15
  %s31 = sld [smem:[%s30]]
  %s32 = scalar_lea.smem %s0, 16
  %s33 = sld [smem:[%s32]]
  %s34 = scalar_lea.smem %s0, 17
  %s35 = sld [smem:[%s34]]
  %s36 = scalar_lea.smem %s0, 18
  %s37 = sld [smem:[%s36]]
  %s38 = scalar_lea.smem %s0, 19
  %s39 = sld [smem:[%s38]]
  %s40 = scalar_lea.smem %s0, 20
  %s41 = sld [smem:[%s40]]
  %s42 = scalar_lea.smem %s0, 21
  %s43 = sld [smem:[%s42]]
  %s44 = scalar_lea.smem %s0, 22
  %s45 = sld [smem:[%s44]]
  %s46 = scalar_lea.smem %s0, 23
  %s47 = sld [smem:[%s46]]
  %s48 = scalar_lea.smem %s0, 24
  %s49 = sld [smem:[%s48]]
  %s50 = scalar_lea.smem %s0, 25
  %s51 = sld [smem:[%s50]]
  %s52 = scalar_lea.smem %s0, 26
  %s53 = sld [smem:[%s52]]
  %s54 = scalar_lea.smem %s0, 27
  %s55 = sld [smem:[%s54]]
  %s56 = scalar_lea.smem %s0, 28
  %s57 = sld [smem:[%s56]]
  %s58 = scalar_lea.smem %s0, 29
  %s59 = sld [smem:[%s58]]
  %s60 = scalar_lea.smem %s0, 30
  %s61 = sld [smem:[%s60]]
  %s62 = scalar_lea.smem %s0, 31
  %s63 = sld [smem:[%s62]]
  %s64 = scalar_lea.smem %s0, 32
  %s65 = sld [smem:[%s64]]
  %s66 = scalar_lea.smem %s0, 33
  %s67 = sld [smem:[%s66]]
  %s68 = scalar_lea.smem %s0, 34
  %s69 = sld [smem:[%s68]]
  %s70 = scalar_lea.smem %s0, 35
  %s71 = sld [smem:[%s70]]
  %s72 = scalar_lea.smem %s0, 36
  %s73 = sld [smem:[%s72]]
  %s74 = scalar_lea.smem %s0, 37
  %s75 = sld [smem:[%s74]]
  %s76 = scalar_lea.smem %s0, 38
  %s77 = sld [smem:[%s76]]
  %s78 = sld [smem:[#allocation0]]
  $region162: #{gpt_forward.1} parent=0
    _
  %s80 = ssub.s32 1, %s78
  %s81 = scalar_select 0, %s80, %s78
  // Predicated region
  $region2: #{gpt_forward.1} parent=0 // pred_check
    _
  $region3: #{gpt_forward.1} parent=0 // pred_check_branch
    %83 = sbr.rel (0) target = $region5
  $region4: #{gpt_forward.1} parent=0 // pred_region
    _
  $region5: #{gpt_forward.1} parent=0 // pred_fallthru
    _
  // Predicated region
  $region6: #{gpt_forward.1} parent=0 // pred_check
    _
  $region7: #{gpt_forward.1} parent=0 // pred_check_branch
    %85 = sbr.rel (0) target = $region9
  $region8: #{gpt_forward.1} parent=0 // pred_region
    _
  $region9: #{gpt_forward.1} parent=0 // pred_fallthru
    _
  // Predicated region
  $region10: #{gpt_forward.1} parent=0 // pred_check
    _
  $region11: #{gpt_forward.1} parent=0 // pred_check_branch
    %87 = sbr.rel (0) target = $region13
  $region12: #{gpt_forward.1} parent=0 // pred_region
    _
  $region13: #{gpt_forward.1} parent=0 // pred_fallthru
    _
  // Predicated region
  $region14: #{gpt_forward.1} parent=0 // pred_check
    _
  $region15: #{gpt_forward.1} parent=0 // pred_check_branch
    %89 = sbr.rel (0) target = $region17
  $region16: #{gpt_forward.1} parent=0 // pred_region
    _
  $region17: #{gpt_forward.1} parent=0 // pred_fallthru
    _
  // Predicated region
  $region18: #{gpt_forward.1} parent=0 // pred_check
    _
  $region19: #{gpt_forward.1} parent=0 // pred_check_branch
    %91 = sbr.rel (0) target = $region21
  $region20: #{gpt_forward.1} parent=0 // pred_region
    _
  $region21: #{gpt_forward.1} parent=0 // pred_fallthru
    _
  // Predicated region
  $region22: #{gpt_forward.1} parent=0 // pred_check
    _
  $region23: #{gpt_forward.1} parent=0 // pred_check_branch
    %93 = sbr.rel (0) target = $region25
  $region24: #{gpt_forward.1} parent=0 // pred_region
    _
  $region25: #{gpt_forward.1} parent=0 // pred_fallthru
    _
  // Predicated region
  $region26: #{gpt_forward.1} parent=0 // pred_check
    _
  $region27: #{gpt_forward.1} parent=0 // pred_check_branch
    %95 = sbr.rel (0) target = $region29
  $region28: #{gpt_forward.1} parent=0 // pred_region
    _
  $region29: #{gpt_forward.1} parent=0 // pred_fallthru
    _
  // Predicated region
  $region30: #{gpt_forward.1} parent=0 // pred_check
    _
  $region31: #{gpt_forward.1} parent=0 // pred_check_branch
    %97 = sbr.rel (0) target = $region33
  $region32: #{gpt_forward.1} parent=0 // pred_region
    _
  $region33: #{gpt_forward.1} parent=0 // pred_fallthru
    _
  // Predicated region
  $region34: #{gpt_forward.1} parent=0 // pred_check
    _
  $region35: #{gpt_forward.1} parent=0 // pred_check_branch
    %99 = sbr.rel (0) target = $region37
  $region36: #{gpt_forward.1} parent=0 // pred_region
    _
  $region37: #{gpt_forward.1} parent=0 // pred_fallthru
    _
  // Predicated region
  $region38: #{gpt_forward.1} parent=0 // pred_check
    _
  $region39: #{gpt_forward.1} parent=0 // pred_check_branch
    %101 = sbr.rel (0) target = $region41
  $region40: #{gpt_forward.1} parent=0 // pred_region
    _
  $region41: #{gpt_forward.1} parent=0 // pred_fallthru
    _
  // Predicated region
  $region42: #{gpt_forward.1} parent=0 // pred_check
    _
  $region43: #{gpt_forward.1} parent=0 // pred_check_branch
    %103 = sbr.rel (0) target = $region45
  $region44: #{gpt_forward.1} parent=0 // pred_region
    _
  $region45: #{gpt_forward.1} parent=0 // pred_fallthru
    _
  // Predicated region
  $region46: #{gpt_forward.1} parent=0 // pred_check
    _
  $region47: #{gpt_forward.1} parent=0 // pred_check_branch
    %105 = sbr.rel (0) target = $region49
  $region48: #{gpt_forward.1} parent=0 // pred_region
    _
  $region49: #{gpt_forward.1} parent=0 // pred_fallthru
    _
  // Predicated region
  $region50: #{gpt_forward.1} parent=0 // pred_check
    _
  $region51: #{gpt_forward.1} parent=0 // pred_check_branch
    %107 = sbr.rel (0) target = $region53
  $region52: #{gpt_forward.1} parent=0 // pred_region
    _
  $region53: #{gpt_forward.1} parent=0 // pred_fallthru
    _
  // Predicated region
  $region54: #{gpt_forward.1} parent=0 // pred_check
    _
  $region55: #{gpt_forward.1} parent=0 // pred_check_branch
    %109 = sbr.rel (0) target = $region57
  $region56: #{gpt_forward.1} parent=0 // pred_region
    _
  $region57: #{gpt_forward.1} parent=0 // pred_fallthru
    _
  // Predicated region
  $region58: #{gpt_forward.1} parent=0 // pred_check
    _
  $region59: #{gpt_forward.1} parent=0 // pred_check_branch
    %111 = sbr.rel (0) target = $region61
  $region60: #{gpt_forward.1} parent=0 // pred_region
    _
  $region61: #{gpt_forward.1} parent=0 // pred_fallthru
    _
  // Predicated region
  $region62: #{gpt_forward.1} parent=0 // pred_check
    _
  $region63: #{gpt_forward.1} parent=0 // pred_check_branch
    %113 = sbr.rel (0) target = $region65
  $region64: #{gpt_forward.1} parent=0 // pred_region
    _
  $region65: #{gpt_forward.1} parent=0 // pred_fallthru
    _
  // Predicated region
  $region66: #{gpt_forward.1} parent=0 // pred_check
    _
  $region67: #{gpt_forward.1} parent=0 // pred_check_branch
    %115 = sbr.rel (0) target = $region69
  $region68: #{gpt_forward.1} parent=0 // pred_region
    _
  $region69: #{gpt_forward.1} parent=0 // pred_fallthru
    _
  // Predicated region
  $region70: #{gpt_forward.1} parent=0 // pred_check
    _
  $region71: #{gpt_forward.1} parent=0 // pred_check_branch
    %117 = sbr.rel (0) target = $region73
  $region72: #{gpt_forward.1} parent=0 // pred_region
    _
  $region73: #{gpt_forward.1} parent=0 // pred_fallthru
    _
  // Predicated region
  $region74: #{gpt_forward.1} parent=0 // pred_check
    _
  $region75: #{gpt_forward.1} parent=0 // pred_check_branch
    %119 = sbr.rel (0) target = $region77
  $region76: #{gpt_forward.1} parent=0 // pred_region
    _
  $region77: #{gpt_forward.1} parent=0 // pred_fallthru
    _
  // Predicated region
  $region78: #{gpt_forward.1} parent=0 // pred_check
    _
  $region79: #{gpt_forward.1} parent=0 // pred_check_branch
    %121 = sbr.rel (0) target = $region81
  $region80: #{gpt_forward.1} parent=0 // pred_region
    _
  $region81: #{gpt_forward.1} parent=0 // pred_fallthru
    _
  // Predicated region
  $region82: #{gpt_forward.1} parent=0 // pred_check
    _
  $region83: #{gpt_forward.1} parent=0 // pred_check_branch
    %123 = sbr.rel (0) target = $region85
  $region84: #{gpt_forward.1} parent=0 // pred_region
    _
  $region85: #{gpt_forward.1} parent=0 // pred_fallthru
    _
  // Predicated region
  $region86: #{gpt_forward.1} parent=0 // pred_check
    _
  $region87: #{gpt_forward.1} parent=0 // pred_check_branch
    %125 = sbr.rel (0) target = $region89
  $region88: #{gpt_forward.1} parent=0 // pred_region
    _
  $region89: #{gpt_forward.1} parent=0 // pred_fallthru
    _
  // Predicated region
  $region90: #{gpt_forward.1} parent=0 // pred_check
    _
  $region91: #{gpt_forward.1} parent=0 // pred_check_branch
    %127 = sbr.rel (0) target = $region93
  $region92: #{gpt_forward.1} parent=0 // pred_region
    _
  $region93: #{gpt_forward.1} parent=0 // pred_fallthru
    _
  // Predicated region
  $region94: #{gpt_forward.1} parent=0 // pred_check
    _
  $region95: #{gpt_forward.1} parent=0 // pred_check_branch
    %129 = sbr.rel (0) target = $region97
  $region96: #{gpt_forward.1} parent=0 // pred_region
    _
  $region97: #{gpt_forward.1} parent=0 // pred_fallthru
    _
  // Predicated region
  $region98: #{gpt_forward.1} parent=0 // pred_check
    _
  $region99: #{gpt_forward.1} parent=0 // pred_check_branch
    %131 = sbr.rel (0) target = $region101
  $region100: #{gpt_forward.1} parent=0 // pred_region
    _
  $region101: #{gpt_forward.1} parent=0 // pred_fallthru
    _
  // Predicated region
  $region102: #{gpt_forward.1} parent=0 // pred_check
    _
  $region103: #{gpt_forward.1} parent=0 // pred_check_branch
    %133 = sbr.rel (0) target = $region105
  $region104: #{gpt_forward.1} parent=0 // pred_region
    _
  $region105: #{gpt_forward.1} parent=0 // pred_fallthru
    _
  // Predicated region
  $region106: #{gpt_forward.1} parent=0 // pred_check
    _
  $region107: #{gpt_forward.1} parent=0 // pred_check_branch
    %135 = sbr.rel (0) target = $region109
  $region108: #{gpt_forward.1} parent=0 // pred_region
    _
  $region109: #{gpt_forward.1} parent=0 // pred_fallthru
    _
  // Predicated region
  $region110: #{gpt_forward.1} parent=0 // pred_check
    _
  $region111: #{gpt_forward.1} parent=0 // pred_check_branch
    %137 = sbr.rel (0) target = $region113
  $region112: #{gpt_forward.1} parent=0 // pred_region
    _
  $region113: #{gpt_forward.1} parent=0 // pred_fallthru
    _
  // Predicated region
  $region114: #{gpt_forward.1} parent=0 // pred_check
    _
  $region115: #{gpt_forward.1} parent=0 // pred_check_branch
    %139 = sbr.rel (0) target = $region117
  $region116: #{gpt_forward.1} parent=0 // pred_region
    _
  $region117: #{gpt_forward.1} parent=0 // pred_fallthru
    _
  // Predicated region
  $region118: #{gpt_forward.1} parent=0 // pred_check
    _
  $region119: #{gpt_forward.1} parent=0 // pred_check_branch
    %141 = sbr.rel (0) target = $region121
  $region120: #{gpt_forward.1} parent=0 // pred_region
    _
  $region121: #{gpt_forward.1} parent=0 // pred_fallthru
    _
  // Predicated region
  $region122: #{gpt_forward.1} parent=0 // pred_check
    _
  $region123: #{gpt_forward.1} parent=0 // pred_check_branch
    %143 = sbr.rel (0) target = $region125
  $region124: #{gpt_forward.1} parent=0 // pred_region
    _
  $region125: #{gpt_forward.1} parent=0 // pred_fallthru
    _
  // Predicated region
  $region126: #{gpt_forward.1} parent=0 // pred_check
    _
  $region127: #{gpt_forward.1} parent=0 // pred_check_branch
    %145 = sbr.rel (0) target = $region129
  $region128: #{gpt_forward.1} parent=0 // pred_region
    _
  $region129: #{gpt_forward.1} parent=0 // pred_fallthru
    _
  // Predicated region
  $region130: #{gpt_forward.1} parent=0 // pred_check
    _
  $region131: #{gpt_forward.1} parent=0 // pred_check_branch
    %147 = sbr.rel (0) target = $region133
  $region132: #{gpt_forward.1} parent=0 // pred_region
    _
  $region133: #{gpt_forward.1} parent=0 // pred_fallthru
    _
  // Predicated region
  $region134: #{gpt_forward.1} parent=0 // pred_check
    _
  $region135: #{gpt_forward.1} parent=0 // pred_check_branch
    %149 = sbr.rel (0) target = $region137
  $region136: #{gpt_forward.1} parent=0 // pred_region
    _
  $region137: #{gpt_forward.1} parent=0 // pred_fallthru
    _
  // Predicated region
  $region138: #{gpt_forward.1} parent=0 // pred_check
    _
  $region139: #{gpt_forward.1} parent=0 // pred_check_branch
    %151 = sbr.rel (0) target = $region141
  $region140: #{gpt_forward.1} parent=0 // pred_region
    _
  $region141: #{gpt_forward.1} parent=0 // pred_fallthru
    _
  // Predicated region
  $region142: #{gpt_forward.1} parent=0 // pred_check
    _
  $region143: #{gpt_forward.1} parent=0 // pred_check_branch
    %153 = sbr.rel (0) target = $region145
  $region144: #{gpt_forward.1} parent=0 // pred_region
    _
  $region145: #{gpt_forward.1} parent=0 // pred_fallthru
    _
  // Predicated region
  $region146: #{gpt_forward.1} parent=0 // pred_check
    _
  $region147: #{gpt_forward.1} parent=0 // pred_check_branch
    %155 = sbr.rel (0) target = $region149
  $region148: #{gpt_forward.1} parent=0 // pred_region
    _
  $region149: #{gpt_forward.1} parent=0 // pred_fallthru
    _
  // Predicated region
  $region150: #{gpt_forward.1} parent=0 // pred_check
    _
  $region151: #{gpt_forward.1} parent=0 // pred_check_branch
    %157 = sbr.rel (0) target = $region153
  $region152: #{gpt_forward.1} parent=0 // pred_region
    _
  $region153: #{gpt_forward.1} parent=0 // pred_fallthru
    _
  %v158 = vld [vmem:[%s1] sm:$0xff]
  %v159 = vld [vmem:[%s1 + $0x8] sm:$0xff]
  %v160 = vld [vmem:[%s3] sm:$0xff]
  %v161 = vld [vmem:[%s3 + $0x8] sm:$0xff]
  %vm162 = vcmask 130048
  %v164 = vsel %vm162, %v158, 0
  %v167 = vsel %vm162, %v159, 0
  %169 = vmatprep.subr.mxu0 0.0
  %170 = vmatpush1.msra.mxu0 %v160
  %171 = vmatprep.subr.mxu0 0.0
  %172 = vmatpush1.msra.mxu0 %v161
  %173 = vmatprep.subr.mxu0 0.0
  %174 = vmatpush1.msra.mxu0 0.0
  %175 = vmatprep.subr.mxu0 0.0
  %176 = vmatpush1.msra.mxu0 0.0
  %177 = vmatprep.subr.mxu0 0.0
  %178 = vmatpush1.msra.mxu0 0.0
  %179 = vmatprep.subr.mxu0 0.0
  %180 = vmatpush1.msra.mxu0 0.0
  %181 = vmatprep.subr.mxu0 0.0
  %182 = vmatpush1.msra.mxu0 0.0
  %183 = vmatprep.subr.mxu0 0.0
  %184 = vmatpush1.msra.mxu0 0.0
  %185 = vmatprep.subr.mxu0 0.0
  %186 = vmatpush1.msra.mxu0 0.0
  %187 = vmatprep.subr.mxu0 0.0
  %188 = vmatpush1.msra.mxu0 0.0
  %189 = vmatprep.subr.mxu0 0.0
  %190 = vmatpush1.msra.mxu0 0.0
  %191 = vmatprep.subr.mxu0 0.0
  %192 = vmatpush1.msra.mxu0 0.0
  %193 = vmatprep.subr.mxu0 0.0
  %194 = vmatpush1.msra.mxu0 0.0
  %195 = vmatprep.subr.mxu0 0.0
  %196 = vmatpush1.msra.mxu0 0.0
  %197 = vmatprep.subr.mxu0 0.0
  %198 = vmatpush1.msra.mxu0 0.0
  %199 = vmatprep.subr.mxu0 0.0
  %200 = vmatpush1.msra.mxu0 0.0
  %201 = vmatprep.subr.mxu0 0.0
  %202 = vmatpush1.msra.mxu0 0.0
  %203 = vmatprep.subr.mxu0 0.0
  %204 = vmatpush1.msra.mxu0 0.0
  %205 = vmatprep.subr.mxu0 0.0
  %206 = vmatpush1.msra.mxu0 0.0
  %207 = vmatprep.subr.mxu0 0.0
  %208 = vmatpush1.msra.mxu0 0.0
  %209 = vmatprep.subr.mxu0 0.0
  %210 = vmatpush1.msra.mxu0 0.0
  %211 = vmatprep.subr.mxu0 0.0
  %212 = vmatpush1.msra.mxu0 0.0
  %213 = vmatprep.subr.mxu0 0.0
  %214 = vmatpush1.msra.mxu0 0.0
  %215 = vmatprep.subr.mxu0 0.0
  %216 = vmatpush1.msra.mxu0 0.0
  %217 = vmatprep.subr.mxu0 0.0
  %218 = vmatpush1.msra.mxu0 0.0
  %219 = vmatprep.subr.mxu0 0.0
  %220 = vmatpush1.msra.mxu0 0.0
  %221 = vmatprep.subr.mxu0 0.0
  %222 = vmatpush1.msra.mxu0 0.0
  %223 = vmatprep.subr.mxu0 0.0
  %224 = vmatpush1.msra.mxu0 0.0
  %225 = vmatprep.subr.mxu0 0.0
  %226 = vmatpush1.msra.mxu0 0.0
  %227 = vmatprep.subr.mxu0 0.0
  %228 = vmatpush1.msra.mxu0 0.0
  %229 = vmatprep.subr.mxu0 0.0
  %230 = vmatpush1.msra.mxu0 0.0
  %231 = vmatprep.subr.mxu0 0.0
  %232 = vmatpush1.msra.mxu0 0.0
  %233 = vmatprep.mubr.f32.mxu0 0.0
  %234 = vmatmul.mubr.f32.gmra.mrb[0].mxu0 %v164
  %v235 = vpop.f32.mrb[0].mxu0
  %v236 = vadd.f32 0.0, %v235
  %v237 = vpop.f32.mrb[0].mxu0
  %238 = vmatprep.mubr.f32.mxu0 0.0
  %239 = vmatmul.mubr.f32.gmra.mrb[0].mxu0 %v167
  %v240 = vpop.f32.mrb[0].mxu0
  %v241 = vadd.f32 0.0, %v240
  %v242 = vpop.f32.mrb[0].mxu0
  %243 = vdwg.mxu0
  %v244 = vld [vmem:[%s5] sm:$0xff]
  %v245 = vadd.f32 %v236, %v244
  %v246 = vadd.f32 %v241, %v244
  %v247 = vlaneseq
  %v248 = vshrl.u32 %v247, 7
  %v249 = vlaneseq
  %v250 = vand.u32 %v249, 127
  %vm251 = vcmp.ge.s32.totalorder %v248, %v250
  %v252 = vld [vmem:[%s13] sm:$0x1]
  %v253 = vld [vmem:[%s15] sm:$0x1]
  %vm254 = vcmask 261120
  %v255 = vsel %vm254, %v245, 0.0
  %256 = vadd.xlane.f32.xlu0 %v255
  %v257 = vpop.xlane.xlu0 %256
  %v258 = vsel %vm254, %v246, 0.0
  %259 = vadd.xlane.f32.xlu0 %v258
  %v260 = vpop.xlane.xlu0 %259
  %v261 = vrcp.pop 32.0
  %v262 = vmul.f32 %v257, %v261
  %v263 = vmul.f32 %v260, %v261
  %v264 = vsub.f32 %v245, %v262
  %v265 = vsub.f32 %v246, %v263
  %v266 = vmul.f32 %v264, %v264
  %v267 = vmul.f32 %v265, %v265
  %v268 = vsel %vm254, %v266, 0.0
  %269 = vadd.xlane.f32.xlu0 %v268
  %v270 = vpop.xlane.xlu0 %269
  %v271 = vsel %vm254, %v267, 0.0
  %272 = vadd.xlane.f32.xlu0 %v271
  %v273 = vpop.xlane.xlu0 %272
  %v274 = vmul.f32 %v270, %v261
  %v275 = vmul.f32 %v273, %v261
  %v276 = vadd.f32 %v274, 1e-05
  %v277 = vadd.f32 %v275, 1e-05
  %v278 = vrsqrt.pop %v276
  %v279 = vmul.f32 %v276, %v278
  %vm280 = vcmp.eq.f32.partialorder %v276, inf
  %v281 = vsel %vm280, %v276, %v279
  %vm282 = vcmp.eq.f32.partialorder %v276, 0.0
  %v283 = vand.u32 %v276, 2147483648
  %v284 = vsel %vm282, %v283, %v281
  %v285 = vrsqrt.pop %v277
  %v286 = vmul.f32 %v277, %v285
  %vm287 = vcmp.eq.f32.partialorder %v277, inf
  %v288 = vsel %vm287, %v277, %v286
  %vm289 = vcmp.eq.f32.partialorder %v277, 0.0
  %v290 = vand.u32 %v277, 2147483648
  %v291 = vsel %vm289, %v290, %v288
  %v292 = vrcp.pop %v284
  %v293 = vmul.f32 %v264, %v292
  %v294 = vrcp.pop %v291
  %v295 = vmul.f32 %v265, %v294
  %v297 = vlaneseq
  %v298 = vshrl.u32 %v297, 7
  %v299 = vsub.s32 0, %v298
  %v300 = vrot.slane %v252, %v299
  %v302 = vmul.f32 %v300, %v293
  %v303 = vmul.f32 %v300, %v295
  %v305 = vlaneseq
  %v306 = vshrl.u32 %v305, 7
  %v307 = vsub.s32 0, %v306
  %v308 = vrot.slane %v253, %v307
  %v310 = vadd.f32 %v302, %v308
  %v311 = vadd.f32 %v303, %v308
  %v312 = vld [vmem:[%s17] sm:$0xff]
  %v313 = vld [vmem:[%s17 + $0x8] sm:$0xff]
  %v314 = vld [vmem:[%s17 + $0x10] sm:$0xff]
  %v315 = vld [vmem:[%s17 + $0x18] sm:$0xff]
  %v316 = vld [vmem:[%s19] sm:$0x1]
  %v318 = vlaneseq
  %v319 = vshrl.u32 %v318, 7
  %v320 = vsub.s32 0, %v319
  %v321 = vrot.slane %v316, %v320
  %v324 = vsel %vm254, %v310, 0
  %v327 = vsel %vm254, %v311, 0
  %329 = vmatprep.subr.mxu0 0.0
  %330 = vmatpush1.msra.mxu0 %v312
  %331 = vmatprep.subr.mxu0 0.0
  %332 = vmatpush1.msra.mxu0 %v313
  %333 = vmatprep.subr.mxu0 0.0
  %334 = vmatpush1.msra.mxu0 %v314
  %335 = vmatprep.subr.mxu0 0.0
  %336 = vmatpush1.msra.mxu0 %v315
  %337 = vmatprep.subr.mxu0 0.0
  %338 = vmatpush1.msra.mxu0 0.0
  %339 = vmatprep.subr.mxu0 0.0
  %340 = vmatpush1.msra.mxu0 0.0
  %341 = vmatprep.subr.mxu0 0.0
  %342 = vmatpush1.msra.mxu0 0.0
  %343 = vmatprep.subr.mxu0 0.0
  %344 = vmatpush1.msra.mxu0 0.0
  %345 = vmatprep.subr.mxu0 0.0
  %346 = vmatpush1.msra.mxu0 0.0
  %347 = vmatprep.subr.mxu0 0.0
  %348 = vmatpush1.msra.mxu0 0.0
  %349 = vmatprep.subr.mxu0 0.0
  %350 = vmatpush1.msra.mxu0 0.0
  %351 = vmatprep.subr.mxu0 0.0
  %352 = vmatpush1.msra.mxu0 0.0
  %353 = vmatprep.subr.mxu0 0.0
  %354 = vmatpush1.msra.mxu0 0.0
  %355 = vmatprep.subr.mxu0 0.0
  %356 = vmatpush1.msra.mxu0 0.0
  %357 = vmatprep.subr.mxu0 0.0
  %358 = vmatpush1.msra.mxu0 0.0
  %359 = vmatprep.subr.mxu0 0.0
  %360 = vmatpush1.msra.mxu0 0.0
  %361 = vmatprep.subr.mxu0 0.0
  %362 = vmatpush1.msra.mxu0 0.0
  %363 = vmatprep.subr.mxu0 0.0
  %364 = vmatpush1.msra.mxu0 0.0
  %365 = vmatprep.subr.mxu0 0.0
  %366 = vmatpush1.msra.mxu0 0.0
  %367 = vmatprep.subr.mxu0 0.0
  %368 = vmatpush1.msra.mxu0 0.0
  %369 = vmatprep.subr.mxu0 0.0
  %370 = vmatpush1.msra.mxu0 0.0
  %371 = vmatprep.subr.mxu0 0.0
  %372 = vmatpush1.msra.mxu0 0.0
  %373 = vmatprep.subr.mxu0 0.0
  %374 = vmatpush1.msra.mxu0 0.0
  %375 = vmatprep.subr.mxu0 0.0
  %376 = vmatpush1.msra.mxu0 0.0
  %377 = vmatprep.subr.mxu0 0.0
  %378 = vmatpush1.msra.mxu0 0.0
  %379 = vmatprep.subr.mxu0 0.0
  %380 = vmatpush1.msra.mxu0 0.0
  %381 = vmatprep.subr.mxu0 0.0
  %382 = vmatpush1.msra.mxu0 0.0
  %383 = vmatprep.subr.mxu0 0.0
  %384 = vmatpush1.msra.mxu0 0.0
  %385 = vmatprep.subr.mxu0 0.0
  %386 = vmatpush1.msra.mxu0 0.0
  %387 = vmatprep.subr.mxu0 0.0
  %388 = vmatpush1.msra.mxu0 0.0
  %389 = vmatprep.subr.mxu0 0.0
  %390 = vmatpush1.msra.mxu0 0.0
  %391 = vmatprep.subr.mxu0 0.0
  %392 = vmatpush1.msra.mxu0 0.0
  %393 = vmatprep.mubr.f32.mxu0 0.0
  %394 = vmatmul.mubr.f32.gmra.mrb[0].mxu0 %v324
  %v395 = vpop.f32.mrb[0].mxu0
  %v396 = vadd.f32 %v321, %v395
  %v397 = vpop.f32.mrb[0].mxu0
  %398 = vmatprep.mubr.f32.mxu0 0.0
  %399 = vmatmul.mubr.f32.gmra.mrb[0].mxu0 %v327
  %v400 = vpop.f32.mrb[0].mxu0
  %v401 = vadd.f32 %v321, %v400
  %v402 = vpop.f32.mrb[0].mxu0
  %403 = vdwg.mxu0
  %v404 = vld [vmem:[%s21] sm:$0xff]
  %v405 = vld [vmem:[%s21 + $0x8] sm:$0xff]
  %v406 = vld [vmem:[%s21 + $0x10] sm:$0xff]
  %v407 = vld [vmem:[%s21 + $0x18] sm:$0xff]
  %v408 = vld [vmem:[%s23] sm:$0x1]
  %v410 = vlaneseq
  %v411 = vshrl.u32 %v410, 7
  %v412 = vsub.s32 0, %v411
  %v413 = vrot.slane %v408, %v412
  %415 = vmatprep.subr.mxu0 0.0
  %416 = vmatpush1.msra.mxu0 %v404
  %417 = vmatprep.subr.mxu0 0.0
  %418 = vmatpush1.msra.mxu0 %v405
  %419 = vmatprep.subr.mxu0 0.0
  %420 = vmatpush1.msra.mxu0 %v406
  %421 = vmatprep.subr.mxu0 0.0
  %422 = vmatpush1.msra.mxu0 %v407
  %423 = vmatprep.subr.mxu0 0.0
  %424 = vmatpush1.msra.mxu0 0.0
  %425 = vmatprep.subr.mxu0 0.0
  %426 = vmatpush1.msra.mxu0 0.0
  %427 = vmatprep.subr.mxu0 0.0
  %428 = vmatpush1.msra.mxu0 0.0
  %429 = vmatprep.subr.mxu0 0.0
  %430 = vmatpush1.msra.mxu0 0.0
  %431 = vmatprep.subr.mxu0 0.0
  %432 = vmatpush1.msra.mxu0 0.0
  %433 = vmatprep.subr.mxu0 0.0
  %434 = vmatpush1.msra.mxu0 0.0
  %435 = vmatprep.subr.mxu0 0.0
  %436 = vmatpush1.msra.mxu0 0.0
  %437 = vmatprep.subr.mxu0 0.0
  %438 = vmatpush1.msra.mxu0 0.0
  %439 = vmatprep.subr.mxu0 0.0
  %440 = vmatpush1.msra.mxu0 0.0
  %441 = vmatprep.subr.mxu0 0.0
  %442 = vmatpush1.msra.mxu0 0.0
  %443 = vmatprep.subr.mxu0 0.0
  %444 = vmatpush1.msra.mxu0 0.0
  %445 = vmatprep.subr.mxu0 0.0
  %446 = vmatpush1.msra.mxu0 0.0
  %447 = vmatprep.subr.mxu0 0.0
  %448 = vmatpush1.msra.mxu0 0.0
  %449 = vmatprep.subr.mxu0 0.0
  %450 = vmatpush1.msra.mxu0 0.0
  %451 = vmatprep.subr.mxu0 0.0
  %452 = vmatpush1.msra.mxu0 0.0
  %453 = vmatprep.subr.mxu0 0.0
  %454 = vmatpush1.msra.mxu0 0.0
  %455 = vmatprep.subr.mxu0 0.0
  %456 = vmatpush1.msra.mxu0 0.0
  %457 = vmatprep.subr.mxu0 0.0
  %458 = vmatpush1.msra.mxu0 0.0
  %459 = vmatprep.subr.mxu0 0.0
  %460 = vmatpush1.msra.mxu0 0.0
  %461 = vmatprep.subr.mxu0 0.0
  %462 = vmatpush1.msra.mxu0 0.0
  %463 = vmatprep.subr.mxu0 0.0
  %464 = vmatpush1.msra.mxu0 0.0
  %465 = vmatprep.subr.mxu0 0.0
  %466 = vmatpush1.msra.mxu0 0.0
  %467 = vmatprep.subr.mxu0 0.0
  %468 = vmatpush1.msra.mxu0 0.0
  %469 = vmatprep.subr.mxu0 0.0
  %470 = vmatpush1.msra.mxu0 0.0
  %471 = vmatprep.subr.mxu0 0.0
  %472 = vmatpush1.msra.mxu0 0.0
  %473 = vmatprep.subr.mxu0 0.0
  %474 = vmatpush1.msra.mxu0 0.0
  %475 = vmatprep.subr.mxu0 0.0
  %476 = vmatpush1.msra.mxu0 0.0
  %477 = vmatprep.subr.mxu0 0.0
  %478 = vmatpush1.msra.mxu0 0.0
  %479 = vmatprep.mubr.f32.mxu0 0.0
  %480 = vmatmul.mubr.f32.gmra.mrb[0].mxu0 %v324
  %v481 = vpop.f32.mrb[0].mxu0
  %v482 = vadd.f32 %v413, %v481
  %v483 = vpop.f32.mrb[0].mxu0
  %484 = vmatprep.mubr.f32.mxu0 0.0
  %485 = vmatmul.mubr.f32.gmra.mrb[0].mxu0 %v327
  %v486 = vpop.f32.mrb[0].mxu0
  %v487 = vadd.f32 %v413, %v486
  %v488 = vpop.f32.mrb[0].mxu0
  %489 = vdwg.mxu0
  %v490 = vld [vmem:[%s25] sm:$0xff]
  %v491 = vld [vmem:[%s25 + $0x8] sm:$0xff]
  %v492 = vld [vmem:[%s25 + $0x10] sm:$0xff]
  %v493 = vld [vmem:[%s25 + $0x18] sm:$0xff]
  %v494 = vld [vmem:[%s27] sm:$0x1]
  %v496 = vlaneseq
  %v497 = vshrl.u32 %v496, 7
  %v498 = vsub.s32 0, %v497
  %v499 = vrot.slane %v494, %v498
  %501 = vmatprep.subr.mxu0 0.0
  %502 = vmatpush1.msra.mxu0 %v490
  %503 = vmatprep.subr.mxu0 0.0
  %504 = vmatpush1.msra.mxu0 %v491
  %505 = vmatprep.subr.mxu0 0.0
  %506 = vmatpush1.msra.mxu0 %v492
  %507 = vmatprep.subr.mxu0 0.0
  %508 = vmatpush1.msra.mxu0 %v493
  %509 = vmatprep.subr.mxu0 0.0
  %510 = vmatpush1.msra.mxu0 0.0
  %511 = vmatprep.subr.mxu0 0.0
  %512 = vmatpush1.msra.mxu0 0.0
  %513 = vmatprep.subr.mxu0 0.0
  %514 = vmatpush1.msra.mxu0 0.0
  %515 = vmatprep.subr.mxu0 0.0
  %516 = vmatpush1.msra.mxu0 0.0
  %517 = vmatprep.subr.mxu0 0.0
  %518 = vmatpush1.msra.mxu0 0.0
  %519 = vmatprep.subr.mxu0 0.0
  %520 = vmatpush1.msra.mxu0 0.0
  %521 = vmatprep.subr.mxu0 0.0
  %522 = vmatpush1.msra.mxu0 0.0
  %523 = vmatprep.subr.mxu0 0.0
  %524 = vmatpush1.msra.mxu0 0.0
  %525 = vmatprep.subr.mxu0 0.0
  %526 = vmatpush1.msra.mxu0 0.0
  %527 = vmatprep.subr.mxu0 0.0
  %528 = vmatpush1.msra.mxu0 0.0
  %529 = vmatprep.subr.mxu0 0.0
  %530 = vmatpush1.msra.mxu0 0.0
  %531 = vmatprep.subr.mxu0 0.0
  %532 = vmatpush1.msra.mxu0 0.0
  %533 = vmatprep.subr.mxu0 0.0
  %534 = vmatpush1.msra.mxu0 0.0
  %535 = vmatprep.subr.mxu0 0.0
  %536 = vmatpush1.msra.mxu0 0.0
  %537 = vmatprep.subr.mxu0 0.0
  %538 = vmatpush1.msra.mxu0 0.0
  %539 = vmatprep.subr.mxu0 0.0
  %540 = vmatpush1.msra.mxu0 0.0
  %541 = vmatprep.subr.mxu0 0.0
  %542 = vmatpush1.msra.mxu0 0.0
  %543 = vmatprep.subr.mxu0 0.0
  %544 = vmatpush1.msra.mxu0 0.0
  %545 = vmatprep.subr.mxu0 0.0
  %546 = vmatpush1.msra.mxu0 0.0
  %547 = vmatprep.subr.mxu0 0.0
  %548 = vmatpush1.msra.mxu0 0.0
  %549 = vmatprep.subr.mxu0 0.0
  %550 = vmatpush1.msra.mxu0 0.0
  %551 = vmatprep.subr.mxu0 0.0
  %552 = vmatpush1.msra.mxu0 0.0
  %553 = vmatprep.subr.mxu0 0.0
  %554 = vmatpush1.msra.mxu0 0.0
  %555 = vmatprep.subr.mxu0 0.0
  %556 = vmatpush1.msra.mxu0 0.0
  %557 = vmatprep.subr.mxu0 0.0
  %558 = vmatpush1.msra.mxu0 0.0
  %559 = vmatprep.subr.mxu0 0.0
  %560 = vmatpush1.msra.mxu0 0.0
  %561 = vmatprep.subr.mxu0 0.0
  %562 = vmatpush1.msra.mxu0 0.0
  %563 = vmatprep.subr.mxu0 0.0
  %564 = vmatpush1.msra.mxu0 0.0
  %565 = vmatprep.mubr.f32.mxu0 0.0
  %566 = vmatmul.mubr.f32.gmra.mrb[0].mxu0 %v324
  %v567 = vpop.f32.mrb[0].mxu0
  %v568 = vadd.f32 %v499, %v567
  %v569 = vpop.f32.mrb[0].mxu0
  %570 = vmatprep.mubr.f32.mxu0 0.0
  %571 = vmatmul.mubr.f32.gmra.mrb[0].mxu0 %v327
  %v572 = vpop.f32.mrb[0].mxu0
  %v573 = vadd.f32 %v499, %v572
  %v574 = vpop.f32.mrb[0].mxu0
  %575 = vdwg.mxu0
  %vm576 = vcmask 64512
  %v578 = vsel %vm576, %v396, 0
  %v581 = vsel %vm576, %v482, 0
  %583 = vmatprep.subr.mxu0 0.0
  %584 = vmatpush1.xpose.msra.mxu0 %v581
  %585 = vmatprep.subr.mxu0 0.0
  %586 = vmatpush1.xpose.msra.mxu0 0.0
  %587 = vmatprep.subr.mxu0 0.0
  %588 = vmatpush1.xpose.msra.mxu0 0.0
  %589 = vmatprep.subr.mxu0 0.0
  %590 = vmatpush1.xpose.msra.mxu0 0.0
  %591 = vmatprep.subr.mxu0 0.0
  %592 = vmatpush1.xpose.msra.mxu0 0.0
  %593 = vmatprep.subr.mxu0 0.0
  %594 = vmatpush1.xpose.msra.mxu0 0.0
  %595 = vmatprep.subr.mxu0 0.0
  %596 = vmatpush1.xpose.msra.mxu0 0.0
  %597 = vmatprep.subr.mxu0 0.0
  %598 = vmatpush1.xpose.msra.mxu0 0.0
  %599 = vmatprep.subr.mxu0 0.0
  %600 = vmatpush1.xpose.msra.mxu0 0.0
  %601 = vmatprep.subr.mxu0 0.0
  %602 = vmatpush1.xpose.msra.mxu0 0.0
  %603 = vmatprep.subr.mxu0 0.0
  %604 = vmatpush1.xpose.msra.mxu0 0.0
  %605 = vmatprep.subr.mxu0 0.0
  %606 = vmatpush1.xpose.msra.mxu0 0.0
  %607 = vmatprep.subr.mxu0 0.0
  %608 = vmatpush1.xpose.msra.mxu0 0.0
  %609 = vmatprep.subr.mxu0 0.0
  %610 = vmatpush1.xpose.msra.mxu0 0.0
  %611 = vmatprep.subr.mxu0 0.0
  %612 = vmatpush1.xpose.msra.mxu0 0.0
  %613 = vmatprep.subr.mxu0 0.0
  %614 = vmatpush1.xpose.msra.mxu0 0.0
  %615 = vmatprep.subr.mxu0 0.0
  %616 = vmatpush1.xpose.msra.mxu0 0.0
  %617 = vmatprep.subr.mxu0 0.0
  %618 = vmatpush1.xpose.msra.mxu0 0.0
  %619 = vmatprep.subr.mxu0 0.0
  %620 = vmatpush1.xpose.msra.mxu0 0.0
  %621 = vmatprep.subr.mxu0 0.0
  %622 = vmatpush1.xpose.msra.mxu0 0.0
  %623 = vmatprep.subr.mxu0 0.0
  %624 = vmatpush1.xpose.msra.mxu0 0.0
  %625 = vmatprep.subr.mxu0 0.0
  %626 = vmatpush1.xpose.msra.mxu0 0.0
  %627 = vmatprep.subr.mxu0 0.0
  %628 = vmatpush1.xpose.msra.mxu0 0.0
  %629 = vmatprep.subr.mxu0 0.0
  %630 = vmatpush1.xpose.msra.mxu0 0.0
  %631 = vmatprep.subr.mxu0 0.0
  %632 = vmatpush1.xpose.msra.mxu0 0.0
  %633 = vmatprep.subr.mxu0 0.0
  %634 = vmatpush1.xpose.msra.mxu0 0.0
  %635 = vmatprep.subr.mxu0 0.0
  %636 = vmatpush1.xpose.msra.mxu0 0.0
  %637 = vmatprep.subr.mxu0 0.0
  %638 = vmatpush1.xpose.msra.mxu0 0.0
  %639 = vmatprep.subr.mxu0 0.0
  %640 = vmatpush1.xpose.msra.mxu0 0.0
  %641 = vmatprep.subr.mxu0 0.0
  %642 = vmatpush1.xpose.msra.mxu0 0.0
  %643 = vmatprep.subr.mxu0 0.0
  %644 = vmatpush1.xpose.msra.mxu0 0.0
  %645 = vmatprep.subr.mxu0 0.0
  %646 = vmatpush1.xpose.msra.mxu0 0.0
  %647 = vmatprep.mubr.f32.mxu0 0.0
  %648 = vmatmul.mubr.f32.gmra.mrb[0].mxu0 %v578
  %v649 = vpop.f32.mrb[0].mxu0
  %v650 = vadd.f32 0.0, %v649
  %v651 = vpop.f32.mrb[0].mxu0
  %652 = vdwg.mxu0
  %v654 = vsel %vm576, %v401, 0
  %v657 = vsel %vm576, %v487, 0
  %659 = vmatprep.subr.mxu0 0.0
  %660 = vmatpush1.xpose.msra.mxu0 %v657
  %661 = vmatprep.subr.mxu0 0.0
  %662 = vmatpush1.xpose.msra.mxu0 0.0
  %663 = vmatprep.subr.mxu0 0.0
  %664 = vmatpush1.xpose.msra.mxu0 0.0
  %665 = vmatprep.subr.mxu0 0.0
  %666 = vmatpush1.xpose.msra.mxu0 0.0
  %667 = vmatprep.subr.mxu0 0.0
  %668 = vmatpush1.xpose.msra.mxu0 0.0
  %669 = vmatprep.subr.mxu0 0.0
  %670 = vmatpush1.xpose.msra.mxu0 0.0
  %671 = vmatprep.subr.mxu0 0.0
  %672 = vmatpush1.xpose.msra.mxu0 0.0
  %673 = vmatprep.subr.mxu0 0.0
  %674 = vmatpush1.xpose.msra.mxu0 0.0
  %675 = vmatprep.subr.mxu0 0.0
  %676 = vmatpush1.xpose.msra.mxu0 0.0
  %677 = vmatprep.subr.mxu0 0.0
  %678 = vmatpush1.xpose.msra.mxu0 0.0
  %679 = vmatprep.subr.mxu0 0.0
  %680 = vmatpush1.xpose.msra.mxu0 0.0
  %681 = vmatprep.subr.mxu0 0.0
  %682 = vmatpush1.xpose.msra.mxu0 0.0
  %683 = vmatprep.subr.mxu0 0.0
  %684 = vmatpush1.xpose.msra.mxu0 0.0
  %685 = vmatprep.subr.mxu0 0.0
  %686 = vmatpush1.xpose.msra.mxu0 0.0
  %687 = vmatprep.subr.mxu0 0.0
  %688 = vmatpush1.xpose.msra.mxu0 0.0
  %689 = vmatprep.subr.mxu0 0.0
  %690 = vmatpush1.xpose.msra.mxu0 0.0
  %691 = vmatprep.subr.mxu0 0.0
  %692 = vmatpush1.xpose.msra.mxu0 0.0
  %693 = vmatprep.subr.mxu0 0.0
  %694 = vmatpush1.xpose.msra.mxu0 0.0
  %695 = vmatprep.subr.mxu0 0.0
  %696 = vmatpush1.xpose.msra.mxu0 0.0
  %697 = vmatprep.subr.mxu0 0.0
  %698 = vmatpush1.xpose.msra.mxu0 0.0
  %699 = vmatprep.subr.mxu0 0.0
  %700 = vmatpush1.xpose.msra.mxu0 0.0
  %701 = vmatprep.subr.mxu0 0.0
  %702 = vmatpush1.xpose.msra.mxu0 0.0
  %703 = vmatprep.subr.mxu0 0.0
  %704 = vmatpush1.xpose.msra.mxu0 0.0
  %705 = vmatprep.subr.mxu0 0.0
  %706 = vmatpush1.xpose.msra.mxu0 0.0
  %707 = vmatprep.subr.mxu0 0.0
  %708 = vmatpush1.xpose.msra.mxu0 0.0
  %709 = vmatprep.subr.mxu0 0.0
  %710 = vmatpush1.xpose.msra.mxu0 0.0
  %711 = vmatprep.subr.mxu0 0.0
  %712 = vmatpush1.xpose.msra.mxu0 0.0
  %713 = vmatprep.subr.mxu0 0.0
  %714 = vmatpush1.xpose.msra.mxu0 0.0
  %715 = vmatprep.subr.mxu0 0.0
  %716 = vmatpush1.xpose.msra.mxu0 0.0
  %717 = vmatprep.subr.mxu0 0.0
  %718 = vmatpush1.xpose.msra.mxu0 0.0
  %719 = vmatprep.subr.mxu0 0.0
  %720 = vmatpush1.xpose.msra.mxu0 0.0
  %721 = vmatprep.subr.mxu0 0.0
  %722 = vmatpush1.xpose.msra.mxu0 0.0
  %723 = vmatprep.mubr.f32.mxu0 0.0
  %724 = vmatmul.mubr.f32.gmra.mrb[0].mxu0 %v654
  %v725 = vpop.f32.mrb[0].mxu0
  %v726 = vadd.f32 0.0, %v725
  %v727 = vpop.f32.mrb[0].mxu0
  %728 = vdwg.mxu0
  %v729 = vmul.f32 %v650, 0.35355338
  %v730 = vmul.f32 %v726, 0.35355338
  %v731 = vsel %vm251, 1, 0
  %vm732 = vcmp.eq.s32.totalorder %v731, 1
  %v733 = vsel %vm732, %v729, -1e+10
  %v734 = vsel %vm732, %v730, -1e+10
  %v735 = vsel %vm576, %v733, -inf
  %736 = vmax.xlane.f32.xlu0 %v735
  %v737 = vpop.xlane.xlu0 %736
  %v738 = vsel %vm576, %v734, -inf
  %739 = vmax.xlane.f32.xlu0 %v738
  %v740 = vpop.xlane.xlu0 %739
  %v741 = vsub.f32 %v733, %v737
  %v742 = vsub.f32 %v734, %v740
  %v743 = vmul.f32 %v741, 1.442695
  %v744 = vpow.pop %v743
  %v745 = vmul.f32 %v742, 1.442695
  %v746 = vpow.pop %v745
  %v747 = vsel %vm576, %v744, 0.0
  %748 = vadd.xlane.f32.xlu0 %v747
  %v749 = vpop.xlane.xlu0 %748
  %v750 = vsel %vm576, %v746, 0.0
  %751 = vadd.xlane.f32.xlu0 %v750
  %v752 = vpop.xlane.xlu0 %751
  %v753 = vrcp.pop %v749
  %v754 = vrcp.pop %v752
  %v755 = vmul.f32 %v744, %v753
  %v756 = vmul.f32 %v746, %v754
  %v758 = vsel %vm576, %v755, 0
  %760 = vmatprep.subr.mxu0 0.0
  %761 = vmatpush1.msra.mxu0 %v568
  %762 = vmatprep.subr.mxu0 0.0
  %763 = vmatpush1.msra.mxu0 0.0
  %764 = vmatprep.subr.mxu0 0.0
  %765 = vmatpush1.msra.mxu0 0.0
  %766 = vmatprep.subr.mxu0 0.0
  %767 = vmatpush1.msra.mxu0 0.0
  %768 = vmatprep.subr.mxu0 0.0
  %769 = vmatpush1.msra.mxu0 0.0
  %770 = vmatprep.subr.mxu0 0.0
  %771 = vmatpush1.msra.mxu0 0.0
  %772 = vmatprep.subr.mxu0 0.0
  %773 = vmatpush1.msra.mxu0 0.0
  %774 = vmatprep.subr.mxu0 0.0
  %775 = vmatpush1.msra.mxu0 0.0
  %776 = vmatprep.subr.mxu0 0.0
  %777 = vmatpush1.msra.mxu0 0.0
  %778 = vmatprep.subr.mxu0 0.0
  %779 = vmatpush1.msra.mxu0 0.0
  %780 = vmatprep.subr.mxu0 0.0
  %781 = vmatpush1.msra.mxu0 0.0
  %782 = vmatprep.subr.mxu0 0.0
  %783 = vmatpush1.msra.mxu0 0.0
  %784 = vmatprep.subr.mxu0 0.0
  %785 = vmatpush1.msra.mxu0 0.0
  %786 = vmatprep.subr.mxu0 0.0
  %787 = vmatpush1.msra.mxu0 0.0
  %788 = vmatprep.subr.mxu0 0.0
  %789 = vmatpush1.msra.mxu0 0.0
  %790 = vmatprep.subr.mxu0 0.0
  %791 = vmatpush1.msra.mxu0 0.0
  %792 = vmatprep.subr.mxu0 0.0
  %793 = vmatpush1.msra.mxu0 0.0
  %794 = vmatprep.subr.mxu0 0.0
  %795 = vmatpush1.msra.mxu0 0.0
  %796 = vmatprep.subr.mxu0 0.0
  %797 = vmatpush1.msra.mxu0 0.0
  %798 = vmatprep.subr.mxu0 0.0
  %799 = vmatpush1.msra.mxu0 0.0
  %800 = vmatprep.subr.mxu0 0.0
  %801 = vmatpush1.msra.mxu0 0.0
  %802 = vmatprep.subr.mxu0 0.0
  %803 = vmatpush1.msra.mxu0 0.0
  %804 = vmatprep.subr.mxu0 0.0
  %805 = vmatpush1.msra.mxu0 0.0
  %806 = vmatprep.subr.mxu0 0.0
  %807 = vmatpush1.msra.mxu0 0.0
  %808 = vmatprep.subr.mxu0 0.0
  %809 = vmatpush1.msra.mxu0 0.0
  %810 = vmatprep.subr.mxu0 0.0
  %811 = vmatpush1.msra.mxu0 0.0
  %812 = vmatprep.subr.mxu0 0.0
  %813 = vmatpush1.msra.mxu0 0.0
  %814 = vmatprep.subr.mxu0 0.0
  %815 = vmatpush1.msra.mxu0 0.0
  %816 = vmatprep.subr.mxu0 0.0
  %817 = vmatpush1.msra.mxu0 0.0
  %818 = vmatprep.subr.mxu0 0.0
  %819 = vmatpush1.msra.mxu0 0.0
  %820 = vmatprep.subr.mxu0 0.0
  %821 = vmatpush1.msra.mxu0 0.0
  %822 = vmatprep.subr.mxu0 0.0
  %823 = vmatpush1.msra.mxu0 0.0
  %824 = vmatprep.mubr.f32.mxu0 0.0
  %825 = vmatmul.mubr.f32.gmra.mrb[0].mxu0 %v758
  %v826 = vpop.f32.mrb[0].mxu0
  %v827 = vadd.f32 0.0, %v826
  %v828 = vpop.f32.mrb[0].mxu0
  %829 = vdwg.mxu0
  %v831 = vsel %vm576, %v756, 0
  %833 = vmatprep.subr.mxu0 0.0
  %834 = vmatpush1.msra.mxu0 %v573
  %835 = vmatprep.subr.mxu0 0.0
  %836 = vmatpush1.msra.mxu0 0.0
  %837 = vmatprep.subr.mxu0 0.0
  %838 = vmatpush1.msra.mxu0 0.0
  %839 = vmatprep.subr.mxu0 0.0
  %840 = vmatpush1.msra.mxu0 0.0
  %841 = vmatprep.subr.mxu0 0.0
  %842 = vmatpush1.msra.mxu0 0.0
  %843 = vmatprep.subr.mxu0 0.0
  %844 = vmatpush1.msra.mxu0 0.0
  %845 = vmatprep.subr.mxu0 0.0
  %846 = vmatpush1.msra.mxu0 0.0
  %847 = vmatprep.subr.mxu0 0.0
  %848 = vmatpush1.msra.mxu0 0.0
  %849 = vmatprep.subr.mxu0 0.0
  %850 = vmatpush1.msra.mxu0 0.0
  %851 = vmatprep.subr.mxu0 0.0
  %852 = vmatpush1.msra.mxu0 0.0
  %853 = vmatprep.subr.mxu0 0.0
  %854 = vmatpush1.msra.mxu0 0.0
  %855 = vmatprep.subr.mxu0 0.0
  %856 = vmatpush1.msra.mxu0 0.0
  %857 = vmatprep.subr.mxu0 0.0
  %858 = vmatpush1.msra.mxu0 0.0
  %859 = vmatprep.subr.mxu0 0.0
  %860 = vmatpush1.msra.mxu0 0.0
  %861 = vmatprep.subr.mxu0 0.0
  %862 = vmatpush1.msra.mxu0 0.0
  %863 = vmatprep.subr.mxu0 0.0
  %864 = vmatpush1.msra.mxu0 0.0
  %865 = vmatprep.subr.mxu0 0.0
  %866 = vmatpush1.msra.mxu0 0.0
  %867 = vmatprep.subr.mxu0 0.0
  %868 = vmatpush1.msra.mxu0 0.0
  %869 = vmatprep.subr.mxu0 0.0
  %870 = vmatpush1.msra.mxu0 0.0
  %871 = vmatprep.subr.mxu0 0.0
  %872 = vmatpush1.msra.mxu0 0.0
  %873 = vmatprep.subr.mxu0 0.0
  %874 = vmatpush1.msra.mxu0 0.0
  %875 = vmatprep.subr.mxu0 0.0
  %876 = vmatpush1.msra.mxu0 0.0
  %877 = vmatprep.subr.mxu0 0.0
  %878 = vmatpush1.msra.mxu0 0.0
  %879 = vmatprep.subr.mxu0 0.0
  %880 = vmatpush1.msra.mxu0 0.0
  %881 = vmatprep.subr.mxu0 0.0
  %882 = vmatpush1.msra.mxu0 0.0
  %883 = vmatprep.subr.mxu0 0.0
  %884 = vmatpush1.msra.mxu0 0.0
  %885 = vmatprep.subr.mxu0 0.0
  %886 = vmatpush1.msra.mxu0 0.0
  %887 = vmatprep.subr.mxu0 0.0
  %888 = vmatpush1.msra.mxu0 0.0
  %889 = vmatprep.subr.mxu0 0.0
  %890 = vmatpush1.msra.mxu0 0.0
  %891 = vmatprep.subr.mxu0 0.0
  %892 = vmatpush1.msra.mxu0 0.0
  %893 = vmatprep.subr.mxu0 0.0
  %894 = vmatpush1.msra.mxu0 0.0
  %895 = vmatprep.subr.mxu0 0.0
  %896 = vmatpush1.msra.mxu0 0.0
  %897 = vmatprep.mubr.f32.mxu0 0.0
  %898 = vmatmul.mubr.f32.gmra.mrb[0].mxu0 %v831
  %v899 = vpop.f32.mrb[0].mxu0
  %v900 = vadd.f32 0.0, %v899
  %v901 = vpop.f32.mrb[0].mxu0
  %902 = vdwg.mxu0
  %v903 = vld [vmem:[%s29] sm:$0xff]
  %s904 = scalar_lea.vmem %s17, 32
  %v905 = vld [vmem:[%s904] sm:$0xff]
  %v906 = vld [vmem:[%s904 + $0x8] sm:$0xff]
  %v907 = vld [vmem:[%s904 + $0x10] sm:$0xff]
  %v908 = vld [vmem:[%s904 + $0x18] sm:$0xff]
  %s909 = scalar_lea.vmem %s19, 1
  %v910 = vld [vmem:[%s909] sm:$0x1]
  %v912 = vlaneseq
  %v913 = vshrl.u32 %v912, 7
  %v914 = vsub.s32 0, %v913
  %v915 = vrot.slane %v910, %v914
  %917 = vmatprep.subr.mxu0 0.0
  %918 = vmatpush1.msra.mxu0 %v905
  %919 = vmatprep.subr.mxu0 0.0
  %920 = vmatpush1.msra.mxu0 %v906
  %921 = vmatprep.subr.mxu0 0.0
  %922 = vmatpush1.msra.mxu0 %v907
  %923 = vmatprep.subr.mxu0 0.0
  %924 = vmatpush1.msra.mxu0 %v908
  %925 = vmatprep.subr.mxu0 0.0
  %926 = vmatpush1.msra.mxu0 0.0
  %927 = vmatprep.subr.mxu0 0.0
  %928 = vmatpush1.msra.mxu0 0.0
  %929 = vmatprep.subr.mxu0 0.0
  %930 = vmatpush1.msra.mxu0 0.0
  %931 = vmatprep.subr.mxu0 0.0
  %932 = vmatpush1.msra.mxu0 0.0
  %933 = vmatprep.subr.mxu0 0.0
  %934 = vmatpush1.msra.mxu0 0.0
  %935 = vmatprep.subr.mxu0 0.0
  %936 = vmatpush1.msra.mxu0 0.0
  %937 = vmatprep.subr.mxu0 0.0
  %938 = vmatpush1.msra.mxu0 0.0
  %939 = vmatprep.subr.mxu0 0.0
  %940 = vmatpush1.msra.mxu0 0.0
  %941 = vmatprep.subr.mxu0 0.0
  %942 = vmatpush1.msra.mxu0 0.0
  %943 = vmatprep.subr.mxu0 0.0
  %944 = vmatpush1.msra.mxu0 0.0
  %945 = vmatprep.subr.mxu0 0.0
  %946 = vmatpush1.msra.mxu0 0.0
  %947 = vmatprep.subr.mxu0 0.0
  %948 = vmatpush1.msra.mxu0 0.0
  %949 = vmatprep.subr.mxu0 0.0
  %950 = vmatpush1.msra.mxu0 0.0
  %951 = vmatprep.subr.mxu0 0.0
  %952 = vmatpush1.msra.mxu0 0.0
  %953 = vmatprep.subr.mxu0 0.0
  %954 = vmatpush1.msra.mxu0 0.0
  %955 = vmatprep.subr.mxu0 0.0
  %956 = vmatpush1.msra.mxu0 0.0
  %957 = vmatprep.subr.mxu0 0.0
  %958 = vmatpush1.msra.mxu0 0.0
  %959 = vmatprep.subr.mxu0 0.0
  %960 = vmatpush1.msra.mxu0 0.0
  %961 = vmatprep.subr.mxu0 0.0
  %962 = vmatpush1.msra.mxu0 0.0
  %963 = vmatprep.subr.mxu0 0.0
  %964 = vmatpush1.msra.mxu0 0.0
  %965 = vmatprep.subr.mxu0 0.0
  %966 = vmatpush1.msra.mxu0 0.0
  %967 = vmatprep.subr.mxu0 0.0
  %968 = vmatpush1.msra.mxu0 0.0
  %969 = vmatprep.subr.mxu0 0.0
  %970 = vmatpush1.msra.mxu0 0.0
  %971 = vmatprep.subr.mxu0 0.0
  %972 = vmatpush1.msra.mxu0 0.0
  %973 = vmatprep.subr.mxu0 0.0
  %974 = vmatpush1.msra.mxu0 0.0
  %975 = vmatprep.subr.mxu0 0.0
  %976 = vmatpush1.msra.mxu0 0.0
  %977 = vmatprep.subr.mxu0 0.0
  %978 = vmatpush1.msra.mxu0 0.0
  %979 = vmatprep.subr.mxu0 0.0
  %980 = vmatpush1.msra.mxu0 0.0
  %981 = vmatprep.mubr.f32.mxu0 0.0
  %982 = vmatmul.mubr.f32.gmra.mrb[0].mxu0 %v324
  %v983 = vpop.f32.mrb[0].mxu0
  %v984 = vadd.f32 %v915, %v983
  %v985 = vpop.f32.mrb[0].mxu0
  %986 = vmatprep.mubr.f32.mxu0 0.0
  %987 = vmatmul.mubr.f32.gmra.mrb[0].mxu0 %v327
  %v988 = vpop.f32.mrb[0].mxu0
  %v989 = vadd.f32 %v915, %v988
  %v990 = vpop.f32.mrb[0].mxu0
  %991 = vdwg.mxu0
  %s992 = scalar_lea.vmem %s21, 32
  %v993 = vld [vmem:[%s992] sm:$0xff]
  %v994 = vld [vmem:[%s992 + $0x8] sm:$0xff]
  %v995 = vld [vmem:[%s992 + $0x10] sm:$0xff]
  %v996 = vld [vmem:[%s992 + $0x18] sm:$0xff]
  %s997 = scalar_lea.vmem %s23, 1
  %v998 = vld [vmem:[%s997] sm:$0x1]
  %v1000 = vlaneseq
  %v1001 = vshrl.u32 %v1000, 7
  %v1002 = vsub.s32 0, %v1001
  %v1003 = vrot.slane %v998, %v1002
  %1005 = vmatprep.subr.mxu0 0.0
  %1006 = vmatpush1.msra.mxu0 %v993
  %1007 = vmatprep.subr.mxu0 0.0
  %1008 = vmatpush1.msra.mxu0 %v994
  %1009 = vmatprep.subr.mxu0 0.0
  %1010 = vmatpush1.msra.mxu0 %v995
  %1011 = vmatprep.subr.mxu0 0.0
  %1012 = vmatpush1.msra.mxu0 %v996
  %1013 = vmatprep.subr.mxu0 0.0
  %1014 = vmatpush1.msra.mxu0 0.0
  %1015 = vmatprep.subr.mxu0 0.0
  %1016 = vmatpush1.msra.mxu0 0.0
  %1017 = vmatprep.subr.mxu0 0.0
  %1018 = vmatpush1.msra.mxu0 0.0
  %1019 = vmatprep.subr.mxu0 0.0
  %1020 = vmatpush1.msra.mxu0 0.0
  %1021 = vmatprep.subr.mxu0 0.0
  %1022 = vmatpush1.msra.mxu0 0.0
  %1023 = vmatprep.subr.mxu0 0.0
  %1024 = vmatpush1.msra.mxu0 0.0
  %1025 = vmatprep.subr.mxu0 0.0
  %1026 = vmatpush1.msra.mxu0 0.0
  %1027 = vmatprep.subr.mxu0 0.0
  %1028 = vmatpush1.msra.mxu0 0.0
  %1029 = vmatprep.subr.mxu0 0.0
  %1030 = vmatpush1.msra.mxu0 0.0
  %1031 = vmatprep.subr.mxu0 0.0
  %1032 = vmatpush1.msra.mxu0 0.0
  %1033 = vmatprep.subr.mxu0 0.0
  %1034 = vmatpush1.msra.mxu0 0.0
  %1035 = vmatprep.subr.mxu0 0.0
  %1036 = vmatpush1.msra.mxu0 0.0
  %1037 = vmatprep.subr.mxu0 0.0
  %1038 = vmatpush1.msra.mxu0 0.0
  %1039 = vmatprep.subr.mxu0 0.0
  %1040 = vmatpush1.msra.mxu0 0.0
  %1041 = vmatprep.subr.mxu0 0.0
  %1042 = vmatpush1.msra.mxu0 0.0
  %1043 = vmatprep.subr.mxu0 0.0
  %1044 = vmatpush1.msra.mxu0 0.0
  %1045 = vmatprep.subr.mxu0 0.0
  %1046 = vmatpush1.msra.mxu0 0.0
  %1047 = vmatprep.subr.mxu0 0.0
  %1048 = vmatpush1.msra.mxu0 0.0
  %1049 = vmatprep.subr.mxu0 0.0
  %1050 = vmatpush1.msra.mxu0 0.0
  %1051 = vmatprep.subr.mxu0 0.0
  %1052 = vmatpush1.msra.mxu0 0.0
  %1053 = vmatprep.subr.mxu0 0.0
  %1054 = vmatpush1.msra.mxu0 0.0
  %1055 = vmatprep.subr.mxu0 0.0
  %1056 = vmatpush1.msra.mxu0 0.0
  %1057 = vmatprep.subr.mxu0 0.0
  %1058 = vmatpush1.msra.mxu0 0.0
  %1059 = vmatprep.subr.mxu0 0.0
  %1060 = vmatpush1.msra.mxu0 0.0
  %1061 = vmatprep.subr.mxu0 0.0
  %1062 = vmatpush1.msra.mxu0 0.0
  %1063 = vmatprep.subr.mxu0 0.0
  %1064 = vmatpush1.msra.mxu0 0.0
  %1065 = vmatprep.subr.mxu0 0.0
  %1066 = vmatpush1.msra.mxu0 0.0
  %1067 = vmatprep.subr.mxu0 0.0
  %1068 = vmatpush1.msra.mxu0 0.0
  %1069 = vmatprep.mubr.f32.mxu0 0.0
  %1070 = vmatmul.mubr.f32.gmra.mrb[0].mxu0 %v324
  %v1071 = vpop.f32.mrb[0].mxu0
  %v1072 = vadd.f32 %v1003, %v1071
  %v1073 = vpop.f32.mrb[0].mxu0
  %1074 = vmatprep.mubr.f32.mxu0 0.0
  %1075 = vmatmul.mubr.f32.gmra.mrb[0].mxu0 %v327
  %v1076 = vpop.f32.mrb[0].mxu0
  %v1077 = vadd.f32 %v1003, %v1076
  %v1078 = vpop.f32.mrb[0].mxu0
  %1079 = vdwg.mxu0
  %s1080 = scalar_lea.vmem %s25, 32
  %v1081 = vld [vmem:[%s1080] sm:$0xff]
  %v1082 = vld [vmem:[%s1080 + $0x8] sm:$0xff]
  %v1083 = vld [vmem:[%s1080 + $0x10] sm:$0xff]
  %v1084 = vld [vmem:[%s1080 + $0x18] sm:$0xff]
  %s1085 = scalar_lea.vmem %s27, 1
  %v1086 = vld [vmem:[%s1085] sm:$0x1]
  %v1088 = vlaneseq
  %v1089 = vshrl.u32 %v1088, 7
  %v1090 = vsub.s32 0, %v1089
  %v1091 = vrot.slane %v1086, %v1090
  %1093 = vmatprep.subr.mxu0 0.0
  %1094 = vmatpush1.msra.mxu0 %v1081
  %1095 = vmatprep.subr.mxu0 0.0
  %1096 = vmatpush1.msra.mxu0 %v1082
  %1097 = vmatprep.subr.mxu0 0.0
  %1098 = vmatpush1.msra.mxu0 %v1083
  %1099 = vmatprep.subr.mxu0 0.0
  %1100 = vmatpush1.msra.mxu0 %v1084
  %1101 = vmatprep.subr.mxu0 0.0
  %1102 = vmatpush1.msra.mxu0 0.0
  %1103 = vmatprep.subr.mxu0 0.0
  %1104 = vmatpush1.msra.mxu0 0.0
  %1105 = vmatprep.subr.mxu0 0.0
  %1106 = vmatpush1.msra.mxu0 0.0
  %1107 = vmatprep.subr.mxu0 0.0
  %1108 = vmatpush1.msra.mxu0 0.0
  %1109 = vmatprep.subr.mxu0 0.0
  %1110 = vmatpush1.msra.mxu0 0.0
  %1111 = vmatprep.subr.mxu0 0.0
  %1112 = vmatpush1.msra.mxu0 0.0
  %1113 = vmatprep.subr.mxu0 0.0
  %1114 = vmatpush1.msra.mxu0 0.0
  %1115 = vmatprep.subr.mxu0 0.0
  %1116 = vmatpush1.msra.mxu0 0.0
  %1117 = vmatprep.subr.mxu0 0.0
  %1118 = vmatpush1.msra.mxu0 0.0
  %1119 = vmatprep.subr.mxu0 0.0
  %1120 = vmatpush1.msra.mxu0 0.0
  %1121 = vmatprep.subr.mxu0 0.0
  %1122 = vmatpush1.msra.mxu0 0.0
  %1123 = vmatprep.subr.mxu0 0.0
  %1124 = vmatpush1.msra.mxu0 0.0
  %1125 = vmatprep.subr.mxu0 0.0
  %1126 = vmatpush1.msra.mxu0 0.0
  %1127 = vmatprep.subr.mxu0 0.0
  %1128 = vmatpush1.msra.mxu0 0.0
  %1129 = vmatprep.subr.mxu0 0.0
  %1130 = vmatpush1.msra.mxu0 0.0
  %1131 = vmatprep.subr.mxu0 0.0
  %1132 = vmatpush1.msra.mxu0 0.0
  %1133 = vmatprep.subr.mxu0 0.0
  %1134 = vmatpush1.msra.mxu0 0.0
  %1135 = vmatprep.subr.mxu0 0.0
  %1136 = vmatpush1.msra.mxu0 0.0
  %1137 = vmatprep.subr.mxu0 0.0
  %1138 = vmatpush1.msra.mxu0 0.0
  %1139 = vmatprep.subr.mxu0 0.0
  %1140 = vmatpush1.msra.mxu0 0.0
  %1141 = vmatprep.subr.mxu0 0.0
  %1142 = vmatpush1.msra.mxu0 0.0
  %1143 = vmatprep.subr.mxu0 0.0
  %1144 = vmatpush1.msra.mxu0 0.0
  %1145 = vmatprep.subr.mxu0 0.0
  %1146 = vmatpush1.msra.mxu0 0.0
  %1147 = vmatprep.subr.mxu0 0.0
  %1148 = vmatpush1.msra.mxu0 0.0
  %1149 = vmatprep.subr.mxu0 0.0
  %1150 = vmatpush1.msra.mxu0 0.0
  %1151 = vmatprep.subr.mxu0 0.0
  %1152 = vmatpush1.msra.mxu0 0.0
  %1153 = vmatprep.subr.mxu0 0.0
  %1154 = vmatpush1.msra.mxu0 0.0
  %1155 = vmatprep.subr.mxu0 0.0
  %1156 = vmatpush1.msra.mxu0 0.0
  %1157 = vmatprep.mubr.f32.mxu0 0.0
  %1158 = vmatmul.mubr.f32.gmra.mrb[0].mxu0 %v324
  %v1159 = vpop.f32.mrb[0].mxu0
  %v1160 = vadd.f32 %v1091, %v1159
  %v1161 = vpop.f32.mrb[0].mxu0
  %1162 = vmatprep.mubr.f32.mxu0 0.0
  %1163 = vmatmul.mubr.f32.gmra.mrb[0].mxu0 %v327
  %v1164 = vpop.f32.mrb[0].mxu0
  %v1165 = vadd.f32 %v1091, %v1164
  %v1166 = vpop.f32.mrb[0].mxu0
  %1167 = vdwg.mxu0
  %v1169 = vsel %vm576, %v984, 0
  %v1172 = vsel %vm576, %v1072, 0
  %1174 = vmatprep.subr.mxu0 0.0
  %1175 = vmatpush1.xpose.msra.mxu0 %v1172
  %1176 = vmatprep.subr.mxu0 0.0
  %1177 = vmatpush1.xpose.msra.mxu0 0.0
  %1178 = vmatprep.subr.mxu0 0.0
  %1179 = vmatpush1.xpose.msra.mxu0 0.0
  %1180 = vmatprep.subr.mxu0 0.0
  %1181 = vmatpush1.xpose.msra.mxu0 0.0
  %1182 = vmatprep.subr.mxu0 0.0
  %1183 = vmatpush1.xpose.msra.mxu0 0.0
  %1184 = vmatprep.subr.mxu0 0.0
  %1185 = vmatpush1.xpose.msra.mxu0 0.0
  %1186 = vmatprep.subr.mxu0 0.0
  %1187 = vmatpush1.xpose.msra.mxu0 0.0
  %1188 = vmatprep.subr.mxu0 0.0
  %1189 = vmatpush1.xpose.msra.mxu0 0.0
  %1190 = vmatprep.subr.mxu0 0.0
  %1191 = vmatpush1.xpose.msra.mxu0 0.0
  %1192 = vmatprep.subr.mxu0 0.0
  %1193 = vmatpush1.xpose.msra.mxu0 0.0
  %1194 = vmatprep.subr.mxu0 0.0
  %1195 = vmatpush1.xpose.msra.mxu0 0.0
  %1196 = vmatprep.subr.mxu0 0.0
  %1197 = vmatpush1.xpose.msra.mxu0 0.0
  %1198 = vmatprep.subr.mxu0 0.0
  %1199 = vmatpush1.xpose.msra.mxu0 0.0
  %1200 = vmatprep.subr.mxu0 0.0
  %1201 = vmatpush1.xpose.msra.mxu0 0.0
  %1202 = vmatprep.subr.mxu0 0.0
  %1203 = vmatpush1.xpose.msra.mxu0 0.0
  %1204 = vmatprep.subr.mxu0 0.0
  %1205 = vmatpush1.xpose.msra.mxu0 0.0
  %1206 = vmatprep.subr.mxu0 0.0
  %1207 = vmatpush1.xpose.msra.mxu0 0.0
  %1208 = vmatprep.subr.mxu0 0.0
  %1209 = vmatpush1.xpose.msra.mxu0 0.0
  %1210 = vmatprep.subr.mxu0 0.0
  %1211 = vmatpush1.xpose.msra.mxu0 0.0
  %1212 = vmatprep.subr.mxu0 0.0
  %1213 = vmatpush1.xpose.msra.mxu0 0.0
  %1214 = vmatprep.subr.mxu0 0.0
  %1215 = vmatpush1.xpose.msra.mxu0 0.0
  %1216 = vmatprep.subr.mxu0 0.0
  %1217 = vmatpush1.xpose.msra.mxu0 0.0
  %1218 = vmatprep.subr.mxu0 0.0
  %1219 = vmatpush1.xpose.msra.mxu0 0.0
  %1220 = vmatprep.subr.mxu0 0.0
  %1221 = vmatpush1.xpose.msra.mxu0 0.0
  %1222 = vmatprep.subr.mxu0 0.0
  %1223 = vmatpush1.xpose.msra.mxu0 0.0
  %1224 = vmatprep.subr.mxu0 0.0
  %1225 = vmatpush1.xpose.msra.mxu0 0.0
  %1226 = vmatprep.subr.mxu0 0.0
  %1227 = vmatpush1.xpose.msra.mxu0 0.0
  %1228 = vmatprep.subr.mxu0 0.0
  %1229 = vmatpush1.xpose.msra.mxu0 0.0
  %1230 = vmatprep.subr.mxu0 0.0
  %1231 = vmatpush1.xpose.msra.mxu0 0.0
  %1232 = vmatprep.subr.mxu0 0.0
  %1233 = vmatpush1.xpose.msra.mxu0 0.0
  %1234 = vmatprep.subr.mxu0 0.0
  %1235 = vmatpush1.xpose.msra.mxu0 0.0
  %1236 = vmatprep.subr.mxu0 0.0
  %1237 = vmatpush1.xpose.msra.mxu0 0.0
  %1238 = vmatprep.mubr.f32.mxu0 0.0
  %1239 = vmatmul.mubr.f32.gmra.mrb[0].mxu0 %v1169
  %v1240 = vpop.f32.mrb[0].mxu0
  %v1241 = vadd.f32 0.0, %v1240
  %v1242 = vpop.f32.mrb[0].mxu0
  %1243 = vdwg.mxu0
  %v1245 = vsel %vm576, %v989, 0
  %v1248 = vsel %vm576, %v1077, 0
  %1250 = vmatprep.subr.mxu0 0.0
  %1251 = vmatpush1.xpose.msra.mxu0 %v1248
  %1252 = vmatprep.subr.mxu0 0.0
  %1253 = vmatpush1.xpose.msra.mxu0 0.0
  %1254 = vmatprep.subr.mxu0 0.0
  %1255 = vmatpush1.xpose.msra.mxu0 0.0
  %1256 = vmatprep.subr.mxu0 0.0
  %1257 = vmatpush1.xpose.msra.mxu0 0.0
  %1258 = vmatprep.subr.mxu0 0.0
  %1259 = vmatpush1.xpose.msra.mxu0 0.0
  %1260 = vmatprep.subr.mxu0 0.0
  %1261 = vmatpush1.xpose.msra.mxu0 0.0
  %1262 = vmatprep.subr.mxu0 0.0
  %1263 = vmatpush1.xpose.msra.mxu0 0.0
  %1264 = vmatprep.subr.mxu0 0.0
  %1265 = vmatpush1.xpose.msra.mxu0 0.0
  %1266 = vmatprep.subr.mxu0 0.0
  %1267 = vmatpush1.xpose.msra.mxu0 0.0
  %1268 = vmatprep.subr.mxu0 0.0
  %1269 = vmatpush1.xpose.msra.mxu0 0.0
  %1270 = vmatprep.subr.mxu0 0.0
  %1271 = vmatpush1.xpose.msra.mxu0 0.0
  %1272 = vmatprep.subr.mxu0 0.0
  %1273 = vmatpush1.xpose.msra.mxu0 0.0
  %1274 = vmatprep.subr.mxu0 0.0
  %1275 = vmatpush1.xpose.msra.mxu0 0.0
  %1276 = vmatprep.subr.mxu0 0.0
  %1277 = vmatpush1.xpose.msra.mxu0 0.0
  %1278 = vmatprep.subr.mxu0 0.0
  %1279 = vmatpush1.xpose.msra.mxu0 0.0
  %1280 = vmatprep.subr.mxu0 0.0
  %1281 = vmatpush1.xpose.msra.mxu0 0.0
  %1282 = vmatprep.subr.mxu0 0.0
  %1283 = vmatpush1.xpose.msra.mxu0 0.0
  %1284 = vmatprep.subr.mxu0 0.0
  %1285 = vmatpush1.xpose.msra.mxu0 0.0
  %1286 = vmatprep.subr.mxu0 0.0
  %1287 = vmatpush1.xpose.msra.mxu0 0.0
  %1288 = vmatprep.subr.mxu0 0.0
  %1289 = vmatpush1.xpose.msra.mxu0 0.0
  %1290 = vmatprep.subr.mxu0 0.0
  %1291 = vmatpush1.xpose.msra.mxu0 0.0
  %1292 = vmatprep.subr.mxu0 0.0
  %1293 = vmatpush1.xpose.msra.mxu0 0.0
  %1294 = vmatprep.subr.mxu0 0.0
  %1295 = vmatpush1.xpose.msra.mxu0 0.0
  %1296 = vmatprep.subr.mxu0 0.0
  %1297 = vmatpush1.xpose.msra.mxu0 0.0
  %1298 = vmatprep.subr.mxu0 0.0
  %1299 = vmatpush1.xpose.msra.mxu0 0.0
  %1300 = vmatprep.subr.mxu0 0.0
  %1301 = vmatpush1.xpose.msra.mxu0 0.0
  %1302 = vmatprep.subr.mxu0 0.0
  %1303 = vmatpush1.xpose.msra.mxu0 0.0
  %1304 = vmatprep.subr.mxu0 0.0
  %1305 = vmatpush1.xpose.msra.mxu0 0.0
  %1306 = vmatprep.subr.mxu0 0.0
  %1307 = vmatpush1.xpose.msra.mxu0 0.0
  %1308 = vmatprep.subr.mxu0 0.0
  %1309 = vmatpush1.xpose.msra.mxu0 0.0
  %1310 = vmatprep.subr.mxu0 0.0
  %1311 = vmatpush1.xpose.msra.mxu0 0.0
  %1312 = vmatprep.subr.mxu0 0.0
  %1313 = vmatpush1.xpose.msra.mxu0 0.0
  %1314 = vmatprep.mubr.f32.mxu0 0.0
  %1315 = vmatmul.mubr.f32.gmra.mrb[0].mxu0 %v1245
  %v1316 = vpop.f32.mrb[0].mxu0
  %v1317 = vadd.f32 0.0, %v1316
  %v1318 = vpop.f32.mrb[0].mxu0
  %1319 = vdwg.mxu0
  %v1320 = vmul.f32 %v1241, 0.35355338
  %v1321 = vmul.f32 %v1317, 0.35355338
  %v1322 = vsel %vm732, %v1320, -1e+10
  %v1323 = vsel %vm732, %v1321, -1e+10
  %v1324 = vsel %vm576, %v1322, -inf
  %1325 = vmax.xlane.f32.xlu0 %v1324
  %v1326 = vpop.xlane.xlu0 %1325
  %v1327 = vsel %vm576, %v1323, -inf
  %1328 = vmax.xlane.f32.xlu0 %v1327
  %v1329 = vpop.xlane.xlu0 %1328
  %v1330 = vsub.f32 %v1322, %v1326
  %v1331 = vsub.f32 %v1323, %v1329
  %v1332 = vmul.f32 %v1330, 1.442695
  %v1333 = vpow.pop %v1332
  %v1334 = vmul.f32 %v1331, 1.442695
  %v1335 = vpow.pop %v1334
  %v1336 = vsel %vm576, %v1333, 0.0
  %1337 = vadd.xlane.f32.xlu0 %v1336
  %v1338 = vpop.xlane.xlu0 %1337
  %v1339 = vsel %vm576, %v1335, 0.0
  %1340 = vadd.xlane.f32.xlu0 %v1339
  %v1341 = vpop.xlane.xlu0 %1340
  %v1342 = vrcp.pop %v1338
  %v1343 = vrcp.pop %v1341
  %v1344 = vmul.f32 %v1333, %v1342
  %v1345 = vmul.f32 %v1335, %v1343
  %v1347 = vsel %vm576, %v1344, 0
  %1349 = vmatprep.subr.mxu0 0.0
  %1350 = vmatpush1.msra.mxu0 %v1160
  %1351 = vmatprep.subr.mxu0 0.0
  %1352 = vmatpush1.msra.mxu0 0.0
  %1353 = vmatprep.subr.mxu0 0.0
  %1354 = vmatpush1.msra.mxu0 0.0
  %1355 = vmatprep.subr.mxu0 0.0
  %1356 = vmatpush1.msra.mxu0 0.0
  %1357 = vmatprep.subr.mxu0 0.0
  %1358 = vmatpush1.msra.mxu0 0.0
  %1359 = vmatprep.subr.mxu0 0.0
  %1360 = vmatpush1.msra.mxu0 0.0
  %1361 = vmatprep.subr.mxu0 0.0
  %1362 = vmatpush1.msra.mxu0 0.0
  %1363 = vmatprep.subr.mxu0 0.0
  %1364 = vmatpush1.msra.mxu0 0.0
  %1365 = vmatprep.subr.mxu0 0.0
  %1366 = vmatpush1.msra.mxu0 0.0
  %1367 = vmatprep.subr.mxu0 0.0
  %1368 = vmatpush1.msra.mxu0 0.0
  %1369 = vmatprep.subr.mxu0 0.0
  %1370 = vmatpush1.msra.mxu0 0.0
  %1371 = vmatprep.subr.mxu0 0.0
  %1372 = vmatpush1.msra.mxu0 0.0
  %1373 = vmatprep.subr.mxu0 0.0
  %1374 = vmatpush1.msra.mxu0 0.0
  %1375 = vmatprep.subr.mxu0 0.0
  %1376 = vmatpush1.msra.mxu0 0.0
  %1377 = vmatprep.subr.mxu0 0.0
  %1378 = vmatpush1.msra.mxu0 0.0
  %1379 = vmatprep.subr.mxu0 0.0
  %1380 = vmatpush1.msra.mxu0 0.0
  %1381 = vmatprep.subr.mxu0 0.0
  %1382 = vmatpush1.msra.mxu0 0.0
  %1383 = vmatprep.subr.mxu0 0.0
  %1384 = vmatpush1.msra.mxu0 0.0
  %1385 = vmatprep.subr.mxu0 0.0
  %1386 = vmatpush1.msra.mxu0 0.0
  %1387 = vmatprep.subr.mxu0 0.0
  %1388 = vmatpush1.msra.mxu0 0.0
  %1389 = vmatprep.subr.mxu0 0.0
  %1390 = vmatpush1.msra.mxu0 0.0
  %1391 = vmatprep.subr.mxu0 0.0
  %1392 = vmatpush1.msra.mxu0 0.0
  %1393 = vmatprep.subr.mxu0 0.0
  %1394 = vmatpush1.msra.mxu0 0.0
  %1395 = vmatprep.subr.mxu0 0.0
  %1396 = vmatpush1.msra.mxu0 0.0
  %1397 = vmatprep.subr.mxu0 0.0
  %1398 = vmatpush1.msra.mxu0 0.0
  %1399 = vmatprep.subr.mxu0 0.0
  %1400 = vmatpush1.msra.mxu0 0.0
  %1401 = vmatprep.subr.mxu0 0.0
  %1402 = vmatpush1.msra.mxu0 0.0
  %1403 = vmatprep.subr.mxu0 0.0
  %1404 = vmatpush1.msra.mxu0 0.0
  %1405 = vmatprep.subr.mxu0 0.0
  %1406 = vmatpush1.msra.mxu0 0.0
  %1407 = vmatprep.subr.mxu0 0.0
  %1408 = vmatpush1.msra.mxu0 0.0
  %1409 = vmatprep.subr.mxu0 0.0
  %1410 = vmatpush1.msra.mxu0 0.0
  %1411 = vmatprep.subr.mxu0 0.0
  %1412 = vmatpush1.msra.mxu0 0.0
  %1413 = vmatprep.mubr.f32.mxu0 0.0
  %1414 = vmatmul.mubr.f32.gmra.mrb[0].mxu0 %v1347
  %v1415 = vpop.f32.mrb[0].mxu0
  %v1416 = vadd.f32 0.0, %v1415
  %v1417 = vpop.f32.mrb[0].mxu0
  %1418 = vdwg.mxu0
  %v1420 = vsel %vm576, %v1345, 0
  %1422 = vmatprep.subr.mxu0 0.0
  %1423 = vmatpush1.msra.mxu0 %v1165
  %1424 = vmatprep.subr.mxu0 0.0
  %1425 = vmatpush1.msra.mxu0 0.0
  %1426 = vmatprep.subr.mxu0 0.0
  %1427 = vmatpush1.msra.mxu0 0.0
  %1428 = vmatprep.subr.mxu0 0.0
  %1429 = vmatpush1.msra.mxu0 0.0
  %1430 = vmatprep.subr.mxu0 0.0
  %1431 = vmatpush1.msra.mxu0 0.0
  %1432 = vmatprep.subr.mxu0 0.0
  %1433 = vmatpush1.msra.mxu0 0.0
  %1434 = vmatprep.subr.mxu0 0.0
  %1435 = vmatpush1.msra.mxu0 0.0
  %1436 = vmatprep.subr.mxu0 0.0
  %1437 = vmatpush1.msra.mxu0 0.0
  %1438 = vmatprep.subr.mxu0 0.0
  %1439 = vmatpush1.msra.mxu0 0.0
  %1440 = vmatprep.subr.mxu0 0.0
  %1441 = vmatpush1.msra.mxu0 0.0
  %1442 = vmatprep.subr.mxu0 0.0
  %1443 = vmatpush1.msra.mxu0 0.0
  %1444 = vmatprep.subr.mxu0 0.0
  %1445 = vmatpush1.msra.mxu0 0.0
  %1446 = vmatprep.subr.mxu0 0.0
  %1447 = vmatpush1.msra.mxu0 0.0
  %1448 = vmatprep.subr.mxu0 0.0
  %1449 = vmatpush1.msra.mxu0 0.0
  %1450 = vmatprep.subr.mxu0 0.0
  %1451 = vmatpush1.msra.mxu0 0.0
  %1452 = vmatprep.subr.mxu0 0.0
  %1453 = vmatpush1.msra.mxu0 0.0
  %1454 = vmatprep.subr.mxu0 0.0
  %1455 = vmatpush1.msra.mxu0 0.0
  %1456 = vmatprep.subr.mxu0 0.0
  %1457 = vmatpush1.msra.mxu0 0.0
  %1458 = vmatprep.subr.mxu0 0.0
  %1459 = vmatpush1.msra.mxu0 0.0
  %1460 = vmatprep.subr.mxu0 0.0
  %1461 = vmatpush1.msra.mxu0 0.0
  %1462 = vmatprep.subr.mxu0 0.0
  %1463 = vmatpush1.msra.mxu0 0.0
  %1464 = vmatprep.subr.mxu0 0.0
  %1465 = vmatpush1.msra.mxu0 0.0
  %1466 = vmatprep.subr.mxu0 0.0
  %1467 = vmatpush1.msra.mxu0 0.0
  %1468 = vmatprep.subr.mxu0 0.0
  %1469 = vmatpush1.msra.mxu0 0.0
  %1470 = vmatprep.subr.mxu0 0.0
  %1471 = vmatpush1.msra.mxu0 0.0
  %1472 = vmatprep.subr.mxu0 0.0
  %1473 = vmatpush1.msra.mxu0 0.0
  %1474 = vmatprep.subr.mxu0 0.0
  %1475 = vmatpush1.msra.mxu0 0.0
  %1476 = vmatprep.subr.mxu0 0.0
  %1477 = vmatpush1.msra.mxu0 0.0
  %1478 = vmatprep.subr.mxu0 0.0
  %1479 = vmatpush1.msra.mxu0 0.0
  %1480 = vmatprep.subr.mxu0 0.0
  %1481 = vmatpush1.msra.mxu0 0.0
  %1482 = vmatprep.subr.mxu0 0.0
  %1483 = vmatpush1.msra.mxu0 0.0
  %1484 = vmatprep.subr.mxu0 0.0
  %1485 = vmatpush1.msra.mxu0 0.0
  %1486 = vmatprep.mubr.f32.mxu0 0.0
  %1487 = vmatmul.mubr.f32.gmra.mrb[0].mxu0 %v1420
  %v1488 = vpop.f32.mrb[0].mxu0
  %v1489 = vadd.f32 0.0, %v1488
  %v1490 = vpop.f32.mrb[0].mxu0
  %1491 = vdwg.mxu0
  %s1492 = scalar_lea.vmem %s29, 8
  %v1493 = vld [vmem:[%s1492] sm:$0xff]
  %v1495 = vsel %vm576, %v1416, 0
  %v1498 = vsel %vm576, %v1489, 0
  %1500 = vmatprep.subr.mxu0 0.0
  %1501 = vmatpush1.msra.mxu0 %v1493
  %1502 = vmatprep.subr.mxu0 0.0
  %1503 = vmatpush1.msra.mxu0 0.0
  %1504 = vmatprep.subr.mxu0 0.0
  %1505 = vmatpush1.msra.mxu0 0.0
  %1506 = vmatprep.subr.mxu0 0.0
  %1507 = vmatpush1.msra.mxu0 0.0
  %1508 = vmatprep.subr.mxu0 0.0
  %1509 = vmatpush1.msra.mxu0 0.0
  %1510 = vmatprep.subr.mxu0 0.0
  %1511 = vmatpush1.msra.mxu0 0.0
  %1512 = vmatprep.subr.mxu0 0.0
  %1513 = vmatpush1.msra.mxu0 0.0
  %1514 = vmatprep.subr.mxu0 0.0
  %1515 = vmatpush1.msra.mxu0 0.0
  %1516 = vmatprep.subr.mxu0 0.0
  %1517 = vmatpush1.msra.mxu0 0.0
  %1518 = vmatprep.subr.mxu0 0.0
  %1519 = vmatpush1.msra.mxu0 0.0
  %1520 = vmatprep.subr.mxu0 0.0
  %1521 = vmatpush1.msra.mxu0 0.0
  %1522 = vmatprep.subr.mxu0 0.0
  %1523 = vmatpush1.msra.mxu0 0.0
  %1524 = vmatprep.subr.mxu0 0.0
  %1525 = vmatpush1.msra.mxu0 0.0
  %1526 = vmatprep.subr.mxu0 0.0
  %1527 = vmatpush1.msra.mxu0 0.0
  %1528 = vmatprep.subr.mxu0 0.0
  %1529 = vmatpush1.msra.mxu0 0.0
  %1530 = vmatprep.subr.mxu0 0.0
  %1531 = vmatpush1.msra.mxu0 0.0
  %1532 = vmatprep.subr.mxu0 0.0
  %1533 = vmatpush1.msra.mxu0 0.0
  %1534 = vmatprep.subr.mxu0 0.0
  %1535 = vmatpush1.msra.mxu0 0.0
  %1536 = vmatprep.subr.mxu0 0.0
  %1537 = vmatpush1.msra.mxu0 0.0
  %1538 = vmatprep.subr.mxu0 0.0
  %1539 = vmatpush1.msra.mxu0 0.0
  %1540 = vmatprep.subr.mxu0 0.0
  %1541 = vmatpush1.msra.mxu0 0.0
  %1542 = vmatprep.subr.mxu0 0.0
  %1543 = vmatpush1.msra.mxu0 0.0
  %1544 = vmatprep.subr.mxu0 0.0
  %1545 = vmatpush1.msra.mxu0 0.0
  %1546 = vmatprep.subr.mxu0 0.0
  %1547 = vmatpush1.msra.mxu0 0.0
  %1548 = vmatprep.subr.mxu0 0.0
  %1549 = vmatpush1.msra.mxu0 0.0
  %1550 = vmatprep.subr.mxu0 0.0
  %1551 = vmatpush1.msra.mxu0 0.0
  %1552 = vmatprep.subr.mxu0 0.0
  %1553 = vmatpush1.msra.mxu0 0.0
  %1554 = vmatprep.subr.mxu0 0.0
  %1555 = vmatpush1.msra.mxu0 0.0
  %1556 = vmatprep.subr.mxu0 0.0
  %1557 = vmatpush1.msra.mxu0 0.0
  %1558 = vmatprep.subr.mxu0 0.0
  %1559 = vmatpush1.msra.mxu0 0.0
  %1560 = vmatprep.subr.mxu0 0.0
  %1561 = vmatpush1.msra.mxu0 0.0
  %1562 = vmatprep.subr.mxu0 0.0
  %1563 = vmatpush1.msra.mxu0 0.0
  %1564 = vmatprep.mubr.f32.mxu0 0.0
  %1565 = vmatmul.mubr.f32.gmra.mrb[0].mxu0 %v1495
  %v1566 = vpop.f32.mrb[0].mxu0
  %v1567 = vadd.f32 0.0, %v1566
  %v1568 = vpop.f32.mrb[0].mxu0
  %1569 = vmatprep.mubr.f32.mxu0 0.0
  %1570 = vmatmul.mubr.f32.gmra.mrb[0].mxu0 %v1498
  %v1571 = vpop.f32.mrb[0].mxu0
  %v1572 = vadd.f32 0.0, %v1571
  %v1573 = vpop.f32.mrb[0].mxu0
  %1574 = vdwg.mxu0
  %v1576 = vsel %vm576, %v827, 0
  %v1579 = vsel %vm576, %v900, 0
  %1581 = vmatprep.subr.mxu0 0.0
  %1582 = vmatpush1.msra.mxu0 %v903
  %1583 = vmatprep.subr.mxu0 0.0
  %1584 = vmatpush1.msra.mxu0 0.0
  %1585 = vmatprep.subr.mxu0 0.0
  %1586 = vmatpush1.msra.mxu0 0.0
  %1587 = vmatprep.subr.mxu0 0.0
  %1588 = vmatpush1.msra.mxu0 0.0
  %1589 = vmatprep.subr.mxu0 0.0
  %1590 = vmatpush1.msra.mxu0 0.0
  %1591 = vmatprep.subr.mxu0 0.0
  %1592 = vmatpush1.msra.mxu0 0.0
  %1593 = vmatprep.subr.mxu0 0.0
  %1594 = vmatpush1.msra.mxu0 0.0
  %1595 = vmatprep.subr.mxu0 0.0
  %1596 = vmatpush1.msra.mxu0 0.0
  %1597 = vmatprep.subr.mxu0 0.0
  %1598 = vmatpush1.msra.mxu0 0.0
  %1599 = vmatprep.subr.mxu0 0.0
  %1600 = vmatpush1.msra.mxu0 0.0
  %1601 = vmatprep.subr.mxu0 0.0
  %1602 = vmatpush1.msra.mxu0 0.0
  %1603 = vmatprep.subr.mxu0 0.0
  %1604 = vmatpush1.msra.mxu0 0.0
  %1605 = vmatprep.subr.mxu0 0.0
  %1606 = vmatpush1.msra.mxu0 0.0
  %1607 = vmatprep.subr.mxu0 0.0
  %1608 = vmatpush1.msra.mxu0 0.0
  %1609 = vmatprep.subr.mxu0 0.0
  %1610 = vmatpush1.msra.mxu0 0.0
  %1611 = vmatprep.subr.mxu0 0.0
  %1612 = vmatpush1.msra.mxu0 0.0
  %1613 = vmatprep.subr.mxu0 0.0
  %1614 = vmatpush1.msra.mxu0 0.0
  %1615 = vmatprep.subr.mxu0 0.0
  %1616 = vmatpush1.msra.mxu0 0.0
  %1617 = vmatprep.subr.mxu0 0.0
  %1618 = vmatpush1.msra.mxu0 0.0
  %1619 = vmatprep.subr.mxu0 0.0
  %1620 = vmatpush1.msra.mxu0 0.0
  %1621 = vmatprep.subr.mxu0 0.0
  %1622 = vmatpush1.msra.mxu0 0.0
  %1623 = vmatprep.subr.mxu0 0.0
  %1624 = vmatpush1.msra.mxu0 0.0
  %1625 = vmatprep.subr.mxu0 0.0
  %1626 = vmatpush1.msra.mxu0 0.0
  %1627 = vmatprep.subr.mxu0 0.0
  %1628 = vmatpush1.msra.mxu0 0.0
  %1629 = vmatprep.subr.mxu0 0.0
  %1630 = vmatpush1.msra.mxu0 0.0
  %1631 = vmatprep.subr.mxu0 0.0
  %1632 = vmatpush1.msra.mxu0 0.0
  %1633 = vmatprep.subr.mxu0 0.0
  %1634 = vmatpush1.msra.mxu0 0.0
  %1635 = vmatprep.subr.mxu0 0.0
  %1636 = vmatpush1.msra.mxu0 0.0
  %1637 = vmatprep.subr.mxu0 0.0
  %1638 = vmatpush1.msra.mxu0 0.0
  %1639 = vmatprep.subr.mxu0 0.0
  %1640 = vmatpush1.msra.mxu0 0.0
  %1641 = vmatprep.subr.mxu0 0.0
  %1642 = vmatpush1.msra.mxu0 0.0
  %1643 = vmatprep.subr.mxu0 0.0
  %1644 = vmatpush1.msra.mxu0 0.0
  %1645 = vmatprep.mubr.f32.mxu0 0.0
  %1646 = vmatmul.mubr.f32.gmra.mrb[0].mxu0 %v1576
  %v1647 = vpop.f32.mrb[0].mxu0
  %v1648 = vadd.f32 %v1567, %v1647
  %v1649 = vpop.f32.mrb[0].mxu0
  %1650 = vmatprep.mubr.f32.mxu0 0.0
  %1651 = vmatmul.mubr.f32.gmra.mrb[0].mxu0 %v1579
  %v1652 = vpop.f32.mrb[0].mxu0
  %v1653 = vadd.f32 %v1572, %v1652
  %v1654 = vpop.f32.mrb[0].mxu0
  %1655 = vdwg.mxu0
  %s1656 = scalar_lea.vmem %s17, 64
  %v1657 = vld [vmem:[%s1656] sm:$0xff]
  %v1658 = vld [vmem:[%s1656 + $0x8] sm:$0xff]
  %v1659 = vld [vmem:[%s1656 + $0x10] sm:$0xff]
  %v1660 = vld [vmem:[%s1656 + $0x18] sm:$0xff]
  %s1661 = scalar_lea.vmem %s19, 2
  %v1662 = vld [vmem:[%s1661] sm:$0x1]
  %v1664 = vlaneseq
  %v1665 = vshrl.u32 %v1664, 7
  %v1666 = vsub.s32 0, %v1665
  %v1667 = vrot.slane %v1662, %v1666
  %1669 = vmatprep.subr.mxu0 0.0
  %1670 = vmatpush1.msra.mxu0 %v1657
  %1671 = vmatprep.subr.mxu0 0.0
  %1672 = vmatpush1.msra.mxu0 %v1658
  %1673 = vmatprep.subr.mxu0 0.0
  %1674 = vmatpush1.msra.mxu0 %v1659
  %1675 = vmatprep.subr.mxu0 0.0
  %1676 = vmatpush1.msra.mxu0 %v1660
  %1677 = vmatprep.subr.mxu0 0.0
  %1678 = vmatpush1.msra.mxu0 0.0
  %1679 = vmatprep.subr.mxu0 0.0
  %1680 = vmatpush1.msra.mxu0 0.0
  %1681 = vmatprep.subr.mxu0 0.0
  %1682 = vmatpush1.msra.mxu0 0.0
  %1683 = vmatprep.subr.mxu0 0.0
  %1684 = vmatpush1.msra.mxu0 0.0
  %1685 = vmatprep.subr.mxu0 0.0
  %1686 = vmatpush1.msra.mxu0 0.0
  %1687 = vmatprep.subr.mxu0 0.0
  %1688 = vmatpush1.msra.mxu0 0.0
  %1689 = vmatprep.subr.mxu0 0.0
  %1690 = vmatpush1.msra.mxu0 0.0
  %1691 = vmatprep.subr.mxu0 0.0
  %1692 = vmatpush1.msra.mxu0 0.0
  %1693 = vmatprep.subr.mxu0 0.0
  %1694 = vmatpush1.msra.mxu0 0.0
  %1695 = vmatprep.subr.mxu0 0.0
  %1696 = vmatpush1.msra.mxu0 0.0
  %1697 = vmatprep.subr.mxu0 0.0
  %1698 = vmatpush1.msra.mxu0 0.0
  %1699 = vmatprep.subr.mxu0 0.0
  %1700 = vmatpush1.msra.mxu0 0.0
  %1701 = vmatprep.subr.mxu0 0.0
  %1702 = vmatpush1.msra.mxu0 0.0
  %1703 = vmatprep.subr.mxu0 0.0
  %1704 = vmatpush1.msra.mxu0 0.0
  %1705 = vmatprep.subr.mxu0 0.0
  %1706 = vmatpush1.msra.mxu0 0.0
  %1707 = vmatprep.subr.mxu0 0.0
  %1708 = vmatpush1.msra.mxu0 0.0
  %1709 = vmatprep.subr.mxu0 0.0
  %1710 = vmatpush1.msra.mxu0 0.0
  %1711 = vmatprep.subr.mxu0 0.0
  %1712 = vmatpush1.msra.mxu0 0.0
  %1713 = vmatprep.subr.mxu0 0.0
  %1714 = vmatpush1.msra.mxu0 0.0
  %1715 = vmatprep.subr.mxu0 0.0
  %1716 = vmatpush1.msra.mxu0 0.0
  %1717 = vmatprep.subr.mxu0 0.0
  %1718 = vmatpush1.msra.mxu0 0.0
  %1719 = vmatprep.subr.mxu0 0.0
  %1720 = vmatpush1.msra.mxu0 0.0
  %1721 = vmatprep.subr.mxu0 0.0
  %1722 = vmatpush1.msra.mxu0 0.0
  %1723 = vmatprep.subr.mxu0 0.0
  %1724 = vmatpush1.msra.mxu0 0.0
  %1725 = vmatprep.subr.mxu0 0.0
  %1726 = vmatpush1.msra.mxu0 0.0
  %1727 = vmatprep.subr.mxu0 0.0
  %1728 = vmatpush1.msra.mxu0 0.0
  %1729 = vmatprep.subr.mxu0 0.0
  %1730 = vmatpush1.msra.mxu0 0.0
  %1731 = vmatprep.subr.mxu0 0.0
  %1732 = vmatpush1.msra.mxu0 0.0
  %1733 = vmatprep.mubr.f32.mxu0 0.0
  %1734 = vmatmul.mubr.f32.gmra.mrb[0].mxu0 %v324
  %v1735 = vpop.f32.mrb[0].mxu0
  %v1736 = vadd.f32 %v1667, %v1735
  %v1737 = vpop.f32.mrb[0].mxu0
  %1738 = vmatprep.mubr.f32.mxu0 0.0
  %1739 = vmatmul.mubr.f32.gmra.mrb[0].mxu0 %v327
  %v1740 = vpop.f32.mrb[0].mxu0
  %v1741 = vadd.f32 %v1667, %v1740
  %v1742 = vpop.f32.mrb[0].mxu0
  %1743 = vdwg.mxu0
  %s1744 = scalar_lea.vmem %s21, 64
  %v1745 = vld [vmem:[%s1744] sm:$0xff]
  %v1746 = vld [vmem:[%s1744 + $0x8] sm:$0xff]
  %v1747 = vld [vmem:[%s1744 + $0x10] sm:$0xff]
  %v1748 = vld [vmem:[%s1744 + $0x18] sm:$0xff]
  %s1749 = scalar_lea.vmem %s23, 2
  %v1750 = vld [vmem:[%s1749] sm:$0x1]
  %v1752 = vlaneseq
  %v1753 = vshrl.u32 %v1752, 7
  %v1754 = vsub.s32 0, %v1753
  %v1755 = vrot.slane %v1750, %v1754
  %1757 = vmatprep.subr.mxu0 0.0
  %1758 = vmatpush1.msra.mxu0 %v1745
  %1759 = vmatprep.subr.mxu0 0.0
  %1760 = vmatpush1.msra.mxu0 %v1746
  %1761 = vmatprep.subr.mxu0 0.0
  %1762 = vmatpush1.msra.mxu0 %v1747
  %1763 = vmatprep.subr.mxu0 0.0
  %1764 = vmatpush1.msra.mxu0 %v1748
  %1765 = vmatprep.subr.mxu0 0.0
  %1766 = vmatpush1.msra.mxu0 0.0
  %1767 = vmatprep.subr.mxu0 0.0
  %1768 = vmatpush1.msra.mxu0 0.0
  %1769 = vmatprep.subr.mxu0 0.0
  %1770 = vmatpush1.msra.mxu0 0.0
  %1771 = vmatprep.subr.mxu0 0.0
  %1772 = vmatpush1.msra.mxu0 0.0
  %1773 = vmatprep.subr.mxu0 0.0
  %1774 = vmatpush1.msra.mxu0 0.0
  %1775 = vmatprep.subr.mxu0 0.0
  %1776 = vmatpush1.msra.mxu0 0.0
  %1777 = vmatprep.subr.mxu0 0.0
  %1778 = vmatpush1.msra.mxu0 0.0
  %1779 = vmatprep.subr.mxu0 0.0
  %1780 = vmatpush1.msra.mxu0 0.0
  %1781 = vmatprep.subr.mxu0 0.0
  %1782 = vmatpush1.msra.mxu0 0.0
  %1783 = vmatprep.subr.mxu0 0.0
  %1784 = vmatpush1.msra.mxu0 0.0
  %1785 = vmatprep.subr.mxu0 0.0
  %1786 = vmatpush1.msra.mxu0 0.0
  %1787 = vmatprep.subr.mxu0 0.0
  %1788 = vmatpush1.msra.mxu0 0.0
  %1789 = vmatprep.subr.mxu0 0.0
  %1790 = vmatpush1.msra.mxu0 0.0
  %1791 = vmatprep.subr.mxu0 0.0
  %1792 = vmatpush1.msra.mxu0 0.0
  %1793 = vmatprep.subr.mxu0 0.0
  %1794 = vmatpush1.msra.mxu0 0.0
  %1795 = vmatprep.subr.mxu0 0.0
  %1796 = vmatpush1.msra.mxu0 0.0
  %1797 = vmatprep.subr.mxu0 0.0
  %1798 = vmatpush1.msra.mxu0 0.0
  %1799 = vmatprep.subr.mxu0 0.0
  %1800 = vmatpush1.msra.mxu0 0.0
  %1801 = vmatprep.subr.mxu0 0.0
  %1802 = vmatpush1.msra.mxu0 0.0
  %1803 = vmatprep.subr.mxu0 0.0
  %1804 = vmatpush1.msra.mxu0 0.0
  %1805 = vmatprep.subr.mxu0 0.0
  %1806 = vmatpush1.msra.mxu0 0.0
  %1807 = vmatprep.subr.mxu0 0.0
  %1808 = vmatpush1.msra.mxu0 0.0
  %1809 = vmatprep.subr.mxu0 0.0
  %1810 = vmatpush1.msra.mxu0 0.0
  %1811 = vmatprep.subr.mxu0 0.0
  %1812 = vmatpush1.msra.mxu0 0.0
  %1813 = vmatprep.subr.mxu0 0.0
  %1814 = vmatpush1.msra.mxu0 0.0
  %1815 = vmatprep.subr.mxu0 0.0
  %1816 = vmatpush1.msra.mxu0 0.0
  %1817 = vmatprep.subr.mxu0 0.0
  %1818 = vmatpush1.msra.mxu0 0.0
  %1819 = vmatprep.subr.mxu0 0.0
  %1820 = vmatpush1.msra.mxu0 0.0
  %1821 = vmatprep.mubr.f32.mxu0 0.0
  %1822 = vmatmul.mubr.f32.gmra.mrb[0].mxu0 %v324
  %v1823 = vpop.f32.mrb[0].mxu0
  %v1824 = vadd.f32 %v1755, %v1823
  %v1825 = vpop.f32.mrb[0].mxu0
  %1826 = vmatprep.mubr.f32.mxu0 0.0
  %1827 = vmatmul.mubr.f32.gmra.mrb[0].mxu0 %v327
  %v1828 = vpop.f32.mrb[0].mxu0
  %v1829 = vadd.f32 %v1755, %v1828
  %v1830 = vpop.f32.mrb[0].mxu0
  %1831 = vdwg.mxu0
  %s1832 = scalar_lea.vmem %s25, 64
  %v1833 = vld [vmem:[%s1832] sm:$0xff]
  %v1834 = vld [vmem:[%s1832 + $0x8] sm:$0xff]
  %v1835 = vld [vmem:[%s1832 + $0x10] sm:$0xff]
  %v1836 = vld [vmem:[%s1832 + $0x18] sm:$0xff]
  %s1837 = scalar_lea.vmem %s27, 2
  %v1838 = vld [vmem:[%s1837] sm:$0x1]
  %v1840 = vlaneseq
  %v1841 = vshrl.u32 %v1840, 7
  %v1842 = vsub.s32 0, %v1841
  %v1843 = vrot.slane %v1838, %v1842
  %1845 = vmatprep.subr.mxu0 0.0
  %1846 = vmatpush1.msra.mxu0 %v1833
  %1847 = vmatprep.subr.mxu0 0.0
  %1848 = vmatpush1.msra.mxu0 %v1834
  %1849 = vmatprep.subr.mxu0 0.0
  %1850 = vmatpush1.msra.mxu0 %v1835
  %1851 = vmatprep.subr.mxu0 0.0
  %1852 = vmatpush1.msra.mxu0 %v1836
  %1853 = vmatprep.subr.mxu0 0.0
  %1854 = vmatpush1.msra.mxu0 0.0
  %1855 = vmatprep.subr.mxu0 0.0
  %1856 = vmatpush1.msra.mxu0 0.0
  %1857 = vmatprep.subr.mxu0 0.0
  %1858 = vmatpush1.msra.mxu0 0.0
  %1859 = vmatprep.subr.mxu0 0.0
  %1860 = vmatpush1.msra.mxu0 0.0
  %1861 = vmatprep.subr.mxu0 0.0
  %1862 = vmatpush1.msra.mxu0 0.0
  %1863 = vmatprep.subr.mxu0 0.0
  %1864 = vmatpush1.msra.mxu0 0.0
  %1865 = vmatprep.subr.mxu0 0.0
  %1866 = vmatpush1.msra.mxu0 0.0
  %1867 = vmatprep.subr.mxu0 0.0
  %1868 = vmatpush1.msra.mxu0 0.0
  %1869 = vmatprep.subr.mxu0 0.0
  %1870 = vmatpush1.msra.mxu0 0.0
  %1871 = vmatprep.subr.mxu0 0.0
  %1872 = vmatpush1.msra.mxu0 0.0
  %1873 = vmatprep.subr.mxu0 0.0
  %1874 = vmatpush1.msra.mxu0 0.0
  %1875 = vmatprep.subr.mxu0 0.0
  %1876 = vmatpush1.msra.mxu0 0.0
  %1877 = vmatprep.subr.mxu0 0.0
  %1878 = vmatpush1.msra.mxu0 0.0
  %1879 = vmatprep.subr.mxu0 0.0
  %1880 = vmatpush1.msra.mxu0 0.0
  %1881 = vmatprep.subr.mxu0 0.0
  %1882 = vmatpush1.msra.mxu0 0.0
  %1883 = vmatprep.subr.mxu0 0.0
  %1884 = vmatpush1.msra.mxu0 0.0
  %1885 = vmatprep.subr.mxu0 0.0
  %1886 = vmatpush1.msra.mxu0 0.0
  %1887 = vmatprep.subr.mxu0 0.0
  %1888 = vmatpush1.msra.mxu0 0.0
  %1889 = vmatprep.subr.mxu0 0.0
  %1890 = vmatpush1.msra.mxu0 0.0
  %1891 = vmatprep.subr.mxu0 0.0
  %1892 = vmatpush1.msra.mxu0 0.0
  %1893 = vmatprep.subr.mxu0 0.0
  %1894 = vmatpush1.msra.mxu0 0.0
  %1895 = vmatprep.subr.mxu0 0.0
  %1896 = vmatpush1.msra.mxu0 0.0
  %1897 = vmatprep.subr.mxu0 0.0
  %1898 = vmatpush1.msra.mxu0 0.0
  %1899 = vmatprep.subr.mxu0 0.0
  %1900 = vmatpush1.msra.mxu0 0.0
  %1901 = vmatprep.subr.mxu0 0.0
  %1902 = vmatpush1.msra.mxu0 0.0
  %1903 = vmatprep.subr.mxu0 0.0
  %1904 = vmatpush1.msra.mxu0 0.0
  %1905 = vmatprep.subr.mxu0 0.0
  %1906 = vmatpush1.msra.mxu0 0.0
  %1907 = vmatprep.subr.mxu0 0.0
  %1908 = vmatpush1.msra.mxu0 0.0
  %1909 = vmatprep.mubr.f32.mxu0 0.0
  %1910 = vmatmul.mubr.f32.gmra.mrb[0].mxu0 %v324
  %v1911 = vpop.f32.mrb[0].mxu0
  %v1912 = vadd.f32 %v1843, %v1911
  %v1913 = vpop.f32.mrb[0].mxu0
  %1914 = vmatprep.mubr.f32.mxu0 0.0
  %1915 = vmatmul.mubr.f32.gmra.mrb[0].mxu0 %v327
  %v1916 = vpop.f32.mrb[0].mxu0
  %v1917 = vadd.f32 %v1843, %v1916
  %v1918 = vpop.f32.mrb[0].mxu0
  %1919 = vdwg.mxu0
  %v1921 = vsel %vm576, %v1736, 0
  %v1924 = vsel %vm576, %v1824, 0
  %1926 = vmatprep.subr.mxu0 0.0
  %1927 = vmatpush1.xpose.msra.mxu0 %v1924
  %1928 = vmatprep.subr.mxu0 0.0
  %1929 = vmatpush1.xpose.msra.mxu0 0.0
  %1930 = vmatprep.subr.mxu0 0.0
  %1931 = vmatpush1.xpose.msra.mxu0 0.0
  %1932 = vmatprep.subr.mxu0 0.0
  %1933 = vmatpush1.xpose.msra.mxu0 0.0
  %1934 = vmatprep.subr.mxu0 0.0
  %1935 = vmatpush1.xpose.msra.mxu0 0.0
  %1936 = vmatprep.subr.mxu0 0.0
  %1937 = vmatpush1.xpose.msra.mxu0 0.0
  %1938 = vmatprep.subr.mxu0 0.0
  %1939 = vmatpush1.xpose.msra.mxu0 0.0
  %1940 = vmatprep.subr.mxu0 0.0
  %1941 = vmatpush1.xpose.msra.mxu0 0.0
  %1942 = vmatprep.subr.mxu0 0.0
  %1943 = vmatpush1.xpose.msra.mxu0 0.0
  %1944 = vmatprep.subr.mxu0 0.0
  %1945 = vmatpush1.xpose.msra.mxu0 0.0
  %1946 = vmatprep.subr.mxu0 0.0
  %1947 = vmatpush1.xpose.msra.mxu0 0.0
  %1948 = vmatprep.subr.mxu0 0.0
  %1949 = vmatpush1.xpose.msra.mxu0 0.0
  %1950 = vmatprep.subr.mxu0 0.0
  %1951 = vmatpush1.xpose.msra.mxu0 0.0
  %1952 = vmatprep.subr.mxu0 0.0
  %1953 = vmatpush1.xpose.msra.mxu0 0.0
  %1954 = vmatprep.subr.mxu0 0.0
  %1955 = vmatpush1.xpose.msra.mxu0 0.0
  %1956 = vmatprep.subr.mxu0 0.0
  %1957 = vmatpush1.xpose.msra.mxu0 0.0
  %1958 = vmatprep.subr.mxu0 0.0
  %1959 = vmatpush1.xpose.msra.mxu0 0.0
  %1960 = vmatprep.subr.mxu0 0.0
  %1961 = vmatpush1.xpose.msra.mxu0 0.0
  %1962 = vmatprep.subr.mxu0 0.0
  %1963 = vmatpush1.xpose.msra.mxu0 0.0
  %1964 = vmatprep.subr.mxu0 0.0
  %1965 = vmatpush1.xpose.msra.mxu0 0.0
  %1966 = vmatprep.subr.mxu0 0.0
  %1967 = vmatpush1.xpose.msra.mxu0 0.0
  %1968 = vmatprep.subr.mxu0 0.0
  %1969 = vmatpush1.xpose.msra.mxu0 0.0
  %1970 = vmatprep.subr.mxu0 0.0
  %1971 = vmatpush1.xpose.msra.mxu0 0.0
  %1972 = vmatprep.subr.mxu0 0.0
  %1973 = vmatpush1.xpose.msra.mxu0 0.0
  %1974 = vmatprep.subr.mxu0 0.0
  %1975 = vmatpush1.xpose.msra.mxu0 0.0
  %1976 = vmatprep.subr.mxu0 0.0
  %1977 = vmatpush1.xpose.msra.mxu0 0.0
  %1978 = vmatprep.subr.mxu0 0.0
  %1979 = vmatpush1.xpose.msra.mxu0 0.0
  %1980 = vmatprep.subr.mxu0 0.0
  %1981 = vmatpush1.xpose.msra.mxu0 0.0
  %1982 = vmatprep.subr.mxu0 0.0
  %1983 = vmatpush1.xpose.msra.mxu0 0.0
  %1984 = vmatprep.subr.mxu0 0.0
  %1985 = vmatpush1.xpose.msra.mxu0 0.0
  %1986 = vmatprep.subr.mxu0 0.0
  %1987 = vmatpush1.xpose.msra.mxu0 0.0
  %1988 = vmatprep.subr.mxu0 0.0
  %1989 = vmatpush1.xpose.msra.mxu0 0.0
  %1990 = vmatprep.mubr.f32.mxu0 0.0
  %1991 = vmatmul.mubr.f32.gmra.mrb[0].mxu0 %v1921
  %v1992 = vpop.f32.mrb[0].mxu0
  %v1993 = vadd.f32 0.0, %v1992
  %v1994 = vpop.f32.mrb[0].mxu0
  %1995 = vdwg.mxu0
  %v1997 = vsel %vm576, %v1741, 0
  %v2000 = vsel %vm576, %v1829, 0
  %2002 = vmatprep.subr.mxu0 0.0
  %2003 = vmatpush1.xpose.msra.mxu0 %v2000
  %2004 = vmatprep.subr.mxu0 0.0
  %2005 = vmatpush1.xpose.msra.mxu0 0.0
  %2006 = vmatprep.subr.mxu0 0.0
  %2007 = vmatpush1.xpose.msra.mxu0 0.0
  %2008 = vmatprep.subr.mxu0 0.0
  %2009 = vmatpush1.xpose.msra.mxu0 0.0
  %2010 = vmatprep.subr.mxu0 0.0
  %2011 = vmatpush1.xpose.msra.mxu0 0.0
  %2012 = vmatprep.subr.mxu0 0.0
  %2013 = vmatpush1.xpose.msra.mxu0 0.0
  %2014 = vmatprep.subr.mxu0 0.0
  %2015 = vmatpush1.xpose.msra.mxu0 0.0
  %2016 = vmatprep.subr.mxu0 0.0
  %2017 = vmatpush1.xpose.msra.mxu0 0.0
  %2018 = vmatprep.subr.mxu0 0.0
  %2019 = vmatpush1.xpose.msra.mxu0 0.0
  %2020 = vmatprep.subr.mxu0 0.0
  %2021 = vmatpush1.xpose.msra.mxu0 0.0
  %2022 = vmatprep.subr.mxu0 0.0
  %2023 = vmatpush1.xpose.msra.mxu0 0.0
  %2024 = vmatprep.subr.mxu0 0.0
  %2025 = vmatpush1.xpose.msra.mxu0 0.0
  %2026 = vmatprep.subr.mxu0 0.0
  %2027 = vmatpush1.xpose.msra.mxu0 0.0
  %2028 = vmatprep.subr.mxu0 0.0
  %2029 = vmatpush1.xpose.msra.mxu0 0.0
  %2030 = vmatprep.subr.mxu0 0.0
  %2031 = vmatpush1.xpose.msra.mxu0 0.0
  %2032 = vmatprep.subr.mxu0 0.0
  %2033 = vmatpush1.xpose.msra.mxu0 0.0
  %2034 = vmatprep.subr.mxu0 0.0
  %2035 = vmatpush1.xpose.msra.mxu0 0.0
  %2036 = vmatprep.subr.mxu0 0.0
  %2037 = vmatpush1.xpose.msra.mxu0 0.0
  %2038 = vmatprep.subr.mxu0 0.0
  %2039 = vmatpush1.xpose.msra.mxu0 0.0
  %2040 = vmatprep.subr.mxu0 0.0
  %2041 = vmatpush1.xpose.msra.mxu0 0.0
  %2042 = vmatprep.subr.mxu0 0.0
  %2043 = vmatpush1.xpose.msra.mxu0 0.0
  %2044 = vmatprep.subr.mxu0 0.0
  %2045 = vmatpush1.xpose.msra.mxu0 0.0
  %2046 = vmatprep.subr.mxu0 0.0
  %2047 = vmatpush1.xpose.msra.mxu0 0.0
  %2048 = vmatprep.subr.mxu0 0.0
  %2049 = vmatpush1.xpose.msra.mxu0 0.0
  %2050 = vmatprep.subr.mxu0 0.0
  %2051 = vmatpush1.xpose.msra.mxu0 0.0
  %2052 = vmatprep.subr.mxu0 0.0
  %2053 = vmatpush1.xpose.msra.mxu0 0.0
  %2054 = vmatprep.subr.mxu0 0.0
  %2055 = vmatpush1.xpose.msra.mxu0 0.0
  %2056 = vmatprep.subr.mxu0 0.0
  %2057 = vmatpush1.xpose.msra.mxu0 0.0
  %2058 = vmatprep.subr.mxu0 0.0
  %2059 = vmatpush1.xpose.msra.mxu0 0.0
  %2060 = vmatprep.subr.mxu0 0.0
  %2061 = vmatpush1.xpose.msra.mxu0 0.0
  %2062 = vmatprep.subr.mxu0 0.0
  %2063 = vmatpush1.xpose.msra.mxu0 0.0
  %2064 = vmatprep.subr.mxu0 0.0
  %2065 = vmatpush1.xpose.msra.mxu0 0.0
  %2066 = vmatprep.mubr.f32.mxu0 0.0
  %2067 = vmatmul.mubr.f32.gmra.mrb[0].mxu0 %v1997
  %v2068 = vpop.f32.mrb[0].mxu0
  %v2069 = vadd.f32 0.0, %v2068
  %v2070 = vpop.f32.mrb[0].mxu0
  %2071 = vdwg.mxu0
  %v2072 = vmul.f32 %v1993, 0.35355338
  %v2073 = vmul.f32 %v2069, 0.35355338
  %v2074 = vsel %vm732, %v2072, -1e+10
  %v2075 = vsel %vm732, %v2073, -1e+10
  %v2076 = vsel %vm576, %v2074, -inf
  %2077 = vmax.xlane.f32.xlu0 %v2076
  %v2078 = vpop.xlane.xlu0 %2077
  %v2079 = vsel %vm576, %v2075, -inf
  %2080 = vmax.xlane.f32.xlu0 %v2079
  %v2081 = vpop.xlane.xlu0 %2080
  %v2082 = vsub.f32 %v2074, %v2078
  %v2083 = vsub.f32 %v2075, %v2081
  %v2084 = vmul.f32 %v2082, 1.442695
  %v2085 = vpow.pop %v2084
  %v2086 = vmul.f32 %v2083, 1.442695
  %v2087 = vpow.pop %v2086
  %v2088 = vsel %vm576, %v2085, 0.0
  %2089 = vadd.xlane.f32.xlu0 %v2088
  %v2090 = vpop.xlane.xlu0 %2089
  %v2091 = vsel %vm576, %v2087, 0.0
  %2092 = vadd.xlane.f32.xlu0 %v2091
  %v2093 = vpop.xlane.xlu0 %2092
  %v2094 = vrcp.pop %v2090
  %v2095 = vrcp.pop %v2093
  %v2096 = vmul.f32 %v2085, %v2094
  %v2097 = vmul.f32 %v2087, %v2095
  %v2099 = vsel %vm576, %v2096, 0
  %2101 = vmatprep.subr.mxu0 0.0
  %2102 = vmatpush1.msra.mxu0 %v1912
  %2103 = vmatprep.subr.mxu0 0.0
  %2104 = vmatpush1.msra.mxu0 0.0
  %2105 = vmatprep.subr.mxu0 0.0
  %2106 = vmatpush1.msra.mxu0 0.0
  %2107 = vmatprep.subr.mxu0 0.0
  %2108 = vmatpush1.msra.mxu0 0.0
  %2109 = vmatprep.subr.mxu0 0.0
  %2110 = vmatpush1.msra.mxu0 0.0
  %2111 = vmatprep.subr.mxu0 0.0
  %2112 = vmatpush1.msra.mxu0 0.0
  %2113 = vmatprep.subr.mxu0 0.0
  %2114 = vmatpush1.msra.mxu0 0.0
  %2115 = vmatprep.subr.mxu0 0.0
  %2116 = vmatpush1.msra.mxu0 0.0
  %2117 = vmatprep.subr.mxu0 0.0
  %2118 = vmatpush1.msra.mxu0 0.0
  %2119 = vmatprep.subr.mxu0 0.0
  %2120 = vmatpush1.msra.mxu0 0.0
  %2121 = vmatprep.subr.mxu0 0.0
  %2122 = vmatpush1.msra.mxu0 0.0
  %2123 = vmatprep.subr.mxu0 0.0
  %2124 = vmatpush1.msra.mxu0 0.0
  %2125 = vmatprep.subr.mxu0 0.0
  %2126 = vmatpush1.msra.mxu0 0.0
  %2127 = vmatprep.subr.mxu0 0.0
  %2128 = vmatpush1.msra.mxu0 0.0
  %2129 = vmatprep.subr.mxu0 0.0
  %2130 = vmatpush1.msra.mxu0 0.0
  %2131 = vmatprep.subr.mxu0 0.0
  %2132 = vmatpush1.msra.mxu0 0.0
  %2133 = vmatprep.subr.mxu0 0.0
  %2134 = vmatpush1.msra.mxu0 0.0
  %2135 = vmatprep.subr.mxu0 0.0
  %2136 = vmatpush1.msra.mxu0 0.0
  %2137 = vmatprep.subr.mxu0 0.0
  %2138 = vmatpush1.msra.mxu0 0.0
  %2139 = vmatprep.subr.mxu0 0.0
  %2140 = vmatpush1.msra.mxu0 0.0
  %2141 = vmatprep.subr.mxu0 0.0
  %2142 = vmatpush1.msra.mxu0 0.0
  %2143 = vmatprep.subr.mxu0 0.0
  %2144 = vmatpush1.msra.mxu0 0.0
  %2145 = vmatprep.subr.mxu0 0.0
  %2146 = vmatpush1.msra.mxu0 0.0
  %2147 = vmatprep.subr.mxu0 0.0
  %2148 = vmatpush1.msra.mxu0 0.0
  %2149 = vmatprep.subr.mxu0 0.0
  %2150 = vmatpush1.msra.mxu0 0.0
  %2151 = vmatprep.subr.mxu0 0.0
  %2152 = vmatpush1.msra.mxu0 0.0
  %2153 = vmatprep.subr.mxu0 0.0
  %2154 = vmatpush1.msra.mxu0 0.0
  %2155 = vmatprep.subr.mxu0 0.0
  %2156 = vmatpush1.msra.mxu0 0.0
  %2157 = vmatprep.subr.mxu0 0.0
  %2158 = vmatpush1.msra.mxu0 0.0
  %2159 = vmatprep.subr.mxu0 0.0
  %2160 = vmatpush1.msra.mxu0 0.0
  %2161 = vmatprep.subr.mxu0 0.0
  %2162 = vmatpush1.msra.mxu0 0.0
  %2163 = vmatprep.subr.mxu0 0.0
  %2164 = vmatpush1.msra.mxu0 0.0
  %2165 = vmatprep.mubr.f32.mxu0 0.0
  %2166 = vmatmul.mubr.f32.gmra.mrb[0].mxu0 %v2099
  %v2167 = vpop.f32.mrb[0].mxu0
  %v2168 = vadd.f32 0.0, %v2167
  %v2169 = vpop.f32.mrb[0].mxu0
  %2170 = vdwg.mxu0
  %v2172 = vsel %vm576, %v2097, 0
  %2174 = vmatprep.subr.mxu0 0.0
  %2175 = vmatpush1.msra.mxu0 %v1917
  %2176 = vmatprep.subr.mxu0 0.0
  %2177 = vmatpush1.msra.mxu0 0.0
  %2178 = vmatprep.subr.mxu0 0.0
  %2179 = vmatpush1.msra.mxu0 0.0
  %2180 = vmatprep.subr.mxu0 0.0
  %2181 = vmatpush1.msra.mxu0 0.0
  %2182 = vmatprep.subr.mxu0 0.0
  %2183 = vmatpush1.msra.mxu0 0.0
  %2184 = vmatprep.subr.mxu0 0.0
  %2185 = vmatpush1.msra.mxu0 0.0
  %2186 = vmatprep.subr.mxu0 0.0
  %2187 = vmatpush1.msra.mxu0 0.0
  %2188 = vmatprep.subr.mxu0 0.0
  %2189 = vmatpush1.msra.mxu0 0.0
  %2190 = vmatprep.subr.mxu0 0.0
  %2191 = vmatpush1.msra.mxu0 0.0
  %2192 = vmatprep.subr.mxu0 0.0
  %2193 = vmatpush1.msra.mxu0 0.0
  %2194 = vmatprep.subr.mxu0 0.0
  %2195 = vmatpush1.msra.mxu0 0.0
  %2196 = vmatprep.subr.mxu0 0.0
  %2197 = vmatpush1.msra.mxu0 0.0
  %2198 = vmatprep.subr.mxu0 0.0
  %2199 = vmatpush1.msra.mxu0 0.0
  %2200 = vmatprep.subr.mxu0 0.0
  %2201 = vmatpush1.msra.mxu0 0.0
  %2202 = vmatprep.subr.mxu0 0.0
  %2203 = vmatpush1.msra.mxu0 0.0
  %2204 = vmatprep.subr.mxu0 0.0
  %2205 = vmatpush1.msra.mxu0 0.0
  %2206 = vmatprep.subr.mxu0 0.0
  %2207 = vmatpush1.msra.mxu0 0.0
  %2208 = vmatprep.subr.mxu0 0.0
  %2209 = vmatpush1.msra.mxu0 0.0
  %2210 = vmatprep.subr.mxu0 0.0
  %2211 = vmatpush1.msra.mxu0 0.0
  %2212 = vmatprep.subr.mxu0 0.0
  %2213 = vmatpush1.msra.mxu0 0.0
  %2214 = vmatprep.subr.mxu0 0.0
  %2215 = vmatpush1.msra.mxu0 0.0
  %2216 = vmatprep.subr.mxu0 0.0
  %2217 = vmatpush1.msra.mxu0 0.0
  %2218 = vmatprep.subr.mxu0 0.0
  %2219 = vmatpush1.msra.mxu0 0.0
  %2220 = vmatprep.subr.mxu0 0.0
  %2221 = vmatpush1.msra.mxu0 0.0
  %2222 = vmatprep.subr.mxu0 0.0
  %2223 = vmatpush1.msra.mxu0 0.0
  %2224 = vmatprep.subr.mxu0 0.0
  %2225 = vmatpush1.msra.mxu0 0.0
  %2226 = vmatprep.subr.mxu0 0.0
  %2227 = vmatpush1.msra.mxu0 0.0
  %2228 = vmatprep.subr.mxu0 0.0
  %2229 = vmatpush1.msra.mxu0 0.0
  %2230 = vmatprep.subr.mxu0 0.0
  %2231 = vmatpush1.msra.mxu0 0.0
  %2232 = vmatprep.subr.mxu0 0.0
  %2233 = vmatpush1.msra.mxu0 0.0
  %2234 = vmatprep.subr.mxu0 0.0
  %2235 = vmatpush1.msra.mxu0 0.0
  %2236 = vmatprep.subr.mxu0 0.0
  %2237 = vmatpush1.msra.mxu0 0.0
  %2238 = vmatprep.mubr.f32.mxu0 0.0
  %2239 = vmatmul.mubr.f32.gmra.mrb[0].mxu0 %v2172
  %v2240 = vpop.f32.mrb[0].mxu0
  %v2241 = vadd.f32 0.0, %v2240
  %v2242 = vpop.f32.mrb[0].mxu0
  %2243 = vdwg.mxu0
  %s2244 = scalar_lea.vmem %s29, 16
  %v2245 = vld [vmem:[%s2244] sm:$0xff]
  %v2247 = vsel %vm576, %v2168, 0
  %v2250 = vsel %vm576, %v2241, 0
  %2252 = vmatprep.subr.mxu0 0.0
  %2253 = vmatpush1.msra.mxu0 %v2245
  %2254 = vmatprep.subr.mxu0 0.0
  %2255 = vmatpush1.msra.mxu0 0.0
  %2256 = vmatprep.subr.mxu0 0.0
  %2257 = vmatpush1.msra.mxu0 0.0
  %2258 = vmatprep.subr.mxu0 0.0
  %2259 = vmatpush1.msra.mxu0 0.0
  %2260 = vmatprep.subr.mxu0 0.0
  %2261 = vmatpush1.msra.mxu0 0.0
  %2262 = vmatprep.subr.mxu0 0.0
  %2263 = vmatpush1.msra.mxu0 0.0
  %2264 = vmatprep.subr.mxu0 0.0
  %2265 = vmatpush1.msra.mxu0 0.0
  %2266 = vmatprep.subr.mxu0 0.0
  %2267 = vmatpush1.msra.mxu0 0.0
  %2268 = vmatprep.subr.mxu0 0.0
  %2269 = vmatpush1.msra.mxu0 0.0
  %2270 = vmatprep.subr.mxu0 0.0
  %2271 = vmatpush1.msra.mxu0 0.0
  %2272 = vmatprep.subr.mxu0 0.0
  %2273 = vmatpush1.msra.mxu0 0.0
  %2274 = vmatprep.subr.mxu0 0.0
  %2275 = vmatpush1.msra.mxu0 0.0
  %2276 = vmatprep.subr.mxu0 0.0
  %2277 = vmatpush1.msra.mxu0 0.0
  %2278 = vmatprep.subr.mxu0 0.0
  %2279 = vmatpush1.msra.mxu0 0.0
  %2280 = vmatprep.subr.mxu0 0.0
  %2281 = vmatpush1.msra.mxu0 0.0
  %2282 = vmatprep.subr.mxu0 0.0
  %2283 = vmatpush1.msra.mxu0 0.0
  %2284 = vmatprep.subr.mxu0 0.0
  %2285 = vmatpush1.msra.mxu0 0.0
  %2286 = vmatprep.subr.mxu0 0.0
  %2287 = vmatpush1.msra.mxu0 0.0
  %2288 = vmatprep.subr.mxu0 0.0
  %2289 = vmatpush1.msra.mxu0 0.0
  %2290 = vmatprep.subr.mxu0 0.0
  %2291 = vmatpush1.msra.mxu0 0.0
  %2292 = vmatprep.subr.mxu0 0.0
  %2293 = vmatpush1.msra.mxu0 0.0
  %2294 = vmatprep.subr.mxu0 0.0
  %2295 = vmatpush1.msra.mxu0 0.0
  %2296 = vmatprep.subr.mxu0 0.0
  %2297 = vmatpush1.msra.mxu0 0.0
  %2298 = vmatprep.subr.mxu0 0.0
  %2299 = vmatpush1.msra.mxu0 0.0
  %2300 = vmatprep.subr.mxu0 0.0
  %2301 = vmatpush1.msra.mxu0 0.0
  %2302 = vmatprep.subr.mxu0 0.0
  %2303 = vmatpush1.msra.mxu0 0.0
  %2304 = vmatprep.subr.mxu0 0.0
  %2305 = vmatpush1.msra.mxu0 0.0
  %2306 = vmatprep.subr.mxu0 0.0
  %2307 = vmatpush1.msra.mxu0 0.0
  %2308 = vmatprep.subr.mxu0 0.0
  %2309 = vmatpush1.msra.mxu0 0.0
  %2310 = vmatprep.subr.mxu0 0.0
  %2311 = vmatpush1.msra.mxu0 0.0
  %2312 = vmatprep.subr.mxu0 0.0
  %2313 = vmatpush1.msra.mxu0 0.0
  %2314 = vmatprep.subr.mxu0 0.0
  %2315 = vmatpush1.msra.mxu0 0.0
  %2316 = vmatprep.mubr.f32.mxu0 0.0
  %2317 = vmatmul.mubr.f32.gmra.mrb[0].mxu0 %v2247
  %v2318 = vpop.f32.mrb[0].mxu0
  %v2319 = vadd.f32 0.0, %v2318
  %v2320 = vpop.f32.mrb[0].mxu0
  %2321 = vmatprep.mubr.f32.mxu0 0.0
  %2322 = vmatmul.mubr.f32.gmra.mrb[0].mxu0 %v2250
  %v2323 = vpop.f32.mrb[0].mxu0
  %v2324 = vadd.f32 0.0, %v2323
  %v2325 = vpop.f32.mrb[0].mxu0
  %2326 = vdwg.mxu0
  %v2327 = vadd.f32 %v1648, %v2319
  %v2328 = vadd.f32 %v1653, %v2324
  %s2329 = scalar_lea.vmem %s17, 96
  %v2330 = vld [vmem:[%s2329] sm:$0xff]
  %v2331 = vld [vmem:[%s2329 + $0x8] sm:$0xff]
  %v2332 = vld [vmem:[%s2329 + $0x10] sm:$0xff]
  %v2333 = vld [vmem:[%s2329 + $0x18] sm:$0xff]
  %s2334 = scalar_lea.vmem %s19, 3
  %v2335 = vld [vmem:[%s2334] sm:$0x1]
  %v2337 = vlaneseq
  %v2338 = vshrl.u32 %v2337, 7
  %v2339 = vsub.s32 0, %v2338
  %v2340 = vrot.slane %v2335, %v2339
  %2342 = vmatprep.subr.mxu0 0.0
  %2343 = vmatpush1.msra.mxu0 %v2330
  %2344 = vmatprep.subr.mxu0 0.0
  %2345 = vmatpush1.msra.mxu0 %v2331
  %2346 = vmatprep.subr.mxu0 0.0
  %2347 = vmatpush1.msra.mxu0 %v2332
  %2348 = vmatprep.subr.mxu0 0.0
  %2349 = vmatpush1.msra.mxu0 %v2333
  %2350 = vmatprep.subr.mxu0 0.0
  %2351 = vmatpush1.msra.mxu0 0.0
  %2352 = vmatprep.subr.mxu0 0.0
  %2353 = vmatpush1.msra.mxu0 0.0
  %2354 = vmatprep.subr.mxu0 0.0
  %2355 = vmatpush1.msra.mxu0 0.0
  %2356 = vmatprep.subr.mxu0 0.0
  %2357 = vmatpush1.msra.mxu0 0.0
  %2358 = vmatprep.subr.mxu0 0.0
  %2359 = vmatpush1.msra.mxu0 0.0
  %2360 = vmatprep.subr.mxu0 0.0
  %2361 = vmatpush1.msra.mxu0 0.0
  %2362 = vmatprep.subr.mxu0 0.0
  %2363 = vmatpush1.msra.mxu0 0.0
  %2364 = vmatprep.subr.mxu0 0.0
  %2365 = vmatpush1.msra.mxu0 0.0
  %2366 = vmatprep.subr.mxu0 0.0
  %2367 = vmatpush1.msra.mxu0 0.0
  %2368 = vmatprep.subr.mxu0 0.0
  %2369 = vmatpush1.msra.mxu0 0.0
  %2370 = vmatprep.subr.mxu0 0.0
  %2371 = vmatpush1.msra.mxu0 0.0
  %2372 = vmatprep.subr.mxu0 0.0
  %2373 = vmatpush1.msra.mxu0 0.0
  %2374 = vmatprep.subr.mxu0 0.0
  %2375 = vmatpush1.msra.mxu0 0.0
  %2376 = vmatprep.subr.mxu0 0.0
  %2377 = vmatpush1.msra.mxu0 0.0
  %2378 = vmatprep.subr.mxu0 0.0
  %2379 = vmatpush1.msra.mxu0 0.0
  %2380 = vmatprep.subr.mxu0 0.0
  %2381 = vmatpush1.msra.mxu0 0.0
  %2382 = vmatprep.subr.mxu0 0.0
  %2383 = vmatpush1.msra.mxu0 0.0
  %2384 = vmatprep.subr.mxu0 0.0
  %2385 = vmatpush1.msra.mxu0 0.0
  %2386 = vmatprep.subr.mxu0 0.0
  %2387 = vmatpush1.msra.mxu0 0.0
  %2388 = vmatprep.subr.mxu0 0.0
  %2389 = vmatpush1.msra.mxu0 0.0
  %2390 = vmatprep.subr.mxu0 0.0
  %2391 = vmatpush1.msra.mxu0 0.0
  %2392 = vmatprep.subr.mxu0 0.0
  %2393 = vmatpush1.msra.mxu0 0.0
  %2394 = vmatprep.subr.mxu0 0.0
  %2395 = vmatpush1.msra.mxu0 0.0
  %2396 = vmatprep.subr.mxu0 0.0
  %2397 = vmatpush1.msra.mxu0 0.0
  %2398 = vmatprep.subr.mxu0 0.0
  %2399 = vmatpush1.msra.mxu0 0.0
  %2400 = vmatprep.subr.mxu0 0.0
  %2401 = vmatpush1.msra.mxu0 0.0
  %2402 = vmatprep.subr.mxu0 0.0
  %2403 = vmatpush1.msra.mxu0 0.0
  %2404 = vmatprep.subr.mxu0 0.0
  %2405 = vmatpush1.msra.mxu0 0.0
  %2406 = vmatprep.mubr.f32.mxu0 0.0
  %2407 = vmatmul.mubr.f32.gmra.mrb[0].mxu0 %v324
  %v2408 = vpop.f32.mrb[0].mxu0
  %v2409 = vadd.f32 %v2340, %v2408
  %v2410 = vpop.f32.mrb[0].mxu0
  %2411 = vmatprep.mubr.f32.mxu0 0.0
  %2412 = vmatmul.mubr.f32.gmra.mrb[0].mxu0 %v327
  %v2413 = vpop.f32.mrb[0].mxu0
  %v2414 = vadd.f32 %v2340, %v2413
  %v2415 = vpop.f32.mrb[0].mxu0
  %2416 = vdwg.mxu0
  %s2417 = scalar_lea.vmem %s21, 96
  %v2418 = vld [vmem:[%s2417] sm:$0xff]
  %v2419 = vld [vmem:[%s2417 + $0x8] sm:$0xff]
  %v2420 = vld [vmem:[%s2417 + $0x10] sm:$0xff]
  %v2421 = vld [vmem:[%s2417 + $0x18] sm:$0xff]
  %s2422 = scalar_lea.vmem %s23, 3
  %v2423 = vld [vmem:[%s2422] sm:$0x1]
  %v2425 = vlaneseq
  %v2426 = vshrl.u32 %v2425, 7
  %v2427 = vsub.s32 0, %v2426
  %v2428 = vrot.slane %v2423, %v2427
  %2430 = vmatprep.subr.mxu0 0.0
  %2431 = vmatpush1.msra.mxu0 %v2418
  %2432 = vmatprep.subr.mxu0 0.0
  %2433 = vmatpush1.msra.mxu0 %v2419
  %2434 = vmatprep.subr.mxu0 0.0
  %2435 = vmatpush1.msra.mxu0 %v2420
  %2436 = vmatprep.subr.mxu0 0.0
  %2437 = vmatpush1.msra.mxu0 %v2421
  %2438 = vmatprep.subr.mxu0 0.0
  %2439 = vmatpush1.msra.mxu0 0.0
  %2440 = vmatprep.subr.mxu0 0.0
  %2441 = vmatpush1.msra.mxu0 0.0
  %2442 = vmatprep.subr.mxu0 0.0
  %2443 = vmatpush1.msra.mxu0 0.0
  %2444 = vmatprep.subr.mxu0 0.0
  %2445 = vmatpush1.msra.mxu0 0.0
  %2446 = vmatprep.subr.mxu0 0.0
  %2447 = vmatpush1.msra.mxu0 0.0
  %2448 = vmatprep.subr.mxu0 0.0
  %2449 = vmatpush1.msra.mxu0 0.0
  %2450 = vmatprep.subr.mxu0 0.0
  %2451 = vmatpush1.msra.mxu0 0.0
  %2452 = vmatprep.subr.mxu0 0.0
  %2453 = vmatpush1.msra.mxu0 0.0
  %2454 = vmatprep.subr.mxu0 0.0
  %2455 = vmatpush1.msra.mxu0 0.0
  %2456 = vmatprep.subr.mxu0 0.0
  %2457 = vmatpush1.msra.mxu0 0.0
  %2458 = vmatprep.subr.mxu0 0.0
  %2459 = vmatpush1.msra.mxu0 0.0
  %2460 = vmatprep.subr.mxu0 0.0
  %2461 = vmatpush1.msra.mxu0 0.0
  %2462 = vmatprep.subr.mxu0 0.0
  %2463 = vmatpush1.msra.mxu0 0.0
  %2464 = vmatprep.subr.mxu0 0.0
  %2465 = vmatpush1.msra.mxu0 0.0
  %2466 = vmatprep.subr.mxu0 0.0
  %2467 = vmatpush1.msra.mxu0 0.0
  %2468 = vmatprep.subr.mxu0 0.0
  %2469 = vmatpush1.msra.mxu0 0.0
  %2470 = vmatprep.subr.mxu0 0.0
  %2471 = vmatpush1.msra.mxu0 0.0
  %2472 = vmatprep.subr.mxu0 0.0
  %2473 = vmatpush1.msra.mxu0 0.0
  %2474 = vmatprep.subr.mxu0 0.0
  %2475 = vmatpush1.msra.mxu0 0.0
  %2476 = vmatprep.subr.mxu0 0.0
  %2477 = vmatpush1.msra.mxu0 0.0
  %2478 = vmatprep.subr.mxu0 0.0
  %2479 = vmatpush1.msra.mxu0 0.0
  %2480 = vmatprep.subr.mxu0 0.0
  %2481 = vmatpush1.msra.mxu0 0.0
  %2482 = vmatprep.subr.mxu0 0.0
  %2483 = vmatpush1.msra.mxu0 0.0
  %2484 = vmatprep.subr.mxu0 0.0
  %2485 = vmatpush1.msra.mxu0 0.0
  %2486 = vmatprep.subr.mxu0 0.0
  %2487 = vmatpush1.msra.mxu0 0.0
  %2488 = vmatprep.subr.mxu0 0.0
  %2489 = vmatpush1.msra.mxu0 0.0
  %2490 = vmatprep.subr.mxu0 0.0
  %2491 = vmatpush1.msra.mxu0 0.0
  %2492 = vmatprep.subr.mxu0 0.0
  %2493 = vmatpush1.msra.mxu0 0.0
  %2494 = vmatprep.mubr.f32.mxu0 0.0
  %2495 = vmatmul.mubr.f32.gmra.mrb[0].mxu0 %v324
  %v2496 = vpop.f32.mrb[0].mxu0
  %v2497 = vadd.f32 %v2428, %v2496
  %v2498 = vpop.f32.mrb[0].mxu0
  %2499 = vmatprep.mubr.f32.mxu0 0.0
  %2500 = vmatmul.mubr.f32.gmra.mrb[0].mxu0 %v327
  %v2501 = vpop.f32.mrb[0].mxu0
  %v2502 = vadd.f32 %v2428, %v2501
  %v2503 = vpop.f32.mrb[0].mxu0
  %2504 = vdwg.mxu0
  %s2505 = scalar_lea.vmem %s25, 96
  %v2506 = vld [vmem:[%s2505] sm:$0xff]
  %v2507 = vld [vmem:[%s2505 + $0x8] sm:$0xff]
  %v2508 = vld [vmem:[%s2505 + $0x10] sm:$0xff]
  %v2509 = vld [vmem:[%s2505 + $0x18] sm:$0xff]
  %s2510 = scalar_lea.vmem %s27, 3
  %v2511 = vld [vmem:[%s2510] sm:$0x1]
  %v2513 = vlaneseq
  %v2514 = vshrl.u32 %v2513, 7
  %v2515 = vsub.s32 0, %v2514
  %v2516 = vrot.slane %v2511, %v2515
  %2518 = vmatprep.subr.mxu0 0.0
  %2519 = vmatpush1.msra.mxu0 %v2506
  %2520 = vmatprep.subr.mxu0 0.0
  %2521 = vmatpush1.msra.mxu0 %v2507
  %2522 = vmatprep.subr.mxu0 0.0
  %2523 = vmatpush1.msra.mxu0 %v2508
  %2524 = vmatprep.subr.mxu0 0.0
  %2525 = vmatpush1.msra.mxu0 %v2509
  %2526 = vmatprep.subr.mxu0 0.0
  %2527 = vmatpush1.msra.mxu0 0.0
  %2528 = vmatprep.subr.mxu0 0.0
  %2529 = vmatpush1.msra.mxu0 0.0
  %2530 = vmatprep.subr.mxu0 0.0
  %2531 = vmatpush1.msra.mxu0 0.0
  %2532 = vmatprep.subr.mxu0 0.0
  %2533 = vmatpush1.msra.mxu0 0.0
  %2534 = vmatprep.subr.mxu0 0.0
  %2535 = vmatpush1.msra.mxu0 0.0
  %2536 = vmatprep.subr.mxu0 0.0
  %2537 = vmatpush1.msra.mxu0 0.0
  %2538 = vmatprep.subr.mxu0 0.0
  %2539 = vmatpush1.msra.mxu0 0.0
  %2540 = vmatprep.subr.mxu0 0.0
  %2541 = vmatpush1.msra.mxu0 0.0
  %2542 = vmatprep.subr.mxu0 0.0
  %2543 = vmatpush1.msra.mxu0 0.0
  %2544 = vmatprep.subr.mxu0 0.0
  %2545 = vmatpush1.msra.mxu0 0.0
  %2546 = vmatprep.subr.mxu0 0.0
  %2547 = vmatpush1.msra.mxu0 0.0
  %2548 = vmatprep.subr.mxu0 0.0
  %2549 = vmatpush1.msra.mxu0 0.0
  %2550 = vmatprep.subr.mxu0 0.0
  %2551 = vmatpush1.msra.mxu0 0.0
  %2552 = vmatprep.subr.mxu0 0.0
  %2553 = vmatpush1.msra.mxu0 0.0
  %2554 = vmatprep.subr.mxu0 0.0
  %2555 = vmatpush1.msra.mxu0 0.0
  %2556 = vmatprep.subr.mxu0 0.0
  %2557 = vmatpush1.msra.mxu0 0.0
  %2558 = vmatprep.subr.mxu0 0.0
  %2559 = vmatpush1.msra.mxu0 0.0
  %2560 = vmatprep.subr.mxu0 0.0
  %2561 = vmatpush1.msra.mxu0 0.0
  %2562 = vmatprep.subr.mxu0 0.0
  %2563 = vmatpush1.msra.mxu0 0.0
  %2564 = vmatprep.subr.mxu0 0.0
  %2565 = vmatpush1.msra.mxu0 0.0
  %2566 = vmatprep.subr.mxu0 0.0
  %2567 = vmatpush1.msra.mxu0 0.0
  %2568 = vmatprep.subr.mxu0 0.0
  %2569 = vmatpush1.msra.mxu0 0.0
  %2570 = vmatprep.subr.mxu0 0.0
  %2571 = vmatpush1.msra.mxu0 0.0
  %2572 = vmatprep.subr.mxu0 0.0
  %2573 = vmatpush1.msra.mxu0 0.0
  %2574 = vmatprep.subr.mxu0 0.0
  %2575 = vmatpush1.msra.mxu0 0.0
  %2576 = vmatprep.subr.mxu0 0.0
  %2577 = vmatpush1.msra.mxu0 0.0
  %2578 = vmatprep.subr.mxu0 0.0
  %2579 = vmatpush1.msra.mxu0 0.0
  %2580 = vmatprep.subr.mxu0 0.0
  %2581 = vmatpush1.msra.mxu0 0.0
  %2582 = vmatprep.mubr.f32.mxu0 0.0
  %2583 = vmatmul.mubr.f32.gmra.mrb[0].mxu0 %v324
  %v2584 = vpop.f32.mrb[0].mxu0
  %v2585 = vadd.f32 %v2516, %v2584
  %v2586 = vpop.f32.mrb[0].mxu0
  %2587 = vmatprep.mubr.f32.mxu0 0.0
  %2588 = vmatmul.mubr.f32.gmra.mrb[0].mxu0 %v327
  %v2589 = vpop.f32.mrb[0].mxu0
  %v2590 = vadd.f32 %v2516, %v2589
  %v2591 = vpop.f32.mrb[0].mxu0
  %2592 = vdwg.mxu0
  %v2594 = vsel %vm576, %v2409, 0
  %v2597 = vsel %vm576, %v2497, 0
  %2599 = vmatprep.subr.mxu0 0.0
  %2600 = vmatpush1.xpose.msra.mxu0 %v2597
  %2601 = vmatprep.subr.mxu0 0.0
  %2602 = vmatpush1.xpose.msra.mxu0 0.0
  %2603 = vmatprep.subr.mxu0 0.0
  %2604 = vmatpush1.xpose.msra.mxu0 0.0
  %2605 = vmatprep.subr.mxu0 0.0
  %2606 = vmatpush1.xpose.msra.mxu0 0.0
  %2607 = vmatprep.subr.mxu0 0.0
  %2608 = vmatpush1.xpose.msra.mxu0 0.0
  %2609 = vmatprep.subr.mxu0 0.0
  %2610 = vmatpush1.xpose.msra.mxu0 0.0
  %2611 = vmatprep.subr.mxu0 0.0
  %2612 = vmatpush1.xpose.msra.mxu0 0.0
  %2613 = vmatprep.subr.mxu0 0.0
  %2614 = vmatpush1.xpose.msra.mxu0 0.0
  %2615 = vmatprep.subr.mxu0 0.0
  %2616 = vmatpush1.xpose.msra.mxu0 0.0
  %2617 = vmatprep.subr.mxu0 0.0
  %2618 = vmatpush1.xpose.msra.mxu0 0.0
  %2619 = vmatprep.subr.mxu0 0.0
  %2620 = vmatpush1.xpose.msra.mxu0 0.0
  %2621 = vmatprep.subr.mxu0 0.0
  %2622 = vmatpush1.xpose.msra.mxu0 0.0
  %2623 = vmatprep.subr.mxu0 0.0
  %2624 = vmatpush1.xpose.msra.mxu0 0.0
  %2625 = vmatprep.subr.mxu0 0.0
  %2626 = vmatpush1.xpose.msra.mxu0 0.0
  %2627 = vmatprep.subr.mxu0 0.0
  %2628 = vmatpush1.xpose.msra.mxu0 0.0
  %2629 = vmatprep.subr.mxu0 0.0
  %2630 = vmatpush1.xpose.msra.mxu0 0.0
  %2631 = vmatprep.subr.mxu0 0.0
  %2632 = vmatpush1.xpose.msra.mxu0 0.0
  %2633 = vmatprep.subr.mxu0 0.0
  %2634 = vmatpush1.xpose.msra.mxu0 0.0
  %2635 = vmatprep.subr.mxu0 0.0
  %2636 = vmatpush1.xpose.msra.mxu0 0.0
  %2637 = vmatprep.subr.mxu0 0.0
  %2638 = vmatpush1.xpose.msra.mxu0 0.0
  %2639 = vmatprep.subr.mxu0 0.0
  %2640 = vmatpush1.xpose.msra.mxu0 0.0
  %2641 = vmatprep.subr.mxu0 0.0
  %2642 = vmatpush1.xpose.msra.mxu0 0.0
  %2643 = vmatprep.subr.mxu0 0.0
  %2644 = vmatpush1.xpose.msra.mxu0 0.0
  %2645 = vmatprep.subr.mxu0 0.0
  %2646 = vmatpush1.xpose.msra.mxu0 0.0
  %2647 = vmatprep.subr.mxu0 0.0
  %2648 = vmatpush1.xpose.msra.mxu0 0.0
  %2649 = vmatprep.subr.mxu0 0.0
  %2650 = vmatpush1.xpose.msra.mxu0 0.0
  %2651 = vmatprep.subr.mxu0 0.0
  %2652 = vmatpush1.xpose.msra.mxu0 0.0
  %2653 = vmatprep.subr.mxu0 0.0
  %2654 = vmatpush1.xpose.msra.mxu0 0.0
  %2655 = vmatprep.subr.mxu0 0.0
  %2656 = vmatpush1.xpose.msra.mxu0 0.0
  %2657 = vmatprep.subr.mxu0 0.0
  %2658 = vmatpush1.xpose.msra.mxu0 0.0
  %2659 = vmatprep.subr.mxu0 0.0
  %2660 = vmatpush1.xpose.msra.mxu0 0.0
  %2661 = vmatprep.subr.mxu0 0.0
  %2662 = vmatpush1.xpose.msra.mxu0 0.0
  %2663 = vmatprep.mubr.f32.mxu0 0.0
  %2664 = vmatmul.mubr.f32.gmra.mrb[0].mxu0 %v2594
  %v2665 = vpop.f32.mrb[0].mxu0
  %v2666 = vadd.f32 0.0, %v2665
  %v2667 = vpop.f32.mrb[0].mxu0
  %2668 = vdwg.mxu0
  %v2670 = vsel %vm576, %v2414, 0
  %v2673 = vsel %vm576, %v2502, 0
  %2675 = vmatprep.subr.mxu0 0.0
  %2676 = vmatpush1.xpose.msra.mxu0 %v2673
  %2677 = vmatprep.subr.mxu0 0.0
  %2678 = vmatpush1.xpose.msra.mxu0 0.0
  %2679 = vmatprep.subr.mxu0 0.0
  %2680 = vmatpush1.xpose.msra.mxu0 0.0
  %2681 = vmatprep.subr.mxu0 0.0
  %2682 = vmatpush1.xpose.msra.mxu0 0.0
  %2683 = vmatprep.subr.mxu0 0.0
  %2684 = vmatpush1.xpose.msra.mxu0 0.0
  %2685 = vmatprep.subr.mxu0 0.0
  %2686 = vmatpush1.xpose.msra.mxu0 0.0
  %2687 = vmatprep.subr.mxu0 0.0
  %2688 = vmatpush1.xpose.msra.mxu0 0.0
  %2689 = vmatprep.subr.mxu0 0.0
  %2690 = vmatpush1.xpose.msra.mxu0 0.0
  %2691 = vmatprep.subr.mxu0 0.0
  %2692 = vmatpush1.xpose.msra.mxu0 0.0
  %2693 = vmatprep.subr.mxu0 0.0
  %2694 = vmatpush1.xpose.msra.mxu0 0.0
  %2695 = vmatprep.subr.mxu0 0.0
  %2696 = vmatpush1.xpose.msra.mxu0 0.0
  %2697 = vmatprep.subr.mxu0 0.0
  %2698 = vmatpush1.xpose.msra.mxu0 0.0
  %2699 = vmatprep.subr.mxu0 0.0
  %2700 = vmatpush1.xpose.msra.mxu0 0.0
  %2701 = vmatprep.subr.mxu0 0.0
  %2702 = vmatpush1.xpose.msra.mxu0 0.0
  %2703 = vmatprep.subr.mxu0 0.0
  %2704 = vmatpush1.xpose.msra.mxu0 0.0
  %2705 = vmatprep.subr.mxu0 0.0
  %2706 = vmatpush1.xpose.msra.mxu0 0.0
  %2707 = vmatprep.subr.mxu0 0.0
  %2708 = vmatpush1.xpose.msra.mxu0 0.0
  %2709 = vmatprep.subr.mxu0 0.0
  %2710 = vmatpush1.xpose.msra.mxu0 0.0
  %2711 = vmatprep.subr.mxu0 0.0
  %2712 = vmatpush1.xpose.msra.mxu0 0.0
  %2713 = vmatprep.subr.mxu0 0.0
  %2714 = vmatpush1.xpose.msra.mxu0 0.0
  %2715 = vmatprep.subr.mxu0 0.0
  %2716 = vmatpush1.xpose.msra.mxu0 0.0
  %2717 = vmatprep.subr.mxu0 0.0
  %2718 = vmatpush1.xpose.msra.mxu0 0.0
  %2719 = vmatprep.subr.mxu0 0.0
  %2720 = vmatpush1.xpose.msra.mxu0 0.0
  %2721 = vmatprep.subr.mxu0 0.0
  %2722 = vmatpush1.xpose.msra.mxu0 0.0
  %2723 = vmatprep.subr.mxu0 0.0
  %2724 = vmatpush1.xpose.msra.mxu0 0.0
  %2725 = vmatprep.subr.mxu0 0.0
  %2726 = vmatpush1.xpose.msra.mxu0 0.0
  %2727 = vmatprep.subr.mxu0 0.0
  %2728 = vmatpush1.xpose.msra.mxu0 0.0
  %2729 = vmatprep.subr.mxu0 0.0
  %2730 = vmatpush1.xpose.msra.mxu0 0.0
  %2731 = vmatprep.subr.mxu0 0.0
  %2732 = vmatpush1.xpose.msra.mxu0 0.0
  %2733 = vmatprep.subr.mxu0 0.0
  %2734 = vmatpush1.xpose.msra.mxu0 0.0
  %2735 = vmatprep.subr.mxu0 0.0
  %2736 = vmatpush1.xpose.msra.mxu0 0.0
  %2737 = vmatprep.subr.mxu0 0.0
  %2738 = vmatpush1.xpose.msra.mxu0 0.0
  %2739 = vmatprep.mubr.f32.mxu0 0.0
  %2740 = vmatmul.mubr.f32.gmra.mrb[0].mxu0 %v2670
  %v2741 = vpop.f32.mrb[0].mxu0
  %v2742 = vadd.f32 0.0, %v2741
  %v2743 = vpop.f32.mrb[0].mxu0
  %2744 = vdwg.mxu0
  %v2745 = vmul.f32 %v2666, 0.35355338
  %v2746 = vmul.f32 %v2742, 0.35355338
  %v2747 = vsel %vm732, %v2745, -1e+10
  %v2748 = vsel %vm732, %v2746, -1e+10
  %v2749 = vsel %vm576, %v2747, -inf
  %2750 = vmax.xlane.f32.xlu0 %v2749
  %v2751 = vpop.xlane.xlu0 %2750
  %v2752 = vsel %vm576, %v2748, -inf
  %2753 = vmax.xlane.f32.xlu0 %v2752
  %v2754 = vpop.xlane.xlu0 %2753
  %v2755 = vsub.f32 %v2747, %v2751
  %v2756 = vsub.f32 %v2748, %v2754
  %v2757 = vmul.f32 %v2755, 1.442695
  %v2758 = vpow.pop %v2757
  %v2759 = vmul.f32 %v2756, 1.442695
  %v2760 = vpow.pop %v2759
  %v2761 = vsel %vm576, %v2758, 0.0
  %2762 = vadd.xlane.f32.xlu0 %v2761
  %v2763 = vpop.xlane.xlu0 %2762
  %v2764 = vsel %vm576, %v2760, 0.0
  %2765 = vadd.xlane.f32.xlu0 %v2764
  %v2766 = vpop.xlane.xlu0 %2765
  %v2767 = vrcp.pop %v2763
  %v2768 = vrcp.pop %v2766
  %v2769 = vmul.f32 %v2758, %v2767
  %v2770 = vmul.f32 %v2760, %v2768
  %v2772 = vsel %vm576, %v2769, 0
  %2774 = vmatprep.subr.mxu0 0.0
  %2775 = vmatpush1.msra.mxu0 %v2585
  %2776 = vmatprep.subr.mxu0 0.0
  %2777 = vmatpush1.msra.mxu0 0.0
  %2778 = vmatprep.subr.mxu0 0.0
  %2779 = vmatpush1.msra.mxu0 0.0
  %2780 = vmatprep.subr.mxu0 0.0
  %2781 = vmatpush1.msra.mxu0 0.0
  %2782 = vmatprep.subr.mxu0 0.0
  %2783 = vmatpush1.msra.mxu0 0.0
  %2784 = vmatprep.subr.mxu0 0.0
  %2785 = vmatpush1.msra.mxu0 0.0
  %2786 = vmatprep.subr.mxu0 0.0
  %2787 = vmatpush1.msra.mxu0 0.0
  %2788 = vmatprep.subr.mxu0 0.0
  %2789 = vmatpush1.msra.mxu0 0.0
  %2790 = vmatprep.subr.mxu0 0.0
  %2791 = vmatpush1.msra.mxu0 0.0
  %2792 = vmatprep.subr.mxu0 0.0
  %2793 = vmatpush1.msra.mxu0 0.0
  %2794 = vmatprep.subr.mxu0 0.0
  %2795 = vmatpush1.msra.mxu0 0.0
  %2796 = vmatprep.subr.mxu0 0.0
  %2797 = vmatpush1.msra.mxu0 0.0
  %2798 = vmatprep.subr.mxu0 0.0
  %2799 = vmatpush1.msra.mxu0 0.0
  %2800 = vmatprep.subr.mxu0 0.0
  %2801 = vmatpush1.msra.mxu0 0.0
  %2802 = vmatprep.subr.mxu0 0.0
  %2803 = vmatpush1.msra.mxu0 0.0
  %2804 = vmatprep.subr.mxu0 0.0
  %2805 = vmatpush1.msra.mxu0 0.0
  %2806 = vmatprep.subr.mxu0 0.0
  %2807 = vmatpush1.msra.mxu0 0.0
  %2808 = vmatprep.subr.mxu0 0.0
  %2809 = vmatpush1.msra.mxu0 0.0
  %2810 = vmatprep.subr.mxu0 0.0
  %2811 = vmatpush1.msra.mxu0 0.0
  %2812 = vmatprep.subr.mxu0 0.0
  %2813 = vmatpush1.msra.mxu0 0.0
  %2814 = vmatprep.subr.mxu0 0.0
  %2815 = vmatpush1.msra.mxu0 0.0
  %2816 = vmatprep.subr.mxu0 0.0
  %2817 = vmatpush1.msra.mxu0 0.0
  %2818 = vmatprep.subr.mxu0 0.0
  %2819 = vmatpush1.msra.mxu0 0.0
  %2820 = vmatprep.subr.mxu0 0.0
  %2821 = vmatpush1.msra.mxu0 0.0
  %2822 = vmatprep.subr.mxu0 0.0
  %2823 = vmatpush1.msra.mxu0 0.0
  %2824 = vmatprep.subr.mxu0 0.0
  %2825 = vmatpush1.msra.mxu0 0.0
  %2826 = vmatprep.subr.mxu0 0.0
  %2827 = vmatpush1.msra.mxu0 0.0
  %2828 = vmatprep.subr.mxu0 0.0
  %2829 = vmatpush1.msra.mxu0 0.0
  %2830 = vmatprep.subr.mxu0 0.0
  %2831 = vmatpush1.msra.mxu0 0.0
  %2832 = vmatprep.subr.mxu0 0.0
  %2833 = vmatpush1.msra.mxu0 0.0
  %2834 = vmatprep.subr.mxu0 0.0
  %2835 = vmatpush1.msra.mxu0 0.0
  %2836 = vmatprep.subr.mxu0 0.0
  %2837 = vmatpush1.msra.mxu0 0.0
  %2838 = vmatprep.mubr.f32.mxu0 0.0
  %2839 = vmatmul.mubr.f32.gmra.mrb[0].mxu0 %v2772
  %v2840 = vpop.f32.mrb[0].mxu0
  %v2841 = vadd.f32 0.0, %v2840
  %v2842 = vpop.f32.mrb[0].mxu0
  %2843 = vdwg.mxu0
  %v2845 = vsel %vm576, %v2770, 0
  %2847 = vmatprep.subr.mxu0 0.0
  %2848 = vmatpush1.msra.mxu0 %v2590
  %2849 = vmatprep.subr.mxu0 0.0
  %2850 = vmatpush1.msra.mxu0 0.0
  %2851 = vmatprep.subr.mxu0 0.0
  %2852 = vmatpush1.msra.mxu0 0.0
  %2853 = vmatprep.subr.mxu0 0.0
  %2854 = vmatpush1.msra.mxu0 0.0
  %2855 = vmatprep.subr.mxu0 0.0
  %2856 = vmatpush1.msra.mxu0 0.0
  %2857 = vmatprep.subr.mxu0 0.0
  %2858 = vmatpush1.msra.mxu0 0.0
  %2859 = vmatprep.subr.mxu0 0.0
  %2860 = vmatpush1.msra.mxu0 0.0
  %2861 = vmatprep.subr.mxu0 0.0
  %2862 = vmatpush1.msra.mxu0 0.0
  %2863 = vmatprep.subr.mxu0 0.0
  %2864 = vmatpush1.msra.mxu0 0.0
  %2865 = vmatprep.subr.mxu0 0.0
  %2866 = vmatpush1.msra.mxu0 0.0
  %2867 = vmatprep.subr.mxu0 0.0
  %2868 = vmatpush1.msra.mxu0 0.0
  %2869 = vmatprep.subr.mxu0 0.0
  %2870 = vmatpush1.msra.mxu0 0.0
  %2871 = vmatprep.subr.mxu0 0.0
  %2872 = vmatpush1.msra.mxu0 0.0
  %2873 = vmatprep.subr.mxu0 0.0
  %2874 = vmatpush1.msra.mxu0 0.0
  %2875 = vmatprep.subr.mxu0 0.0
  %2876 = vmatpush1.msra.mxu0 0.0
  %2877 = vmatprep.subr.mxu0 0.0
  %2878 = vmatpush1.msra.mxu0 0.0
  %2879 = vmatprep.subr.mxu0 0.0
  %2880 = vmatpush1.msra.mxu0 0.0
  %2881 = vmatprep.subr.mxu0 0.0
  %2882 = vmatpush1.msra.mxu0 0.0
  %2883 = vmatprep.subr.mxu0 0.0
  %2884 = vmatpush1.msra.mxu0 0.0
  %2885 = vmatprep.subr.mxu0 0.0
  %2886 = vmatpush1.msra.mxu0 0.0
  %2887 = vmatprep.subr.mxu0 0.0
  %2888 = vmatpush1.msra.mxu0 0.0
  %2889 = vmatprep.subr.mxu0 0.0
  %2890 = vmatpush1.msra.mxu0 0.0
  %2891 = vmatprep.subr.mxu0 0.0
  %2892 = vmatpush1.msra.mxu0 0.0
  %2893 = vmatprep.subr.mxu0 0.0
  %2894 = vmatpush1.msra.mxu0 0.0
  %2895 = vmatprep.subr.mxu0 0.0
  %2896 = vmatpush1.msra.mxu0 0.0
  %2897 = vmatprep.subr.mxu0 0.0
  %2898 = vmatpush1.msra.mxu0 0.0
  %2899 = vmatprep.subr.mxu0 0.0
  %2900 = vmatpush1.msra.mxu0 0.0
  %2901 = vmatprep.subr.mxu0 0.0
  %2902 = vmatpush1.msra.mxu0 0.0
  %2903 = vmatprep.subr.mxu0 0.0
  %2904 = vmatpush1.msra.mxu0 0.0
  %2905 = vmatprep.subr.mxu0 0.0
  %2906 = vmatpush1.msra.mxu0 0.0
  %2907 = vmatprep.subr.mxu0 0.0
  %2908 = vmatpush1.msra.mxu0 0.0
  %2909 = vmatprep.subr.mxu0 0.0
  %2910 = vmatpush1.msra.mxu0 0.0
  %2911 = vmatprep.mubr.f32.mxu0 0.0
  %2912 = vmatmul.mubr.f32.gmra.mrb[0].mxu0 %v2845
  %v2913 = vpop.f32.mrb[0].mxu0
  %v2914 = vadd.f32 0.0, %v2913
  %v2915 = vpop.f32.mrb[0].mxu0
  %2916 = vdwg.mxu0
  %s2917 = scalar_lea.vmem %s29, 24
  %v2918 = vld [vmem:[%s2917] sm:$0xff]
  %v2920 = vsel %vm576, %v2841, 0
  %v2923 = vsel %vm576, %v2914, 0
  %2925 = vmatprep.subr.mxu0 0.0
  %2926 = vmatpush1.msra.mxu0 %v2918
  %2927 = vmatprep.subr.mxu0 0.0
  %2928 = vmatpush1.msra.mxu0 0.0
  %2929 = vmatprep.subr.mxu0 0.0
  %2930 = vmatpush1.msra.mxu0 0.0
  %2931 = vmatprep.subr.mxu0 0.0
  %2932 = vmatpush1.msra.mxu0 0.0
  %2933 = vmatprep.subr.mxu0 0.0
  %2934 = vmatpush1.msra.mxu0 0.0
  %2935 = vmatprep.subr.mxu0 0.0
  %2936 = vmatpush1.msra.mxu0 0.0
  %2937 = vmatprep.subr.mxu0 0.0
  %2938 = vmatpush1.msra.mxu0 0.0
  %2939 = vmatprep.subr.mxu0 0.0
  %2940 = vmatpush1.msra.mxu0 0.0
  %2941 = vmatprep.subr.mxu0 0.0
  %2942 = vmatpush1.msra.mxu0 0.0
  %2943 = vmatprep.subr.mxu0 0.0
  %2944 = vmatpush1.msra.mxu0 0.0
  %2945 = vmatprep.subr.mxu0 0.0
  %2946 = vmatpush1.msra.mxu0 0.0
  %2947 = vmatprep.subr.mxu0 0.0
  %2948 = vmatpush1.msra.mxu0 0.0
  %2949 = vmatprep.subr.mxu0 0.0
  %2950 = vmatpush1.msra.mxu0 0.0
  %2951 = vmatprep.subr.mxu0 0.0
  %2952 = vmatpush1.msra.mxu0 0.0
  %2953 = vmatprep.subr.mxu0 0.0
  %2954 = vmatpush1.msra.mxu0 0.0
  %2955 = vmatprep.subr.mxu0 0.0
  %2956 = vmatpush1.msra.mxu0 0.0
  %2957 = vmatprep.subr.mxu0 0.0
  %2958 = vmatpush1.msra.mxu0 0.0
  %2959 = vmatprep.subr.mxu0 0.0
  %2960 = vmatpush1.msra.mxu0 0.0
  %2961 = vmatprep.subr.mxu0 0.0
  %2962 = vmatpush1.msra.mxu0 0.0
  %2963 = vmatprep.subr.mxu0 0.0
  %2964 = vmatpush1.msra.mxu0 0.0
  %2965 = vmatprep.subr.mxu0 0.0
  %2966 = vmatpush1.msra.mxu0 0.0
  %2967 = vmatprep.subr.mxu0 0.0
  %2968 = vmatpush1.msra.mxu0 0.0
  %2969 = vmatprep.subr.mxu0 0.0
  %2970 = vmatpush1.msra.mxu0 0.0
  %2971 = vmatprep.subr.mxu0 0.0
  %2972 = vmatpush1.msra.mxu0 0.0
  %2973 = vmatprep.subr.mxu0 0.0
  %2974 = vmatpush1.msra.mxu0 0.0
  %2975 = vmatprep.subr.mxu0 0.0
  %2976 = vmatpush1.msra.mxu0 0.0
  %2977 = vmatprep.subr.mxu0 0.0
  %2978 = vmatpush1.msra.mxu0 0.0
  %2979 = vmatprep.subr.mxu0 0.0
  %2980 = vmatpush1.msra.mxu0 0.0
  %2981 = vmatprep.subr.mxu0 0.0
  %2982 = vmatpush1.msra.mxu0 0.0
  %2983 = vmatprep.subr.mxu0 0.0
  %2984 = vmatpush1.msra.mxu0 0.0
  %2985 = vmatprep.subr.mxu0 0.0
  %2986 = vmatpush1.msra.mxu0 0.0
  %2987 = vmatprep.subr.mxu0 0.0
  %2988 = vmatpush1.msra.mxu0 0.0
  %2989 = vmatprep.mubr.f32.mxu0 0.0
  %2990 = vmatmul.mubr.f32.gmra.mrb[0].mxu0 %v2920
  %v2991 = vpop.f32.mrb[0].mxu0
  %v2992 = vadd.f32 0.0, %v2991
  %v2993 = vpop.f32.mrb[0].mxu0
  %2994 = vmatprep.mubr.f32.mxu0 0.0
  %2995 = vmatmul.mubr.f32.gmra.mrb[0].mxu0 %v2923
  %v2996 = vpop.f32.mrb[0].mxu0
  %v2997 = vadd.f32 0.0, %v2996
  %v2998 = vpop.f32.mrb[0].mxu0
  %2999 = vdwg.mxu0
  %v3000 = vadd.f32 %v2327, %v2992
  %v3001 = vadd.f32 %v2328, %v2997
  %v3002 = vadd.f32 %v245, %v3000
  %v3003 = vadd.f32 %v246, %v3001
  %v3004 = vld [vmem:[%s31] sm:$0x1]
  %v3006 = vlaneseq
  %v3007 = vshrl.u32 %v3006, 7
  %v3008 = vsub.s32 0, %v3007
  %v3009 = vrot.slane %v3004, %v3008
  %v3011 = vadd.f32 %v3002, %v3009
  %v3012 = vadd.f32 %v3003, %v3009
  %v3013 = vld [vmem:[%s33] sm:$0x1]
  %v3014 = vld [vmem:[%s35] sm:$0x1]
  %v3015 = vsel %vm254, %v3011, 0.0
  %3016 = vadd.xlane.f32.xlu0 %v3015
  %v3017 = vpop.xlane.xlu0 %3016
  %v3018 = vsel %vm254, %v3012, 0.0
  %3019 = vadd.xlane.f32.xlu0 %v3018
  %v3020 = vpop.xlane.xlu0 %3019
  %v3021 = vmul.f32 %v3017, %v261
  %v3022 = vmul.f32 %v3020, %v261
  %v3023 = vsub.f32 %v3011, %v3021
  %v3024 = vsub.f32 %v3012, %v3022
  %v3025 = vmul.f32 %v3023, %v3023
  %v3026 = vmul.f32 %v3024, %v3024
  %v3027 = vsel %vm254, %v3025, 0.0
  %3028 = vadd.xlane.f32.xlu0 %v3027
  %v3029 = vpop.xlane.xlu0 %3028
  %v3030 = vsel %vm254, %v3026, 0.0
  %3031 = vadd.xlane.f32.xlu0 %v3030
  %v3032 = vpop.xlane.xlu0 %3031
  %v3033 = vmul.f32 %v3029, %v261
  %v3034 = vmul.f32 %v3032, %v261
  %v3035 = vadd.f32 %v3033, 1e-05
  %v3036 = vadd.f32 %v3034, 1e-05
  %v3037 = vrsqrt.pop %v3035
  %v3038 = vmul.f32 %v3035, %v3037
  %vm3039 = vcmp.eq.f32.partialorder %v3035, inf
  %v3040 = vsel %vm3039, %v3035, %v3038
  %vm3041 = vcmp.eq.f32.partialorder %v3035, 0.0
  %v3042 = vand.u32 %v3035, 2147483648
  %v3043 = vsel %vm3041, %v3042, %v3040
  %v3044 = vrsqrt.pop %v3036
  %v3045 = vmul.f32 %v3036, %v3044
  %vm3046 = vcmp.eq.f32.partialorder %v3036, inf
  %v3047 = vsel %vm3046, %v3036, %v3045
  %vm3048 = vcmp.eq.f32.partialorder %v3036, 0.0
  %v3049 = vand.u32 %v3036, 2147483648
  %v3050 = vsel %vm3048, %v3049, %v3047
  %v3051 = vrcp.pop %v3043
  %v3052 = vmul.f32 %v3023, %v3051
  %v3053 = vrcp.pop %v3050
  %v3054 = vmul.f32 %v3024, %v3053
  %v3056 = vlaneseq
  %v3057 = vshrl.u32 %v3056, 7
  %v3058 = vsub.s32 0, %v3057
  %v3059 = vrot.slane %v3013, %v3058
  %v3061 = vmul.f32 %v3059, %v3052
  %v3062 = vmul.f32 %v3059, %v3054
  %v3064 = vlaneseq
  %v3065 = vshrl.u32 %v3064, 7
  %v3066 = vsub.s32 0, %v3065
  %v3067 = vrot.slane %v3014, %v3066
  %v3069 = vadd.f32 %v3061, %v3067
  %v3070 = vadd.f32 %v3062, %v3067
  %v3071 = vld [vmem:[%s37] sm:$0xff]
  %v3072 = vld [vmem:[%s37 + $0x8] sm:$0xff]
  %v3073 = vld [vmem:[%s37 + $0x10] sm:$0xff]
  %v3074 = vld [vmem:[%s37 + $0x18] sm:$0xff]
  %v3075 = vld [vmem:[%s39] sm:$0x1]
  %v3077 = vlaneseq
  %v3078 = vshrl.u32 %v3077, 7
  %v3079 = vsub.s32 0, %v3078
  %v3080 = vrot.slane %v3075, %v3079
  %v3083 = vsel %vm254, %v3069, 0
  %v3086 = vsel %vm254, %v3070, 0
  %3088 = vmatprep.subr.mxu0 0.0
  %3089 = vmatpush1.msra.mxu0 %v3071
  %3090 = vmatprep.subr.mxu0 0.0
  %3091 = vmatpush1.msra.mxu0 %v3072
  %3092 = vmatprep.subr.mxu0 0.0
  %3093 = vmatpush1.msra.mxu0 %v3073
  %3094 = vmatprep.subr.mxu0 0.0
  %3095 = vmatpush1.msra.mxu0 %v3074
  %3096 = vmatprep.subr.mxu0 0.0
  %3097 = vmatpush1.msra.mxu0 0.0
  %3098 = vmatprep.subr.mxu0 0.0
  %3099 = vmatpush1.msra.mxu0 0.0
  %3100 = vmatprep.subr.mxu0 0.0
  %3101 = vmatpush1.msra.mxu0 0.0
  %3102 = vmatprep.subr.mxu0 0.0
  %3103 = vmatpush1.msra.mxu0 0.0
  %3104 = vmatprep.subr.mxu0 0.0
  %3105 = vmatpush1.msra.mxu0 0.0
  %3106 = vmatprep.subr.mxu0 0.0
  %3107 = vmatpush1.msra.mxu0 0.0
  %3108 = vmatprep.subr.mxu0 0.0
  %3109 = vmatpush1.msra.mxu0 0.0
  %3110 = vmatprep.subr.mxu0 0.0
  %3111 = vmatpush1.msra.mxu0 0.0
  %3112 = vmatprep.subr.mxu0 0.0
  %3113 = vmatpush1.msra.mxu0 0.0
  %3114 = vmatprep.subr.mxu0 0.0
  %3115 = vmatpush1.msra.mxu0 0.0
  %3116 = vmatprep.subr.mxu0 0.0
  %3117 = vmatpush1.msra.mxu0 0.0
  %3118 = vmatprep.subr.mxu0 0.0
  %3119 = vmatpush1.msra.mxu0 0.0
  %3120 = vmatprep.subr.mxu0 0.0
  %3121 = vmatpush1.msra.mxu0 0.0
  %3122 = vmatprep.subr.mxu0 0.0
  %3123 = vmatpush1.msra.mxu0 0.0
  %3124 = vmatprep.subr.mxu0 0.0
  %3125 = vmatpush1.msra.mxu0 0.0
  %3126 = vmatprep.subr.mxu0 0.0
  %3127 = vmatpush1.msra.mxu0 0.0
  %3128 = vmatprep.subr.mxu0 0.0
  %3129 = vmatpush1.msra.mxu0 0.0
  %3130 = vmatprep.subr.mxu0 0.0
  %3131 = vmatpush1.msra.mxu0 0.0
  %3132 = vmatprep.subr.mxu0 0.0
  %3133 = vmatpush1.msra.mxu0 0.0
  %3134 = vmatprep.subr.mxu0 0.0
  %3135 = vmatpush1.msra.mxu0 0.0
  %3136 = vmatprep.subr.mxu0 0.0
  %3137 = vmatpush1.msra.mxu0 0.0
  %3138 = vmatprep.subr.mxu0 0.0
  %3139 = vmatpush1.msra.mxu0 0.0
  %3140 = vmatprep.subr.mxu0 0.0
  %3141 = vmatpush1.msra.mxu0 0.0
  %3142 = vmatprep.subr.mxu0 0.0
  %3143 = vmatpush1.msra.mxu0 0.0
  %3144 = vmatprep.subr.mxu0 0.0
  %3145 = vmatpush1.msra.mxu0 0.0
  %3146 = vmatprep.subr.mxu0 0.0
  %3147 = vmatpush1.msra.mxu0 0.0
  %3148 = vmatprep.subr.mxu0 0.0
  %3149 = vmatpush1.msra.mxu0 0.0
  %3150 = vmatprep.subr.mxu0 0.0
  %3151 = vmatpush1.msra.mxu0 0.0
  %3152 = vmatprep.mubr.f32.mxu0 0.0
  %3153 = vmatmul.mubr.f32.gmra.mrb[0].mxu0 %v3083
  %v3154 = vpop.f32.mrb[0].mxu0
  %v3155 = vadd.f32 %v3080, %v3154
  %v3156 = vpop.f32.mrb[0].mxu0
  %3157 = vmatprep.mubr.f32.mxu0 0.0
  %3158 = vmatmul.mubr.f32.gmra.mrb[0].mxu0 %v3086
  %v3159 = vpop.f32.mrb[0].mxu0
  %v3160 = vadd.f32 %v3080, %v3159
  %v3161 = vpop.f32.mrb[0].mxu0
  %3162 = vdwg.mxu0
  %v3163 = vmul.f32 %v3155, 0.5
  %v3164 = vmul.f32 %v3160, 0.5
  %v3165 = vmul.f32 %v3155, %v3155
  %v3166 = vmul.f32 %v3160, %v3160
  %v3167 = vmul.f32 %v3155, %v3165
  %v3168 = vmul.f32 %v3160, %v3166
  %v3169 = vmul.f32 %v3167, 0.044715
  %v3170 = vmul.f32 %v3168, 0.044715
  %v3171 = vadd.f32 %v3155, %v3169
  %v3172 = vadd.f32 %v3160, %v3170
  %v3173 = vmul.f32 %v3171, 0.7978846
  %v3174 = vmul.f32 %v3172, 0.7978846
  %v3175 = vtanh.pop %v3173
  %v3176 = vtanh.pop %v3174
  %v3177 = vadd.f32 %v3175, 1.0
  %v3178 = vadd.f32 %v3176, 1.0
  %v3179 = vmul.f32 %v3163, %v3177
  %v3180 = vmul.f32 %v3164, %v3178
  %v3181 = vld [vmem:[%s41] sm:$0xff]
  %v3182 = vld [vmem:[%s41 + $0x8] sm:$0xff]
  %v3183 = vld [vmem:[%s41 + $0x10] sm:$0xff]
  %v3184 = vld [vmem:[%s41 + $0x18] sm:$0xff]
  %v3185 = vld [vmem:[%s41 + $0x20] sm:$0xff]
  %v3186 = vld [vmem:[%s41 + $0x28] sm:$0xff]
  %v3187 = vld [vmem:[%s41 + $0x30] sm:$0xff]
  %v3188 = vld [vmem:[%s41 + $0x38] sm:$0xff]
  %v3189 = vld [vmem:[%s41 + $0x40] sm:$0xff]
  %v3190 = vld [vmem:[%s41 + $0x48] sm:$0xff]
  %v3191 = vld [vmem:[%s41 + $0x50] sm:$0xff]
  %v3192 = vld [vmem:[%s41 + $0x58] sm:$0xff]
  %v3193 = vld [vmem:[%s41 + $0x60] sm:$0xff]
  %v3194 = vld [vmem:[%s41 + $0x68] sm:$0xff]
  %v3195 = vld [vmem:[%s41 + $0x70] sm:$0xff]
  %v3196 = vld [vmem:[%s41 + $0x78] sm:$0xff]
  %v3197 = vld [vmem:[%s43] sm:$0x1]
  %v3199 = vlaneseq
  %v3200 = vshrl.u32 %v3199, 7
  %v3201 = vsub.s32 0, %v3200
  %v3202 = vrot.slane %v3197, %v3201
  %3204 = vmatprep.subr.mxu0 0.0
  %3205 = vmatpush1.msra.mxu0 %v3181
  %3206 = vmatprep.subr.mxu0 0.0
  %3207 = vmatpush1.msra.mxu0 %v3182
  %3208 = vmatprep.subr.mxu0 0.0
  %3209 = vmatpush1.msra.mxu0 %v3183
  %3210 = vmatprep.subr.mxu0 0.0
  %3211 = vmatpush1.msra.mxu0 %v3184
  %3212 = vmatprep.subr.mxu0 0.0
  %3213 = vmatpush1.msra.mxu0 %v3185
  %3214 = vmatprep.subr.mxu0 0.0
  %3215 = vmatpush1.msra.mxu0 %v3186
  %3216 = vmatprep.subr.mxu0 0.0
  %3217 = vmatpush1.msra.mxu0 %v3187
  %3218 = vmatprep.subr.mxu0 0.0
  %3219 = vmatpush1.msra.mxu0 %v3188
  %3220 = vmatprep.subr.mxu0 0.0
  %3221 = vmatpush1.msra.mxu0 %v3189
  %3222 = vmatprep.subr.mxu0 0.0
  %3223 = vmatpush1.msra.mxu0 %v3190
  %3224 = vmatprep.subr.mxu0 0.0
  %3225 = vmatpush1.msra.mxu0 %v3191
  %3226 = vmatprep.subr.mxu0 0.0
  %3227 = vmatpush1.msra.mxu0 %v3192
  %3228 = vmatprep.subr.mxu0 0.0
  %3229 = vmatpush1.msra.mxu0 %v3193
  %3230 = vmatprep.subr.mxu0 0.0
  %3231 = vmatpush1.msra.mxu0 %v3194
  %3232 = vmatprep.subr.mxu0 0.0
  %3233 = vmatpush1.msra.mxu0 %v3195
  %3234 = vmatprep.subr.mxu0 0.0
  %3235 = vmatpush1.msra.mxu0 %v3196
  %3236 = vmatprep.subr.mxu0 0.0
  %3237 = vmatpush1.msra.mxu0 0.0
  %3238 = vmatprep.subr.mxu0 0.0
  %3239 = vmatpush1.msra.mxu0 0.0
  %3240 = vmatprep.subr.mxu0 0.0
  %3241 = vmatpush1.msra.mxu0 0.0
  %3242 = vmatprep.subr.mxu0 0.0
  %3243 = vmatpush1.msra.mxu0 0.0
  %3244 = vmatprep.subr.mxu0 0.0
  %3245 = vmatpush1.msra.mxu0 0.0
  %3246 = vmatprep.subr.mxu0 0.0
  %3247 = vmatpush1.msra.mxu0 0.0
  %3248 = vmatprep.subr.mxu0 0.0
  %3249 = vmatpush1.msra.mxu0 0.0
  %3250 = vmatprep.subr.mxu0 0.0
  %3251 = vmatpush1.msra.mxu0 0.0
  %3252 = vmatprep.subr.mxu0 0.0
  %3253 = vmatpush1.msra.mxu0 0.0
  %3254 = vmatprep.subr.mxu0 0.0
  %3255 = vmatpush1.msra.mxu0 0.0
  %3256 = vmatprep.subr.mxu0 0.0
  %3257 = vmatpush1.msra.mxu0 0.0
  %3258 = vmatprep.subr.mxu0 0.0
  %3259 = vmatpush1.msra.mxu0 0.0
  %3260 = vmatprep.subr.mxu0 0.0
  %3261 = vmatpush1.msra.mxu0 0.0
  %3262 = vmatprep.subr.mxu0 0.0
  %3263 = vmatpush1.msra.mxu0 0.0
  %3264 = vmatprep.subr.mxu0 0.0
  %3265 = vmatpush1.msra.mxu0 0.0
  %3266 = vmatprep.subr.mxu0 0.0
  %3267 = vmatpush1.msra.mxu0 0.0
  %3268 = vmatprep.mubr.f32.mxu0 0.0
  %3269 = vmatmul.mubr.f32.gmra.mrb[0].mxu0 %v3179
  %v3270 = vpop.f32.mrb[0].mxu0
  %v3271 = vadd.f32 %v3202, %v3270
  %v3272 = vpop.f32.mrb[0].mxu0
  %3273 = vmatprep.mubr.f32.mxu0 0.0
  %3274 = vmatmul.mubr.f32.gmra.mrb[0].mxu0 %v3180
  %v3275 = vpop.f32.mrb[0].mxu0
  %v3276 = vadd.f32 %v3202, %v3275
  %v3277 = vpop.f32.mrb[0].mxu0
  %3278 = vdwg.mxu0
  %v3279 = vadd.f32 %v3011, %v3271
  %v3280 = vadd.f32 %v3012, %v3276
  %v3281 = vld [vmem:[%s45] sm:$0x1]
  %v3282 = vld [vmem:[%s47] sm:$0x1]
  %v3283 = vsel %vm254, %v3279, 0.0
  %3284 = vadd.xlane.f32.xlu0 %v3283
  %v3285 = vpop.xlane.xlu0 %3284
  %v3286 = vsel %vm254, %v3280, 0.0
  %3287 = vadd.xlane.f32.xlu0 %v3286
  %v3288 = vpop.xlane.xlu0 %3287
  %v3289 = vmul.f32 %v3285, %v261
  %v3290 = vmul.f32 %v3288, %v261
  %v3291 = vsub.f32 %v3279, %v3289
  %v3292 = vsub.f32 %v3280, %v3290
  %v3293 = vmul.f32 %v3291, %v3291
  %v3294 = vmul.f32 %v3292, %v3292
  %v3295 = vsel %vm254, %v3293, 0.0
  %3296 = vadd.xlane.f32.xlu0 %v3295
  %v3297 = vpop.xlane.xlu0 %3296
  %v3298 = vsel %vm254, %v3294, 0.0
  %3299 = vadd.xlane.f32.xlu0 %v3298
  %v3300 = vpop.xlane.xlu0 %3299
  %v3301 = vmul.f32 %v3297, %v261
  %v3302 = vmul.f32 %v3300, %v261
  %v3303 = vadd.f32 %v3301, 1e-05
  %v3304 = vadd.f32 %v3302, 1e-05
  %v3305 = vrsqrt.pop %v3303
  %v3306 = vmul.f32 %v3303, %v3305
  %vm3307 = vcmp.eq.f32.partialorder %v3303, inf
  %v3308 = vsel %vm3307, %v3303, %v3306
  %vm3309 = vcmp.eq.f32.partialorder %v3303, 0.0
  %v3310 = vand.u32 %v3303, 2147483648
  %v3311 = vsel %vm3309, %v3310, %v3308
  %v3312 = vrsqrt.pop %v3304
  %v3313 = vmul.f32 %v3304, %v3312
  %vm3314 = vcmp.eq.f32.partialorder %v3304, inf
  %v3315 = vsel %vm3314, %v3304, %v3313
  %vm3316 = vcmp.eq.f32.partialorder %v3304, 0.0
  %v3317 = vand.u32 %v3304, 2147483648
  %v3318 = vsel %vm3316, %v3317, %v3315
  %v3319 = vrcp.pop %v3311
  %v3320 = vmul.f32 %v3291, %v3319
  %v3321 = vrcp.pop %v3318
  %v3322 = vmul.f32 %v3292, %v3321
  %v3324 = vlaneseq
  %v3325 = vshrl.u32 %v3324, 7
  %v3326 = vsub.s32 0, %v3325
  %v3327 = vrot.slane %v3281, %v3326
  %v3329 = vmul.f32 %v3327, %v3320
  %v3330 = vmul.f32 %v3327, %v3322
  %v3332 = vlaneseq
  %v3333 = vshrl.u32 %v3332, 7
  %v3334 = vsub.s32 0, %v3333
  %v3335 = vrot.slane %v3282, %v3334
  %v3337 = vadd.f32 %v3329, %v3335
  %v3338 = vadd.f32 %v3330, %v3335
  %v3339 = vld [vmem:[%s49] sm:$0xff]
  %v3340 = vld [vmem:[%s49 + $0x8] sm:$0xff]
  %v3341 = vld [vmem:[%s49 + $0x10] sm:$0xff]
  %v3342 = vld [vmem:[%s49 + $0x18] sm:$0xff]
  %v3343 = vld [vmem:[%s51] sm:$0x1]
  %v3345 = vlaneseq
  %v3346 = vshrl.u32 %v3345, 7
  %v3347 = vsub.s32 0, %v3346
  %v3348 = vrot.slane %v3343, %v3347
  %v3351 = vsel %vm254, %v3337, 0
  %v3354 = vsel %vm254, %v3338, 0
  %3356 = vmatprep.subr.mxu0 0.0
  %3357 = vmatpush1.msra.mxu0 %v3339
  %3358 = vmatprep.subr.mxu0 0.0
  %3359 = vmatpush1.msra.mxu0 %v3340
  %3360 = vmatprep.subr.mxu0 0.0
  %3361 = vmatpush1.msra.mxu0 %v3341
  %3362 = vmatprep.subr.mxu0 0.0
  %3363 = vmatpush1.msra.mxu0 %v3342
  %3364 = vmatprep.subr.mxu0 0.0
  %3365 = vmatpush1.msra.mxu0 0.0
  %3366 = vmatprep.subr.mxu0 0.0
  %3367 = vmatpush1.msra.mxu0 0.0
  %3368 = vmatprep.subr.mxu0 0.0
  %3369 = vmatpush1.msra.mxu0 0.0
  %3370 = vmatprep.subr.mxu0 0.0
  %3371 = vmatpush1.msra.mxu0 0.0
  %3372 = vmatprep.subr.mxu0 0.0
  %3373 = vmatpush1.msra.mxu0 0.0
  %3374 = vmatprep.subr.mxu0 0.0
  %3375 = vmatpush1.msra.mxu0 0.0
  %3376 = vmatprep.subr.mxu0 0.0
  %3377 = vmatpush1.msra.mxu0 0.0
  %3378 = vmatprep.subr.mxu0 0.0
  %3379 = vmatpush1.msra.mxu0 0.0
  %3380 = vmatprep.subr.mxu0 0.0
  %3381 = vmatpush1.msra.mxu0 0.0
  %3382 = vmatprep.subr.mxu0 0.0
  %3383 = vmatpush1.msra.mxu0 0.0
  %3384 = vmatprep.subr.mxu0 0.0
  %3385 = vmatpush1.msra.mxu0 0.0
  %3386 = vmatprep.subr.mxu0 0.0
  %3387 = vmatpush1.msra.mxu0 0.0
  %3388 = vmatprep.subr.mxu0 0.0
  %3389 = vmatpush1.msra.mxu0 0.0
  %3390 = vmatprep.subr.mxu0 0.0
  %3391 = vmatpush1.msra.mxu0 0.0
  %3392 = vmatprep.subr.mxu0 0.0
  %3393 = vmatpush1.msra.mxu0 0.0
  %3394 = vmatprep.subr.mxu0 0.0
  %3395 = vmatpush1.msra.mxu0 0.0
  %3396 = vmatprep.subr.mxu0 0.0
  %3397 = vmatpush1.msra.mxu0 0.0
  %3398 = vmatprep.subr.mxu0 0.0
  %3399 = vmatpush1.msra.mxu0 0.0
  %3400 = vmatprep.subr.mxu0 0.0
  %3401 = vmatpush1.msra.mxu0 0.0
  %3402 = vmatprep.subr.mxu0 0.0
  %3403 = vmatpush1.msra.mxu0 0.0
  %3404 = vmatprep.subr.mxu0 0.0
  %3405 = vmatpush1.msra.mxu0 0.0
  %3406 = vmatprep.subr.mxu0 0.0
  %3407 = vmatpush1.msra.mxu0 0.0
  %3408 = vmatprep.subr.mxu0 0.0
  %3409 = vmatpush1.msra.mxu0 0.0
  %3410 = vmatprep.subr.mxu0 0.0
  %3411 = vmatpush1.msra.mxu0 0.0
  %3412 = vmatprep.subr.mxu0 0.0
  %3413 = vmatpush1.msra.mxu0 0.0
  %3414 = vmatprep.subr.mxu0 0.0
  %3415 = vmatpush1.msra.mxu0 0.0
  %3416 = vmatprep.subr.mxu0 0.0
  %3417 = vmatpush1.msra.mxu0 0.0
  %3418 = vmatprep.subr.mxu0 0.0
  %3419 = vmatpush1.msra.mxu0 0.0
  %3420 = vmatprep.mubr.f32.mxu0 0.0
  %3421 = vmatmul.mubr.f32.gmra.mrb[0].mxu0 %v3351
  %v3422 = vpop.f32.mrb[0].mxu0
  %v3423 = vadd.f32 %v3348, %v3422
  %v3424 = vpop.f32.mrb[0].mxu0
  %3425 = vmatprep.mubr.f32.mxu0 0.0
  %3426 = vmatmul.mubr.f32.gmra.mrb[0].mxu0 %v3354
  %v3427 = vpop.f32.mrb[0].mxu0
  %v3428 = vadd.f32 %v3348, %v3427
  %v3429 = vpop.f32.mrb[0].mxu0
  %3430 = vdwg.mxu0
  %v3431 = vld [vmem:[%s53] sm:$0xff]
  %v3432 = vld [vmem:[%s53 + $0x8] sm:$0xff]
  %v3433 = vld [vmem:[%s53 + $0x10] sm:$0xff]
  %v3434 = vld [vmem:[%s53 + $0x18] sm:$0xff]
  %v3435 = vld [vmem:[%s55] sm:$0x1]
  %v3437 = vlaneseq
  %v3438 = vshrl.u32 %v3437, 7
  %v3439 = vsub.s32 0, %v3438
  %v3440 = vrot.slane %v3435, %v3439
  %3442 = vmatprep.subr.mxu0 0.0
  %3443 = vmatpush1.msra.mxu0 %v3431
  %3444 = vmatprep.subr.mxu0 0.0
  %3445 = vmatpush1.msra.mxu0 %v3432
  %3446 = vmatprep.subr.mxu0 0.0
  %3447 = vmatpush1.msra.mxu0 %v3433
  %3448 = vmatprep.subr.mxu0 0.0
  %3449 = vmatpush1.msra.mxu0 %v3434
  %3450 = vmatprep.subr.mxu0 0.0
  %3451 = vmatpush1.msra.mxu0 0.0
  %3452 = vmatprep.subr.mxu0 0.0
  %3453 = vmatpush1.msra.mxu0 0.0
  %3454 = vmatprep.subr.mxu0 0.0
  %3455 = vmatpush1.msra.mxu0 0.0
  %3456 = vmatprep.subr.mxu0 0.0
  %3457 = vmatpush1.msra.mxu0 0.0
  %3458 = vmatprep.subr.mxu0 0.0
  %3459 = vmatpush1.msra.mxu0 0.0
  %3460 = vmatprep.subr.mxu0 0.0
  %3461 = vmatpush1.msra.mxu0 0.0
  %3462 = vmatprep.subr.mxu0 0.0
  %3463 = vmatpush1.msra.mxu0 0.0
  %3464 = vmatprep.subr.mxu0 0.0
  %3465 = vmatpush1.msra.mxu0 0.0
  %3466 = vmatprep.subr.mxu0 0.0
  %3467 = vmatpush1.msra.mxu0 0.0
  %3468 = vmatprep.subr.mxu0 0.0
  %3469 = vmatpush1.msra.mxu0 0.0
  %3470 = vmatprep.subr.mxu0 0.0
  %3471 = vmatpush1.msra.mxu0 0.0
  %3472 = vmatprep.subr.mxu0 0.0
  %3473 = vmatpush1.msra.mxu0 0.0
  %3474 = vmatprep.subr.mxu0 0.0
  %3475 = vmatpush1.msra.mxu0 0.0
  %3476 = vmatprep.subr.mxu0 0.0
  %3477 = vmatpush1.msra.mxu0 0.0
  %3478 = vmatprep.subr.mxu0 0.0
  %3479 = vmatpush1.msra.mxu0 0.0
  %3480 = vmatprep.subr.mxu0 0.0
  %3481 = vmatpush1.msra.mxu0 0.0
  %3482 = vmatprep.subr.mxu0 0.0
  %3483 = vmatpush1.msra.mxu0 0.0
  %3484 = vmatprep.subr.mxu0 0.0
  %3485 = vmatpush1.msra.mxu0 0.0
  %3486 = vmatprep.subr.mxu0 0.0
  %3487 = vmatpush1.msra.mxu0 0.0
  %3488 = vmatprep.subr.mxu0 0.0
  %3489 = vmatpush1.msra.mxu0 0.0
  %3490 = vmatprep.subr.mxu0 0.0
  %3491 = vmatpush1.msra.mxu0 0.0
  %3492 = vmatprep.subr.mxu0 0.0
  %3493 = vmatpush1.msra.mxu0 0.0
  %3494 = vmatprep.subr.mxu0 0.0
  %3495 = vmatpush1.msra.mxu0 0.0
  %3496 = vmatprep.subr.mxu0 0.0
  %3497 = vmatpush1.msra.mxu0 0.0
  %3498 = vmatprep.subr.mxu0 0.0
  %3499 = vmatpush1.msra.mxu0 0.0
  %3500 = vmatprep.subr.mxu0 0.0
  %3501 = vmatpush1.msra.mxu0 0.0
  %3502 = vmatprep.subr.mxu0 0.0
  %3503 = vmatpush1.msra.mxu0 0.0
  %3504 = vmatprep.subr.mxu0 0.0
  %3505 = vmatpush1.msra.mxu0 0.0
  %3506 = vmatprep.mubr.f32.mxu0 0.0
  %3507 = vmatmul.mubr.f32.gmra.mrb[0].mxu0 %v3351
  %v3508 = vpop.f32.mrb[0].mxu0
  %v3509 = vadd.f32 %v3440, %v3508
  %v3510 = vpop.f32.mrb[0].mxu0
  %3511 = vmatprep.mubr.f32.mxu0 0.0
  %3512 = vmatmul.mubr.f32.gmra.mrb[0].mxu0 %v3354
  %v3513 = vpop.f32.mrb[0].mxu0
  %v3514 = vadd.f32 %v3440, %v3513
  %v3515 = vpop.f32.mrb[0].mxu0
  %3516 = vdwg.mxu0
  %v3517 = vld [vmem:[%s57] sm:$0xff]
  %v3518 = vld [vmem:[%s57 + $0x8] sm:$0xff]
  %v3519 = vld [vmem:[%s57 + $0x10] sm:$0xff]
  %v3520 = vld [vmem:[%s57 + $0x18] sm:$0xff]
  %v3521 = vld [vmem:[%s59] sm:$0x1]
  %v3523 = vlaneseq
  %v3524 = vshrl.u32 %v3523, 7
  %v3525 = vsub.s32 0, %v3524
  %v3526 = vrot.slane %v3521, %v3525
  %3528 = vmatprep.subr.mxu0 0.0
  %3529 = vmatpush1.msra.mxu0 %v3517
  %3530 = vmatprep.subr.mxu0 0.0
  %3531 = vmatpush1.msra.mxu0 %v3518
  %3532 = vmatprep.subr.mxu0 0.0
  %3533 = vmatpush1.msra.mxu0 %v3519
  %3534 = vmatprep.subr.mxu0 0.0
  %3535 = vmatpush1.msra.mxu0 %v3520
  %3536 = vmatprep.subr.mxu0 0.0
  %3537 = vmatpush1.msra.mxu0 0.0
  %3538 = vmatprep.subr.mxu0 0.0
  %3539 = vmatpush1.msra.mxu0 0.0
  %3540 = vmatprep.subr.mxu0 0.0
  %3541 = vmatpush1.msra.mxu0 0.0
  %3542 = vmatprep.subr.mxu0 0.0
  %3543 = vmatpush1.msra.mxu0 0.0
  %3544 = vmatprep.subr.mxu0 0.0
  %3545 = vmatpush1.msra.mxu0 0.0
  %3546 = vmatprep.subr.mxu0 0.0
  %3547 = vmatpush1.msra.mxu0 0.0
  %3548 = vmatprep.subr.mxu0 0.0
  %3549 = vmatpush1.msra.mxu0 0.0
  %3550 = vmatprep.subr.mxu0 0.0
  %3551 = vmatpush1.msra.mxu0 0.0
  %3552 = vmatprep.subr.mxu0 0.0
  %3553 = vmatpush1.msra.mxu0 0.0
  %3554 = vmatprep.subr.mxu0 0.0
  %3555 = vmatpush1.msra.mxu0 0.0
  %3556 = vmatprep.subr.mxu0 0.0
  %3557 = vmatpush1.msra.mxu0 0.0
  %3558 = vmatprep.subr.mxu0 0.0
  %3559 = vmatpush1.msra.mxu0 0.0
  %3560 = vmatprep.subr.mxu0 0.0
  %3561 = vmatpush1.msra.mxu0 0.0
  %3562 = vmatprep.subr.mxu0 0.0
  %3563 = vmatpush1.msra.mxu0 0.0
  %3564 = vmatprep.subr.mxu0 0.0
  %3565 = vmatpush1.msra.mxu0 0.0
  %3566 = vmatprep.subr.mxu0 0.0
  %3567 = vmatpush1.msra.mxu0 0.0
  %3568 = vmatprep.subr.mxu0 0.0
  %3569 = vmatpush1.msra.mxu0 0.0
  %3570 = vmatprep.subr.mxu0 0.0
  %3571 = vmatpush1.msra.mxu0 0.0
  %3572 = vmatprep.subr.mxu0 0.0
  %3573 = vmatpush1.msra.mxu0 0.0
  %3574 = vmatprep.subr.mxu0 0.0
  %3575 = vmatpush1.msra.mxu0 0.0
  %3576 = vmatprep.subr.mxu0 0.0
  %3577 = vmatpush1.msra.mxu0 0.0
  %3578 = vmatprep.subr.mxu0 0.0
  %3579 = vmatpush1.msra.mxu0 0.0
  %3580 = vmatprep.subr.mxu0 0.0
  %3581 = vmatpush1.msra.mxu0 0.0
  %3582 = vmatprep.subr.mxu0 0.0
  %3583 = vmatpush1.msra.mxu0 0.0
  %3584 = vmatprep.subr.mxu0 0.0
  %3585 = vmatpush1.msra.mxu0 0.0
  %3586 = vmatprep.subr.mxu0 0.0
  %3587 = vmatpush1.msra.mxu0 0.0
  %3588 = vmatprep.subr.mxu0 0.0
  %3589 = vmatpush1.msra.mxu0 0.0
  %3590 = vmatprep.subr.mxu0 0.0
  %3591 = vmatpush1.msra.mxu0 0.0
  %3592 = vmatprep.mubr.f32.mxu0 0.0
  %3593 = vmatmul.mubr.f32.gmra.mrb[0].mxu0 %v3351
  %v3594 = vpop.f32.mrb[0].mxu0
  %v3595 = vadd.f32 %v3526, %v3594
  %v3596 = vpop.f32.mrb[0].mxu0
  %3597 = vmatprep.mubr.f32.mxu0 0.0
  %3598 = vmatmul.mubr.f32.gmra.mrb[0].mxu0 %v3354
  %v3599 = vpop.f32.mrb[0].mxu0
  %v3600 = vadd.f32 %v3526, %v3599
  %v3601 = vpop.f32.mrb[0].mxu0
  %3602 = vdwg.mxu0
  %v3604 = vsel %vm576, %v3423, 0
  %v3607 = vsel %vm576, %v3509, 0
  %3609 = vmatprep.subr.mxu0 0.0
  %3610 = vmatpush1.xpose.msra.mxu0 %v3607
  %3611 = vmatprep.subr.mxu0 0.0
  %3612 = vmatpush1.xpose.msra.mxu0 0.0
  %3613 = vmatprep.subr.mxu0 0.0
  %3614 = vmatpush1.xpose.msra.mxu0 0.0
  %3615 = vmatprep.subr.mxu0 0.0
  %3616 = vmatpush1.xpose.msra.mxu0 0.0
  %3617 = vmatprep.subr.mxu0 0.0
  %3618 = vmatpush1.xpose.msra.mxu0 0.0
  %3619 = vmatprep.subr.mxu0 0.0
  %3620 = vmatpush1.xpose.msra.mxu0 0.0
  %3621 = vmatprep.subr.mxu0 0.0
  %3622 = vmatpush1.xpose.msra.mxu0 0.0
  %3623 = vmatprep.subr.mxu0 0.0
  %3624 = vmatpush1.xpose.msra.mxu0 0.0
  %3625 = vmatprep.subr.mxu0 0.0
  %3626 = vmatpush1.xpose.msra.mxu0 0.0
  %3627 = vmatprep.subr.mxu0 0.0
  %3628 = vmatpush1.xpose.msra.mxu0 0.0
  %3629 = vmatprep.subr.mxu0 0.0
  %3630 = vmatpush1.xpose.msra.mxu0 0.0
  %3631 = vmatprep.subr.mxu0 0.0
  %3632 = vmatpush1.xpose.msra.mxu0 0.0
  %3633 = vmatprep.subr.mxu0 0.0
  %3634 = vmatpush1.xpose.msra.mxu0 0.0
  %3635 = vmatprep.subr.mxu0 0.0
  %3636 = vmatpush1.xpose.msra.mxu0 0.0
  %3637 = vmatprep.subr.mxu0 0.0
  %3638 = vmatpush1.xpose.msra.mxu0 0.0
  %3639 = vmatprep.subr.mxu0 0.0
  %3640 = vmatpush1.xpose.msra.mxu0 0.0
  %3641 = vmatprep.subr.mxu0 0.0
  %3642 = vmatpush1.xpose.msra.mxu0 0.0
  %3643 = vmatprep.subr.mxu0 0.0
  %3644 = vmatpush1.xpose.msra.mxu0 0.0
  %3645 = vmatprep.subr.mxu0 0.0
  %3646 = vmatpush1.xpose.msra.mxu0 0.0
  %3647 = vmatprep.subr.mxu0 0.0
  %3648 = vmatpush1.xpose.msra.mxu0 0.0
  %3649 = vmatprep.subr.mxu0 0.0
  %3650 = vmatpush1.xpose.msra.mxu0 0.0
  %3651 = vmatprep.subr.mxu0 0.0
  %3652 = vmatpush1.xpose.msra.mxu0 0.0
  %3653 = vmatprep.subr.mxu0 0.0
  %3654 = vmatpush1.xpose.msra.mxu0 0.0
  %3655 = vmatprep.subr.mxu0 0.0
  %3656 = vmatpush1.xpose.msra.mxu0 0.0
  %3657 = vmatprep.subr.mxu0 0.0
  %3658 = vmatpush1.xpose.msra.mxu0 0.0
  %3659 = vmatprep.subr.mxu0 0.0
  %3660 = vmatpush1.xpose.msra.mxu0 0.0
  %3661 = vmatprep.subr.mxu0 0.0
  %3662 = vmatpush1.xpose.msra.mxu0 0.0
  %3663 = vmatprep.subr.mxu0 0.0
  %3664 = vmatpush1.xpose.msra.mxu0 0.0
  %3665 = vmatprep.subr.mxu0 0.0
  %3666 = vmatpush1.xpose.msra.mxu0 0.0
  %3667 = vmatprep.subr.mxu0 0.0
  %3668 = vmatpush1.xpose.msra.mxu0 0.0
  %3669 = vmatprep.subr.mxu0 0.0
  %3670 = vmatpush1.xpose.msra.mxu0 0.0
  %3671 = vmatprep.subr.mxu0 0.0
  %3672 = vmatpush1.xpose.msra.mxu0 0.0
  %3673 = vmatprep.mubr.f32.mxu0 0.0
  %3674 = vmatmul.mubr.f32.gmra.mrb[0].mxu0 %v3604
  %v3675 = vpop.f32.mrb[0].mxu0
  %v3676 = vadd.f32 0.0, %v3675
  %v3677 = vpop.f32.mrb[0].mxu0
  %3678 = vdwg.mxu0
  %v3680 = vsel %vm576, %v3428, 0
  %v3683 = vsel %vm576, %v3514, 0
  %3685 = vmatprep.subr.mxu0 0.0
  %3686 = vmatpush1.xpose.msra.mxu0 %v3683
  %3687 = vmatprep.subr.mxu0 0.0
  %3688 = vmatpush1.xpose.msra.mxu0 0.0
  %3689 = vmatprep.subr.mxu0 0.0
  %3690 = vmatpush1.xpose.msra.mxu0 0.0
  %3691 = vmatprep.subr.mxu0 0.0
  %3692 = vmatpush1.xpose.msra.mxu0 0.0
  %3693 = vmatprep.subr.mxu0 0.0
  %3694 = vmatpush1.xpose.msra.mxu0 0.0
  %3695 = vmatprep.subr.mxu0 0.0
  %3696 = vmatpush1.xpose.msra.mxu0 0.0
  %3697 = vmatprep.subr.mxu0 0.0
  %3698 = vmatpush1.xpose.msra.mxu0 0.0
  %3699 = vmatprep.subr.mxu0 0.0
  %3700 = vmatpush1.xpose.msra.mxu0 0.0
  %3701 = vmatprep.subr.mxu0 0.0
  %3702 = vmatpush1.xpose.msra.mxu0 0.0
  %3703 = vmatprep.subr.mxu0 0.0
  %3704 = vmatpush1.xpose.msra.mxu0 0.0
  %3705 = vmatprep.subr.mxu0 0.0
  %3706 = vmatpush1.xpose.msra.mxu0 0.0
  %3707 = vmatprep.subr.mxu0 0.0
  %3708 = vmatpush1.xpose.msra.mxu0 0.0
  %3709 = vmatprep.subr.mxu0 0.0
  %3710 = vmatpush1.xpose.msra.mxu0 0.0
  %3711 = vmatprep.subr.mxu0 0.0
  %3712 = vmatpush1.xpose.msra.mxu0 0.0
  %3713 = vmatprep.subr.mxu0 0.0
  %3714 = vmatpush1.xpose.msra.mxu0 0.0
  %3715 = vmatprep.subr.mxu0 0.0
  %3716 = vmatpush1.xpose.msra.mxu0 0.0
  %3717 = vmatprep.subr.mxu0 0.0
  %3718 = vmatpush1.xpose.msra.mxu0 0.0
  %3719 = vmatprep.subr.mxu0 0.0
  %3720 = vmatpush1.xpose.msra.mxu0 0.0
  %3721 = vmatprep.subr.mxu0 0.0
  %3722 = vmatpush1.xpose.msra.mxu0 0.0
  %3723 = vmatprep.subr.mxu0 0.0
  %3724 = vmatpush1.xpose.msra.mxu0 0.0
  %3725 = vmatprep.subr.mxu0 0.0
  %3726 = vmatpush1.xpose.msra.mxu0 0.0
  %3727 = vmatprep.subr.mxu0 0.0
  %3728 = vmatpush1.xpose.msra.mxu0 0.0
  %3729 = vmatprep.subr.mxu0 0.0
  %3730 = vmatpush1.xpose.msra.mxu0 0.0
  %3731 = vmatprep.subr.mxu0 0.0
  %3732 = vmatpush1.xpose.msra.mxu0 0.0
  %3733 = vmatprep.subr.mxu0 0.0
  %3734 = vmatpush1.xpose.msra.mxu0 0.0
  %3735 = vmatprep.subr.mxu0 0.0
  %3736 = vmatpush1.xpose.msra.mxu0 0.0
  %3737 = vmatprep.subr.mxu0 0.0
  %3738 = vmatpush1.xpose.msra.mxu0 0.0
  %3739 = vmatprep.subr.mxu0 0.0
  %3740 = vmatpush1.xpose.msra.mxu0 0.0
  %3741 = vmatprep.subr.mxu0 0.0
  %3742 = vmatpush1.xpose.msra.mxu0 0.0
  %3743 = vmatprep.subr.mxu0 0.0
  %3744 = vmatpush1.xpose.msra.mxu0 0.0
  %3745 = vmatprep.subr.mxu0 0.0
  %3746 = vmatpush1.xpose.msra.mxu0 0.0
  %3747 = vmatprep.subr.mxu0 0.0
  %3748 = vmatpush1.xpose.msra.mxu0 0.0
  %3749 = vmatprep.mubr.f32.mxu0 0.0
  %3750 = vmatmul.mubr.f32.gmra.mrb[0].mxu0 %v3680
  %v3751 = vpop.f32.mrb[0].mxu0
  %v3752 = vadd.f32 0.0, %v3751
  %v3753 = vpop.f32.mrb[0].mxu0
  %3754 = vdwg.mxu0
  %v3755 = vmul.f32 %v3676, 0.35355338
  %v3756 = vmul.f32 %v3752, 0.35355338
  %v3757 = vsel %vm732, %v3755, -1e+10
  %v3758 = vsel %vm732, %v3756, -1e+10
  %v3759 = vsel %vm576, %v3757, -inf
  %3760 = vmax.xlane.f32.xlu0 %v3759
  %v3761 = vpop.xlane.xlu0 %3760
  %v3762 = vsel %vm576, %v3758, -inf
  %3763 = vmax.xlane.f32.xlu0 %v3762
  %v3764 = vpop.xlane.xlu0 %3763
  %v3765 = vsub.f32 %v3757, %v3761
  %v3766 = vsub.f32 %v3758, %v3764
  %v3767 = vmul.f32 %v3765, 1.442695
  %v3768 = vpow.pop %v3767
  %v3769 = vmul.f32 %v3766, 1.442695
  %v3770 = vpow.pop %v3769
  %v3771 = vsel %vm576, %v3768, 0.0
  %3772 = vadd.xlane.f32.xlu0 %v3771
  %v3773 = vpop.xlane.xlu0 %3772
  %v3774 = vsel %vm576, %v3770, 0.0
  %3775 = vadd.xlane.f32.xlu0 %v3774
  %v3776 = vpop.xlane.xlu0 %3775
  %v3777 = vrcp.pop %v3773
  %v3778 = vrcp.pop %v3776
  %v3779 = vmul.f32 %v3768, %v3777
  %v3780 = vmul.f32 %v3770, %v3778
  %v3782 = vsel %vm576, %v3779, 0
  %3784 = vmatprep.subr.mxu0 0.0
  %3785 = vmatpush1.msra.mxu0 %v3595
  %3786 = vmatprep.subr.mxu0 0.0
  %3787 = vmatpush1.msra.mxu0 0.0
  %3788 = vmatprep.subr.mxu0 0.0
  %3789 = vmatpush1.msra.mxu0 0.0
  %3790 = vmatprep.subr.mxu0 0.0
  %3791 = vmatpush1.msra.mxu0 0.0
  %3792 = vmatprep.subr.mxu0 0.0
  %3793 = vmatpush1.msra.mxu0 0.0
  %3794 = vmatprep.subr.mxu0 0.0
  %3795 = vmatpush1.msra.mxu0 0.0
  %3796 = vmatprep.subr.mxu0 0.0
  %3797 = vmatpush1.msra.mxu0 0.0
  %3798 = vmatprep.subr.mxu0 0.0
  %3799 = vmatpush1.msra.mxu0 0.0
  %3800 = vmatprep.subr.mxu0 0.0
  %3801 = vmatpush1.msra.mxu0 0.0
  %3802 = vmatprep.subr.mxu0 0.0
  %3803 = vmatpush1.msra.mxu0 0.0
  %3804 = vmatprep.subr.mxu0 0.0
  %3805 = vmatpush1.msra.mxu0 0.0
  %3806 = vmatprep.subr.mxu0 0.0
  %3807 = vmatpush1.msra.mxu0 0.0
  %3808 = vmatprep.subr.mxu0 0.0
  %3809 = vmatpush1.msra.mxu0 0.0
  %3810 = vmatprep.subr.mxu0 0.0
  %3811 = vmatpush1.msra.mxu0 0.0
  %3812 = vmatprep.subr.mxu0 0.0
  %3813 = vmatpush1.msra.mxu0 0.0
  %3814 = vmatprep.subr.mxu0 0.0
  %3815 = vmatpush1.msra.mxu0 0.0
  %3816 = vmatprep.subr.mxu0 0.0
  %3817 = vmatpush1.msra.mxu0 0.0
  %3818 = vmatprep.subr.mxu0 0.0
  %3819 = vmatpush1.msra.mxu0 0.0
  %3820 = vmatprep.subr.mxu0 0.0
  %3821 = vmatpush1.msra.mxu0 0.0
  %3822 = vmatprep.subr.mxu0 0.0
  %3823 = vmatpush1.msra.mxu0 0.0
  %3824 = vmatprep.subr.mxu0 0.0
  %3825 = vmatpush1.msra.mxu0 0.0
  %3826 = vmatprep.subr.mxu0 0.0
  %3827 = vmatpush1.msra.mxu0 0.0
  %3828 = vmatprep.subr.mxu0 0.0
  %3829 = vmatpush1.msra.mxu0 0.0
  %3830 = vmatprep.subr.mxu0 0.0
  %3831 = vmatpush1.msra.mxu0 0.0
  %3832 = vmatprep.subr.mxu0 0.0
  %3833 = vmatpush1.msra.mxu0 0.0
  %3834 = vmatprep.subr.mxu0 0.0
  %3835 = vmatpush1.msra.mxu0 0.0
  %3836 = vmatprep.subr.mxu0 0.0
  %3837 = vmatpush1.msra.mxu0 0.0
  %3838 = vmatprep.subr.mxu0 0.0
  %3839 = vmatpush1.msra.mxu0 0.0
  %3840 = vmatprep.subr.mxu0 0.0
  %3841 = vmatpush1.msra.mxu0 0.0
  %3842 = vmatprep.subr.mxu0 0.0
  %3843 = vmatpush1.msra.mxu0 0.0
  %3844 = vmatprep.subr.mxu0 0.0
  %3845 = vmatpush1.msra.mxu0 0.0
  %3846 = vmatprep.subr.mxu0 0.0
  %3847 = vmatpush1.msra.mxu0 0.0
  %3848 = vmatprep.mubr.f32.mxu0 0.0
  %3849 = vmatmul.mubr.f32.gmra.mrb[0].mxu0 %v3782
  %v3850 = vpop.f32.mrb[0].mxu0
  %v3851 = vadd.f32 0.0, %v3850
  %v3852 = vpop.f32.mrb[0].mxu0
  %3853 = vdwg.mxu0
  %v3855 = vsel %vm576, %v3780, 0
  %3857 = vmatprep.subr.mxu0 0.0
  %3858 = vmatpush1.msra.mxu0 %v3600
  %3859 = vmatprep.subr.mxu0 0.0
  %3860 = vmatpush1.msra.mxu0 0.0
  %3861 = vmatprep.subr.mxu0 0.0
  %3862 = vmatpush1.msra.mxu0 0.0
  %3863 = vmatprep.subr.mxu0 0.0
  %3864 = vmatpush1.msra.mxu0 0.0
  %3865 = vmatprep.subr.mxu0 0.0
  %3866 = vmatpush1.msra.mxu0 0.0
  %3867 = vmatprep.subr.mxu0 0.0
  %3868 = vmatpush1.msra.mxu0 0.0
  %3869 = vmatprep.subr.mxu0 0.0
  %3870 = vmatpush1.msra.mxu0 0.0
  %3871 = vmatprep.subr.mxu0 0.0
  %3872 = vmatpush1.msra.mxu0 0.0
  %3873 = vmatprep.subr.mxu0 0.0
  %3874 = vmatpush1.msra.mxu0 0.0
  %3875 = vmatprep.subr.mxu0 0.0
  %3876 = vmatpush1.msra.mxu0 0.0
  %3877 = vmatprep.subr.mxu0 0.0
  %3878 = vmatpush1.msra.mxu0 0.0
  %3879 = vmatprep.subr.mxu0 0.0
  %3880 = vmatpush1.msra.mxu0 0.0
  %3881 = vmatprep.subr.mxu0 0.0
  %3882 = vmatpush1.msra.mxu0 0.0
  %3883 = vmatprep.subr.mxu0 0.0
  %3884 = vmatpush1.msra.mxu0 0.0
  %3885 = vmatprep.subr.mxu0 0.0
  %3886 = vmatpush1.msra.mxu0 0.0
  %3887 = vmatprep.subr.mxu0 0.0
  %3888 = vmatpush1.msra.mxu0 0.0
  %3889 = vmatprep.subr.mxu0 0.0
  %3890 = vmatpush1.msra.mxu0 0.0
  %3891 = vmatprep.subr.mxu0 0.0
  %3892 = vmatpush1.msra.mxu0 0.0
  %3893 = vmatprep.subr.mxu0 0.0
  %3894 = vmatpush1.msra.mxu0 0.0
  %3895 = vmatprep.subr.mxu0 0.0
  %3896 = vmatpush1.msra.mxu0 0.0
  %3897 = vmatprep.subr.mxu0 0.0
  %3898 = vmatpush1.msra.mxu0 0.0
  %3899 = vmatprep.subr.mxu0 0.0
  %3900 = vmatpush1.msra.mxu0 0.0
  %3901 = vmatprep.subr.mxu0 0.0
  %3902 = vmatpush1.msra.mxu0 0.0
  %3903 = vmatprep.subr.mxu0 0.0
  %3904 = vmatpush1.msra.mxu0 0.0
  %3905 = vmatprep.subr.mxu0 0.0
  %3906 = vmatpush1.msra.mxu0 0.0
  %3907 = vmatprep.subr.mxu0 0.0
  %3908 = vmatpush1.msra.mxu0 0.0
  %3909 = vmatprep.subr.mxu0 0.0
  %3910 = vmatpush1.msra.mxu0 0.0
  %3911 = vmatprep.subr.mxu0 0.0
  %3912 = vmatpush1.msra.mxu0 0.0
  %3913 = vmatprep.subr.mxu0 0.0
  %3914 = vmatpush1.msra.mxu0 0.0
  %3915 = vmatprep.subr.mxu0 0.0
  %3916 = vmatpush1.msra.mxu0 0.0
  %3917 = vmatprep.subr.mxu0 0.0
  %3918 = vmatpush1.msra.mxu0 0.0
  %3919 = vmatprep.subr.mxu0 0.0
  %3920 = vmatpush1.msra.mxu0 0.0
  %3921 = vmatprep.mubr.f32.mxu0 0.0
  %3922 = vmatmul.mubr.f32.gmra.mrb[0].mxu0 %v3855
  %v3923 = vpop.f32.mrb[0].mxu0
  %v3924 = vadd.f32 0.0, %v3923
  %v3925 = vpop.f32.mrb[0].mxu0
  %3926 = vdwg.mxu0
  %v3927 = vld [vmem:[%s61] sm:$0xff]
  %s3928 = scalar_lea.vmem %s49, 32
  %v3929 = vld [vmem:[%s3928] sm:$0xff]
  %v3930 = vld [vmem:[%s3928 + $0x8] sm:$0xff]
  %v3931 = vld [vmem:[%s3928 + $0x10] sm:$0xff]
  %v3932 = vld [vmem:[%s3928 + $0x18] sm:$0xff]
  %s3933 = scalar_lea.vmem %s51, 1
  %v3934 = vld [vmem:[%s3933] sm:$0x1]
  %v3936 = vlaneseq
  %v3937 = vshrl.u32 %v3936, 7
  %v3938 = vsub.s32 0, %v3937
  %v3939 = vrot.slane %v3934, %v3938
  %3941 = vmatprep.subr.mxu0 0.0
  %3942 = vmatpush1.msra.mxu0 %v3929
  %3943 = vmatprep.subr.mxu0 0.0
  %3944 = vmatpush1.msra.mxu0 %v3930
  %3945 = vmatprep.subr.mxu0 0.0
  %3946 = vmatpush1.msra.mxu0 %v3931
  %3947 = vmatprep.subr.mxu0 0.0
  %3948 = vmatpush1.msra.mxu0 %v3932
  %3949 = vmatprep.subr.mxu0 0.0
  %3950 = vmatpush1.msra.mxu0 0.0
  %3951 = vmatprep.subr.mxu0 0.0
  %3952 = vmatpush1.msra.mxu0 0.0
  %3953 = vmatprep.subr.mxu0 0.0
  %3954 = vmatpush1.msra.mxu0 0.0
  %3955 = vmatprep.subr.mxu0 0.0
  %3956 = vmatpush1.msra.mxu0 0.0
  %3957 = vmatprep.subr.mxu0 0.0
  %3958 = vmatpush1.msra.mxu0 0.0
  %3959 = vmatprep.subr.mxu0 0.0
  %3960 = vmatpush1.msra.mxu0 0.0
  %3961 = vmatprep.subr.mxu0 0.0
  %3962 = vmatpush1.msra.mxu0 0.0
  %3963 = vmatprep.subr.mxu0 0.0
  %3964 = vmatpush1.msra.mxu0 0.0
  %3965 = vmatprep.subr.mxu0 0.0
  %3966 = vmatpush1.msra.mxu0 0.0
  %3967 = vmatprep.subr.mxu0 0.0
  %3968 = vmatpush1.msra.mxu0 0.0
  %3969 = vmatprep.subr.mxu0 0.0
  %3970 = vmatpush1.msra.mxu0 0.0
  %3971 = vmatprep.subr.mxu0 0.0
  %3972 = vmatpush1.msra.mxu0 0.0
  %3973 = vmatprep.subr.mxu0 0.0
  %3974 = vmatpush1.msra.mxu0 0.0
  %3975 = vmatprep.subr.mxu0 0.0
  %3976 = vmatpush1.msra.mxu0 0.0
  %3977 = vmatprep.subr.mxu0 0.0
  %3978 = vmatpush1.msra.mxu0 0.0
  %3979 = vmatprep.subr.mxu0 0.0
  %3980 = vmatpush1.msra.mxu0 0.0
  %3981 = vmatprep.subr.mxu0 0.0
  %3982 = vmatpush1.msra.mxu0 0.0
  %3983 = vmatprep.subr.mxu0 0.0
  %3984 = vmatpush1.msra.mxu0 0.0
  %3985 = vmatprep.subr.mxu0 0.0
  %3986 = vmatpush1.msra.mxu0 0.0
  %3987 = vmatprep.subr.mxu0 0.0
  %3988 = vmatpush1.msra.mxu0 0.0
  %3989 = vmatprep.subr.mxu0 0.0
  %3990 = vmatpush1.msra.mxu0 0.0
  %3991 = vmatprep.subr.mxu0 0.0
  %3992 = vmatpush1.msra.mxu0 0.0
  %3993 = vmatprep.subr.mxu0 0.0
  %3994 = vmatpush1.msra.mxu0 0.0
  %3995 = vmatprep.subr.mxu0 0.0
  %3996 = vmatpush1.msra.mxu0 0.0
  %3997 = vmatprep.subr.mxu0 0.0
  %3998 = vmatpush1.msra.mxu0 0.0
  %3999 = vmatprep.subr.mxu0 0.0
  %4000 = vmatpush1.msra.mxu0 0.0
  %4001 = vmatprep.subr.mxu0 0.0
  %4002 = vmatpush1.msra.mxu0 0.0
  %4003 = vmatprep.subr.mxu0 0.0
  %4004 = vmatpush1.msra.mxu0 0.0
  %4005 = vmatprep.mubr.f32.mxu0 0.0
  %4006 = vmatmul.mubr.f32.gmra.mrb[0].mxu0 %v3351
  %v4007 = vpop.f32.mrb[0].mxu0
  %v4008 = vadd.f32 %v3939, %v4007
  %v4009 = vpop.f32.mrb[0].mxu0
  %4010 = vmatprep.mubr.f32.mxu0 0.0
  %4011 = vmatmul.mubr.f32.gmra.mrb[0].mxu0 %v3354
  %v4012 = vpop.f32.mrb[0].mxu0
  %v4013 = vadd.f32 %v3939, %v4012
  %v4014 = vpop.f32.mrb[0].mxu0
  %4015 = vdwg.mxu0
  %s4016 = scalar_lea.vmem %s53, 32
  %v4017 = vld [vmem:[%s4016] sm:$0xff]
  %v4018 = vld [vmem:[%s4016 + $0x8] sm:$0xff]
  %v4019 = vld [vmem:[%s4016 + $0x10] sm:$0xff]
  %v4020 = vld [vmem:[%s4016 + $0x18] sm:$0xff]
  %s4021 = scalar_lea.vmem %s55, 1
  %v4022 = vld [vmem:[%s4021] sm:$0x1]
  %v4024 = vlaneseq
  %v4025 = vshrl.u32 %v4024, 7
  %v4026 = vsub.s32 0, %v4025
  %v4027 = vrot.slane %v4022, %v4026
  %4029 = vmatprep.subr.mxu0 0.0
  %4030 = vmatpush1.msra.mxu0 %v4017
  %4031 = vmatprep.subr.mxu0 0.0
  %4032 = vmatpush1.msra.mxu0 %v4018
  %4033 = vmatprep.subr.mxu0 0.0
  %4034 = vmatpush1.msra.mxu0 %v4019
  %4035 = vmatprep.subr.mxu0 0.0
  %4036 = vmatpush1.msra.mxu0 %v4020
  %4037 = vmatprep.subr.mxu0 0.0
  %4038 = vmatpush1.msra.mxu0 0.0
  %4039 = vmatprep.subr.mxu0 0.0
  %4040 = vmatpush1.msra.mxu0 0.0
  %4041 = vmatprep.subr.mxu0 0.0
  %4042 = vmatpush1.msra.mxu0 0.0
  %4043 = vmatprep.subr.mxu0 0.0
  %4044 = vmatpush1.msra.mxu0 0.0
  %4045 = vmatprep.subr.mxu0 0.0
  %4046 = vmatpush1.msra.mxu0 0.0
  %4047 = vmatprep.subr.mxu0 0.0
  %4048 = vmatpush1.msra.mxu0 0.0
  %4049 = vmatprep.subr.mxu0 0.0
  %4050 = vmatpush1.msra.mxu0 0.0
  %4051 = vmatprep.subr.mxu0 0.0
  %4052 = vmatpush1.msra.mxu0 0.0
  %4053 = vmatprep.subr.mxu0 0.0
  %4054 = vmatpush1.msra.mxu0 0.0
  %4055 = vmatprep.subr.mxu0 0.0
  %4056 = vmatpush1.msra.mxu0 0.0
  %4057 = vmatprep.subr.mxu0 0.0
  %4058 = vmatpush1.msra.mxu0 0.0
  %4059 = vmatprep.subr.mxu0 0.0
  %4060 = vmatpush1.msra.mxu0 0.0
  %4061 = vmatprep.subr.mxu0 0.0
  %4062 = vmatpush1.msra.mxu0 0.0
  %4063 = vmatprep.subr.mxu0 0.0
  %4064 = vmatpush1.msra.mxu0 0.0
  %4065 = vmatprep.subr.mxu0 0.0
  %4066 = vmatpush1.msra.mxu0 0.0
  %4067 = vmatprep.subr.mxu0 0.0
  %4068 = vmatpush1.msra.mxu0 0.0
  %4069 = vmatprep.subr.mxu0 0.0
  %4070 = vmatpush1.msra.mxu0 0.0
  %4071 = vmatprep.subr.mxu0 0.0
  %4072 = vmatpush1.msra.mxu0 0.0
  %4073 = vmatprep.subr.mxu0 0.0
  %4074 = vmatpush1.msra.mxu0 0.0
  %4075 = vmatprep.subr.mxu0 0.0
  %4076 = vmatpush1.msra.mxu0 0.0
  %4077 = vmatprep.subr.mxu0 0.0
  %4078 = vmatpush1.msra.mxu0 0.0
  %4079 = vmatprep.subr.mxu0 0.0
  %4080 = vmatpush1.msra.mxu0 0.0
  %4081 = vmatprep.subr.mxu0 0.0
  %4082 = vmatpush1.msra.mxu0 0.0
  %4083 = vmatprep.subr.mxu0 0.0
  %4084 = vmatpush1.msra.mxu0 0.0
  %4085 = vmatprep.subr.mxu0 0.0
  %4086 = vmatpush1.msra.mxu0 0.0
  %4087 = vmatprep.subr.mxu0 0.0
  %4088 = vmatpush1.msra.mxu0 0.0
  %4089 = vmatprep.subr.mxu0 0.0
  %4090 = vmatpush1.msra.mxu0 0.0
  %4091 = vmatprep.subr.mxu0 0.0
  %4092 = vmatpush1.msra.mxu0 0.0
  %4093 = vmatprep.mubr.f32.mxu0 0.0
  %4094 = vmatmul.mubr.f32.gmra.mrb[0].mxu0 %v3351
  %v4095 = vpop.f32.mrb[0].mxu0
  %v4096 = vadd.f32 %v4027, %v4095
  %v4097 = vpop.f32.mrb[0].mxu0
  %4098 = vmatprep.mubr.f32.mxu0 0.0
  %4099 = vmatmul.mubr.f32.gmra.mrb[0].mxu0 %v3354
  %v4100 = vpop.f32.mrb[0].mxu0
  %v4101 = vadd.f32 %v4027, %v4100
  %v4102 = vpop.f32.mrb[0].mxu0
  %4103 = vdwg.mxu0
  %s4104 = scalar_lea.vmem %s57, 32
  %v4105 = vld [vmem:[%s4104] sm:$0xff]
  %v4106 = vld [vmem:[%s4104 + $0x8] sm:$0xff]
  %v4107 = vld [vmem:[%s4104 + $0x10] sm:$0xff]
  %v4108 = vld [vmem:[%s4104 + $0x18] sm:$0xff]
  %s4109 = scalar_lea.vmem %s59, 1
  %v4110 = vld [vmem:[%s4109] sm:$0x1]
  %v4112 = vlaneseq
  %v4113 = vshrl.u32 %v4112, 7
  %v4114 = vsub.s32 0, %v4113
  %v4115 = vrot.slane %v4110, %v4114
  %4117 = vmatprep.subr.mxu0 0.0
  %4118 = vmatpush1.msra.mxu0 %v4105
  %4119 = vmatprep.subr.mxu0 0.0
  %4120 = vmatpush1.msra.mxu0 %v4106
  %4121 = vmatprep.subr.mxu0 0.0
  %4122 = vmatpush1.msra.mxu0 %v4107
  %4123 = vmatprep.subr.mxu0 0.0
  %4124 = vmatpush1.msra.mxu0 %v4108
  %4125 = vmatprep.subr.mxu0 0.0
  %4126 = vmatpush1.msra.mxu0 0.0
  %4127 = vmatprep.subr.mxu0 0.0
  %4128 = vmatpush1.msra.mxu0 0.0
  %4129 = vmatprep.subr.mxu0 0.0
  %4130 = vmatpush1.msra.mxu0 0.0
  %4131 = vmatprep.subr.mxu0 0.0
  %4132 = vmatpush1.msra.mxu0 0.0
  %4133 = vmatprep.subr.mxu0 0.0
  %4134 = vmatpush1.msra.mxu0 0.0
  %4135 = vmatprep.subr.mxu0 0.0
  %4136 = vmatpush1.msra.mxu0 0.0
  %4137 = vmatprep.subr.mxu0 0.0
  %4138 = vmatpush1.msra.mxu0 0.0
  %4139 = vmatprep.subr.mxu0 0.0
  %4140 = vmatpush1.msra.mxu0 0.0
  %4141 = vmatprep.subr.mxu0 0.0
  %4142 = vmatpush1.msra.mxu0 0.0
  %4143 = vmatprep.subr.mxu0 0.0
  %4144 = vmatpush1.msra.mxu0 0.0
  %4145 = vmatprep.subr.mxu0 0.0
  %4146 = vmatpush1.msra.mxu0 0.0
  %4147 = vmatprep.subr.mxu0 0.0
  %4148 = vmatpush1.msra.mxu0 0.0
  %4149 = vmatprep.subr.mxu0 0.0
  %4150 = vmatpush1.msra.mxu0 0.0
  %4151 = vmatprep.subr.mxu0 0.0
  %4152 = vmatpush1.msra.mxu0 0.0
  %4153 = vmatprep.subr.mxu0 0.0
  %4154 = vmatpush1.msra.mxu0 0.0
  %4155 = vmatprep.subr.mxu0 0.0
  %4156 = vmatpush1.msra.mxu0 0.0
  %4157 = vmatprep.subr.mxu0 0.0
  %4158 = vmatpush1.msra.mxu0 0.0
  %4159 = vmatprep.subr.mxu0 0.0
  %4160 = vmatpush1.msra.mxu0 0.0
  %4161 = vmatprep.subr.mxu0 0.0
  %4162 = vmatpush1.msra.mxu0 0.0
  %4163 = vmatprep.subr.mxu0 0.0
  %4164 = vmatpush1.msra.mxu0 0.0
  %4165 = vmatprep.subr.mxu0 0.0
  %4166 = vmatpush1.msra.mxu0 0.0
  %4167 = vmatprep.subr.mxu0 0.0
  %4168 = vmatpush1.msra.mxu0 0.0
  %4169 = vmatprep.subr.mxu0 0.0
  %4170 = vmatpush1.msra.mxu0 0.0
  %4171 = vmatprep.subr.mxu0 0.0
  %4172 = vmatpush1.msra.mxu0 0.0
  %4173 = vmatprep.subr.mxu0 0.0
  %4174 = vmatpush1.msra.mxu0 0.0
  %4175 = vmatprep.subr.mxu0 0.0
  %4176 = vmatpush1.msra.mxu0 0.0
  %4177 = vmatprep.subr.mxu0 0.0
  %4178 = vmatpush1.msra.mxu0 0.0
  %4179 = vmatprep.subr.mxu0 0.0
  %4180 = vmatpush1.msra.mxu0 0.0
  %4181 = vmatprep.mubr.f32.mxu0 0.0
  %4182 = vmatmul.mubr.f32.gmra.mrb[0].mxu0 %v3351
  %v4183 = vpop.f32.mrb[0].mxu0
  %v4184 = vadd.f32 %v4115, %v4183
  %v4185 = vpop.f32.mrb[0].mxu0
  %4186 = vmatprep.mubr.f32.mxu0 0.0
  %4187 = vmatmul.mubr.f32.gmra.mrb[0].mxu0 %v3354
  %v4188 = vpop.f32.mrb[0].mxu0
  %v4189 = vadd.f32 %v4115, %v4188
  %v4190 = vpop.f32.mrb[0].mxu0
  %4191 = vdwg.mxu0
  %v4193 = vsel %vm576, %v4008, 0
  %v4196 = vsel %vm576, %v4096, 0
  %4198 = vmatprep.subr.mxu0 0.0
  %4199 = vmatpush1.xpose.msra.mxu0 %v4196
  %4200 = vmatprep.subr.mxu0 0.0
  %4201 = vmatpush1.xpose.msra.mxu0 0.0
  %4202 = vmatprep.subr.mxu0 0.0
  %4203 = vmatpush1.xpose.msra.mxu0 0.0
  %4204 = vmatprep.subr.mxu0 0.0
  %4205 = vmatpush1.xpose.msra.mxu0 0.0
  %4206 = vmatprep.subr.mxu0 0.0
  %4207 = vmatpush1.xpose.msra.mxu0 0.0
  %4208 = vmatprep.subr.mxu0 0.0
  %4209 = vmatpush1.xpose.msra.mxu0 0.0
  %4210 = vmatprep.subr.mxu0 0.0
  %4211 = vmatpush1.xpose.msra.mxu0 0.0
  %4212 = vmatprep.subr.mxu0 0.0
  %4213 = vmatpush1.xpose.msra.mxu0 0.0
  %4214 = vmatprep.subr.mxu0 0.0
  %4215 = vmatpush1.xpose.msra.mxu0 0.0
  %4216 = vmatprep.subr.mxu0 0.0
  %4217 = vmatpush1.xpose.msra.mxu0 0.0
  %4218 = vmatprep.subr.mxu0 0.0
  %4219 = vmatpush1.xpose.msra.mxu0 0.0
  %4220 = vmatprep.subr.mxu0 0.0
  %4221 = vmatpush1.xpose.msra.mxu0 0.0
  %4222 = vmatprep.subr.mxu0 0.0
  %4223 = vmatpush1.xpose.msra.mxu0 0.0
  %4224 = vmatprep.subr.mxu0 0.0
  %4225 = vmatpush1.xpose.msra.mxu0 0.0
  %4226 = vmatprep.subr.mxu0 0.0
  %4227 = vmatpush1.xpose.msra.mxu0 0.0
  %4228 = vmatprep.subr.mxu0 0.0
  %4229 = vmatpush1.xpose.msra.mxu0 0.0
  %4230 = vmatprep.subr.mxu0 0.0
  %4231 = vmatpush1.xpose.msra.mxu0 0.0
  %4232 = vmatprep.subr.mxu0 0.0
  %4233 = vmatpush1.xpose.msra.mxu0 0.0
  %4234 = vmatprep.subr.mxu0 0.0
  %4235 = vmatpush1.xpose.msra.mxu0 0.0
  %4236 = vmatprep.subr.mxu0 0.0
  %4237 = vmatpush1.xpose.msra.mxu0 0.0
  %4238 = vmatprep.subr.mxu0 0.0
  %4239 = vmatpush1.xpose.msra.mxu0 0.0
  %4240 = vmatprep.subr.mxu0 0.0
  %4241 = vmatpush1.xpose.msra.mxu0 0.0
  %4242 = vmatprep.subr.mxu0 0.0
  %4243 = vmatpush1.xpose.msra.mxu0 0.0
  %4244 = vmatprep.subr.mxu0 0.0
  %4245 = vmatpush1.xpose.msra.mxu0 0.0
  %4246 = vmatprep.subr.mxu0 0.0
  %4247 = vmatpush1.xpose.msra.mxu0 0.0
  %4248 = vmatprep.subr.mxu0 0.0
  %4249 = vmatpush1.xpose.msra.mxu0 0.0
  %4250 = vmatprep.subr.mxu0 0.0
  %4251 = vmatpush1.xpose.msra.mxu0 0.0
  %4252 = vmatprep.subr.mxu0 0.0
  %4253 = vmatpush1.xpose.msra.mxu0 0.0
  %4254 = vmatprep.subr.mxu0 0.0
  %4255 = vmatpush1.xpose.msra.mxu0 0.0
  %4256 = vmatprep.subr.mxu0 0.0
  %4257 = vmatpush1.xpose.msra.mxu0 0.0
  %4258 = vmatprep.subr.mxu0 0.0
  %4259 = vmatpush1.xpose.msra.mxu0 0.0
  %4260 = vmatprep.subr.mxu0 0.0
  %4261 = vmatpush1.xpose.msra.mxu0 0.0
  %4262 = vmatprep.mubr.f32.mxu0 0.0
  %4263 = vmatmul.mubr.f32.gmra.mrb[0].mxu0 %v4193
  %v4264 = vpop.f32.mrb[0].mxu0
  %v4265 = vadd.f32 0.0, %v4264
  %v4266 = vpop.f32.mrb[0].mxu0
  %4267 = vdwg.mxu0
  %v4269 = vsel %vm576, %v4013, 0
  %v4272 = vsel %vm576, %v4101, 0
  %4274 = vmatprep.subr.mxu0 0.0
  %4275 = vmatpush1.xpose.msra.mxu0 %v4272
  %4276 = vmatprep.subr.mxu0 0.0
  %4277 = vmatpush1.xpose.msra.mxu0 0.0
  %4278 = vmatprep.subr.mxu0 0.0
  %4279 = vmatpush1.xpose.msra.mxu0 0.0
  %4280 = vmatprep.subr.mxu0 0.0
  %4281 = vmatpush1.xpose.msra.mxu0 0.0
  %4282 = vmatprep.subr.mxu0 0.0
  %4283 = vmatpush1.xpose.msra.mxu0 0.0
  %4284 = vmatprep.subr.mxu0 0.0
  %4285 = vmatpush1.xpose.msra.mxu0 0.0
  %4286 = vmatprep.subr.mxu0 0.0
  %4287 = vmatpush1.xpose.msra.mxu0 0.0
  %4288 = vmatprep.subr.mxu0 0.0
  %4289 = vmatpush1.xpose.msra.mxu0 0.0
  %4290 = vmatprep.subr.mxu0 0.0
  %4291 = vmatpush1.xpose.msra.mxu0 0.0
  %4292 = vmatprep.subr.mxu0 0.0
  %4293 = vmatpush1.xpose.msra.mxu0 0.0
  %4294 = vmatprep.subr.mxu0 0.0
  %4295 = vmatpush1.xpose.msra.mxu0 0.0
  %4296 = vmatprep.subr.mxu0 0.0
  %4297 = vmatpush1.xpose.msra.mxu0 0.0
  %4298 = vmatprep.subr.mxu0 0.0
  %4299 = vmatpush1.xpose.msra.mxu0 0.0
  %4300 = vmatprep.subr.mxu0 0.0
  %4301 = vmatpush1.xpose.msra.mxu0 0.0
  %4302 = vmatprep.subr.mxu0 0.0
  %4303 = vmatpush1.xpose.msra.mxu0 0.0
  %4304 = vmatprep.subr.mxu0 0.0
  %4305 = vmatpush1.xpose.msra.mxu0 0.0
  %4306 = vmatprep.subr.mxu0 0.0
  %4307 = vmatpush1.xpose.msra.mxu0 0.0
  %4308 = vmatprep.subr.mxu0 0.0
  %4309 = vmatpush1.xpose.msra.mxu0 0.0
  %4310 = vmatprep.subr.mxu0 0.0
  %4311 = vmatpush1.xpose.msra.mxu0 0.0
  %4312 = vmatprep.subr.mxu0 0.0
  %4313 = vmatpush1.xpose.msra.mxu0 0.0
  %4314 = vmatprep.subr.mxu0 0.0
  %4315 = vmatpush1.xpose.msra.mxu0 0.0
  %4316 = vmatprep.subr.mxu0 0.0
  %4317 = vmatpush1.xpose.msra.mxu0 0.0
  %4318 = vmatprep.subr.mxu0 0.0
  %4319 = vmatpush1.xpose.msra.mxu0 0.0
  %4320 = vmatprep.subr.mxu0 0.0
  %4321 = vmatpush1.xpose.msra.mxu0 0.0
  %4322 = vmatprep.subr.mxu0 0.0
  %4323 = vmatpush1.xpose.msra.mxu0 0.0
  %4324 = vmatprep.subr.mxu0 0.0
  %4325 = vmatpush1.xpose.msra.mxu0 0.0
  %4326 = vmatprep.subr.mxu0 0.0
  %4327 = vmatpush1.xpose.msra.mxu0 0.0
  %4328 = vmatprep.subr.mxu0 0.0
  %4329 = vmatpush1.xpose.msra.mxu0 0.0
  %4330 = vmatprep.subr.mxu0 0.0
  %4331 = vmatpush1.xpose.msra.mxu0 0.0
  %4332 = vmatprep.subr.mxu0 0.0
  %4333 = vmatpush1.xpose.msra.mxu0 0.0
  %4334 = vmatprep.subr.mxu0 0.0
  %4335 = vmatpush1.xpose.msra.mxu0 0.0
  %4336 = vmatprep.subr.mxu0 0.0
  %4337 = vmatpush1.xpose.msra.mxu0 0.0
  %4338 = vmatprep.mubr.f32.mxu0 0.0
  %4339 = vmatmul.mubr.f32.gmra.mrb[0].mxu0 %v4269
  %v4340 = vpop.f32.mrb[0].mxu0
  %v4341 = vadd.f32 0.0, %v4340
  %v4342 = vpop.f32.mrb[0].mxu0
  %4343 = vdwg.mxu0
  %v4344 = vmul.f32 %v4265, 0.35355338
  %v4345 = vmul.f32 %v4341, 0.35355338
  %v4346 = vsel %vm732, %v4344, -1e+10
  %v4347 = vsel %vm732, %v4345, -1e+10
  %v4348 = vsel %vm576, %v4346, -inf
  %4349 = vmax.xlane.f32.xlu0 %v4348
  %v4350 = vpop.xlane.xlu0 %4349
  %v4351 = vsel %vm576, %v4347, -inf
  %4352 = vmax.xlane.f32.xlu0 %v4351
  %v4353 = vpop.xlane.xlu0 %4352
  %v4354 = vsub.f32 %v4346, %v4350
  %v4355 = vsub.f32 %v4347, %v4353
  %v4356 = vmul.f32 %v4354, 1.442695
  %v4357 = vpow.pop %v4356
  %v4358 = vmul.f32 %v4355, 1.442695
  %v4359 = vpow.pop %v4358
  %v4360 = vsel %vm576, %v4357, 0.0
  %4361 = vadd.xlane.f32.xlu0 %v4360
  %v4362 = vpop.xlane.xlu0 %4361
  %v4363 = vsel %vm576, %v4359, 0.0
  %4364 = vadd.xlane.f32.xlu0 %v4363
  %v4365 = vpop.xlane.xlu0 %4364
  %v4366 = vrcp.pop %v4362
  %v4367 = vrcp.pop %v4365
  %v4368 = vmul.f32 %v4357, %v4366
  %v4369 = vmul.f32 %v4359, %v4367
  %v4371 = vsel %vm576, %v4368, 0
  %4373 = vmatprep.subr.mxu0 0.0
  %4374 = vmatpush1.msra.mxu0 %v4184
  %4375 = vmatprep.subr.mxu0 0.0
  %4376 = vmatpush1.msra.mxu0 0.0
  %4377 = vmatprep.subr.mxu0 0.0
  %4378 = vmatpush1.msra.mxu0 0.0
  %4379 = vmatprep.subr.mxu0 0.0
  %4380 = vmatpush1.msra.mxu0 0.0
  %4381 = vmatprep.subr.mxu0 0.0
  %4382 = vmatpush1.msra.mxu0 0.0
  %4383 = vmatprep.subr.mxu0 0.0
  %4384 = vmatpush1.msra.mxu0 0.0
  %4385 = vmatprep.subr.mxu0 0.0
  %4386 = vmatpush1.msra.mxu0 0.0
  %4387 = vmatprep.subr.mxu0 0.0
  %4388 = vmatpush1.msra.mxu0 0.0
  %4389 = vmatprep.subr.mxu0 0.0
  %4390 = vmatpush1.msra.mxu0 0.0
  %4391 = vmatprep.subr.mxu0 0.0
  %4392 = vmatpush1.msra.mxu0 0.0
  %4393 = vmatprep.subr.mxu0 0.0
  %4394 = vmatpush1.msra.mxu0 0.0
  %4395 = vmatprep.subr.mxu0 0.0
  %4396 = vmatpush1.msra.mxu0 0.0
  %4397 = vmatprep.subr.mxu0 0.0
  %4398 = vmatpush1.msra.mxu0 0.0
  %4399 = vmatprep.subr.mxu0 0.0
  %4400 = vmatpush1.msra.mxu0 0.0
  %4401 = vmatprep.subr.mxu0 0.0
  %4402 = vmatpush1.msra.mxu0 0.0
  %4403 = vmatprep.subr.mxu0 0.0
  %4404 = vmatpush1.msra.mxu0 0.0
  %4405 = vmatprep.subr.mxu0 0.0
  %4406 = vmatpush1.msra.mxu0 0.0
  %4407 = vmatprep.subr.mxu0 0.0
  %4408 = vmatpush1.msra.mxu0 0.0
  %4409 = vmatprep.subr.mxu0 0.0
  %4410 = vmatpush1.msra.mxu0 0.0
  %4411 = vmatprep.subr.mxu0 0.0
  %4412 = vmatpush1.msra.mxu0 0.0
  %4413 = vmatprep.subr.mxu0 0.0
  %4414 = vmatpush1.msra.mxu0 0.0
  %4415 = vmatprep.subr.mxu0 0.0
  %4416 = vmatpush1.msra.mxu0 0.0
  %4417 = vmatprep.subr.mxu0 0.0
  %4418 = vmatpush1.msra.mxu0 0.0
  %4419 = vmatprep.subr.mxu0 0.0
  %4420 = vmatpush1.msra.mxu0 0.0
  %4421 = vmatprep.subr.mxu0 0.0
  %4422 = vmatpush1.msra.mxu0 0.0
  %4423 = vmatprep.subr.mxu0 0.0
  %4424 = vmatpush1.msra.mxu0 0.0
  %4425 = vmatprep.subr.mxu0 0.0
  %4426 = vmatpush1.msra.mxu0 0.0
  %4427 = vmatprep.subr.mxu0 0.0
  %4428 = vmatpush1.msra.mxu0 0.0
  %4429 = vmatprep.subr.mxu0 0.0
  %4430 = vmatpush1.msra.mxu0 0.0
  %4431 = vmatprep.subr.mxu0 0.0
  %4432 = vmatpush1.msra.mxu0 0.0
  %4433 = vmatprep.subr.mxu0 0.0
  %4434 = vmatpush1.msra.mxu0 0.0
  %4435 = vmatprep.subr.mxu0 0.0
  %4436 = vmatpush1.msra.mxu0 0.0
  %4437 = vmatprep.mubr.f32.mxu0 0.0
  %4438 = vmatmul.mubr.f32.gmra.mrb[0].mxu0 %v4371
  %v4439 = vpop.f32.mrb[0].mxu0
  %v4440 = vadd.f32 0.0, %v4439
  %v4441 = vpop.f32.mrb[0].mxu0
  %4442 = vdwg.mxu0
  %v4444 = vsel %vm576, %v4369, 0
  %4446 = vmatprep.subr.mxu0 0.0
  %4447 = vmatpush1.msra.mxu0 %v4189
  %4448 = vmatprep.subr.mxu0 0.0
  %4449 = vmatpush1.msra.mxu0 0.0
  %4450 = vmatprep.subr.mxu0 0.0
  %4451 = vmatpush1.msra.mxu0 0.0
  %4452 = vmatprep.subr.mxu0 0.0
  %4453 = vmatpush1.msra.mxu0 0.0
  %4454 = vmatprep.subr.mxu0 0.0
  %4455 = vmatpush1.msra.mxu0 0.0
  %4456 = vmatprep.subr.mxu0 0.0
  %4457 = vmatpush1.msra.mxu0 0.0
  %4458 = vmatprep.subr.mxu0 0.0
  %4459 = vmatpush1.msra.mxu0 0.0
  %4460 = vmatprep.subr.mxu0 0.0
  %4461 = vmatpush1.msra.mxu0 0.0
  %4462 = vmatprep.subr.mxu0 0.0
  %4463 = vmatpush1.msra.mxu0 0.0
  %4464 = vmatprep.subr.mxu0 0.0
  %4465 = vmatpush1.msra.mxu0 0.0
  %4466 = vmatprep.subr.mxu0 0.0
  %4467 = vmatpush1.msra.mxu0 0.0
  %4468 = vmatprep.subr.mxu0 0.0
  %4469 = vmatpush1.msra.mxu0 0.0
  %4470 = vmatprep.subr.mxu0 0.0
  %4471 = vmatpush1.msra.mxu0 0.0
  %4472 = vmatprep.subr.mxu0 0.0
  %4473 = vmatpush1.msra.mxu0 0.0
  %4474 = vmatprep.subr.mxu0 0.0
  %4475 = vmatpush1.msra.mxu0 0.0
  %4476 = vmatprep.subr.mxu0 0.0
  %4477 = vmatpush1.msra.mxu0 0.0
  %4478 = vmatprep.subr.mxu0 0.0
  %4479 = vmatpush1.msra.mxu0 0.0
  %4480 = vmatprep.subr.mxu0 0.0
  %4481 = vmatpush1.msra.mxu0 0.0
  %4482 = vmatprep.subr.mxu0 0.0
  %4483 = vmatpush1.msra.mxu0 0.0
  %4484 = vmatprep.subr.mxu0 0.0
  %4485 = vmatpush1.msra.mxu0 0.0
  %4486 = vmatprep.subr.mxu0 0.0
  %4487 = vmatpush1.msra.mxu0 0.0
  %4488 = vmatprep.subr.mxu0 0.0
  %4489 = vmatpush1.msra.mxu0 0.0
  %4490 = vmatprep.subr.mxu0 0.0
  %4491 = vmatpush1.msra.mxu0 0.0
  %4492 = vmatprep.subr.mxu0 0.0
  %4493 = vmatpush1.msra.mxu0 0.0
  %4494 = vmatprep.subr.mxu0 0.0
  %4495 = vmatpush1.msra.mxu0 0.0
  %4496 = vmatprep.subr.mxu0 0.0
  %4497 = vmatpush1.msra.mxu0 0.0
  %4498 = vmatprep.subr.mxu0 0.0
  %4499 = vmatpush1.msra.mxu0 0.0
  %4500 = vmatprep.subr.mxu0 0.0
  %4501 = vmatpush1.msra.mxu0 0.0
  %4502 = vmatprep.subr.mxu0 0.0
  %4503 = vmatpush1.msra.mxu0 0.0
  %4504 = vmatprep.subr.mxu0 0.0
  %4505 = vmatpush1.msra.mxu0 0.0
  %4506 = vmatprep.subr.mxu0 0.0
  %4507 = vmatpush1.msra.mxu0 0.0
  %4508 = vmatprep.subr.mxu0 0.0
  %4509 = vmatpush1.msra.mxu0 0.0
  %4510 = vmatprep.mubr.f32.mxu0 0.0
  %4511 = vmatmul.mubr.f32.gmra.mrb[0].mxu0 %v4444
  %v4512 = vpop.f32.mrb[0].mxu0
  %v4513 = vadd.f32 0.0, %v4512
  %v4514 = vpop.f32.mrb[0].mxu0
  %4515 = vdwg.mxu0
  %s4516 = scalar_lea.vmem %s61, 8
  %v4517 = vld [vmem:[%s4516] sm:$0xff]
  %v4519 = vsel %vm576, %v4440, 0
  %v4522 = vsel %vm576, %v4513, 0
  %4524 = vmatprep.subr.mxu0 0.0
  %4525 = vmatpush1.msra.mxu0 %v4517
  %4526 = vmatprep.subr.mxu0 0.0
  %4527 = vmatpush1.msra.mxu0 0.0
  %4528 = vmatprep.subr.mxu0 0.0
  %4529 = vmatpush1.msra.mxu0 0.0
  %4530 = vmatprep.subr.mxu0 0.0
  %4531 = vmatpush1.msra.mxu0 0.0
  %4532 = vmatprep.subr.mxu0 0.0
  %4533 = vmatpush1.msra.mxu0 0.0
  %4534 = vmatprep.subr.mxu0 0.0
  %4535 = vmatpush1.msra.mxu0 0.0
  %4536 = vmatprep.subr.mxu0 0.0
  %4537 = vmatpush1.msra.mxu0 0.0
  %4538 = vmatprep.subr.mxu0 0.0
  %4539 = vmatpush1.msra.mxu0 0.0
  %4540 = vmatprep.subr.mxu0 0.0
  %4541 = vmatpush1.msra.mxu0 0.0
  %4542 = vmatprep.subr.mxu0 0.0
  %4543 = vmatpush1.msra.mxu0 0.0
  %4544 = vmatprep.subr.mxu0 0.0
  %4545 = vmatpush1.msra.mxu0 0.0
  %4546 = vmatprep.subr.mxu0 0.0
  %4547 = vmatpush1.msra.mxu0 0.0
  %4548 = vmatprep.subr.mxu0 0.0
  %4549 = vmatpush1.msra.mxu0 0.0
  %4550 = vmatprep.subr.mxu0 0.0
  %4551 = vmatpush1.msra.mxu0 0.0
  %4552 = vmatprep.subr.mxu0 0.0
  %4553 = vmatpush1.msra.mxu0 0.0
  %4554 = vmatprep.subr.mxu0 0.0
  %4555 = vmatpush1.msra.mxu0 0.0
  %4556 = vmatprep.subr.mxu0 0.0
  %4557 = vmatpush1.msra.mxu0 0.0
  %4558 = vmatprep.subr.mxu0 0.0
  %4559 = vmatpush1.msra.mxu0 0.0
  %4560 = vmatprep.subr.mxu0 0.0
  %4561 = vmatpush1.msra.mxu0 0.0
  %4562 = vmatprep.subr.mxu0 0.0
  %4563 = vmatpush1.msra.mxu0 0.0
  %4564 = vmatprep.subr.mxu0 0.0
  %4565 = vmatpush1.msra.mxu0 0.0
  %4566 = vmatprep.subr.mxu0 0.0
  %4567 = vmatpush1.msra.mxu0 0.0
  %4568 = vmatprep.subr.mxu0 0.0
  %4569 = vmatpush1.msra.mxu0 0.0
  %4570 = vmatprep.subr.mxu0 0.0
  %4571 = vmatpush1.msra.mxu0 0.0
  %4572 = vmatprep.subr.mxu0 0.0
  %4573 = vmatpush1.msra.mxu0 0.0
  %4574 = vmatprep.subr.mxu0 0.0
  %4575 = vmatpush1.msra.mxu0 0.0
  %4576 = vmatprep.subr.mxu0 0.0
  %4577 = vmatpush1.msra.mxu0 0.0
  %4578 = vmatprep.subr.mxu0 0.0
  %4579 = vmatpush1.msra.mxu0 0.0
  %4580 = vmatprep.subr.mxu0 0.0
  %4581 = vmatpush1.msra.mxu0 0.0
  %4582 = vmatprep.subr.mxu0 0.0
  %4583 = vmatpush1.msra.mxu0 0.0
  %4584 = vmatprep.subr.mxu0 0.0
  %4585 = vmatpush1.msra.mxu0 0.0
  %4586 = vmatprep.subr.mxu0 0.0
  %4587 = vmatpush1.msra.mxu0 0.0
  %4588 = vmatprep.mubr.f32.mxu0 0.0
  %4589 = vmatmul.mubr.f32.gmra.mrb[0].mxu0 %v4519
  %v4590 = vpop.f32.mrb[0].mxu0
  %v4591 = vadd.f32 0.0, %v4590
  %v4592 = vpop.f32.mrb[0].mxu0
  %4593 = vmatprep.mubr.f32.mxu0 0.0
  %4594 = vmatmul.mubr.f32.gmra.mrb[0].mxu0 %v4522
  %v4595 = vpop.f32.mrb[0].mxu0
  %v4596 = vadd.f32 0.0, %v4595
  %v4597 = vpop.f32.mrb[0].mxu0
  %4598 = vdwg.mxu0
  %v4600 = vsel %vm576, %v3851, 0
  %v4603 = vsel %vm576, %v3924, 0
  %4605 = vmatprep.subr.mxu0 0.0
  %4606 = vmatpush1.msra.mxu0 %v3927
  %4607 = vmatprep.subr.mxu0 0.0
  %4608 = vmatpush1.msra.mxu0 0.0
  %4609 = vmatprep.subr.mxu0 0.0
  %4610 = vmatpush1.msra.mxu0 0.0
  %4611 = vmatprep.subr.mxu0 0.0
  %4612 = vmatpush1.msra.mxu0 0.0
  %4613 = vmatprep.subr.mxu0 0.0
  %4614 = vmatpush1.msra.mxu0 0.0
  %4615 = vmatprep.subr.mxu0 0.0
  %4616 = vmatpush1.msra.mxu0 0.0
  %4617 = vmatprep.subr.mxu0 0.0
  %4618 = vmatpush1.msra.mxu0 0.0
  %4619 = vmatprep.subr.mxu0 0.0
  %4620 = vmatpush1.msra.mxu0 0.0
  %4621 = vmatprep.subr.mxu0 0.0
  %4622 = vmatpush1.msra.mxu0 0.0
  %4623 = vmatprep.subr.mxu0 0.0
  %4624 = vmatpush1.msra.mxu0 0.0
  %4625 = vmatprep.subr.mxu0 0.0
  %4626 = vmatpush1.msra.mxu0 0.0
  %4627 = vmatprep.subr.mxu0 0.0
  %4628 = vmatpush1.msra.mxu0 0.0
  %4629 = vmatprep.subr.mxu0 0.0
  %4630 = vmatpush1.msra.mxu0 0.0
  %4631 = vmatprep.subr.mxu0 0.0
  %4632 = vmatpush1.msra.mxu0 0.0
  %4633 = vmatprep.subr.mxu0 0.0
  %4634 = vmatpush1.msra.mxu0 0.0
  %4635 = vmatprep.subr.mxu0 0.0
  %4636 = vmatpush1.msra.mxu0 0.0
  %4637 = vmatprep.subr.mxu0 0.0
  %4638 = vmatpush1.msra.mxu0 0.0
  %4639 = vmatprep.subr.mxu0 0.0
  %4640 = vmatpush1.msra.mxu0 0.0
  %4641 = vmatprep.subr.mxu0 0.0
  %4642 = vmatpush1.msra.mxu0 0.0
  %4643 = vmatprep.subr.mxu0 0.0
  %4644 = vmatpush1.msra.mxu0 0.0
  %4645 = vmatprep.subr.mxu0 0.0
  %4646 = vmatpush1.msra.mxu0 0.0
  %4647 = vmatprep.subr.mxu0 0.0
  %4648 = vmatpush1.msra.mxu0 0.0
  %4649 = vmatprep.subr.mxu0 0.0
  %4650 = vmatpush1.msra.mxu0 0.0
  %4651 = vmatprep.subr.mxu0 0.0
  %4652 = vmatpush1.msra.mxu0 0.0
  %4653 = vmatprep.subr.mxu0 0.0
  %4654 = vmatpush1.msra.mxu0 0.0
  %4655 = vmatprep.subr.mxu0 0.0
  %4656 = vmatpush1.msra.mxu0 0.0
  %4657 = vmatprep.subr.mxu0 0.0
  %4658 = vmatpush1.msra.mxu0 0.0
  %4659 = vmatprep.subr.mxu0 0.0
  %4660 = vmatpush1.msra.mxu0 0.0
  %4661 = vmatprep.subr.mxu0 0.0
  %4662 = vmatpush1.msra.mxu0 0.0
  %4663 = vmatprep.subr.mxu0 0.0
  %4664 = vmatpush1.msra.mxu0 0.0
  %4665 = vmatprep.subr.mxu0 0.0
  %4666 = vmatpush1.msra.mxu0 0.0
  %4667 = vmatprep.subr.mxu0 0.0
  %4668 = vmatpush1.msra.mxu0 0.0
  %4669 = vmatprep.mubr.f32.mxu0 0.0
  %4670 = vmatmul.mubr.f32.gmra.mrb[0].mxu0 %v4600
  %v4671 = vpop.f32.mrb[0].mxu0
  %v4672 = vadd.f32 %v4591, %v4671
  %v4673 = vpop.f32.mrb[0].mxu0
  %4674 = vmatprep.mubr.f32.mxu0 0.0
  %4675 = vmatmul.mubr.f32.gmra.mrb[0].mxu0 %v4603
  %v4676 = vpop.f32.mrb[0].mxu0
  %v4677 = vadd.f32 %v4596, %v4676
  %v4678 = vpop.f32.mrb[0].mxu0
  %4679 = vdwg.mxu0
  %s4680 = scalar_lea.vmem %s49, 64
  %v4681 = vld [vmem:[%s4680] sm:$0xff]
  %v4682 = vld [vmem:[%s4680 + $0x8] sm:$0xff]
  %v4683 = vld [vmem:[%s4680 + $0x10] sm:$0xff]
  %v4684 = vld [vmem:[%s4680 + $0x18] sm:$0xff]
  %s4685 = scalar_lea.vmem %s51, 2
  %v4686 = vld [vmem:[%s4685] sm:$0x1]
  %v4688 = vlaneseq
  %v4689 = vshrl.u32 %v4688, 7
  %v4690 = vsub.s32 0, %v4689
  %v4691 = vrot.slane %v4686, %v4690
  %4693 = vmatprep.subr.mxu0 0.0
  %4694 = vmatpush1.msra.mxu0 %v4681
  %4695 = vmatprep.subr.mxu0 0.0
  %4696 = vmatpush1.msra.mxu0 %v4682
  %4697 = vmatprep.subr.mxu0 0.0
  %4698 = vmatpush1.msra.mxu0 %v4683
  %4699 = vmatprep.subr.mxu0 0.0
  %4700 = vmatpush1.msra.mxu0 %v4684
  %4701 = vmatprep.subr.mxu0 0.0
  %4702 = vmatpush1.msra.mxu0 0.0
  %4703 = vmatprep.subr.mxu0 0.0
  %4704 = vmatpush1.msra.mxu0 0.0
  %4705 = vmatprep.subr.mxu0 0.0
  %4706 = vmatpush1.msra.mxu0 0.0
  %4707 = vmatprep.subr.mxu0 0.0
  %4708 = vmatpush1.msra.mxu0 0.0
  %4709 = vmatprep.subr.mxu0 0.0
  %4710 = vmatpush1.msra.mxu0 0.0
  %4711 = vmatprep.subr.mxu0 0.0
  %4712 = vmatpush1.msra.mxu0 0.0
  %4713 = vmatprep.subr.mxu0 0.0
  %4714 = vmatpush1.msra.mxu0 0.0
  %4715 = vmatprep.subr.mxu0 0.0
  %4716 = vmatpush1.msra.mxu0 0.0
  %4717 = vmatprep.subr.mxu0 0.0
  %4718 = vmatpush1.msra.mxu0 0.0
  %4719 = vmatprep.subr.mxu0 0.0
  %4720 = vmatpush1.msra.mxu0 0.0
  %4721 = vmatprep.subr.mxu0 0.0
  %4722 = vmatpush1.msra.mxu0 0.0
  %4723 = vmatprep.subr.mxu0 0.0
  %4724 = vmatpush1.msra.mxu0 0.0
  %4725 = vmatprep.subr.mxu0 0.0
  %4726 = vmatpush1.msra.mxu0 0.0
  %4727 = vmatprep.subr.mxu0 0.0
  %4728 = vmatpush1.msra.mxu0 0.0
  %4729 = vmatprep.subr.mxu0 0.0
  %4730 = vmatpush1.msra.mxu0 0.0
  %4731 = vmatprep.subr.mxu0 0.0
  %4732 = vmatpush1.msra.mxu0 0.0
  %4733 = vmatprep.subr.mxu0 0.0
  %4734 = vmatpush1.msra.mxu0 0.0
  %4735 = vmatprep.subr.mxu0 0.0
  %4736 = vmatpush1.msra.mxu0 0.0
  %4737 = vmatprep.subr.mxu0 0.0
  %4738 = vmatpush1.msra.mxu0 0.0
  %4739 = vmatprep.subr.mxu0 0.0
  %4740 = vmatpush1.msra.mxu0 0.0
  %4741 = vmatprep.subr.mxu0 0.0
  %4742 = vmatpush1.msra.mxu0 0.0
  %4743 = vmatprep.subr.mxu0 0.0
  %4744 = vmatpush1.msra.mxu0 0.0
  %4745 = vmatprep.subr.mxu0 0.0
  %4746 = vmatpush1.msra.mxu0 0.0
  %4747 = vmatprep.subr.mxu0 0.0
  %4748 = vmatpush1.msra.mxu0 0.0
  %4749 = vmatprep.subr.mxu0 0.0
  %4750 = vmatpush1.msra.mxu0 0.0
  %4751 = vmatprep.subr.mxu0 0.0
  %4752 = vmatpush1.msra.mxu0 0.0
  %4753 = vmatprep.subr.mxu0 0.0
  %4754 = vmatpush1.msra.mxu0 0.0
  %4755 = vmatprep.subr.mxu0 0.0
  %4756 = vmatpush1.msra.mxu0 0.0
  %4757 = vmatprep.mubr.f32.mxu0 0.0
  %4758 = vmatmul.mubr.f32.gmra.mrb[0].mxu0 %v3351
  %v4759 = vpop.f32.mrb[0].mxu0
  %v4760 = vadd.f32 %v4691, %v4759
  %v4761 = vpop.f32.mrb[0].mxu0
  %4762 = vmatprep.mubr.f32.mxu0 0.0
  %4763 = vmatmul.mubr.f32.gmra.mrb[0].mxu0 %v3354
  %v4764 = vpop.f32.mrb[0].mxu0
  %v4765 = vadd.f32 %v4691, %v4764
  %v4766 = vpop.f32.mrb[0].mxu0
  %4767 = vdwg.mxu0
  %s4768 = scalar_lea.vmem %s53, 64
  %v4769 = vld [vmem:[%s4768] sm:$0xff]
  %v4770 = vld [vmem:[%s4768 + $0x8] sm:$0xff]
  %v4771 = vld [vmem:[%s4768 + $0x10] sm:$0xff]
  %v4772 = vld [vmem:[%s4768 + $0x18] sm:$0xff]
  %s4773 = scalar_lea.vmem %s55, 2
  %v4774 = vld [vmem:[%s4773] sm:$0x1]
  %v4776 = vlaneseq
  %v4777 = vshrl.u32 %v4776, 7
  %v4778 = vsub.s32 0, %v4777
  %v4779 = vrot.slane %v4774, %v4778
  %4781 = vmatprep.subr.mxu0 0.0
  %4782 = vmatpush1.msra.mxu0 %v4769
  %4783 = vmatprep.subr.mxu0 0.0
  %4784 = vmatpush1.msra.mxu0 %v4770
  %4785 = vmatprep.subr.mxu0 0.0
  %4786 = vmatpush1.msra.mxu0 %v4771
  %4787 = vmatprep.subr.mxu0 0.0
  %4788 = vmatpush1.msra.mxu0 %v4772
  %4789 = vmatprep.subr.mxu0 0.0
  %4790 = vmatpush1.msra.mxu0 0.0
  %4791 = vmatprep.subr.mxu0 0.0
  %4792 = vmatpush1.msra.mxu0 0.0
  %4793 = vmatprep.subr.mxu0 0.0
  %4794 = vmatpush1.msra.mxu0 0.0
  %4795 = vmatprep.subr.mxu0 0.0
  %4796 = vmatpush1.msra.mxu0 0.0
  %4797 = vmatprep.subr.mxu0 0.0
  %4798 = vmatpush1.msra.mxu0 0.0
  %4799 = vmatprep.subr.mxu0 0.0
  %4800 = vmatpush1.msra.mxu0 0.0
  %4801 = vmatprep.subr.mxu0 0.0
  %4802 = vmatpush1.msra.mxu0 0.0
  %4803 = vmatprep.subr.mxu0 0.0
  %4804 = vmatpush1.msra.mxu0 0.0
  %4805 = vmatprep.subr.mxu0 0.0
  %4806 = vmatpush1.msra.mxu0 0.0
  %4807 = vmatprep.subr.mxu0 0.0
  %4808 = vmatpush1.msra.mxu0 0.0
  %4809 = vmatprep.subr.mxu0 0.0
  %4810 = vmatpush1.msra.mxu0 0.0
  %4811 = vmatprep.subr.mxu0 0.0
  %4812 = vmatpush1.msra.mxu0 0.0
  %4813 = vmatprep.subr.mxu0 0.0
  %4814 = vmatpush1.msra.mxu0 0.0
  %4815 = vmatprep.subr.mxu0 0.0
  %4816 = vmatpush1.msra.mxu0 0.0
  %4817 = vmatprep.subr.mxu0 0.0
  %4818 = vmatpush1.msra.mxu0 0.0
  %4819 = vmatprep.subr.mxu0 0.0
  %4820 = vmatpush1.msra.mxu0 0.0
  %4821 = vmatprep.subr.mxu0 0.0
  %4822 = vmatpush1.msra.mxu0 0.0
  %4823 = vmatprep.subr.mxu0 0.0
  %4824 = vmatpush1.msra.mxu0 0.0
  %4825 = vmatprep.subr.mxu0 0.0
  %4826 = vmatpush1.msra.mxu0 0.0
  %4827 = vmatprep.subr.mxu0 0.0
  %4828 = vmatpush1.msra.mxu0 0.0
  %4829 = vmatprep.subr.mxu0 0.0
  %4830 = vmatpush1.msra.mxu0 0.0
  %4831 = vmatprep.subr.mxu0 0.0
  %4832 = vmatpush1.msra.mxu0 0.0
  %4833 = vmatprep.subr.mxu0 0.0
  %4834 = vmatpush1.msra.mxu0 0.0
  %4835 = vmatprep.subr.mxu0 0.0
  %4836 = vmatpush1.msra.mxu0 0.0
  %4837 = vmatprep.subr.mxu0 0.0
  %4838 = vmatpush1.msra.mxu0 0.0
  %4839 = vmatprep.subr.mxu0 0.0
  %4840 = vmatpush1.msra.mxu0 0.0
  %4841 = vmatprep.subr.mxu0 0.0
  %4842 = vmatpush1.msra.mxu0 0.0
  %4843 = vmatprep.subr.mxu0 0.0
  %4844 = vmatpush1.msra.mxu0 0.0
  %4845 = vmatprep.mubr.f32.mxu0 0.0
  %4846 = vmatmul.mubr.f32.gmra.mrb[0].mxu0 %v3351
  %v4847 = vpop.f32.mrb[0].mxu0
  %v4848 = vadd.f32 %v4779, %v4847
  %v4849 = vpop.f32.mrb[0].mxu0
  %4850 = vmatprep.mubr.f32.mxu0 0.0
  %4851 = vmatmul.mubr.f32.gmra.mrb[0].mxu0 %v3354
  %v4852 = vpop.f32.mrb[0].mxu0
  %v4853 = vadd.f32 %v4779, %v4852
  %v4854 = vpop.f32.mrb[0].mxu0
  %4855 = vdwg.mxu0
  %s4856 = scalar_lea.vmem %s57, 64
  %v4857 = vld [vmem:[%s4856] sm:$0xff]
  %v4858 = vld [vmem:[%s4856 + $0x8] sm:$0xff]
  %v4859 = vld [vmem:[%s4856 + $0x10] sm:$0xff]
  %v4860 = vld [vmem:[%s4856 + $0x18] sm:$0xff]
  %s4861 = scalar_lea.vmem %s59, 2
  %v4862 = vld [vmem:[%s4861] sm:$0x1]
  %v4864 = vlaneseq
  %v4865 = vshrl.u32 %v4864, 7
  %v4866 = vsub.s32 0, %v4865
  %v4867 = vrot.slane %v4862, %v4866
  %4869 = vmatprep.subr.mxu0 0.0
  %4870 = vmatpush1.msra.mxu0 %v4857
  %4871 = vmatprep.subr.mxu0 0.0
  %4872 = vmatpush1.msra.mxu0 %v4858
  %4873 = vmatprep.subr.mxu0 0.0
  %4874 = vmatpush1.msra.mxu0 %v4859
  %4875 = vmatprep.subr.mxu0 0.0
  %4876 = vmatpush1.msra.mxu0 %v4860
  %4877 = vmatprep.subr.mxu0 0.0
  %4878 = vmatpush1.msra.mxu0 0.0
  %4879 = vmatprep.subr.mxu0 0.0
  %4880 = vmatpush1.msra.mxu0 0.0
  %4881 = vmatprep.subr.mxu0 0.0
  %4882 = vmatpush1.msra.mxu0 0.0
  %4883 = vmatprep.subr.mxu0 0.0
  %4884 = vmatpush1.msra.mxu0 0.0
  %4885 = vmatprep.subr.mxu0 0.0
  %4886 = vmatpush1.msra.mxu0 0.0
  %4887 = vmatprep.subr.mxu0 0.0
  %4888 = vmatpush1.msra.mxu0 0.0
  %4889 = vmatprep.subr.mxu0 0.0
  %4890 = vmatpush1.msra.mxu0 0.0
  %4891 = vmatprep.subr.mxu0 0.0
  %4892 = vmatpush1.msra.mxu0 0.0
  %4893 = vmatprep.subr.mxu0 0.0
  %4894 = vmatpush1.msra.mxu0 0.0
  %4895 = vmatprep.subr.mxu0 0.0
  %4896 = vmatpush1.msra.mxu0 0.0
  %4897 = vmatprep.subr.mxu0 0.0
  %4898 = vmatpush1.msra.mxu0 0.0
  %4899 = vmatprep.subr.mxu0 0.0
  %4900 = vmatpush1.msra.mxu0 0.0
  %4901 = vmatprep.subr.mxu0 0.0
  %4902 = vmatpush1.msra.mxu0 0.0
  %4903 = vmatprep.subr.mxu0 0.0
  %4904 = vmatpush1.msra.mxu0 0.0
  %4905 = vmatprep.subr.mxu0 0.0
  %4906 = vmatpush1.msra.mxu0 0.0
  %4907 = vmatprep.subr.mxu0 0.0
  %4908 = vmatpush1.msra.mxu0 0.0
  %4909 = vmatprep.subr.mxu0 0.0
  %4910 = vmatpush1.msra.mxu0 0.0
  %4911 = vmatprep.subr.mxu0 0.0
  %4912 = vmatpush1.msra.mxu0 0.0
  %4913 = vmatprep.subr.mxu0 0.0
  %4914 = vmatpush1.msra.mxu0 0.0
  %4915 = vmatprep.subr.mxu0 0.0
  %4916 = vmatpush1.msra.mxu0 0.0
  %4917 = vmatprep.subr.mxu0 0.0
  %4918 = vmatpush1.msra.mxu0 0.0
  %4919 = vmatprep.subr.mxu0 0.0
  %4920 = vmatpush1.msra.mxu0 0.0
  %4921 = vmatprep.subr.mxu0 0.0
  %4922 = vmatpush1.msra.mxu0 0.0
  %4923 = vmatprep.subr.mxu0 0.0
  %4924 = vmatpush1.msra.mxu0 0.0
  %4925 = vmatprep.subr.mxu0 0.0
  %4926 = vmatpush1.msra.mxu0 0.0
  %4927 = vmatprep.subr.mxu0 0.0
  %4928 = vmatpush1.msra.mxu0 0.0
  %4929 = vmatprep.subr.mxu0 0.0
  %4930 = vmatpush1.msra.mxu0 0.0
  %4931 = vmatprep.subr.mxu0 0.0
  %4932 = vmatpush1.msra.mxu0 0.0
  %4933 = vmatprep.mubr.f32.mxu0 0.0
  %4934 = vmatmul.mubr.f32.gmra.mrb[0].mxu0 %v3351
  %v4935 = vpop.f32.mrb[0].mxu0
  %v4936 = vadd.f32 %v4867, %v4935
  %v4937 = vpop.f32.mrb[0].mxu0
  %4938 = vmatprep.mubr.f32.mxu0 0.0
  %4939 = vmatmul.mubr.f32.gmra.mrb[0].mxu0 %v3354
  %v4940 = vpop.f32.mrb[0].mxu0
  %v4941 = vadd.f32 %v4867, %v4940
  %v4942 = vpop.f32.mrb[0].mxu0
  %4943 = vdwg.mxu0
  %v4945 = vsel %vm576, %v4760, 0
  %v4948 = vsel %vm576, %v4848, 0
  %4950 = vmatprep.subr.mxu0 0.0
  %4951 = vmatpush1.xpose.msra.mxu0 %v4948
  %4952 = vmatprep.subr.mxu0 0.0
  %4953 = vmatpush1.xpose.msra.mxu0 0.0
  %4954 = vmatprep.subr.mxu0 0.0
  %4955 = vmatpush1.xpose.msra.mxu0 0.0
  %4956 = vmatprep.subr.mxu0 0.0
  %4957 = vmatpush1.xpose.msra.mxu0 0.0
  %4958 = vmatprep.subr.mxu0 0.0
  %4959 = vmatpush1.xpose.msra.mxu0 0.0
  %4960 = vmatprep.subr.mxu0 0.0
  %4961 = vmatpush1.xpose.msra.mxu0 0.0
  %4962 = vmatprep.subr.mxu0 0.0
  %4963 = vmatpush1.xpose.msra.mxu0 0.0
  %4964 = vmatprep.subr.mxu0 0.0
  %4965 = vmatpush1.xpose.msra.mxu0 0.0
  %4966 = vmatprep.subr.mxu0 0.0
  %4967 = vmatpush1.xpose.msra.mxu0 0.0
  %4968 = vmatprep.subr.mxu0 0.0
  %4969 = vmatpush1.xpose.msra.mxu0 0.0
  %4970 = vmatprep.subr.mxu0 0.0
  %4971 = vmatpush1.xpose.msra.mxu0 0.0
  %4972 = vmatprep.subr.mxu0 0.0
  %4973 = vmatpush1.xpose.msra.mxu0 0.0
  %4974 = vmatprep.subr.mxu0 0.0
  %4975 = vmatpush1.xpose.msra.mxu0 0.0
  %4976 = vmatprep.subr.mxu0 0.0
  %4977 = vmatpush1.xpose.msra.mxu0 0.0
  %4978 = vmatprep.subr.mxu0 0.0
  %4979 = vmatpush1.xpose.msra.mxu0 0.0
  %4980 = vmatprep.subr.mxu0 0.0
  %4981 = vmatpush1.xpose.msra.mxu0 0.0
  %4982 = vmatprep.subr.mxu0 0.0
  %4983 = vmatpush1.xpose.msra.mxu0 0.0
  %4984 = vmatprep.subr.mxu0 0.0
  %4985 = vmatpush1.xpose.msra.mxu0 0.0
  %4986 = vmatprep.subr.mxu0 0.0
  %4987 = vmatpush1.xpose.msra.mxu0 0.0
  %4988 = vmatprep.subr.mxu0 0.0
  %4989 = vmatpush1.xpose.msra.mxu0 0.0
  %4990 = vmatprep.subr.mxu0 0.0
  %4991 = vmatpush1.xpose.msra.mxu0 0.0
  %4992 = vmatprep.subr.mxu0 0.0
  %4993 = vmatpush1.xpose.msra.mxu0 0.0
  %4994 = vmatprep.subr.mxu0 0.0
  %4995 = vmatpush1.xpose.msra.mxu0 0.0
  %4996 = vmatprep.subr.mxu0 0.0
  %4997 = vmatpush1.xpose.msra.mxu0 0.0
  %4998 = vmatprep.subr.mxu0 0.0
  %4999 = vmatpush1.xpose.msra.mxu0 0.0
  %5000 = vmatprep.subr.mxu0 0.0
  %5001 = vmatpush1.xpose.msra.mxu0 0.0
  %5002 = vmatprep.subr.mxu0 0.0
  %5003 = vmatpush1.xpose.msra.mxu0 0.0
  %5004 = vmatprep.subr.mxu0 0.0
  %5005 = vmatpush1.xpose.msra.mxu0 0.0
  %5006 = vmatprep.subr.mxu0 0.0
  %5007 = vmatpush1.xpose.msra.mxu0 0.0
  %5008 = vmatprep.subr.mxu0 0.0
  %5009 = vmatpush1.xpose.msra.mxu0 0.0
  %5010 = vmatprep.subr.mxu0 0.0
  %5011 = vmatpush1.xpose.msra.mxu0 0.0
  %5012 = vmatprep.subr.mxu0 0.0
  %5013 = vmatpush1.xpose.msra.mxu0 0.0
  %5014 = vmatprep.mubr.f32.mxu0 0.0
  %5015 = vmatmul.mubr.f32.gmra.mrb[0].mxu0 %v4945
  %v5016 = vpop.f32.mrb[0].mxu0
  %v5017 = vadd.f32 0.0, %v5016
  %v5018 = vpop.f32.mrb[0].mxu0
  %5019 = vdwg.mxu0
  %v5021 = vsel %vm576, %v4765, 0
  %v5024 = vsel %vm576, %v4853, 0
  %5026 = vmatprep.subr.mxu0 0.0
  %5027 = vmatpush1.xpose.msra.mxu0 %v5024
  %5028 = vmatprep.subr.mxu0 0.0
  %5029 = vmatpush1.xpose.msra.mxu0 0.0
  %5030 = vmatprep.subr.mxu0 0.0
  %5031 = vmatpush1.xpose.msra.mxu0 0.0
  %5032 = vmatprep.subr.mxu0 0.0
  %5033 = vmatpush1.xpose.msra.mxu0 0.0
  %5034 = vmatprep.subr.mxu0 0.0
  %5035 = vmatpush1.xpose.msra.mxu0 0.0
  %5036 = vmatprep.subr.mxu0 0.0
  %5037 = vmatpush1.xpose.msra.mxu0 0.0
  %5038 = vmatprep.subr.mxu0 0.0
  %5039 = vmatpush1.xpose.msra.mxu0 0.0
  %5040 = vmatprep.subr.mxu0 0.0
  %5041 = vmatpush1.xpose.msra.mxu0 0.0
  %5042 = vmatprep.subr.mxu0 0.0
  %5043 = vmatpush1.xpose.msra.mxu0 0.0
  %5044 = vmatprep.subr.mxu0 0.0
  %5045 = vmatpush1.xpose.msra.mxu0 0.0
  %5046 = vmatprep.subr.mxu0 0.0
  %5047 = vmatpush1.xpose.msra.mxu0 0.0
  %5048 = vmatprep.subr.mxu0 0.0
  %5049 = vmatpush1.xpose.msra.mxu0 0.0
  %5050 = vmatprep.subr.mxu0 0.0
  %5051 = vmatpush1.xpose.msra.mxu0 0.0
  %5052 = vmatprep.subr.mxu0 0.0
  %5053 = vmatpush1.xpose.msra.mxu0 0.0
  %5054 = vmatprep.subr.mxu0 0.0
  %5055 = vmatpush1.xpose.msra.mxu0 0.0
  %5056 = vmatprep.subr.mxu0 0.0
  %5057 = vmatpush1.xpose.msra.mxu0 0.0
  %5058 = vmatprep.subr.mxu0 0.0
  %5059 = vmatpush1.xpose.msra.mxu0 0.0
  %5060 = vmatprep.subr.mxu0 0.0
  %5061 = vmatpush1.xpose.msra.mxu0 0.0
  %5062 = vmatprep.subr.mxu0 0.0
  %5063 = vmatpush1.xpose.msra.mxu0 0.0
  %5064 = vmatprep.subr.mxu0 0.0
  %5065 = vmatpush1.xpose.msra.mxu0 0.0
  %5066 = vmatprep.subr.mxu0 0.0
  %5067 = vmatpush1.xpose.msra.mxu0 0.0
  %5068 = vmatprep.subr.mxu0 0.0
  %5069 = vmatpush1.xpose.msra.mxu0 0.0
  %5070 = vmatprep.subr.mxu0 0.0
  %5071 = vmatpush1.xpose.msra.mxu0 0.0
  %5072 = vmatprep.subr.mxu0 0.0
  %5073 = vmatpush1.xpose.msra.mxu0 0.0
  %5074 = vmatprep.subr.mxu0 0.0
  %5075 = vmatpush1.xpose.msra.mxu0 0.0
  %5076 = vmatprep.subr.mxu0 0.0
  %5077 = vmatpush1.xpose.msra.mxu0 0.0
  %5078 = vmatprep.subr.mxu0 0.0
  %5079 = vmatpush1.xpose.msra.mxu0 0.0
  %5080 = vmatprep.subr.mxu0 0.0
  %5081 = vmatpush1.xpose.msra.mxu0 0.0
  %5082 = vmatprep.subr.mxu0 0.0
  %5083 = vmatpush1.xpose.msra.mxu0 0.0
  %5084 = vmatprep.subr.mxu0 0.0
  %5085 = vmatpush1.xpose.msra.mxu0 0.0
  %5086 = vmatprep.subr.mxu0 0.0
  %5087 = vmatpush1.xpose.msra.mxu0 0.0
  %5088 = vmatprep.subr.mxu0 0.0
  %5089 = vmatpush1.xpose.msra.mxu0 0.0
  %5090 = vmatprep.mubr.f32.mxu0 0.0
  %5091 = vmatmul.mubr.f32.gmra.mrb[0].mxu0 %v5021
  %v5092 = vpop.f32.mrb[0].mxu0
  %v5093 = vadd.f32 0.0, %v5092
  %v5094 = vpop.f32.mrb[0].mxu0
  %5095 = vdwg.mxu0
  %v5096 = vmul.f32 %v5017, 0.35355338
  %v5097 = vmul.f32 %v5093, 0.35355338
  %v5098 = vsel %vm732, %v5096, -1e+10
  %v5099 = vsel %vm732, %v5097, -1e+10
  %v5100 = vsel %vm576, %v5098, -inf
  %5101 = vmax.xlane.f32.xlu0 %v5100
  %v5102 = vpop.xlane.xlu0 %5101
  %v5103 = vsel %vm576, %v5099, -inf
  %5104 = vmax.xlane.f32.xlu0 %v5103
  %v5105 = vpop.xlane.xlu0 %5104
  %v5106 = vsub.f32 %v5098, %v5102
  %v5107 = vsub.f32 %v5099, %v5105
  %v5108 = vmul.f32 %v5106, 1.442695
  %v5109 = vpow.pop %v5108
  %v5110 = vmul.f32 %v5107, 1.442695
  %v5111 = vpow.pop %v5110
  %v5112 = vsel %vm576, %v5109, 0.0
  %5113 = vadd.xlane.f32.xlu0 %v5112
  %v5114 = vpop.xlane.xlu0 %5113
  %v5115 = vsel %vm576, %v5111, 0.0
  %5116 = vadd.xlane.f32.xlu0 %v5115
  %v5117 = vpop.xlane.xlu0 %5116
  %v5118 = vrcp.pop %v5114
  %v5119 = vrcp.pop %v5117
  %v5120 = vmul.f32 %v5109, %v5118
  %v5121 = vmul.f32 %v5111, %v5119
  %v5123 = vsel %vm576, %v5120, 0
  %5125 = vmatprep.subr.mxu0 0.0
  %5126 = vmatpush1.msra.mxu0 %v4936
  %5127 = vmatprep.subr.mxu0 0.0
  %5128 = vmatpush1.msra.mxu0 0.0
  %5129 = vmatprep.subr.mxu0 0.0
  %5130 = vmatpush1.msra.mxu0 0.0
  %5131 = vmatprep.subr.mxu0 0.0
  %5132 = vmatpush1.msra.mxu0 0.0
  %5133 = vmatprep.subr.mxu0 0.0
  %5134 = vmatpush1.msra.mxu0 0.0
  %5135 = vmatprep.subr.mxu0 0.0
  %5136 = vmatpush1.msra.mxu0 0.0
  %5137 = vmatprep.subr.mxu0 0.0
  %5138 = vmatpush1.msra.mxu0 0.0
  %5139 = vmatprep.subr.mxu0 0.0
  %5140 = vmatpush1.msra.mxu0 0.0
  %5141 = vmatprep.subr.mxu0 0.0
  %5142 = vmatpush1.msra.mxu0 0.0
  %5143 = vmatprep.subr.mxu0 0.0
  %5144 = vmatpush1.msra.mxu0 0.0
  %5145 = vmatprep.subr.mxu0 0.0
  %5146 = vmatpush1.msra.mxu0 0.0
  %5147 = vmatprep.subr.mxu0 0.0
  %5148 = vmatpush1.msra.mxu0 0.0
  %5149 = vmatprep.subr.mxu0 0.0
  %5150 = vmatpush1.msra.mxu0 0.0
  %5151 = vmatprep.subr.mxu0 0.0
  %5152 = vmatpush1.msra.mxu0 0.0
  %5153 = vmatprep.subr.mxu0 0.0
  %5154 = vmatpush1.msra.mxu0 0.0
  %5155 = vmatprep.subr.mxu0 0.0
  %5156 = vmatpush1.msra.mxu0 0.0
  %5157 = vmatprep.subr.mxu0 0.0
  %5158 = vmatpush1.msra.mxu0 0.0
  %5159 = vmatprep.subr.mxu0 0.0
  %5160 = vmatpush1.msra.mxu0 0.0
  %5161 = vmatprep.subr.mxu0 0.0
  %5162 = vmatpush1.msra.mxu0 0.0
  %5163 = vmatprep.subr.mxu0 0.0
  %5164 = vmatpush1.msra.mxu0 0.0
  %5165 = vmatprep.subr.mxu0 0.0
  %5166 = vmatpush1.msra.mxu0 0.0
  %5167 = vmatprep.subr.mxu0 0.0
  %5168 = vmatpush1.msra.mxu0 0.0
  %5169 = vmatprep.subr.mxu0 0.0
  %5170 = vmatpush1.msra.mxu0 0.0
  %5171 = vmatprep.subr.mxu0 0.0
  %5172 = vmatpush1.msra.mxu0 0.0
  %5173 = vmatprep.subr.mxu0 0.0
  %5174 = vmatpush1.msra.mxu0 0.0
  %5175 = vmatprep.subr.mxu0 0.0
  %5176 = vmatpush1.msra.mxu0 0.0
  %5177 = vmatprep.subr.mxu0 0.0
  %5178 = vmatpush1.msra.mxu0 0.0
  %5179 = vmatprep.subr.mxu0 0.0
  %5180 = vmatpush1.msra.mxu0 0.0
  %5181 = vmatprep.subr.mxu0 0.0
  %5182 = vmatpush1.msra.mxu0 0.0
  %5183 = vmatprep.subr.mxu0 0.0
  %5184 = vmatpush1.msra.mxu0 0.0
  %5185 = vmatprep.subr.mxu0 0.0
  %5186 = vmatpush1.msra.mxu0 0.0
  %5187 = vmatprep.subr.mxu0 0.0
  %5188 = vmatpush1.msra.mxu0 0.0
  %5189 = vmatprep.mubr.f32.mxu0 0.0
  %5190 = vmatmul.mubr.f32.gmra.mrb[0].mxu0 %v5123
  %v5191 = vpop.f32.mrb[0].mxu0
  %v5192 = vadd.f32 0.0, %v5191
  %v5193 = vpop.f32.mrb[0].mxu0
  %5194 = vdwg.mxu0
  %v5196 = vsel %vm576, %v5121, 0
  %5198 = vmatprep.subr.mxu0 0.0
  %5199 = vmatpush1.msra.mxu0 %v4941
  %5200 = vmatprep.subr.mxu0 0.0
  %5201 = vmatpush1.msra.mxu0 0.0
  %5202 = vmatprep.subr.mxu0 0.0
  %5203 = vmatpush1.msra.mxu0 0.0
  %5204 = vmatprep.subr.mxu0 0.0
  %5205 = vmatpush1.msra.mxu0 0.0
  %5206 = vmatprep.subr.mxu0 0.0
  %5207 = vmatpush1.msra.mxu0 0.0
  %5208 = vmatprep.subr.mxu0 0.0
  %5209 = vmatpush1.msra.mxu0 0.0
  %5210 = vmatprep.subr.mxu0 0.0
  %5211 = vmatpush1.msra.mxu0 0.0
  %5212 = vmatprep.subr.mxu0 0.0
  %5213 = vmatpush1.msra.mxu0 0.0
  %5214 = vmatprep.subr.mxu0 0.0
  %5215 = vmatpush1.msra.mxu0 0.0
  %5216 = vmatprep.subr.mxu0 0.0
  %5217 = vmatpush1.msra.mxu0 0.0
  %5218 = vmatprep.subr.mxu0 0.0
  %5219 = vmatpush1.msra.mxu0 0.0
  %5220 = vmatprep.subr.mxu0 0.0
  %5221 = vmatpush1.msra.mxu0 0.0
  %5222 = vmatprep.subr.mxu0 0.0
  %5223 = vmatpush1.msra.mxu0 0.0
  %5224 = vmatprep.subr.mxu0 0.0
  %5225 = vmatpush1.msra.mxu0 0.0
  %5226 = vmatprep.subr.mxu0 0.0
  %5227 = vmatpush1.msra.mxu0 0.0
  %5228 = vmatprep.subr.mxu0 0.0
  %5229 = vmatpush1.msra.mxu0 0.0
  %5230 = vmatprep.subr.mxu0 0.0
  %5231 = vmatpush1.msra.mxu0 0.0
  %5232 = vmatprep.subr.mxu0 0.0
  %5233 = vmatpush1.msra.mxu0 0.0
  %5234 = vmatprep.subr.mxu0 0.0
  %5235 = vmatpush1.msra.mxu0 0.0
  %5236 = vmatprep.subr.mxu0 0.0
  %5237 = vmatpush1.msra.mxu0 0.0
  %5238 = vmatprep.subr.mxu0 0.0
  %5239 = vmatpush1.msra.mxu0 0.0
  %5240 = vmatprep.subr.mxu0 0.0
  %5241 = vmatpush1.msra.mxu0 0.0
  %5242 = vmatprep.subr.mxu0 0.0
  %5243 = vmatpush1.msra.mxu0 0.0
  %5244 = vmatprep.subr.mxu0 0.0
  %5245 = vmatpush1.msra.mxu0 0.0
  %5246 = vmatprep.subr.mxu0 0.0
  %5247 = vmatpush1.msra.mxu0 0.0
  %5248 = vmatprep.subr.mxu0 0.0
  %5249 = vmatpush1.msra.mxu0 0.0
  %5250 = vmatprep.subr.mxu0 0.0
  %5251 = vmatpush1.msra.mxu0 0.0
  %5252 = vmatprep.subr.mxu0 0.0
  %5253 = vmatpush1.msra.mxu0 0.0
  %5254 = vmatprep.subr.mxu0 0.0
  %5255 = vmatpush1.msra.mxu0 0.0
  %5256 = vmatprep.subr.mxu0 0.0
  %5257 = vmatpush1.msra.mxu0 0.0
  %5258 = vmatprep.subr.mxu0 0.0
  %5259 = vmatpush1.msra.mxu0 0.0
  %5260 = vmatprep.subr.mxu0 0.0
  %5261 = vmatpush1.msra.mxu0 0.0
  %5262 = vmatprep.mubr.f32.mxu0 0.0
  %5263 = vmatmul.mubr.f32.gmra.mrb[0].mxu0 %v5196
  %v5264 = vpop.f32.mrb[0].mxu0
  %v5265 = vadd.f32 0.0, %v5264
  %v5266 = vpop.f32.mrb[0].mxu0
  %5267 = vdwg.mxu0
  %s5268 = scalar_lea.vmem %s61, 16
  %v5269 = vld [vmem:[%s5268] sm:$0xff]
  %v5271 = vsel %vm576, %v5192, 0
  %v5274 = vsel %vm576, %v5265, 0
  %5276 = vmatprep.subr.mxu0 0.0
  %5277 = vmatpush1.msra.mxu0 %v5269
  %5278 = vmatprep.subr.mxu0 0.0
  %5279 = vmatpush1.msra.mxu0 0.0
  %5280 = vmatprep.subr.mxu0 0.0
  %5281 = vmatpush1.msra.mxu0 0.0
  %5282 = vmatprep.subr.mxu0 0.0
  %5283 = vmatpush1.msra.mxu0 0.0
  %5284 = vmatprep.subr.mxu0 0.0
  %5285 = vmatpush1.msra.mxu0 0.0
  %5286 = vmatprep.subr.mxu0 0.0
  %5287 = vmatpush1.msra.mxu0 0.0
  %5288 = vmatprep.subr.mxu0 0.0
  %5289 = vmatpush1.msra.mxu0 0.0
  %5290 = vmatprep.subr.mxu0 0.0
  %5291 = vmatpush1.msra.mxu0 0.0
  %5292 = vmatprep.subr.mxu0 0.0
  %5293 = vmatpush1.msra.mxu0 0.0
  %5294 = vmatprep.subr.mxu0 0.0
  %5295 = vmatpush1.msra.mxu0 0.0
  %5296 = vmatprep.subr.mxu0 0.0
  %5297 = vmatpush1.msra.mxu0 0.0
  %5298 = vmatprep.subr.mxu0 0.0
  %5299 = vmatpush1.msra.mxu0 0.0
  %5300 = vmatprep.subr.mxu0 0.0
  %5301 = vmatpush1.msra.mxu0 0.0
  %5302 = vmatprep.subr.mxu0 0.0
  %5303 = vmatpush1.msra.mxu0 0.0
  %5304 = vmatprep.subr.mxu0 0.0
  %5305 = vmatpush1.msra.mxu0 0.0
  %5306 = vmatprep.subr.mxu0 0.0
  %5307 = vmatpush1.msra.mxu0 0.0
  %5308 = vmatprep.subr.mxu0 0.0
  %5309 = vmatpush1.msra.mxu0 0.0
  %5310 = vmatprep.subr.mxu0 0.0
  %5311 = vmatpush1.msra.mxu0 0.0
  %5312 = vmatprep.subr.mxu0 0.0
  %5313 = vmatpush1.msra.mxu0 0.0
  %5314 = vmatprep.subr.mxu0 0.0
  %5315 = vmatpush1.msra.mxu0 0.0
  %5316 = vmatprep.subr.mxu0 0.0
  %5317 = vmatpush1.msra.mxu0 0.0
  %5318 = vmatprep.subr.mxu0 0.0
  %5319 = vmatpush1.msra.mxu0 0.0
  %5320 = vmatprep.subr.mxu0 0.0
  %5321 = vmatpush1.msra.mxu0 0.0
  %5322 = vmatprep.subr.mxu0 0.0
  %5323 = vmatpush1.msra.mxu0 0.0
  %5324 = vmatprep.subr.mxu0 0.0
  %5325 = vmatpush1.msra.mxu0 0.0
  %5326 = vmatprep.subr.mxu0 0.0
  %5327 = vmatpush1.msra.mxu0 0.0
  %5328 = vmatprep.subr.mxu0 0.0
  %5329 = vmatpush1.msra.mxu0 0.0
  %5330 = vmatprep.subr.mxu0 0.0
  %5331 = vmatpush1.msra.mxu0 0.0
  %5332 = vmatprep.subr.mxu0 0.0
  %5333 = vmatpush1.msra.mxu0 0.0
  %5334 = vmatprep.subr.mxu0 0.0
  %5335 = vmatpush1.msra.mxu0 0.0
  %5336 = vmatprep.subr.mxu0 0.0
  %5337 = vmatpush1.msra.mxu0 0.0
  %5338 = vmatprep.subr.mxu0 0.0
  %5339 = vmatpush1.msra.mxu0 0.0
  %5340 = vmatprep.mubr.f32.mxu0 0.0
  %5341 = vmatmul.mubr.f32.gmra.mrb[0].mxu0 %v5271
  %v5342 = vpop.f32.mrb[0].mxu0
  %v5343 = vadd.f32 0.0, %v5342
  %v5344 = vpop.f32.mrb[0].mxu0
  %5345 = vmatprep.mubr.f32.mxu0 0.0
  %5346 = vmatmul.mubr.f32.gmra.mrb[0].mxu0 %v5274
  %v5347 = vpop.f32.mrb[0].mxu0
  %v5348 = vadd.f32 0.0, %v5347
  %v5349 = vpop.f32.mrb[0].mxu0
  %5350 = vdwg.mxu0
  %v5351 = vadd.f32 %v4672, %v5343
  %v5352 = vadd.f32 %v4677, %v5348
  %s5353 = scalar_lea.vmem %s49, 96
  %v5354 = vld [vmem:[%s5353] sm:$0xff]
  %v5355 = vld [vmem:[%s5353 + $0x8] sm:$0xff]
  %v5356 = vld [vmem:[%s5353 + $0x10] sm:$0xff]
  %v5357 = vld [vmem:[%s5353 + $0x18] sm:$0xff]
  %s5358 = scalar_lea.vmem %s51, 3
  %v5359 = vld [vmem:[%s5358] sm:$0x1]
  %v5361 = vlaneseq
  %v5362 = vshrl.u32 %v5361, 7
  %v5363 = vsub.s32 0, %v5362
  %v5364 = vrot.slane %v5359, %v5363
  %5366 = vmatprep.subr.mxu0 0.0
  %5367 = vmatpush1.msra.mxu0 %v5354
  %5368 = vmatprep.subr.mxu0 0.0
  %5369 = vmatpush1.msra.mxu0 %v5355
  %5370 = vmatprep.subr.mxu0 0.0
  %5371 = vmatpush1.msra.mxu0 %v5356
  %5372 = vmatprep.subr.mxu0 0.0
  %5373 = vmatpush1.msra.mxu0 %v5357
  %5374 = vmatprep.subr.mxu0 0.0
  %5375 = vmatpush1.msra.mxu0 0.0
  %5376 = vmatprep.subr.mxu0 0.0
  %5377 = vmatpush1.msra.mxu0 0.0
  %5378 = vmatprep.subr.mxu0 0.0
  %5379 = vmatpush1.msra.mxu0 0.0
  %5380 = vmatprep.subr.mxu0 0.0
  %5381 = vmatpush1.msra.mxu0 0.0
  %5382 = vmatprep.subr.mxu0 0.0
  %5383 = vmatpush1.msra.mxu0 0.0
  %5384 = vmatprep.subr.mxu0 0.0
  %5385 = vmatpush1.msra.mxu0 0.0
  %5386 = vmatprep.subr.mxu0 0.0
  %5387 = vmatpush1.msra.mxu0 0.0
  %5388 = vmatprep.subr.mxu0 0.0
  %5389 = vmatpush1.msra.mxu0 0.0
  %5390 = vmatprep.subr.mxu0 0.0
  %5391 = vmatpush1.msra.mxu0 0.0
  %5392 = vmatprep.subr.mxu0 0.0
  %5393 = vmatpush1.msra.mxu0 0.0
  %5394 = vmatprep.subr.mxu0 0.0
  %5395 = vmatpush1.msra.mxu0 0.0
  %5396 = vmatprep.subr.mxu0 0.0
  %5397 = vmatpush1.msra.mxu0 0.0
  %5398 = vmatprep.subr.mxu0 0.0
  %5399 = vmatpush1.msra.mxu0 0.0
  %5400 = vmatprep.subr.mxu0 0.0
  %5401 = vmatpush1.msra.mxu0 0.0
  %5402 = vmatprep.subr.mxu0 0.0
  %5403 = vmatpush1.msra.mxu0 0.0
  %5404 = vmatprep.subr.mxu0 0.0
  %5405 = vmatpush1.msra.mxu0 0.0
  %5406 = vmatprep.subr.mxu0 0.0
  %5407 = vmatpush1.msra.mxu0 0.0
  %5408 = vmatprep.subr.mxu0 0.0
  %5409 = vmatpush1.msra.mxu0 0.0
  %5410 = vmatprep.subr.mxu0 0.0
  %5411 = vmatpush1.msra.mxu0 0.0
  %5412 = vmatprep.subr.mxu0 0.0
  %5413 = vmatpush1.msra.mxu0 0.0
  %5414 = vmatprep.subr.mxu0 0.0
  %5415 = vmatpush1.msra.mxu0 0.0
  %5416 = vmatprep.subr.mxu0 0.0
  %5417 = vmatpush1.msra.mxu0 0.0
  %5418 = vmatprep.subr.mxu0 0.0
  %5419 = vmatpush1.msra.mxu0 0.0
  %5420 = vmatprep.subr.mxu0 0.0
  %5421 = vmatpush1.msra.mxu0 0.0
  %5422 = vmatprep.subr.mxu0 0.0
  %5423 = vmatpush1.msra.mxu0 0.0
  %5424 = vmatprep.subr.mxu0 0.0
  %5425 = vmatpush1.msra.mxu0 0.0
  %5426 = vmatprep.subr.mxu0 0.0
  %5427 = vmatpush1.msra.mxu0 0.0
  %5428 = vmatprep.subr.mxu0 0.0
  %5429 = vmatpush1.msra.mxu0 0.0
  %5430 = vmatprep.mubr.f32.mxu0 0.0
  %5431 = vmatmul.mubr.f32.gmra.mrb[0].mxu0 %v3351
  %v5432 = vpop.f32.mrb[0].mxu0
  %v5433 = vadd.f32 %v5364, %v5432
  %v5434 = vpop.f32.mrb[0].mxu0
  %5435 = vmatprep.mubr.f32.mxu0 0.0
  %5436 = vmatmul.mubr.f32.gmra.mrb[0].mxu0 %v3354
  %v5437 = vpop.f32.mrb[0].mxu0
  %v5438 = vadd.f32 %v5364, %v5437
  %v5439 = vpop.f32.mrb[0].mxu0
  %5440 = vdwg.mxu0
  %s5441 = scalar_lea.vmem %s53, 96
  %v5442 = vld [vmem:[%s5441] sm:$0xff]
  %v5443 = vld [vmem:[%s5441 + $0x8] sm:$0xff]
  %v5444 = vld [vmem:[%s5441 + $0x10] sm:$0xff]
  %v5445 = vld [vmem:[%s5441 + $0x18] sm:$0xff]
  %s5446 = scalar_lea.vmem %s55, 3
  %v5447 = vld [vmem:[%s5446] sm:$0x1]
  %v5449 = vlaneseq
  %v5450 = vshrl.u32 %v5449, 7
  %v5451 = vsub.s32 0, %v5450
  %v5452 = vrot.slane %v5447, %v5451
  %5454 = vmatprep.subr.mxu0 0.0
  %5455 = vmatpush1.msra.mxu0 %v5442
  %5456 = vmatprep.subr.mxu0 0.0
  %5457 = vmatpush1.msra.mxu0 %v5443
  %5458 = vmatprep.subr.mxu0 0.0
  %5459 = vmatpush1.msra.mxu0 %v5444
  %5460 = vmatprep.subr.mxu0 0.0
  %5461 = vmatpush1.msra.mxu0 %v5445
  %5462 = vmatprep.subr.mxu0 0.0
  %5463 = vmatpush1.msra.mxu0 0.0
  %5464 = vmatprep.subr.mxu0 0.0
  %5465 = vmatpush1.msra.mxu0 0.0
  %5466 = vmatprep.subr.mxu0 0.0
  %5467 = vmatpush1.msra.mxu0 0.0
  %5468 = vmatprep.subr.mxu0 0.0
  %5469 = vmatpush1.msra.mxu0 0.0
  %5470 = vmatprep.subr.mxu0 0.0
  %5471 = vmatpush1.msra.mxu0 0.0
  %5472 = vmatprep.subr.mxu0 0.0
  %5473 = vmatpush1.msra.mxu0 0.0
  %5474 = vmatprep.subr.mxu0 0.0
  %5475 = vmatpush1.msra.mxu0 0.0
  %5476 = vmatprep.subr.mxu0 0.0
  %5477 = vmatpush1.msra.mxu0 0.0
  %5478 = vmatprep.subr.mxu0 0.0
  %5479 = vmatpush1.msra.mxu0 0.0
  %5480 = vmatprep.subr.mxu0 0.0
  %5481 = vmatpush1.msra.mxu0 0.0
  %5482 = vmatprep.subr.mxu0 0.0
  %5483 = vmatpush1.msra.mxu0 0.0
  %5484 = vmatprep.subr.mxu0 0.0
  %5485 = vmatpush1.msra.mxu0 0.0
  %5486 = vmatprep.subr.mxu0 0.0
  %5487 = vmatpush1.msra.mxu0 0.0
  %5488 = vmatprep.subr.mxu0 0.0
  %5489 = vmatpush1.msra.mxu0 0.0
  %5490 = vmatprep.subr.mxu0 0.0
  %5491 = vmatpush1.msra.mxu0 0.0
  %5492 = vmatprep.subr.mxu0 0.0
  %5493 = vmatpush1.msra.mxu0 0.0
  %5494 = vmatprep.subr.mxu0 0.0
  %5495 = vmatpush1.msra.mxu0 0.0
  %5496 = vmatprep.subr.mxu0 0.0
  %5497 = vmatpush1.msra.mxu0 0.0
  %5498 = vmatprep.subr.mxu0 0.0
  %5499 = vmatpush1.msra.mxu0 0.0
  %5500 = vmatprep.subr.mxu0 0.0
  %5501 = vmatpush1.msra.mxu0 0.0
  %5502 = vmatprep.subr.mxu0 0.0
  %5503 = vmatpush1.msra.mxu0 0.0
  %5504 = vmatprep.subr.mxu0 0.0
  %5505 = vmatpush1.msra.mxu0 0.0
  %5506 = vmatprep.subr.mxu0 0.0
  %5507 = vmatpush1.msra.mxu0 0.0
  %5508 = vmatprep.subr.mxu0 0.0
  %5509 = vmatpush1.msra.mxu0 0.0
  %5510 = vmatprep.subr.mxu0 0.0
  %5511 = vmatpush1.msra.mxu0 0.0
  %5512 = vmatprep.subr.mxu0 0.0
  %5513 = vmatpush1.msra.mxu0 0.0
  %5514 = vmatprep.subr.mxu0 0.0
  %5515 = vmatpush1.msra.mxu0 0.0
  %5516 = vmatprep.subr.mxu0 0.0
  %5517 = vmatpush1.msra.mxu0 0.0
  %5518 = vmatprep.mubr.f32.mxu0 0.0
  %5519 = vmatmul.mubr.f32.gmra.mrb[0].mxu0 %v3351
  %v5520 = vpop.f32.mrb[0].mxu0
  %v5521 = vadd.f32 %v5452, %v5520
  %v5522 = vpop.f32.mrb[0].mxu0
  %5523 = vmatprep.mubr.f32.mxu0 0.0
  %5524 = vmatmul.mubr.f32.gmra.mrb[0].mxu0 %v3354
  %v5525 = vpop.f32.mrb[0].mxu0
  %v5526 = vadd.f32 %v5452, %v5525
  %v5527 = vpop.f32.mrb[0].mxu0
  %5528 = vdwg.mxu0
  %s5529 = scalar_lea.vmem %s57, 96
  %v5530 = vld [vmem:[%s5529] sm:$0xff]
  %v5531 = vld [vmem:[%s5529 + $0x8] sm:$0xff]
  %v5532 = vld [vmem:[%s5529 + $0x10] sm:$0xff]
  %v5533 = vld [vmem:[%s5529 + $0x18] sm:$0xff]
  %s5534 = scalar_lea.vmem %s59, 3
  %v5535 = vld [vmem:[%s5534] sm:$0x1]
  %v5537 = vlaneseq
  %v5538 = vshrl.u32 %v5537, 7
  %v5539 = vsub.s32 0, %v5538
  %v5540 = vrot.slane %v5535, %v5539
  %5542 = vmatprep.subr.mxu0 0.0
  %5543 = vmatpush1.msra.mxu0 %v5530
  %5544 = vmatprep.subr.mxu0 0.0
  %5545 = vmatpush1.msra.mxu0 %v5531
  %5546 = vmatprep.subr.mxu0 0.0
  %5547 = vmatpush1.msra.mxu0 %v5532
  %5548 = vmatprep.subr.mxu0 0.0
  %5549 = vmatpush1.msra.mxu0 %v5533
  %5550 = vmatprep.subr.mxu0 0.0
  %5551 = vmatpush1.msra.mxu0 0.0
  %5552 = vmatprep.subr.mxu0 0.0
  %5553 = vmatpush1.msra.mxu0 0.0
  %5554 = vmatprep.subr.mxu0 0.0
  %5555 = vmatpush1.msra.mxu0 0.0
  %5556 = vmatprep.subr.mxu0 0.0
  %5557 = vmatpush1.msra.mxu0 0.0
  %5558 = vmatprep.subr.mxu0 0.0
  %5559 = vmatpush1.msra.mxu0 0.0
  %5560 = vmatprep.subr.mxu0 0.0
  %5561 = vmatpush1.msra.mxu0 0.0
  %5562 = vmatprep.subr.mxu0 0.0
  %5563 = vmatpush1.msra.mxu0 0.0
  %5564 = vmatprep.subr.mxu0 0.0
  %5565 = vmatpush1.msra.mxu0 0.0
  %5566 = vmatprep.subr.mxu0 0.0
  %5567 = vmatpush1.msra.mxu0 0.0
  %5568 = vmatprep.subr.mxu0 0.0
  %5569 = vmatpush1.msra.mxu0 0.0
  %5570 = vmatprep.subr.mxu0 0.0
  %5571 = vmatpush1.msra.mxu0 0.0
  %5572 = vmatprep.subr.mxu0 0.0
  %5573 = vmatpush1.msra.mxu0 0.0
  %5574 = vmatprep.subr.mxu0 0.0
  %5575 = vmatpush1.msra.mxu0 0.0
  %5576 = vmatprep.subr.mxu0 0.0
  %5577 = vmatpush1.msra.mxu0 0.0
  %5578 = vmatprep.subr.mxu0 0.0
  %5579 = vmatpush1.msra.mxu0 0.0
  %5580 = vmatprep.subr.mxu0 0.0
  %5581 = vmatpush1.msra.mxu0 0.0
  %5582 = vmatprep.subr.mxu0 0.0
  %5583 = vmatpush1.msra.mxu0 0.0
  %5584 = vmatprep.subr.mxu0 0.0
  %5585 = vmatpush1.msra.mxu0 0.0
  %5586 = vmatprep.subr.mxu0 0.0
  %5587 = vmatpush1.msra.mxu0 0.0
  %5588 = vmatprep.subr.mxu0 0.0
  %5589 = vmatpush1.msra.mxu0 0.0
  %5590 = vmatprep.subr.mxu0 0.0
  %5591 = vmatpush1.msra.mxu0 0.0
  %5592 = vmatprep.subr.mxu0 0.0
  %5593 = vmatpush1.msra.mxu0 0.0
  %5594 = vmatprep.subr.mxu0 0.0
  %5595 = vmatpush1.msra.mxu0 0.0
  %5596 = vmatprep.subr.mxu0 0.0
  %5597 = vmatpush1.msra.mxu0 0.0
  %5598 = vmatprep.subr.mxu0 0.0
  %5599 = vmatpush1.msra.mxu0 0.0
  %5600 = vmatprep.subr.mxu0 0.0
  %5601 = vmatpush1.msra.mxu0 0.0
  %5602 = vmatprep.subr.mxu0 0.0
  %5603 = vmatpush1.msra.mxu0 0.0
  %5604 = vmatprep.subr.mxu0 0.0
  %5605 = vmatpush1.msra.mxu0 0.0
  %5606 = vmatprep.mubr.f32.mxu0 0.0
  %5607 = vmatmul.mubr.f32.gmra.mrb[0].mxu0 %v3351
  %v5608 = vpop.f32.mrb[0].mxu0
  %v5609 = vadd.f32 %v5540, %v5608
  %v5610 = vpop.f32.mrb[0].mxu0
  %5611 = vmatprep.mubr.f32.mxu0 0.0
  %5612 = vmatmul.mubr.f32.gmra.mrb[0].mxu0 %v3354
  %v5613 = vpop.f32.mrb[0].mxu0
  %v5614 = vadd.f32 %v5540, %v5613
  %v5615 = vpop.f32.mrb[0].mxu0
  %5616 = vdwg.mxu0
  %v5618 = vsel %vm576, %v5433, 0
  %v5621 = vsel %vm576, %v5521, 0
  %5623 = vmatprep.subr.mxu0 0.0
  %5624 = vmatpush1.xpose.msra.mxu0 %v5621
  %5625 = vmatprep.subr.mxu0 0.0
  %5626 = vmatpush1.xpose.msra.mxu0 0.0
  %5627 = vmatprep.subr.mxu0 0.0
  %5628 = vmatpush1.xpose.msra.mxu0 0.0
  %5629 = vmatprep.subr.mxu0 0.0
  %5630 = vmatpush1.xpose.msra.mxu0 0.0
  %5631 = vmatprep.subr.mxu0 0.0
  %5632 = vmatpush1.xpose.msra.mxu0 0.0
  %5633 = vmatprep.subr.mxu0 0.0
  %5634 = vmatpush1.xpose.msra.mxu0 0.0
  %5635 = vmatprep.subr.mxu0 0.0
  %5636 = vmatpush1.xpose.msra.mxu0 0.0
  %5637 = vmatprep.subr.mxu0 0.0
  %5638 = vmatpush1.xpose.msra.mxu0 0.0
  %5639 = vmatprep.subr.mxu0 0.0
  %5640 = vmatpush1.xpose.msra.mxu0 0.0
  %5641 = vmatprep.subr.mxu0 0.0
  %5642 = vmatpush1.xpose.msra.mxu0 0.0
  %5643 = vmatprep.subr.mxu0 0.0
  %5644 = vmatpush1.xpose.msra.mxu0 0.0
  %5645 = vmatprep.subr.mxu0 0.0
  %5646 = vmatpush1.xpose.msra.mxu0 0.0
  %5647 = vmatprep.subr.mxu0 0.0
  %5648 = vmatpush1.xpose.msra.mxu0 0.0
  %5649 = vmatprep.subr.mxu0 0.0
  %5650 = vmatpush1.xpose.msra.mxu0 0.0
  %5651 = vmatprep.subr.mxu0 0.0
  %5652 = vmatpush1.xpose.msra.mxu0 0.0
  %5653 = vmatprep.subr.mxu0 0.0
  %5654 = vmatpush1.xpose.msra.mxu0 0.0
  %5655 = vmatprep.subr.mxu0 0.0
  %5656 = vmatpush1.xpose.msra.mxu0 0.0
  %5657 = vmatprep.subr.mxu0 0.0
  %5658 = vmatpush1.xpose.msra.mxu0 0.0
  %5659 = vmatprep.subr.mxu0 0.0
  %5660 = vmatpush1.xpose.msra.mxu0 0.0
  %5661 = vmatprep.subr.mxu0 0.0
  %5662 = vmatpush1.xpose.msra.mxu0 0.0
  %5663 = vmatprep.subr.mxu0 0.0
  %5664 = vmatpush1.xpose.msra.mxu0 0.0
  %5665 = vmatprep.subr.mxu0 0.0
  %5666 = vmatpush1.xpose.msra.mxu0 0.0
  %5667 = vmatprep.subr.mxu0 0.0
  %5668 = vmatpush1.xpose.msra.mxu0 0.0
  %5669 = vmatprep.subr.mxu0 0.0
  %5670 = vmatpush1.xpose.msra.mxu0 0.0
  %5671 = vmatprep.subr.mxu0 0.0
  %5672 = vmatpush1.xpose.msra.mxu0 0.0
  %5673 = vmatprep.subr.mxu0 0.0
  %5674 = vmatpush1.xpose.msra.mxu0 0.0
  %5675 = vmatprep.subr.mxu0 0.0
  %5676 = vmatpush1.xpose.msra.mxu0 0.0
  %5677 = vmatprep.subr.mxu0 0.0
  %5678 = vmatpush1.xpose.msra.mxu0 0.0
  %5679 = vmatprep.subr.mxu0 0.0
  %5680 = vmatpush1.xpose.msra.mxu0 0.0
  %5681 = vmatprep.subr.mxu0 0.0
  %5682 = vmatpush1.xpose.msra.mxu0 0.0
  %5683 = vmatprep.subr.mxu0 0.0
  %5684 = vmatpush1.xpose.msra.mxu0 0.0
  %5685 = vmatprep.subr.mxu0 0.0
  %5686 = vmatpush1.xpose.msra.mxu0 0.0
  %5687 = vmatprep.mubr.f32.mxu0 0.0
  %5688 = vmatmul.mubr.f32.gmra.mrb[0].mxu0 %v5618
  %v5689 = vpop.f32.mrb[0].mxu0
  %v5690 = vadd.f32 0.0, %v5689
  %v5691 = vpop.f32.mrb[0].mxu0
  %5692 = vdwg.mxu0
  %v5694 = vsel %vm576, %v5438, 0
  %v5697 = vsel %vm576, %v5526, 0
  %5699 = vmatprep.subr.mxu0 0.0
  %5700 = vmatpush1.xpose.msra.mxu0 %v5697
  %5701 = vmatprep.subr.mxu0 0.0
  %5702 = vmatpush1.xpose.msra.mxu0 0.0
  %5703 = vmatprep.subr.mxu0 0.0
  %5704 = vmatpush1.xpose.msra.mxu0 0.0
  %5705 = vmatprep.subr.mxu0 0.0
  %5706 = vmatpush1.xpose.msra.mxu0 0.0
  %5707 = vmatprep.subr.mxu0 0.0
  %5708 = vmatpush1.xpose.msra.mxu0 0.0
  %5709 = vmatprep.subr.mxu0 0.0
  %5710 = vmatpush1.xpose.msra.mxu0 0.0
  %5711 = vmatprep.subr.mxu0 0.0
  %5712 = vmatpush1.xpose.msra.mxu0 0.0
  %5713 = vmatprep.subr.mxu0 0.0
  %5714 = vmatpush1.xpose.msra.mxu0 0.0
  %5715 = vmatprep.subr.mxu0 0.0
  %5716 = vmatpush1.xpose.msra.mxu0 0.0
  %5717 = vmatprep.subr.mxu0 0.0
  %5718 = vmatpush1.xpose.msra.mxu0 0.0
  %5719 = vmatprep.subr.mxu0 0.0
  %5720 = vmatpush1.xpose.msra.mxu0 0.0
  %5721 = vmatprep.subr.mxu0 0.0
  %5722 = vmatpush1.xpose.msra.mxu0 0.0
  %5723 = vmatprep.subr.mxu0 0.0
  %5724 = vmatpush1.xpose.msra.mxu0 0.0
  %5725 = vmatprep.subr.mxu0 0.0
  %5726 = vmatpush1.xpose.msra.mxu0 0.0
  %5727 = vmatprep.subr.mxu0 0.0
  %5728 = vmatpush1.xpose.msra.mxu0 0.0
  %5729 = vmatprep.subr.mxu0 0.0
  %5730 = vmatpush1.xpose.msra.mxu0 0.0
  %5731 = vmatprep.subr.mxu0 0.0
  %5732 = vmatpush1.xpose.msra.mxu0 0.0
  %5733 = vmatprep.subr.mxu0 0.0
  %5734 = vmatpush1.xpose.msra.mxu0 0.0
  %5735 = vmatprep.subr.mxu0 0.0
  %5736 = vmatpush1.xpose.msra.mxu0 0.0
  %5737 = vmatprep.subr.mxu0 0.0
  %5738 = vmatpush1.xpose.msra.mxu0 0.0
  %5739 = vmatprep.subr.mxu0 0.0
  %5740 = vmatpush1.xpose.msra.mxu0 0.0
  %5741 = vmatprep.subr.mxu0 0.0
  %5742 = vmatpush1.xpose.msra.mxu0 0.0
  %5743 = vmatprep.subr.mxu0 0.0
  %5744 = vmatpush1.xpose.msra.mxu0 0.0
  %5745 = vmatprep.subr.mxu0 0.0
  %5746 = vmatpush1.xpose.msra.mxu0 0.0
  %5747 = vmatprep.subr.mxu0 0.0
  %5748 = vmatpush1.xpose.msra.mxu0 0.0
  %5749 = vmatprep.subr.mxu0 0.0
  %5750 = vmatpush1.xpose.msra.mxu0 0.0
  %5751 = vmatprep.subr.mxu0 0.0
  %5752 = vmatpush1.xpose.msra.mxu0 0.0
  %5753 = vmatprep.subr.mxu0 0.0
  %5754 = vmatpush1.xpose.msra.mxu0 0.0
  %5755 = vmatprep.subr.mxu0 0.0
  %5756 = vmatpush1.xpose.msra.mxu0 0.0
  %5757 = vmatprep.subr.mxu0 0.0
  %5758 = vmatpush1.xpose.msra.mxu0 0.0
  %5759 = vmatprep.subr.mxu0 0.0
  %5760 = vmatpush1.xpose.msra.mxu0 0.0
  %5761 = vmatprep.subr.mxu0 0.0
  %5762 = vmatpush1.xpose.msra.mxu0 0.0
  %5763 = vmatprep.mubr.f32.mxu0 0.0
  %5764 = vmatmul.mubr.f32.gmra.mrb[0].mxu0 %v5694
  %v5765 = vpop.f32.mrb[0].mxu0
  %v5766 = vadd.f32 0.0, %v5765
  %v5767 = vpop.f32.mrb[0].mxu0
  %5768 = vdwg.mxu0
  %v5769 = vmul.f32 %v5690, 0.35355338
  %v5770 = vmul.f32 %v5766, 0.35355338
  %v5771 = vsel %vm732, %v5769, -1e+10
  %v5772 = vsel %vm732, %v5770, -1e+10
  %v5773 = vsel %vm576, %v5771, -inf
  %5774 = vmax.xlane.f32.xlu0 %v5773
  %v5775 = vpop.xlane.xlu0 %5774
  %v5776 = vsel %vm576, %v5772, -inf
  %5777 = vmax.xlane.f32.xlu0 %v5776
  %v5778 = vpop.xlane.xlu0 %5777
  %v5779 = vsub.f32 %v5771, %v5775
  %v5780 = vsub.f32 %v5772, %v5778
  %v5781 = vmul.f32 %v5779, 1.442695
  %v5782 = vpow.pop %v5781
  %v5783 = vmul.f32 %v5780, 1.442695
  %v5784 = vpow.pop %v5783
  %v5785 = vsel %vm576, %v5782, 0.0
  %5786 = vadd.xlane.f32.xlu0 %v5785
  %v5787 = vpop.xlane.xlu0 %5786
  %v5788 = vsel %vm576, %v5784, 0.0
  %5789 = vadd.xlane.f32.xlu0 %v5788
  %v5790 = vpop.xlane.xlu0 %5789
  %v5791 = vrcp.pop %v5787
  %v5792 = vrcp.pop %v5790
  %v5793 = vmul.f32 %v5782, %v5791
  %v5794 = vmul.f32 %v5784, %v5792
  %v5796 = vsel %vm576, %v5793, 0
  %5798 = vmatprep.subr.mxu0 0.0
  %5799 = vmatpush1.msra.mxu0 %v5609
  %5800 = vmatprep.subr.mxu0 0.0
  %5801 = vmatpush1.msra.mxu0 0.0
  %5802 = vmatprep.subr.mxu0 0.0
  %5803 = vmatpush1.msra.mxu0 0.0
  %5804 = vmatprep.subr.mxu0 0.0
  %5805 = vmatpush1.msra.mxu0 0.0
  %5806 = vmatprep.subr.mxu0 0.0
  %5807 = vmatpush1.msra.mxu0 0.0
  %5808 = vmatprep.subr.mxu0 0.0
  %5809 = vmatpush1.msra.mxu0 0.0
  %5810 = vmatprep.subr.mxu0 0.0
  %5811 = vmatpush1.msra.mxu0 0.0
  %5812 = vmatprep.subr.mxu0 0.0
  %5813 = vmatpush1.msra.mxu0 0.0
  %5814 = vmatprep.subr.mxu0 0.0
  %5815 = vmatpush1.msra.mxu0 0.0
  %5816 = vmatprep.subr.mxu0 0.0
  %5817 = vmatpush1.msra.mxu0 0.0
  %5818 = vmatprep.subr.mxu0 0.0
  %5819 = vmatpush1.msra.mxu0 0.0
  %5820 = vmatprep.subr.mxu0 0.0
  %5821 = vmatpush1.msra.mxu0 0.0
  %5822 = vmatprep.subr.mxu0 0.0
  %5823 = vmatpush1.msra.mxu0 0.0
  %5824 = vmatprep.subr.mxu0 0.0
  %5825 = vmatpush1.msra.mxu0 0.0
  %5826 = vmatprep.subr.mxu0 0.0
  %5827 = vmatpush1.msra.mxu0 0.0
  %5828 = vmatprep.subr.mxu0 0.0
  %5829 = vmatpush1.msra.mxu0 0.0
  %5830 = vmatprep.subr.mxu0 0.0
  %5831 = vmatpush1.msra.mxu0 0.0
  %5832 = vmatprep.subr.mxu0 0.0
  %5833 = vmatpush1.msra.mxu0 0.0
  %5834 = vmatprep.subr.mxu0 0.0
  %5835 = vmatpush1.msra.mxu0 0.0
  %5836 = vmatprep.subr.mxu0 0.0
  %5837 = vmatpush1.msra.mxu0 0.0
  %5838 = vmatprep.subr.mxu0 0.0
  %5839 = vmatpush1.msra.mxu0 0.0
  %5840 = vmatprep.subr.mxu0 0.0
  %5841 = vmatpush1.msra.mxu0 0.0
  %5842 = vmatprep.subr.mxu0 0.0
  %5843 = vmatpush1.msra.mxu0 0.0
  %5844 = vmatprep.subr.mxu0 0.0
  %5845 = vmatpush1.msra.mxu0 0.0
  %5846 = vmatprep.subr.mxu0 0.0
  %5847 = vmatpush1.msra.mxu0 0.0
  %5848 = vmatprep.subr.mxu0 0.0
  %5849 = vmatpush1.msra.mxu0 0.0
  %5850 = vmatprep.subr.mxu0 0.0
  %5851 = vmatpush1.msra.mxu0 0.0
  %5852 = vmatprep.subr.mxu0 0.0
  %5853 = vmatpush1.msra.mxu0 0.0
  %5854 = vmatprep.subr.mxu0 0.0
  %5855 = vmatpush1.msra.mxu0 0.0
  %5856 = vmatprep.subr.mxu0 0.0
  %5857 = vmatpush1.msra.mxu0 0.0
  %5858 = vmatprep.subr.mxu0 0.0
  %5859 = vmatpush1.msra.mxu0 0.0
  %5860 = vmatprep.subr.mxu0 0.0
  %5861 = vmatpush1.msra.mxu0 0.0
  %5862 = vmatprep.mubr.f32.mxu0 0.0
  %5863 = vmatmul.mubr.f32.gmra.mrb[0].mxu0 %v5796
  %v5864 = vpop.f32.mrb[0].mxu0
  %v5865 = vadd.f32 0.0, %v5864
  %v5866 = vpop.f32.mrb[0].mxu0
  %5867 = vdwg.mxu0
  %v5869 = vsel %vm576, %v5794, 0
  %5871 = vmatprep.subr.mxu0 0.0
  %5872 = vmatpush1.msra.mxu0 %v5614
  %5873 = vmatprep.subr.mxu0 0.0
  %5874 = vmatpush1.msra.mxu0 0.0
  %5875 = vmatprep.subr.mxu0 0.0
  %5876 = vmatpush1.msra.mxu0 0.0
  %5877 = vmatprep.subr.mxu0 0.0
  %5878 = vmatpush1.msra.mxu0 0.0
  %5879 = vmatprep.subr.mxu0 0.0
  %5880 = vmatpush1.msra.mxu0 0.0
  %5881 = vmatprep.subr.mxu0 0.0
  %5882 = vmatpush1.msra.mxu0 0.0
  %5883 = vmatprep.subr.mxu0 0.0
  %5884 = vmatpush1.msra.mxu0 0.0
  %5885 = vmatprep.subr.mxu0 0.0
  %5886 = vmatpush1.msra.mxu0 0.0
  %5887 = vmatprep.subr.mxu0 0.0
  %5888 = vmatpush1.msra.mxu0 0.0
  %5889 = vmatprep.subr.mxu0 0.0
  %5890 = vmatpush1.msra.mxu0 0.0
  %5891 = vmatprep.subr.mxu0 0.0
  %5892 = vmatpush1.msra.mxu0 0.0
  %5893 = vmatprep.subr.mxu0 0.0
  %5894 = vmatpush1.msra.mxu0 0.0
  %5895 = vmatprep.subr.mxu0 0.0
  %5896 = vmatpush1.msra.mxu0 0.0
  %5897 = vmatprep.subr.mxu0 0.0
  %5898 = vmatpush1.msra.mxu0 0.0
  %5899 = vmatprep.subr.mxu0 0.0
  %5900 = vmatpush1.msra.mxu0 0.0
  %5901 = vmatprep.subr.mxu0 0.0
  %5902 = vmatpush1.msra.mxu0 0.0
  %5903 = vmatprep.subr.mxu0 0.0
  %5904 = vmatpush1.msra.mxu0 0.0
  %5905 = vmatprep.subr.mxu0 0.0
  %5906 = vmatpush1.msra.mxu0 0.0
  %5907 = vmatprep.subr.mxu0 0.0
  %5908 = vmatpush1.msra.mxu0 0.0
  %5909 = vmatprep.subr.mxu0 0.0
  %5910 = vmatpush1.msra.mxu0 0.0
  %5911 = vmatprep.subr.mxu0 0.0
  %5912 = vmatpush1.msra.mxu0 0.0
  %5913 = vmatprep.subr.mxu0 0.0
  %5914 = vmatpush1.msra.mxu0 0.0
  %5915 = vmatprep.subr.mxu0 0.0
  %5916 = vmatpush1.msra.mxu0 0.0
  %5917 = vmatprep.subr.mxu0 0.0
  %5918 = vmatpush1.msra.mxu0 0.0
  %5919 = vmatprep.subr.mxu0 0.0
  %5920 = vmatpush1.msra.mxu0 0.0
  %5921 = vmatprep.subr.mxu0 0.0
  %5922 = vmatpush1.msra.mxu0 0.0
  %5923 = vmatprep.subr.mxu0 0.0
  %5924 = vmatpush1.msra.mxu0 0.0
  %5925 = vmatprep.subr.mxu0 0.0
  %5926 = vmatpush1.msra.mxu0 0.0
  %5927 = vmatprep.subr.mxu0 0.0
  %5928 = vmatpush1.msra.mxu0 0.0
  %5929 = vmatprep.subr.mxu0 0.0
  %5930 = vmatpush1.msra.mxu0 0.0
  %5931 = vmatprep.subr.mxu0 0.0
  %5932 = vmatpush1.msra.mxu0 0.0
  %5933 = vmatprep.subr.mxu0 0.0
  %5934 = vmatpush1.msra.mxu0 0.0
  %5935 = vmatprep.mubr.f32.mxu0 0.0
  %5936 = vmatmul.mubr.f32.gmra.mrb[0].mxu0 %v5869
  %v5937 = vpop.f32.mrb[0].mxu0
  %v5938 = vadd.f32 0.0, %v5937
  %v5939 = vpop.f32.mrb[0].mxu0
  %5940 = vdwg.mxu0
  %s5941 = scalar_lea.vmem %s61, 24
  %v5942 = vld [vmem:[%s5941] sm:$0xff]
  %v5944 = vsel %vm576, %v5865, 0
  %v5947 = vsel %vm576, %v5938, 0
  %5949 = vmatprep.subr.mxu0 0.0
  %5950 = vmatpush1.msra.mxu0 %v5942
  %5951 = vmatprep.subr.mxu0 0.0
  %5952 = vmatpush1.msra.mxu0 0.0
  %5953 = vmatprep.subr.mxu0 0.0
  %5954 = vmatpush1.msra.mxu0 0.0
  %5955 = vmatprep.subr.mxu0 0.0
  %5956 = vmatpush1.msra.mxu0 0.0
  %5957 = vmatprep.subr.mxu0 0.0
  %5958 = vmatpush1.msra.mxu0 0.0
  %5959 = vmatprep.subr.mxu0 0.0
  %5960 = vmatpush1.msra.mxu0 0.0
  %5961 = vmatprep.subr.mxu0 0.0
  %5962 = vmatpush1.msra.mxu0 0.0
  %5963 = vmatprep.subr.mxu0 0.0
  %5964 = vmatpush1.msra.mxu0 0.0
  %5965 = vmatprep.subr.mxu0 0.0
  %5966 = vmatpush1.msra.mxu0 0.0
  %5967 = vmatprep.subr.mxu0 0.0
  %5968 = vmatpush1.msra.mxu0 0.0
  %5969 = vmatprep.subr.mxu0 0.0
  %5970 = vmatpush1.msra.mxu0 0.0
  %5971 = vmatprep.subr.mxu0 0.0
  %5972 = vmatpush1.msra.mxu0 0.0
  %5973 = vmatprep.subr.mxu0 0.0
  %5974 = vmatpush1.msra.mxu0 0.0
  %5975 = vmatprep.subr.mxu0 0.0
  %5976 = vmatpush1.msra.mxu0 0.0
  %5977 = vmatprep.subr.mxu0 0.0
  %5978 = vmatpush1.msra.mxu0 0.0
  %5979 = vmatprep.subr.mxu0 0.0
  %5980 = vmatpush1.msra.mxu0 0.0
  %5981 = vmatprep.subr.mxu0 0.0
  %5982 = vmatpush1.msra.mxu0 0.0
  %5983 = vmatprep.subr.mxu0 0.0
  %5984 = vmatpush1.msra.mxu0 0.0
  %5985 = vmatprep.subr.mxu0 0.0
  %5986 = vmatpush1.msra.mxu0 0.0
  %5987 = vmatprep.subr.mxu0 0.0
  %5988 = vmatpush1.msra.mxu0 0.0
  %5989 = vmatprep.subr.mxu0 0.0
  %5990 = vmatpush1.msra.mxu0 0.0
  %5991 = vmatprep.subr.mxu0 0.0
  %5992 = vmatpush1.msra.mxu0 0.0
  %5993 = vmatprep.subr.mxu0 0.0
  %5994 = vmatpush1.msra.mxu0 0.0
  %5995 = vmatprep.subr.mxu0 0.0
  %5996 = vmatpush1.msra.mxu0 0.0
  %5997 = vmatprep.subr.mxu0 0.0
  %5998 = vmatpush1.msra.mxu0 0.0
  %5999 = vmatprep.subr.mxu0 0.0
  %6000 = vmatpush1.msra.mxu0 0.0
  %6001 = vmatprep.subr.mxu0 0.0
  %6002 = vmatpush1.msra.mxu0 0.0
  %6003 = vmatprep.subr.mxu0 0.0
  %6004 = vmatpush1.msra.mxu0 0.0
  %6005 = vmatprep.subr.mxu0 0.0
  %6006 = vmatpush1.msra.mxu0 0.0
  %6007 = vmatprep.subr.mxu0 0.0
  %6008 = vmatpush1.msra.mxu0 0.0
  %6009 = vmatprep.subr.mxu0 0.0
  %6010 = vmatpush1.msra.mxu0 0.0
  %6011 = vmatprep.subr.mxu0 0.0
  %6012 = vmatpush1.msra.mxu0 0.0
  %6013 = vmatprep.mubr.f32.mxu0 0.0
  %6014 = vmatmul.mubr.f32.gmra.mrb[0].mxu0 %v5944
  %v6015 = vpop.f32.mrb[0].mxu0
  %v6016 = vadd.f32 0.0, %v6015
  %v6017 = vpop.f32.mrb[0].mxu0
  %6018 = vmatprep.mubr.f32.mxu0 0.0
  %6019 = vmatmul.mubr.f32.gmra.mrb[0].mxu0 %v5947
  %v6020 = vpop.f32.mrb[0].mxu0
  %v6021 = vadd.f32 0.0, %v6020
  %v6022 = vpop.f32.mrb[0].mxu0
  %6023 = vdwg.mxu0
  %v6024 = vadd.f32 %v5351, %v6016
  %v6025 = vadd.f32 %v5352, %v6021
  %v6026 = vadd.f32 %v3279, %v6024
  %v6027 = vadd.f32 %v3280, %v6025
  %v6028 = vld [vmem:[%s63] sm:$0x1]
  %v6030 = vlaneseq
  %v6031 = vshrl.u32 %v6030, 7
  %v6032 = vsub.s32 0, %v6031
  %v6033 = vrot.slane %v6028, %v6032
  %v6035 = vadd.f32 %v6026, %v6033
  %v6036 = vadd.f32 %v6027, %v6033
  %v6037 = vld [vmem:[%s65] sm:$0x1]
  %v6038 = vld [vmem:[%s67] sm:$0x1]
  %v6039 = vsel %vm254, %v6035, 0.0
  %6040 = vadd.xlane.f32.xlu0 %v6039
  %v6041 = vpop.xlane.xlu0 %6040
  %v6042 = vsel %vm254, %v6036, 0.0
  %6043 = vadd.xlane.f32.xlu0 %v6042
  %v6044 = vpop.xlane.xlu0 %6043
  %v6045 = vmul.f32 %v6041, %v261
  %v6046 = vmul.f32 %v6044, %v261
  %v6047 = vsub.f32 %v6035, %v6045
  %v6048 = vsub.f32 %v6036, %v6046
  %v6049 = vmul.f32 %v6047, %v6047
  %v6050 = vmul.f32 %v6048, %v6048
  %v6051 = vsel %vm254, %v6049, 0.0
  %6052 = vadd.xlane.f32.xlu0 %v6051
  %v6053 = vpop.xlane.xlu0 %6052
  %v6054 = vsel %vm254, %v6050, 0.0
  %6055 = vadd.xlane.f32.xlu0 %v6054
  %v6056 = vpop.xlane.xlu0 %6055
  %v6057 = vmul.f32 %v6053, %v261
  %v6058 = vmul.f32 %v6056, %v261
  %v6059 = vadd.f32 %v6057, 1e-05
  %v6060 = vadd.f32 %v6058, 1e-05
  %v6061 = vrsqrt.pop %v6059
  %v6062 = vmul.f32 %v6059, %v6061
  %vm6063 = vcmp.eq.f32.partialorder %v6059, inf
  %v6064 = vsel %vm6063, %v6059, %v6062
  %vm6065 = vcmp.eq.f32.partialorder %v6059, 0.0
  %v6066 = vand.u32 %v6059, 2147483648
  %v6067 = vsel %vm6065, %v6066, %v6064
  %v6068 = vrsqrt.pop %v6060
  %v6069 = vmul.f32 %v6060, %v6068
  %vm6070 = vcmp.eq.f32.partialorder %v6060, inf
  %v6071 = vsel %vm6070, %v6060, %v6069
  %vm6072 = vcmp.eq.f32.partialorder %v6060, 0.0
  %v6073 = vand.u32 %v6060, 2147483648
  %v6074 = vsel %vm6072, %v6073, %v6071
  %v6075 = vrcp.pop %v6067
  %v6076 = vmul.f32 %v6047, %v6075
  %v6077 = vrcp.pop %v6074
  %v6078 = vmul.f32 %v6048, %v6077
  %v6080 = vlaneseq
  %v6081 = vshrl.u32 %v6080, 7
  %v6082 = vsub.s32 0, %v6081
  %v6083 = vrot.slane %v6037, %v6082
  %v6085 = vmul.f32 %v6083, %v6076
  %v6086 = vmul.f32 %v6083, %v6078
  %v6088 = vlaneseq
  %v6089 = vshrl.u32 %v6088, 7
  %v6090 = vsub.s32 0, %v6089
  %v6091 = vrot.slane %v6038, %v6090
  %v6093 = vadd.f32 %v6085, %v6091
  %v6094 = vadd.f32 %v6086, %v6091
  %v6095 = vld [vmem:[%s69] sm:$0xff]
  %v6096 = vld [vmem:[%s69 + $0x8] sm:$0xff]
  %v6097 = vld [vmem:[%s69 + $0x10] sm:$0xff]
  %v6098 = vld [vmem:[%s69 + $0x18] sm:$0xff]
  %v6099 = vld [vmem:[%s71] sm:$0x1]
  %v6101 = vlaneseq
  %v6102 = vshrl.u32 %v6101, 7
  %v6103 = vsub.s32 0, %v6102
  %v6104 = vrot.slane %v6099, %v6103
  %v6107 = vsel %vm254, %v6093, 0
  %v6110 = vsel %vm254, %v6094, 0
  %6112 = vmatprep.subr.mxu0 0.0
  %6113 = vmatpush1.msra.mxu0 %v6095
  %6114 = vmatprep.subr.mxu0 0.0
  %6115 = vmatpush1.msra.mxu0 %v6096
  %6116 = vmatprep.subr.mxu0 0.0
  %6117 = vmatpush1.msra.mxu0 %v6097
  %6118 = vmatprep.subr.mxu0 0.0
  %6119 = vmatpush1.msra.mxu0 %v6098
  %6120 = vmatprep.subr.mxu0 0.0
  %6121 = vmatpush1.msra.mxu0 0.0
  %6122 = vmatprep.subr.mxu0 0.0
  %6123 = vmatpush1.msra.mxu0 0.0
  %6124 = vmatprep.subr.mxu0 0.0
  %6125 = vmatpush1.msra.mxu0 0.0
  %6126 = vmatprep.subr.mxu0 0.0
  %6127 = vmatpush1.msra.mxu0 0.0
  %6128 = vmatprep.subr.mxu0 0.0
  %6129 = vmatpush1.msra.mxu0 0.0
  %6130 = vmatprep.subr.mxu0 0.0
  %6131 = vmatpush1.msra.mxu0 0.0
  %6132 = vmatprep.subr.mxu0 0.0
  %6133 = vmatpush1.msra.mxu0 0.0
  %6134 = vmatprep.subr.mxu0 0.0
  %6135 = vmatpush1.msra.mxu0 0.0
  %6136 = vmatprep.subr.mxu0 0.0
  %6137 = vmatpush1.msra.mxu0 0.0
  %6138 = vmatprep.subr.mxu0 0.0
  %6139 = vmatpush1.msra.mxu0 0.0
  %6140 = vmatprep.subr.mxu0 0.0
  %6141 = vmatpush1.msra.mxu0 0.0
  %6142 = vmatprep.subr.mxu0 0.0
  %6143 = vmatpush1.msra.mxu0 0.0
  %6144 = vmatprep.subr.mxu0 0.0
  %6145 = vmatpush1.msra.mxu0 0.0
  %6146 = vmatprep.subr.mxu0 0.0
  %6147 = vmatpush1.msra.mxu0 0.0
  %6148 = vmatprep.subr.mxu0 0.0
  %6149 = vmatpush1.msra.mxu0 0.0
  %6150 = vmatprep.subr.mxu0 0.0
  %6151 = vmatpush1.msra.mxu0 0.0
  %6152 = vmatprep.subr.mxu0 0.0
  %6153 = vmatpush1.msra.mxu0 0.0
  %6154 = vmatprep.subr.mxu0 0.0
  %6155 = vmatpush1.msra.mxu0 0.0
  %6156 = vmatprep.subr.mxu0 0.0
  %6157 = vmatpush1.msra.mxu0 0.0
  %6158 = vmatprep.subr.mxu0 0.0
  %6159 = vmatpush1.msra.mxu0 0.0
  %6160 = vmatprep.subr.mxu0 0.0
  %6161 = vmatpush1.msra.mxu0 0.0
  %6162 = vmatprep.subr.mxu0 0.0
  %6163 = vmatpush1.msra.mxu0 0.0
  %6164 = vmatprep.subr.mxu0 0.0
  %6165 = vmatpush1.msra.mxu0 0.0
  %6166 = vmatprep.subr.mxu0 0.0
  %6167 = vmatpush1.msra.mxu0 0.0
  %6168 = vmatprep.subr.mxu0 0.0
  %6169 = vmatpush1.msra.mxu0 0.0
  %6170 = vmatprep.subr.mxu0 0.0
  %6171 = vmatpush1.msra.mxu0 0.0
  %6172 = vmatprep.subr.mxu0 0.0
  %6173 = vmatpush1.msra.mxu0 0.0
  %6174 = vmatprep.subr.mxu0 0.0
  %6175 = vmatpush1.msra.mxu0 0.0
  %6176 = vmatprep.mubr.f32.mxu0 0.0
  %6177 = vmatmul.mubr.f32.gmra.mrb[0].mxu0 %v6107
  %v6178 = vpop.f32.mrb[0].mxu0
  %v6179 = vadd.f32 %v6104, %v6178
  %v6180 = vpop.f32.mrb[0].mxu0
  %6181 = vmatprep.mubr.f32.mxu0 0.0
  %6182 = vmatmul.mubr.f32.gmra.mrb[0].mxu0 %v6110
  %v6183 = vpop.f32.mrb[0].mxu0
  %v6184 = vadd.f32 %v6104, %v6183
  %v6185 = vpop.f32.mrb[0].mxu0
  %6186 = vdwg.mxu0
  %v6187 = vmul.f32 %v6179, 0.5
  %v6188 = vmul.f32 %v6184, 0.5
  %v6189 = vmul.f32 %v6179, %v6179
  %v6190 = vmul.f32 %v6184, %v6184
  %v6191 = vmul.f32 %v6179, %v6189
  %v6192 = vmul.f32 %v6184, %v6190
  %v6193 = vmul.f32 %v6191, 0.044715
  %v6194 = vmul.f32 %v6192, 0.044715
  %v6195 = vadd.f32 %v6179, %v6193
  %v6196 = vadd.f32 %v6184, %v6194
  %v6197 = vmul.f32 %v6195, 0.7978846
  %v6198 = vmul.f32 %v6196, 0.7978846
  %v6199 = vtanh.pop %v6197
  %v6200 = vtanh.pop %v6198
  %v6201 = vadd.f32 %v6199, 1.0
  %v6202 = vadd.f32 %v6200, 1.0
  %v6203 = vmul.f32 %v6187, %v6201
  %v6204 = vmul.f32 %v6188, %v6202
  %v6205 = vld [vmem:[%s73] sm:$0xff]
  %v6206 = vld [vmem:[%s73 + $0x8] sm:$0xff]
  %v6207 = vld [vmem:[%s73 + $0x10] sm:$0xff]
  %v6208 = vld [vmem:[%s73 + $0x18] sm:$0xff]
  %v6209 = vld [vmem:[%s73 + $0x20] sm:$0xff]
  %v6210 = vld [vmem:[%s73 + $0x28] sm:$0xff]
  %v6211 = vld [vmem:[%s73 + $0x30] sm:$0xff]
  %v6212 = vld [vmem:[%s73 + $0x38] sm:$0xff]
  %v6213 = vld [vmem:[%s73 + $0x40] sm:$0xff]
  %v6214 = vld [vmem:[%s73 + $0x48] sm:$0xff]
  %v6215 = vld [vmem:[%s73 + $0x50] sm:$0xff]
  %v6216 = vld [vmem:[%s73 + $0x58] sm:$0xff]
  %v6217 = vld [vmem:[%s73 + $0x60] sm:$0xff]
  %v6218 = vld [vmem:[%s73 + $0x68] sm:$0xff]
  %v6219 = vld [vmem:[%s73 + $0x70] sm:$0xff]
  %v6220 = vld [vmem:[%s73 + $0x78] sm:$0xff]
  %v6221 = vld [vmem:[%s75] sm:$0x1]
  %v6223 = vlaneseq
  %v6224 = vshrl.u32 %v6223, 7
  %v6225 = vsub.s32 0, %v6224
  %v6226 = vrot.slane %v6221, %v6225
  %6228 = vmatprep.subr.mxu0 0.0
  %6229 = vmatpush1.msra.mxu0 %v6205
  %6230 = vmatprep.subr.mxu0 0.0
  %6231 = vmatpush1.msra.mxu0 %v6206
  %6232 = vmatprep.subr.mxu0 0.0
  %6233 = vmatpush1.msra.mxu0 %v6207
  %6234 = vmatprep.subr.mxu0 0.0
  %6235 = vmatpush1.msra.mxu0 %v6208
  %6236 = vmatprep.subr.mxu0 0.0
  %6237 = vmatpush1.msra.mxu0 %v6209
  %6238 = vmatprep.subr.mxu0 0.0
  %6239 = vmatpush1.msra.mxu0 %v6210
  %6240 = vmatprep.subr.mxu0 0.0
  %6241 = vmatpush1.msra.mxu0 %v6211
  %6242 = vmatprep.subr.mxu0 0.0
  %6243 = vmatpush1.msra.mxu0 %v6212
  %6244 = vmatprep.subr.mxu0 0.0
  %6245 = vmatpush1.msra.mxu0 %v6213
  %6246 = vmatprep.subr.mxu0 0.0
  %6247 = vmatpush1.msra.mxu0 %v6214
  %6248 = vmatprep.subr.mxu0 0.0
  %6249 = vmatpush1.msra.mxu0 %v6215
  %6250 = vmatprep.subr.mxu0 0.0
  %6251 = vmatpush1.msra.mxu0 %v6216
  %6252 = vmatprep.subr.mxu0 0.0
  %6253 = vmatpush1.msra.mxu0 %v6217
  %6254 = vmatprep.subr.mxu0 0.0
  %6255 = vmatpush1.msra.mxu0 %v6218
  %6256 = vmatprep.subr.mxu0 0.0
  %6257 = vmatpush1.msra.mxu0 %v6219
  %6258 = vmatprep.subr.mxu0 0.0
  %6259 = vmatpush1.msra.mxu0 %v6220
  %6260 = vmatprep.subr.mxu0 0.0
  %6261 = vmatpush1.msra.mxu0 0.0
  %6262 = vmatprep.subr.mxu0 0.0
  %6263 = vmatpush1.msra.mxu0 0.0
  %6264 = vmatprep.subr.mxu0 0.0
  %6265 = vmatpush1.msra.mxu0 0.0
  %6266 = vmatprep.subr.mxu0 0.0
  %6267 = vmatpush1.msra.mxu0 0.0
  %6268 = vmatprep.subr.mxu0 0.0
  %6269 = vmatpush1.msra.mxu0 0.0
  %6270 = vmatprep.subr.mxu0 0.0
  %6271 = vmatpush1.msra.mxu0 0.0
  %6272 = vmatprep.subr.mxu0 0.0
  %6273 = vmatpush1.msra.mxu0 0.0
  %6274 = vmatprep.subr.mxu0 0.0
  %6275 = vmatpush1.msra.mxu0 0.0
  %6276 = vmatprep.subr.mxu0 0.0
  %6277 = vmatpush1.msra.mxu0 0.0
  %6278 = vmatprep.subr.mxu0 0.0
  %6279 = vmatpush1.msra.mxu0 0.0
  %6280 = vmatprep.subr.mxu0 0.0
  %6281 = vmatpush1.msra.mxu0 0.0
  %6282 = vmatprep.subr.mxu0 0.0
  %6283 = vmatpush1.msra.mxu0 0.0
  %6284 = vmatprep.subr.mxu0 0.0
  %6285 = vmatpush1.msra.mxu0 0.0
  %6286 = vmatprep.subr.mxu0 0.0
  %6287 = vmatpush1.msra.mxu0 0.0
  %6288 = vmatprep.subr.mxu0 0.0
  %6289 = vmatpush1.msra.mxu0 0.0
  %6290 = vmatprep.subr.mxu0 0.0
  %6291 = vmatpush1.msra.mxu0 0.0
  %6292 = vmatprep.mubr.f32.mxu0 0.0
  %6293 = vmatmul.mubr.f32.gmra.mrb[0].mxu0 %v6203
  %v6294 = vpop.f32.mrb[0].mxu0
  %v6295 = vadd.f32 %v6226, %v6294
  %v6296 = vpop.f32.mrb[0].mxu0
  %6297 = vmatprep.mubr.f32.mxu0 0.0
  %6298 = vmatmul.mubr.f32.gmra.mrb[0].mxu0 %v6204
  %v6299 = vpop.f32.mrb[0].mxu0
  %v6300 = vadd.f32 %v6226, %v6299
  %v6301 = vpop.f32.mrb[0].mxu0
  %6302 = vdwg.mxu0
  %v6303 = vadd.f32 %v6035, %v6295
  %v6304 = vadd.f32 %v6036, %v6300
  %v6305 = vld [vmem:[%s7] sm:$0x1]
  %v6306 = vld [vmem:[%s9] sm:$0x1]
  %v6307 = vsel %vm254, %v6303, 0.0
  %6308 = vadd.xlane.f32.xlu0 %v6307
  %v6309 = vpop.xlane.xlu0 %6308
  %v6310 = vsel %vm254, %v6304, 0.0
  %6311 = vadd.xlane.f32.xlu0 %v6310
  %v6312 = vpop.xlane.xlu0 %6311
  %v6313 = vmul.f32 %v6309, %v261
  %v6314 = vmul.f32 %v6312, %v261
  %v6315 = vsub.f32 %v6303, %v6313
  %v6316 = vsub.f32 %v6304, %v6314
  %v6317 = vmul.f32 %v6315, %v6315
  %v6318 = vmul.f32 %v6316, %v6316
  %v6319 = vsel %vm254, %v6317, 0.0
  %6320 = vadd.xlane.f32.xlu0 %v6319
  %v6321 = vpop.xlane.xlu0 %6320
  %v6322 = vsel %vm254, %v6318, 0.0
  %6323 = vadd.xlane.f32.xlu0 %v6322
  %v6324 = vpop.xlane.xlu0 %6323
  %v6325 = vmul.f32 %v6321, %v261
  %v6326 = vmul.f32 %v6324, %v261
  %v6327 = vadd.f32 %v6325, 1e-05
  %v6328 = vadd.f32 %v6326, 1e-05
  %v6329 = vrsqrt.pop %v6327
  %v6330 = vmul.f32 %v6327, %v6329
  %vm6331 = vcmp.eq.f32.partialorder %v6327, inf
  %v6332 = vsel %vm6331, %v6327, %v6330
  %vm6333 = vcmp.eq.f32.partialorder %v6327, 0.0
  %v6334 = vand.u32 %v6327, 2147483648
  %v6335 = vsel %vm6333, %v6334, %v6332
  %v6336 = vrsqrt.pop %v6328
  %v6337 = vmul.f32 %v6328, %v6336
  %vm6338 = vcmp.eq.f32.partialorder %v6328, inf
  %v6339 = vsel %vm6338, %v6328, %v6337
  %vm6340 = vcmp.eq.f32.partialorder %v6328, 0.0
  %v6341 = vand.u32 %v6328, 2147483648
  %v6342 = vsel %vm6340, %v6341, %v6339
  %v6343 = vrcp.pop %v6335
  %v6344 = vmul.f32 %v6315, %v6343
  %v6345 = vrcp.pop %v6342
  %v6346 = vmul.f32 %v6316, %v6345
  %v6348 = vlaneseq
  %v6349 = vshrl.u32 %v6348, 7
  %v6350 = vsub.s32 0, %v6349
  %v6351 = vrot.slane %v6305, %v6350
  %v6353 = vmul.f32 %v6351, %v6344
  %v6354 = vmul.f32 %v6351, %v6346
  %v6356 = vlaneseq
  %v6357 = vshrl.u32 %v6356, 7
  %v6358 = vsub.s32 0, %v6357
  %v6359 = vrot.slane %v6306, %v6358
  %v6361 = vadd.f32 %v6353, %v6359
  %v6362 = vadd.f32 %v6354, %v6359
  %v6363 = vld [vmem:[%s11] sm:$0xff]
  %v6364 = vld [vmem:[%s11 + $0x8] sm:$0xff]
  %v6365 = vld [vmem:[%s11 + $0x10] sm:$0xff]
  %v6366 = vld [vmem:[%s11 + $0x18] sm:$0xff]
  %v6368 = vsel %vm254, %v6361, 0
  %v6371 = vsel %vm254, %v6362, 0
  %6373 = vmatprep.subr.mxu0 0.0
  %6374 = vmatpush1.msra.mxu0 %v6363
  %6375 = vmatprep.subr.mxu0 0.0
  %6376 = vmatpush1.msra.mxu0 %v6364
  %6377 = vmatprep.subr.mxu0 0.0
  %6378 = vmatpush1.msra.mxu0 %v6365
  %6379 = vmatprep.subr.mxu0 0.0
  %6380 = vmatpush1.msra.mxu0 %v6366
  %6381 = vmatprep.subr.mxu0 0.0
  %6382 = vmatpush1.msra.mxu0 0.0
  %6383 = vmatprep.subr.mxu0 0.0
  %6384 = vmatpush1.msra.mxu0 0.0
  %6385 = vmatprep.subr.mxu0 0.0
  %6386 = vmatpush1.msra.mxu0 0.0
  %6387 = vmatprep.subr.mxu0 0.0
  %6388 = vmatpush1.msra.mxu0 0.0
  %6389 = vmatprep.subr.mxu0 0.0
  %6390 = vmatpush1.msra.mxu0 0.0
  %6391 = vmatprep.subr.mxu0 0.0
  %6392 = vmatpush1.msra.mxu0 0.0
  %6393 = vmatprep.subr.mxu0 0.0
  %6394 = vmatpush1.msra.mxu0 0.0
  %6395 = vmatprep.subr.mxu0 0.0
  %6396 = vmatpush1.msra.mxu0 0.0
  %6397 = vmatprep.subr.mxu0 0.0
  %6398 = vmatpush1.msra.mxu0 0.0
  %6399 = vmatprep.subr.mxu0 0.0
  %6400 = vmatpush1.msra.mxu0 0.0
  %6401 = vmatprep.subr.mxu0 0.0
  %6402 = vmatpush1.msra.mxu0 0.0
  %6403 = vmatprep.subr.mxu0 0.0
  %6404 = vmatpush1.msra.mxu0 0.0
  %6405 = vmatprep.subr.mxu0 0.0
  %6406 = vmatpush1.msra.mxu0 0.0
  %6407 = vmatprep.subr.mxu0 0.0
  %6408 = vmatpush1.msra.mxu0 0.0
  %6409 = vmatprep.subr.mxu0 0.0
  %6410 = vmatpush1.msra.mxu0 0.0
  %6411 = vmatprep.subr.mxu0 0.0
  %6412 = vmatpush1.msra.mxu0 0.0
  %6413 = vmatprep.subr.mxu0 0.0
  %6414 = vmatpush1.msra.mxu0 0.0
  %6415 = vmatprep.subr.mxu0 0.0
  %6416 = vmatpush1.msra.mxu0 0.0
  %6417 = vmatprep.subr.mxu0 0.0
  %6418 = vmatpush1.msra.mxu0 0.0
  %6419 = vmatprep.subr.mxu0 0.0
  %6420 = vmatpush1.msra.mxu0 0.0
  %6421 = vmatprep.subr.mxu0 0.0
  %6422 = vmatpush1.msra.mxu0 0.0
  %6423 = vmatprep.subr.mxu0 0.0
  %6424 = vmatpush1.msra.mxu0 0.0
  %6425 = vmatprep.subr.mxu0 0.0
  %6426 = vmatpush1.msra.mxu0 0.0
  %6427 = vmatprep.subr.mxu0 0.0
  %6428 = vmatpush1.msra.mxu0 0.0
  %6429 = vmatprep.subr.mxu0 0.0
  %6430 = vmatpush1.msra.mxu0 0.0
  %6431 = vmatprep.subr.mxu0 0.0
  %6432 = vmatpush1.msra.mxu0 0.0
  %6433 = vmatprep.subr.mxu0 0.0
  %6434 = vmatpush1.msra.mxu0 0.0
  %6435 = vmatprep.subr.mxu0 0.0
  %6436 = vmatpush1.msra.mxu0 0.0
  %6437 = vmatprep.mubr.f32.mxu0 0.0
  %6438 = vmatmul.mubr.f32.gmra.mrb[0].mxu0 %v6368
  %v6439 = vpop.f32.mrb[0].mxu0
  %v6440 = vadd.f32 0.0, %v6439
  %v6441 = vpop.f32.mrb[0].mxu0
  %6442 = vmatprep.mubr.f32.mxu0 0.0
  %6443 = vmatmul.mubr.f32.gmra.mrb[0].mxu0 %v6371
  %v6444 = vpop.f32.mrb[0].mxu0
  %v6445 = vadd.f32 0.0, %v6444
  %v6446 = vpop.f32.mrb[0].mxu0
  %6447 = vdwg.mxu0
  %v6448 = vmul.f32 %v6440, 0.5
  %v6449 = vmul.f32 %v6445, 0.5
  %v6450 = vtanh.pop %v6448
  %v6451 = vtanh.pop %v6449
  %v6452 = vadd.f32 %v6450, 1.0
  %v6453 = vadd.f32 %v6451, 1.0
  %v6454 = vmul.f32 %v6452, 0.5
  %v6455 = vmul.f32 %v6453, 0.5
  %6456 = vst [vmem:[%s77] sm:$0xff] %v6454
  %6457 = vst [vmem:[%s77 + $0x8] sm:$0xff] %v6455
  // Predicated region
  $region154: #{gpt_forward.1} parent=0 // pred_check
    _
  $region155: #{gpt_forward.1} parent=0 // pred_check_branch
    %6459 = sbr.rel (0) target = $region157
  $region156: #{gpt_forward.1} parent=0 // pred_region
    _
  $region157: #{gpt_forward.1} parent=0 // pred_fallthru
    _
  // Predicated region
  $region158: #{gpt_forward.1} parent=0 // pred_check
    _
  $region159: #{gpt_forward.1} parent=0 // pred_check_branch
    %6461 = sbr.rel (0) target = $region161
  $region160: #{gpt_forward.1} parent=0 // pred_region
    _
  $region161: #{gpt_forward.1} parent=0 // pred_fallthru
    _

</llo_original>
